<compile_context>
chip_gen: v7x
topology: tpu7x:2x2x1
jax: 0.10.0
libtpu: 0.0.40
codegen_flags: <defaults>
</compile_context>

<pallas_src>
import jax
import jax.numpy as jnp
import numpy as np
from jax.experimental import pallas as pl


# ----------------------------------------------------------------------------
# Fused Pallas kernel: all LSTM layers + time steps + final Linear
# ----------------------------------------------------------------------------
def _fused_lstm_fc_kernel(x_ref, *refs):
    """Entire LSTMModel forward in one kernel invocation.

    x_ref : (B, T, D_in)   batch_first input, whole array resident in VMEM
    refs  : for each layer  w_ih (4, D_l, H), w_hh (4, H, H), b (4, 1, H)
            then            fc_w (H, O), fc_b (1, O)
            then            out  (B, O)                         [output ref]
    Gate order along the leading size-4 axis is (i, f, g, o), matching PyTorch.
    """
    out_ref = refs[-1]
    fc_w_ref = refs[-3]
    fc_b_ref = refs[-2]
    layer_refs = refs[:-3]
    num_layers = len(layer_refs) // 3

    B, T, _ = x_ref.shape

    # Time-major list of per-step (B, feat) inputs for the current layer.
    x_all = x_ref[...]
    xs = [x_all[:, t, :] for t in range(T)]

    for layer in range(num_layers):
        w_ih_ref = layer_refs[3 * layer + 0]   # (4, D_l, H)
        w_hh_ref = layer_refs[3 * layer + 1]   # (4, H,   H)
        b_ref = layer_refs[3 * layer + 2]      # (4, 1,   H)
        H = w_hh_ref.shape[1]

        # --- Hoisted, time-independent input projection (off the serial path) ---
        # One (T*B, D_l) @ (D_l, H) matmul per gate instead of T tiny matmuls.
        x_stack = jnp.concatenate(xs, axis=0)                     # (T*B, D_l)
        gx = [
            jnp.dot(x_stack, w_ih_ref[k], preferred_element_type=jnp.float32)
            + b_ref[k]
            for k in range(4)
        ]                                                         # 4 x (T*B, H)

        # --- Serial recurrence: only h @ W_hh per step ---
        h = jnp.zeros((B, H), jnp.float32)
        c = jnp.zeros((B, H), jnp.float32)
        xs = []
        for t in range(T):
            rows = slice(t * B, (t + 1) * B)
            i = jax.nn.sigmoid(
                gx[0][rows] + jnp.dot(h, w_hh_ref[0], preferred_element_type=jnp.float32))
            f = jax.nn.sigmoid(
                gx[1][rows] + jnp.dot(h, w_hh_ref[1], preferred_element_type=jnp.float32))
            g = jnp.tanh(
                gx[2][rows] + jnp.dot(h, w_hh_ref[2], preferred_element_type=jnp.float32))
            o = jax.nn.sigmoid(
                gx[3][rows] + jnp.dot(h, w_hh_ref[3], preferred_element_type=jnp.float32))
            c = f * c + i * g
            h = o * jnp.tanh(c)
            xs.append(h)

    # Final Linear on the last time step of the last layer: fc(out[:, -1, :]).
    out_ref[...] = (
        jnp.dot(xs[-1], fc_w_ref[...], preferred_element_type=jnp.float32) + fc_b_ref[...]
    ).astype(out_ref.dtype)


# ----------------------------------------------------------------------------
# Wrapper
# ----------------------------------------------------------------------------
@jax.jit
def lstm_model_forward(x_btd, layer_params, fc_w, fc_b):
    """Forward pass matching LSTMModel.forward.

    x_btd        : (B, T, input_size)   (batch_first, same as PyTorch)
    layer_params : tuple of (w_ih, w_hh, b) per layer with shapes
                   (4, D_l, H), (4, H, H), (4, 1, H)   [gate order i, f, g, o]
    Returns (B, output_size).
    """
    B = x_btd.shape[0]
    O = fc_w.shape[1]
    flat_args = [x_btd.astype(jnp.float32)]
    for (w_ih, w_hh, b) in layer_params:
        flat_args += [w_ih, w_hh, b]
    flat_args += [fc_w, fc_b]
    return pl.pallas_call(
        _fused_lstm_fc_kernel,
        out_shape=jax.ShapeDtypeStruct((B, O), jnp.float32),
    )(*flat_args)


# ----------------------------------------------------------------------------
# Pure-JAX reference (full f32 matmuls) for correctness check
# ----------------------------------------------------------------------------
def _dot_f32(a, b):
    return jnp.dot(a, b, precision=jax.lax.Precision.HIGHEST)


def lstm_model_ref(x_btd, layer_params, fc_w, fc_b):
    B, T, _ = x_btd.shape
    seq = x_btd.astype(jnp.float32)
    for (w_ih, w_hh, b) in layer_params:
        H = w_hh.shape[-1]
        h = jnp.zeros((B, H), jnp.float32)
        c = jnp.zeros((B, H), jnp.float32)
        outs = []
        for t in range(T):
            x_t = seq[:, t, :]
            i = jax.nn.sigmoid(_dot_f32(x_t, w_ih[0]) + _dot_f32(h, w_hh[0]) + b[0])
            f = jax.nn.sigmoid(_dot_f32(x_t, w_ih[1]) + _dot_f32(h, w_hh[1]) + b[1])
            g = jnp.tanh(_dot_f32(x_t, w_ih[2]) + _dot_f32(h, w_hh[2]) + b[2])
            o = jax.nn.sigmoid(_dot_f32(x_t, w_ih[3]) + _dot_f32(h, w_hh[3]) + b[3])
            c = f * c + i * g
            h = o * jnp.tanh(c)
            outs.append(h)
        seq = jnp.stack(outs, axis=1)
    return _dot_f32(seq[:, -1, :], fc_w) + fc_b


# ----------------------------------------------------------------------------
# Parameter construction (deterministic, mirrors nn.LSTM / nn.Linear init bounds).
# A real torch weight_ih (4H, D) maps to this layout via
#   w_ih = weight_ih.reshape(4, H, D).transpose(0, 2, 1)   (gate order i, f, g, o),
# and b = (b_ih + b_hh).reshape(4, 1, H).
# ----------------------------------------------------------------------------
def make_params(key, input_size, hidden_size, num_layers, output_size):
    H = hidden_size
    bound = 1.0 / np.sqrt(H)
    layers = []
    for layer in range(num_layers):
        d_in = input_size if layer == 0 else H
        key, k1, k2, k3, k4 = jax.random.split(key, 5)
        w_ih = jax.random.uniform(k1, (4, d_in, H), jnp.float32, -bound, bound)
        w_hh = jax.random.uniform(k2, (4, H, H), jnp.float32, -bound, bound)
        b_ih = jax.random.uniform(k3, (4, 1, H), jnp.float32, -bound, bound)
        b_hh = jax.random.uniform(k4, (4, 1, H), jnp.float32, -bound, bound)
        layers.append((w_ih, w_hh, b_ih + b_hh))
    key, k5, k6 = jax.random.split(key, 3)
    fc_w = jax.random.uniform(k5, (H, output_size), jnp.float32, -bound, bound)
    fc_b = jax.random.uniform(k6, (1, output_size), jnp.float32, -bound, bound)
    return tuple(layers), fc_w, fc_b


# ----------------------------------------------------------------------------
if __name__ == "__main__":
    batch = 2
    seq_len = 8
    input_size = 16
    hidden_size = 32
    num_layers = 2
    output_size = 8

    key = jax.random.PRNGKey(0)
    key, kx, kp = jax.random.split(key, 3)

    x = jax.random.normal(kx, (batch, seq_len, input_size), jnp.float32)
    layer_params, fc_w, fc_b = make_params(
        kp, input_size, hidden_size, num_layers, output_size
    )

    out = lstm_model_forward(x, layer_params, fc_w, fc_b)
    out = jax.block_until_ready(out)

    ref = lstm_model_ref(x, layer_params, fc_w, fc_b)
    np.testing.assert_allclose(np.asarray(out), np.asarray(ref), atol=1e-5, rtol=1e-5)

    assert out.shape == (batch, output_size)
    print("KERNEL_OK")
</pallas_src>

<mosaic_0001>
module attributes {stable_mosaic.version = 11 : i64} {
  func.func @_fused_lstm_fc_kernel(%arg0: memref<2x8x16xf32, #tpu.memory_space<vmem>>, %arg1: memref<4x16x32xf32, #tpu.memory_space<vmem>>, %arg2: memref<4x32x32xf32, #tpu.memory_space<vmem>>, %arg3: memref<4x1x32xf32, #tpu.memory_space<vmem>>, %arg4: memref<4x32x32xf32, #tpu.memory_space<vmem>>, %arg5: memref<4x32x32xf32, #tpu.memory_space<vmem>>, %arg6: memref<4x1x32xf32, #tpu.memory_space<vmem>>, %arg7: memref<32x8xf32, #tpu.memory_space<vmem>>, %arg8: memref<1x8xf32, #tpu.memory_space<vmem>>, %arg9: memref<2x8xf32, #tpu.memory_space<vmem>>) attributes {dimension_semantics = [], scalar_prefetch = 0 : i64, scratch_operands = 0 : i64, tpu.core_type = #tpu.core_type<tc>} {
    %c0 = arith.constant 0 : index
    %c0_0 = arith.constant 0 : index
    %c0_1 = arith.constant 0 : index
    %0 = vector.load %arg0[%c0, %c0_0, %c0_1] : memref<2x8x16xf32, #tpu.memory_space<vmem>>, vector<2x8x16xf32>
    %1 = vector.extract_strided_slice %0 {offsets = [0, 0, 0], sizes = [2, 1, 16], strides = [1, 1, 1]} : vector<2x8x16xf32> to vector<2x1x16xf32>
    %2 = vector.shape_cast %1 : vector<2x1x16xf32> to vector<2x16xf32>
    %3 = vector.extract_strided_slice %0 {offsets = [0, 1, 0], sizes = [2, 1, 16], strides = [1, 1, 1]} : vector<2x8x16xf32> to vector<2x1x16xf32>
    %4 = vector.shape_cast %3 : vector<2x1x16xf32> to vector<2x16xf32>
    %5 = vector.extract_strided_slice %0 {offsets = [0, 2, 0], sizes = [2, 1, 16], strides = [1, 1, 1]} : vector<2x8x16xf32> to vector<2x1x16xf32>
    %6 = vector.shape_cast %5 : vector<2x1x16xf32> to vector<2x16xf32>
    %7 = vector.extract_strided_slice %0 {offsets = [0, 3, 0], sizes = [2, 1, 16], strides = [1, 1, 1]} : vector<2x8x16xf32> to vector<2x1x16xf32>
    %8 = vector.shape_cast %7 : vector<2x1x16xf32> to vector<2x16xf32>
    %9 = vector.extract_strided_slice %0 {offsets = [0, 4, 0], sizes = [2, 1, 16], strides = [1, 1, 1]} : vector<2x8x16xf32> to vector<2x1x16xf32>
    %10 = vector.shape_cast %9 : vector<2x1x16xf32> to vector<2x16xf32>
    %11 = vector.extract_strided_slice %0 {offsets = [0, 5, 0], sizes = [2, 1, 16], strides = [1, 1, 1]} : vector<2x8x16xf32> to vector<2x1x16xf32>
    %12 = vector.shape_cast %11 : vector<2x1x16xf32> to vector<2x16xf32>
    %13 = vector.extract_strided_slice %0 {offsets = [0, 6, 0], sizes = [2, 1, 16], strides = [1, 1, 1]} : vector<2x8x16xf32> to vector<2x1x16xf32>
    %14 = vector.shape_cast %13 : vector<2x1x16xf32> to vector<2x16xf32>
    %15 = vector.extract_strided_slice %0 {offsets = [0, 7, 0], sizes = [2, 1, 16], strides = [1, 1, 1]} : vector<2x8x16xf32> to vector<2x1x16xf32>
    %16 = vector.shape_cast %15 : vector<2x1x16xf32> to vector<2x16xf32>
    %17 = tpu.concatenate %2, %4, %6, %8, %10, %12, %14, %16 in 0 : vector<2x16xf32>, vector<2x16xf32>, vector<2x16xf32>, vector<2x16xf32>, vector<2x16xf32>, vector<2x16xf32>, vector<2x16xf32>, vector<2x16xf32> -> vector<16x16xf32>
    %c0_2 = arith.constant 0 : index
    %c0_3 = arith.constant 0 : index
    %c0_4 = arith.constant 0 : index
    %18 = vector.load %arg1[%c0_2, %c0_3, %c0_4] : memref<4x16x32xf32, #tpu.memory_space<vmem>>, vector<1x16x32xf32>
    %19 = vector.shape_cast %18 : vector<1x16x32xf32> to vector<16x32xf32>
    %cst = arith.constant dense<0.000000e+00> : vector<16x32xf32>
    %20 = tpu.matmul %17, %19, %cst {dimension_numbers = #tpu.dot_dimension_numbers<[1], [0], [0], [1], [0, 0, 1, 1], [], []>} : vector<16x16xf32>, vector<16x32xf32>, vector<16x32xf32> -> vector<16x32xf32>
    %c0_5 = arith.constant 0 : index
    %c0_6 = arith.constant 0 : index
    %c0_7 = arith.constant 0 : index
    %21 = vector.load %arg3[%c0_5, %c0_6, %c0_7] : memref<4x1x32xf32, #tpu.memory_space<vmem>>, vector<1x1x32xf32>
    %22 = vector.shape_cast %21 : vector<1x1x32xf32> to vector<1x32xf32>
    %23 = vector.broadcast %22 : vector<1x32xf32> to vector<16x32xf32>
    %24 = arith.addf %20, %23 : vector<16x32xf32>
    %c1 = arith.constant 1 : index
    %c0_8 = arith.constant 0 : index
    %c0_9 = arith.constant 0 : index
    %25 = vector.load %arg1[%c1, %c0_8, %c0_9] : memref<4x16x32xf32, #tpu.memory_space<vmem>>, vector<1x16x32xf32>
    %26 = vector.shape_cast %25 : vector<1x16x32xf32> to vector<16x32xf32>
    %cst_10 = arith.constant dense<0.000000e+00> : vector<16x32xf32>
    %27 = tpu.matmul %17, %26, %cst_10 {dimension_numbers = #tpu.dot_dimension_numbers<[1], [0], [0], [1], [0, 0, 1, 1], [], []>} : vector<16x16xf32>, vector<16x32xf32>, vector<16x32xf32> -> vector<16x32xf32>
    %c1_11 = arith.constant 1 : index
    %c0_12 = arith.constant 0 : index
    %c0_13 = arith.constant 0 : index
    %28 = vector.load %arg3[%c1_11, %c0_12, %c0_13] : memref<4x1x32xf32, #tpu.memory_space<vmem>>, vector<1x1x32xf32>
    %29 = vector.shape_cast %28 : vector<1x1x32xf32> to vector<1x32xf32>
    %30 = vector.broadcast %29 : vector<1x32xf32> to vector<16x32xf32>
    %31 = arith.addf %27, %30 : vector<16x32xf32>
    %c2 = arith.constant 2 : index
    %c0_14 = arith.constant 0 : index
    %c0_15 = arith.constant 0 : index
    %32 = vector.load %arg1[%c2, %c0_14, %c0_15] : memref<4x16x32xf32, #tpu.memory_space<vmem>>, vector<1x16x32xf32>
    %33 = vector.shape_cast %32 : vector<1x16x32xf32> to vector<16x32xf32>
    %cst_16 = arith.constant dense<0.000000e+00> : vector<16x32xf32>
    %34 = tpu.matmul %17, %33, %cst_16 {dimension_numbers = #tpu.dot_dimension_numbers<[1], [0], [0], [1], [0, 0, 1, 1], [], []>} : vector<16x16xf32>, vector<16x32xf32>, vector<16x32xf32> -> vector<16x32xf32>
    %c2_17 = arith.constant 2 : index
    %c0_18 = arith.constant 0 : index
    %c0_19 = arith.constant 0 : index
    %35 = vector.load %arg3[%c2_17, %c0_18, %c0_19] : memref<4x1x32xf32, #tpu.memory_space<vmem>>, vector<1x1x32xf32>
    %36 = vector.shape_cast %35 : vector<1x1x32xf32> to vector<1x32xf32>
    %37 = vector.broadcast %36 : vector<1x32xf32> to vector<16x32xf32>
    %38 = arith.addf %34, %37 : vector<16x32xf32>
    %c3 = arith.constant 3 : index
    %c0_20 = arith.constant 0 : index
    %c0_21 = arith.constant 0 : index
    %39 = vector.load %arg1[%c3, %c0_20, %c0_21] : memref<4x16x32xf32, #tpu.memory_space<vmem>>, vector<1x16x32xf32>
    %40 = vector.shape_cast %39 : vector<1x16x32xf32> to vector<16x32xf32>
    %cst_22 = arith.constant dense<0.000000e+00> : vector<16x32xf32>
    %41 = tpu.matmul %17, %40, %cst_22 {dimension_numbers = #tpu.dot_dimension_numbers<[1], [0], [0], [1], [0, 0, 1, 1], [], []>} : vector<16x16xf32>, vector<16x32xf32>, vector<16x32xf32> -> vector<16x32xf32>
    %c3_23 = arith.constant 3 : index
    %c0_24 = arith.constant 0 : index
    %c0_25 = arith.constant 0 : index
    %42 = vector.load %arg3[%c3_23, %c0_24, %c0_25] : memref<4x1x32xf32, #tpu.memory_space<vmem>>, vector<1x1x32xf32>
    %43 = vector.shape_cast %42 : vector<1x1x32xf32> to vector<1x32xf32>
    %44 = vector.broadcast %43 : vector<1x32xf32> to vector<16x32xf32>
    %45 = arith.addf %41, %44 : vector<16x32xf32>
    %cst_26 = arith.constant 0.000000e+00 : f32
    %46 = vector.broadcast %cst_26 : f32 to vector<2x32xf32>
    %cst_27 = arith.constant 0.000000e+00 : f32
    %47 = vector.broadcast %cst_27 : f32 to vector<2x32xf32>
    %48 = vector.extract_strided_slice %24 {offsets = [0, 0], sizes = [2, 32], strides = [1, 1]} : vector<16x32xf32> to vector<2x32xf32>
    %c0_28 = arith.constant 0 : index
    %c0_29 = arith.constant 0 : index
    %c0_30 = arith.constant 0 : index
    %49 = vector.load %arg2[%c0_28, %c0_29, %c0_30] : memref<4x32x32xf32, #tpu.memory_space<vmem>>, vector<1x32x32xf32>
    %50 = vector.shape_cast %49 : vector<1x32x32xf32> to vector<32x32xf32>
    %cst_31 = arith.constant dense<0.000000e+00> : vector<2x32xf32>
    %51 = tpu.matmul %46, %50, %cst_31 {dimension_numbers = #tpu.dot_dimension_numbers<[1], [0], [0], [1], [0, 0, 1, 1], [], []>} : vector<2x32xf32>, vector<32x32xf32>, vector<2x32xf32> -> vector<2x32xf32>
    %52 = arith.addf %48, %51 : vector<2x32xf32>
    %53 = arith.negf %52 : vector<2x32xf32>
    %54 = math.exp %53 : vector<2x32xf32>
    %cst_32 = arith.constant 1.000000e+00 : f32
    %55 = vector.broadcast %cst_32 : f32 to vector<2x32xf32>
    %56 = arith.addf %55, %54 : vector<2x32xf32>
    %57 = arith.divf %55, %56 : vector<2x32xf32>
    %58 = vector.extract_strided_slice %31 {offsets = [0, 0], sizes = [2, 32], strides = [1, 1]} : vector<16x32xf32> to vector<2x32xf32>
    %c1_33 = arith.constant 1 : index
    %c0_34 = arith.constant 0 : index
    %c0_35 = arith.constant 0 : index
    %59 = vector.load %arg2[%c1_33, %c0_34, %c0_35] : memref<4x32x32xf32, #tpu.memory_space<vmem>>, vector<1x32x32xf32>
    %60 = vector.shape_cast %59 : vector<1x32x32xf32> to vector<32x32xf32>
    %cst_36 = arith.constant dense<0.000000e+00> : vector<2x32xf32>
    %61 = tpu.matmul %46, %60, %cst_36 {dimension_numbers = #tpu.dot_dimension_numbers<[1], [0], [0], [1], [0, 0, 1, 1], [], []>} : vector<2x32xf32>, vector<32x32xf32>, vector<2x32xf32> -> vector<2x32xf32>
    %62 = arith.addf %58, %61 : vector<2x32xf32>
    %63 = arith.negf %62 : vector<2x32xf32>
    %64 = math.exp %63 : vector<2x32xf32>
    %cst_37 = arith.constant 1.000000e+00 : f32
    %65 = vector.broadcast %cst_37 : f32 to vector<2x32xf32>
    %66 = arith.addf %65, %64 : vector<2x32xf32>
    %67 = arith.divf %65, %66 : vector<2x32xf32>
    %68 = vector.extract_strided_slice %38 {offsets = [0, 0], sizes = [2, 32], strides = [1, 1]} : vector<16x32xf32> to vector<2x32xf32>
    %c2_38 = arith.constant 2 : index
    %c0_39 = arith.constant 0 : index
    %c0_40 = arith.constant 0 : index
    %69 = vector.load %arg2[%c2_38, %c0_39, %c0_40] : memref<4x32x32xf32, #tpu.memory_space<vmem>>, vector<1x32x32xf32>
    %70 = vector.shape_cast %69 : vector<1x32x32xf32> to vector<32x32xf32>
    %cst_41 = arith.constant dense<0.000000e+00> : vector<2x32xf32>
    %71 = tpu.matmul %46, %70, %cst_41 {dimension_numbers = #tpu.dot_dimension_numbers<[1], [0], [0], [1], [0, 0, 1, 1], [], []>} : vector<2x32xf32>, vector<32x32xf32>, vector<2x32xf32> -> vector<2x32xf32>
    %72 = arith.addf %68, %71 : vector<2x32xf32>
    %73 = math.tanh %72 : vector<2x32xf32>
    %74 = vector.extract_strided_slice %45 {offsets = [0, 0], sizes = [2, 32], strides = [1, 1]} : vector<16x32xf32> to vector<2x32xf32>
    %c3_42 = arith.constant 3 : index
    %c0_43 = arith.constant 0 : index
    %c0_44 = arith.constant 0 : index
    %75 = vector.load %arg2[%c3_42, %c0_43, %c0_44] : memref<4x32x32xf32, #tpu.memory_space<vmem>>, vector<1x32x32xf32>
    %76 = vector.shape_cast %75 : vector<1x32x32xf32> to vector<32x32xf32>
    %cst_45 = arith.constant dense<0.000000e+00> : vector<2x32xf32>
    %77 = tpu.matmul %46, %76, %cst_45 {dimension_numbers = #tpu.dot_dimension_numbers<[1], [0], [0], [1], [0, 0, 1, 1], [], []>} : vector<2x32xf32>, vector<32x32xf32>, vector<2x32xf32> -> vector<2x32xf32>
    %78 = arith.addf %74, %77 : vector<2x32xf32>
    %79 = arith.negf %78 : vector<2x32xf32>
    %80 = math.exp %79 : vector<2x32xf32>
    %cst_46 = arith.constant 1.000000e+00 : f32
    %81 = vector.broadcast %cst_46 : f32 to vector<2x32xf32>
    %82 = arith.addf %81, %80 : vector<2x32xf32>
    %83 = arith.divf %81, %82 : vector<2x32xf32>
    %84 = arith.mulf %67, %47 : vector<2x32xf32>
    %85 = arith.mulf %57, %73 : vector<2x32xf32>
    %86 = arith.addf %84, %85 : vector<2x32xf32>
    %87 = math.tanh %86 : vector<2x32xf32>
    %88 = arith.mulf %83, %87 : vector<2x32xf32>
    %89 = vector.extract_strided_slice %24 {offsets = [2, 0], sizes = [2, 32], strides = [1, 1]} : vector<16x32xf32> to vector<2x32xf32>
    %c0_47 = arith.constant 0 : index
    %c0_48 = arith.constant 0 : index
    %c0_49 = arith.constant 0 : index
    %90 = vector.load %arg2[%c0_47, %c0_48, %c0_49] : memref<4x32x32xf32, #tpu.memory_space<vmem>>, vector<1x32x32xf32>
    %91 = vector.shape_cast %90 : vector<1x32x32xf32> to vector<32x32xf32>
    %cst_50 = arith.constant dense<0.000000e+00> : vector<2x32xf32>
    %92 = tpu.matmul %88, %91, %cst_50 {dimension_numbers = #tpu.dot_dimension_numbers<[1], [0], [0], [1], [0, 0, 1, 1], [], []>} : vector<2x32xf32>, vector<32x32xf32>, vector<2x32xf32> -> vector<2x32xf32>
    %93 = arith.addf %89, %92 : vector<2x32xf32>
    %94 = arith.negf %93 : vector<2x32xf32>
    %95 = math.exp %94 : vector<2x32xf32>
    %cst_51 = arith.constant 1.000000e+00 : f32
    %96 = vector.broadcast %cst_51 : f32 to vector<2x32xf32>
    %97 = arith.addf %96, %95 : vector<2x32xf32>
    %98 = arith.divf %96, %97 : vector<2x32xf32>
    %99 = vector.extract_strided_slice %31 {offsets = [2, 0], sizes = [2, 32], strides = [1, 1]} : vector<16x32xf32> to vector<2x32xf32>
    %c1_52 = arith.constant 1 : index
    %c0_53 = arith.constant 0 : index
    %c0_54 = arith.constant 0 : index
    %100 = vector.load %arg2[%c1_52, %c0_53, %c0_54] : memref<4x32x32xf32, #tpu.memory_space<vmem>>, vector<1x32x32xf32>
    %101 = vector.shape_cast %100 : vector<1x32x32xf32> to vector<32x32xf32>
    %cst_55 = arith.constant dense<0.000000e+00> : vector<2x32xf32>
    %102 = tpu.matmul %88, %101, %cst_55 {dimension_numbers = #tpu.dot_dimension_numbers<[1], [0], [0], [1], [0, 0, 1, 1], [], []>} : vector<2x32xf32>, vector<32x32xf32>, vector<2x32xf32> -> vector<2x32xf32>
    %103 = arith.addf %99, %102 : vector<2x32xf32>
    %104 = arith.negf %103 : vector<2x32xf32>
    %105 = math.exp %104 : vector<2x32xf32>
    %cst_56 = arith.constant 1.000000e+00 : f32
    %106 = vector.broadcast %cst_56 : f32 to vector<2x32xf32>
    %107 = arith.addf %106, %105 : vector<2x32xf32>
    %108 = arith.divf %106, %107 : vector<2x32xf32>
    %109 = vector.extract_strided_slice %38 {offsets = [2, 0], sizes = [2, 32], strides = [1, 1]} : vector<16x32xf32> to vector<2x32xf32>
    %c2_57 = arith.constant 2 : index
    %c0_58 = arith.constant 0 : index
    %c0_59 = arith.constant 0 : index
    %110 = vector.load %arg2[%c2_57, %c0_58, %c0_59] : memref<4x32x32xf32, #tpu.memory_space<vmem>>, vector<1x32x32xf32>
    %111 = vector.shape_cast %110 : vector<1x32x32xf32> to vector<32x32xf32>
    %cst_60 = arith.constant dense<0.000000e+00> : vector<2x32xf32>
    %112 = tpu.matmul %88, %111, %cst_60 {dimension_numbers = #tpu.dot_dimension_numbers<[1], [0], [0], [1], [0, 0, 1, 1], [], []>} : vector<2x32xf32>, vector<32x32xf32>, vector<2x32xf32> -> vector<2x32xf32>
    %113 = arith.addf %109, %112 : vector<2x32xf32>
    %114 = math.tanh %113 : vector<2x32xf32>
    %115 = vector.extract_strided_slice %45 {offsets = [2, 0], sizes = [2, 32], strides = [1, 1]} : vector<16x32xf32> to vector<2x32xf32>
    %c3_61 = arith.constant 3 : index
    %c0_62 = arith.constant 0 : index
    %c0_63 = arith.constant 0 : index
    %116 = vector.load %arg2[%c3_61, %c0_62, %c0_63] : memref<4x32x32xf32, #tpu.memory_space<vmem>>, vector<1x32x32xf32>
    %117 = vector.shape_cast %116 : vector<1x32x32xf32> to vector<32x32xf32>
    %cst_64 = arith.constant dense<0.000000e+00> : vector<2x32xf32>
    %118 = tpu.matmul %88, %117, %cst_64 {dimension_numbers = #tpu.dot_dimension_numbers<[1], [0], [0], [1], [0, 0, 1, 1], [], []>} : vector<2x32xf32>, vector<32x32xf32>, vector<2x32xf32> -> vector<2x32xf32>
    %119 = arith.addf %115, %118 : vector<2x32xf32>
    %120 = arith.negf %119 : vector<2x32xf32>
    %121 = math.exp %120 : vector<2x32xf32>
    %cst_65 = arith.constant 1.000000e+00 : f32
    %122 = vector.broadcast %cst_65 : f32 to vector<2x32xf32>
    %123 = arith.addf %122, %121 : vector<2x32xf32>
    %124 = arith.divf %122, %123 : vector<2x32xf32>
    %125 = arith.mulf %108, %86 : vector<2x32xf32>
    %126 = arith.mulf %98, %114 : vector<2x32xf32>
    %127 = arith.addf %125, %126 : vector<2x32xf32>
    %128 = math.tanh %127 : vector<2x32xf32>
    %129 = arith.mulf %124, %128 : vector<2x32xf32>
    %130 = vector.extract_strided_slice %24 {offsets = [4, 0], sizes = [2, 32], strides = [1, 1]} : vector<16x32xf32> to vector<2x32xf32>
    %c0_66 = arith.constant 0 : index
    %c0_67 = arith.constant 0 : index
    %c0_68 = arith.constant 0 : index
    %131 = vector.load %arg2[%c0_66, %c0_67, %c0_68] : memref<4x32x32xf32, #tpu.memory_space<vmem>>, vector<1x32x32xf32>
    %132 = vector.shape_cast %131 : vector<1x32x32xf32> to vector<32x32xf32>
    %cst_69 = arith.constant dense<0.000000e+00> : vector<2x32xf32>
    %133 = tpu.matmul %129, %132, %cst_69 {dimension_numbers = #tpu.dot_dimension_numbers<[1], [0], [0], [1], [0, 0, 1, 1], [], []>} : vector<2x32xf32>, vector<32x32xf32>, vector<2x32xf32> -> vector<2x32xf32>
    %134 = arith.addf %130, %133 : vector<2x32xf32>
    %135 = arith.negf %134 : vector<2x32xf32>
    %136 = math.exp %135 : vector<2x32xf32>
    %cst_70 = arith.constant 1.000000e+00 : f32
    %137 = vector.broadcast %cst_70 : f32 to vector<2x32xf32>
    %138 = arith.addf %137, %136 : vector<2x32xf32>
    %139 = arith.divf %137, %138 : vector<2x32xf32>
    %140 = vector.extract_strided_slice %31 {offsets = [4, 0], sizes = [2, 32], strides = [1, 1]} : vector<16x32xf32> to vector<2x32xf32>
    %c1_71 = arith.constant 1 : index
    %c0_72 = arith.constant 0 : index
    %c0_73 = arith.constant 0 : index
    %141 = vector.load %arg2[%c1_71, %c0_72, %c0_73] : memref<4x32x32xf32, #tpu.memory_space<vmem>>, vector<1x32x32xf32>
    %142 = vector.shape_cast %141 : vector<1x32x32xf32> to vector<32x32xf32>
    %cst_74 = arith.constant dense<0.000000e+00> : vector<2x32xf32>
    %143 = tpu.matmul %129, %142, %cst_74 {dimension_numbers = #tpu.dot_dimension_numbers<[1], [0], [0], [1], [0, 0, 1, 1], [], []>} : vector<2x32xf32>, vector<32x32xf32>, vector<2x32xf32> -> vector<2x32xf32>
    %144 = arith.addf %140, %143 : vector<2x32xf32>
    %145 = arith.negf %144 : vector<2x32xf32>
    %146 = math.exp %145 : vector<2x32xf32>
    %cst_75 = arith.constant 1.000000e+00 : f32
    %147 = vector.broadcast %cst_75 : f32 to vector<2x32xf32>
    %148 = arith.addf %147, %146 : vector<2x32xf32>
    %149 = arith.divf %147, %148 : vector<2x32xf32>
    %150 = vector.extract_strided_slice %38 {offsets = [4, 0], sizes = [2, 32], strides = [1, 1]} : vector<16x32xf32> to vector<2x32xf32>
    %c2_76 = arith.constant 2 : index
    %c0_77 = arith.constant 0 : index
    %c0_78 = arith.constant 0 : index
    %151 = vector.load %arg2[%c2_76, %c0_77, %c0_78] : memref<4x32x32xf32, #tpu.memory_space<vmem>>, vector<1x32x32xf32>
    %152 = vector.shape_cast %151 : vector<1x32x32xf32> to vector<32x32xf32>
    %cst_79 = arith.constant dense<0.000000e+00> : vector<2x32xf32>
    %153 = tpu.matmul %129, %152, %cst_79 {dimension_numbers = #tpu.dot_dimension_numbers<[1], [0], [0], [1], [0, 0, 1, 1], [], []>} : vector<2x32xf32>, vector<32x32xf32>, vector<2x32xf32> -> vector<2x32xf32>
    %154 = arith.addf %150, %153 : vector<2x32xf32>
    %155 = math.tanh %154 : vector<2x32xf32>
    %156 = vector.extract_strided_slice %45 {offsets = [4, 0], sizes = [2, 32], strides = [1, 1]} : vector<16x32xf32> to vector<2x32xf32>
    %c3_80 = arith.constant 3 : index
    %c0_81 = arith.constant 0 : index
    %c0_82 = arith.constant 0 : index
    %157 = vector.load %arg2[%c3_80, %c0_81, %c0_82] : memref<4x32x32xf32, #tpu.memory_space<vmem>>, vector<1x32x32xf32>
    %158 = vector.shape_cast %157 : vector<1x32x32xf32> to vector<32x32xf32>
    %cst_83 = arith.constant dense<0.000000e+00> : vector<2x32xf32>
    %159 = tpu.matmul %129, %158, %cst_83 {dimension_numbers = #tpu.dot_dimension_numbers<[1], [0], [0], [1], [0, 0, 1, 1], [], []>} : vector<2x32xf32>, vector<32x32xf32>, vector<2x32xf32> -> vector<2x32xf32>
    %160 = arith.addf %156, %159 : vector<2x32xf32>
    %161 = arith.negf %160 : vector<2x32xf32>
    %162 = math.exp %161 : vector<2x32xf32>
    %cst_84 = arith.constant 1.000000e+00 : f32
    %163 = vector.broadcast %cst_84 : f32 to vector<2x32xf32>
    %164 = arith.addf %163, %162 : vector<2x32xf32>
    %165 = arith.divf %163, %164 : vector<2x32xf32>
    %166 = arith.mulf %149, %127 : vector<2x32xf32>
    %167 = arith.mulf %139, %155 : vector<2x32xf32>
    %168 = arith.addf %166, %167 : vector<2x32xf32>
    %169 = math.tanh %168 : vector<2x32xf32>
    %170 = arith.mulf %165, %169 : vector<2x32xf32>
    %171 = vector.extract_strided_slice %24 {offsets = [6, 0], sizes = [2, 32], strides = [1, 1]} : vector<16x32xf32> to vector<2x32xf32>
    %c0_85 = arith.constant 0 : index
    %c0_86 = arith.constant 0 : index
    %c0_87 = arith.constant 0 : index
    %172 = vector.load %arg2[%c0_85, %c0_86, %c0_87] : memref<4x32x32xf32, #tpu.memory_space<vmem>>, vector<1x32x32xf32>
    %173 = vector.shape_cast %172 : vector<1x32x32xf32> to vector<32x32xf32>
    %cst_88 = arith.constant dense<0.000000e+00> : vector<2x32xf32>
    %174 = tpu.matmul %170, %173, %cst_88 {dimension_numbers = #tpu.dot_dimension_numbers<[1], [0], [0], [1], [0, 0, 1, 1], [], []>} : vector<2x32xf32>, vector<32x32xf32>, vector<2x32xf32> -> vector<2x32xf32>
    %175 = arith.addf %171, %174 : vector<2x32xf32>
    %176 = arith.negf %175 : vector<2x32xf32>
    %177 = math.exp %176 : vector<2x32xf32>
    %cst_89 = arith.constant 1.000000e+00 : f32
    %178 = vector.broadcast %cst_89 : f32 to vector<2x32xf32>
    %179 = arith.addf %178, %177 : vector<2x32xf32>
    %180 = arith.divf %178, %179 : vector<2x32xf32>
    %181 = vector.extract_strided_slice %31 {offsets = [6, 0], sizes = [2, 32], strides = [1, 1]} : vector<16x32xf32> to vector<2x32xf32>
    %c1_90 = arith.constant 1 : index
    %c0_91 = arith.constant 0 : index
    %c0_92 = arith.constant 0 : index
    %182 = vector.load %arg2[%c1_90, %c0_91, %c0_92] : memref<4x32x32xf32, #tpu.memory_space<vmem>>, vector<1x32x32xf32>
    %183 = vector.shape_cast %182 : vector<1x32x32xf32> to vector<32x32xf32>
    %cst_93 = arith.constant dense<0.000000e+00> : vector<2x32xf32>
    %184 = tpu.matmul %170, %183, %cst_93 {dimension_numbers = #tpu.dot_dimension_numbers<[1], [0], [0], [1], [0, 0, 1, 1], [], []>} : vector<2x32xf32>, vector<32x32xf32>, vector<2x32xf32> -> vector<2x32xf32>
    %185 = arith.addf %181, %184 : vector<2x32xf32>
    %186 = arith.negf %185 : vector<2x32xf32>
    %187 = math.exp %186 : vector<2x32xf32>
    %cst_94 = arith.constant 1.000000e+00 : f32
    %188 = vector.broadcast %cst_94 : f32 to vector<2x32xf32>
    %189 = arith.addf %188, %187 : vector<2x32xf32>
    %190 = arith.divf %188, %189 : vector<2x32xf32>
    %191 = vector.extract_strided_slice %38 {offsets = [6, 0], sizes = [2, 32], strides = [1, 1]} : vector<16x32xf32> to vector<2x32xf32>
    %c2_95 = arith.constant 2 : index
    %c0_96 = arith.constant 0 : index
    %c0_97 = arith.constant 0 : index
    %192 = vector.load %arg2[%c2_95, %c0_96, %c0_97] : memref<4x32x32xf32, #tpu.memory_space<vmem>>, vector<1x32x32xf32>
    %193 = vector.shape_cast %192 : vector<1x32x32xf32> to vector<32x32xf32>
    %cst_98 = arith.constant dense<0.000000e+00> : vector<2x32xf32>
    %194 = tpu.matmul %170, %193, %cst_98 {dimension_numbers = #tpu.dot_dimension_numbers<[1], [0], [0], [1], [0, 0, 1, 1], [], []>} : vector<2x32xf32>, vector<32x32xf32>, vector<2x32xf32> -> vector<2x32xf32>
    %195 = arith.addf %191, %194 : vector<2x32xf32>
    %196 = math.tanh %195 : vector<2x32xf32>
    %197 = vector.extract_strided_slice %45 {offsets = [6, 0], sizes = [2, 32], strides = [1, 1]} : vector<16x32xf32> to vector<2x32xf32>
    %c3_99 = arith.constant 3 : index
    %c0_100 = arith.constant 0 : index
    %c0_101 = arith.constant 0 : index
    %198 = vector.load %arg2[%c3_99, %c0_100, %c0_101] : memref<4x32x32xf32, #tpu.memory_space<vmem>>, vector<1x32x32xf32>
    %199 = vector.shape_cast %198 : vector<1x32x32xf32> to vector<32x32xf32>
    %cst_102 = arith.constant dense<0.000000e+00> : vector<2x32xf32>
    %200 = tpu.matmul %170, %199, %cst_102 {dimension_numbers = #tpu.dot_dimension_numbers<[1], [0], [0], [1], [0, 0, 1, 1], [], []>} : vector<2x32xf32>, vector<32x32xf32>, vector<2x32xf32> -> vector<2x32xf32>
    %201 = arith.addf %197, %200 : vector<2x32xf32>
    %202 = arith.negf %201 : vector<2x32xf32>
    %203 = math.exp %202 : vector<2x32xf32>
    %cst_103 = arith.constant 1.000000e+00 : f32
    %204 = vector.broadcast %cst_103 : f32 to vector<2x32xf32>
    %205 = arith.addf %204, %203 : vector<2x32xf32>
    %206 = arith.divf %204, %205 : vector<2x32xf32>
    %207 = arith.mulf %190, %168 : vector<2x32xf32>
    %208 = arith.mulf %180, %196 : vector<2x32xf32>
    %209 = arith.addf %207, %208 : vector<2x32xf32>
    %210 = math.tanh %209 : vector<2x32xf32>
    %211 = arith.mulf %206, %210 : vector<2x32xf32>
    %212 = vector.extract_strided_slice %24 {offsets = [8, 0], sizes = [2, 32], strides = [1, 1]} : vector<16x32xf32> to vector<2x32xf32>
    %c0_104 = arith.constant 0 : index
    %c0_105 = arith.constant 0 : index
    %c0_106 = arith.constant 0 : index
    %213 = vector.load %arg2[%c0_104, %c0_105, %c0_106] : memref<4x32x32xf32, #tpu.memory_space<vmem>>, vector<1x32x32xf32>
    %214 = vector.shape_cast %213 : vector<1x32x32xf32> to vector<32x32xf32>
    %cst_107 = arith.constant dense<0.000000e+00> : vector<2x32xf32>
    %215 = tpu.matmul %211, %214, %cst_107 {dimension_numbers = #tpu.dot_dimension_numbers<[1], [0], [0], [1], [0, 0, 1, 1], [], []>} : vector<2x32xf32>, vector<32x32xf32>, vector<2x32xf32> -> vector<2x32xf32>
    %216 = arith.addf %212, %215 : vector<2x32xf32>
    %217 = arith.negf %216 : vector<2x32xf32>
    %218 = math.exp %217 : vector<2x32xf32>
    %cst_108 = arith.constant 1.000000e+00 : f32
    %219 = vector.broadcast %cst_108 : f32 to vector<2x32xf32>
    %220 = arith.addf %219, %218 : vector<2x32xf32>
    %221 = arith.divf %219, %220 : vector<2x32xf32>
    %222 = vector.extract_strided_slice %31 {offsets = [8, 0], sizes = [2, 32], strides = [1, 1]} : vector<16x32xf32> to vector<2x32xf32>
    %c1_109 = arith.constant 1 : index
    %c0_110 = arith.constant 0 : index
    %c0_111 = arith.constant 0 : index
    %223 = vector.load %arg2[%c1_109, %c0_110, %c0_111] : memref<4x32x32xf32, #tpu.memory_space<vmem>>, vector<1x32x32xf32>
    %224 = vector.shape_cast %223 : vector<1x32x32xf32> to vector<32x32xf32>
    %cst_112 = arith.constant dense<0.000000e+00> : vector<2x32xf32>
    %225 = tpu.matmul %211, %224, %cst_112 {dimension_numbers = #tpu.dot_dimension_numbers<[1], [0], [0], [1], [0, 0, 1, 1], [], []>} : vector<2x32xf32>, vector<32x32xf32>, vector<2x32xf32> -> vector<2x32xf32>
    %226 = arith.addf %222, %225 : vector<2x32xf32>
    %227 = arith.negf %226 : vector<2x32xf32>
    %228 = math.exp %227 : vector<2x32xf32>
    %cst_113 = arith.constant 1.000000e+00 : f32
    %229 = vector.broadcast %cst_113 : f32 to vector<2x32xf32>
    %230 = arith.addf %229, %228 : vector<2x32xf32>
    %231 = arith.divf %229, %230 : vector<2x32xf32>
    %232 = vector.extract_strided_slice %38 {offsets = [8, 0], sizes = [2, 32], strides = [1, 1]} : vector<16x32xf32> to vector<2x32xf32>
    %c2_114 = arith.constant 2 : index
    %c0_115 = arith.constant 0 : index
    %c0_116 = arith.constant 0 : index
    %233 = vector.load %arg2[%c2_114, %c0_115, %c0_116] : memref<4x32x32xf32, #tpu.memory_space<vmem>>, vector<1x32x32xf32>
    %234 = vector.shape_cast %233 : vector<1x32x32xf32> to vector<32x32xf32>
    %cst_117 = arith.constant dense<0.000000e+00> : vector<2x32xf32>
    %235 = tpu.matmul %211, %234, %cst_117 {dimension_numbers = #tpu.dot_dimension_numbers<[1], [0], [0], [1], [0, 0, 1, 1], [], []>} : vector<2x32xf32>, vector<32x32xf32>, vector<2x32xf32> -> vector<2x32xf32>
    %236 = arith.addf %232, %235 : vector<2x32xf32>
    %237 = math.tanh %236 : vector<2x32xf32>
    %238 = vector.extract_strided_slice %45 {offsets = [8, 0], sizes = [2, 32], strides = [1, 1]} : vector<16x32xf32> to vector<2x32xf32>
    %c3_118 = arith.constant 3 : index
    %c0_119 = arith.constant 0 : index
    %c0_120 = arith.constant 0 : index
    %239 = vector.load %arg2[%c3_118, %c0_119, %c0_120] : memref<4x32x32xf32, #tpu.memory_space<vmem>>, vector<1x32x32xf32>
    %240 = vector.shape_cast %239 : vector<1x32x32xf32> to vector<32x32xf32>
    %cst_121 = arith.constant dense<0.000000e+00> : vector<2x32xf32>
    %241 = tpu.matmul %211, %240, %cst_121 {dimension_numbers = #tpu.dot_dimension_numbers<[1], [0], [0], [1], [0, 0, 1, 1], [], []>} : vector<2x32xf32>, vector<32x32xf32>, vector<2x32xf32> -> vector<2x32xf32>
    %242 = arith.addf %238, %241 : vector<2x32xf32>
    %243 = arith.negf %242 : vector<2x32xf32>
    %244 = math.exp %243 : vector<2x32xf32>
    %cst_122 = arith.constant 1.000000e+00 : f32
    %245 = vector.broadcast %cst_122 : f32 to vector<2x32xf32>
    %246 = arith.addf %245, %244 : vector<2x32xf32>
    %247 = arith.divf %245, %246 : vector<2x32xf32>
    %248 = arith.mulf %231, %209 : vector<2x32xf32>
    %249 = arith.mulf %221, %237 : vector<2x32xf32>
    %250 = arith.addf %248, %249 : vector<2x32xf32>
    %251 = math.tanh %250 : vector<2x32xf32>
    %252 = arith.mulf %247, %251 : vector<2x32xf32>
    %253 = vector.extract_strided_slice %24 {offsets = [10, 0], sizes = [2, 32], strides = [1, 1]} : vector<16x32xf32> to vector<2x32xf32>
    %c0_123 = arith.constant 0 : index
    %c0_124 = arith.constant 0 : index
    %c0_125 = arith.constant 0 : index
    %254 = vector.load %arg2[%c0_123, %c0_124, %c0_125] : memref<4x32x32xf32, #tpu.memory_space<vmem>>, vector<1x32x32xf32>
    %255 = vector.shape_cast %254 : vector<1x32x32xf32> to vector<32x32xf32>
    %cst_126 = arith.constant dense<0.000000e+00> : vector<2x32xf32>
    %256 = tpu.matmul %252, %255, %cst_126 {dimension_numbers = #tpu.dot_dimension_numbers<[1], [0], [0], [1], [0, 0, 1, 1], [], []>} : vector<2x32xf32>, vector<32x32xf32>, vector<2x32xf32> -> vector<2x32xf32>
    %257 = arith.addf %253, %256 : vector<2x32xf32>
    %258 = arith.negf %257 : vector<2x32xf32>
    %259 = math.exp %258 : vector<2x32xf32>
    %cst_127 = arith.constant 1.000000e+00 : f32
    %260 = vector.broadcast %cst_127 : f32 to vector<2x32xf32>
    %261 = arith.addf %260, %259 : vector<2x32xf32>
    %262 = arith.divf %260, %261 : vector<2x32xf32>
    %263 = vector.extract_strided_slice %31 {offsets = [10, 0], sizes = [2, 32], strides = [1, 1]} : vector<16x32xf32> to vector<2x32xf32>
    %c1_128 = arith.constant 1 : index
    %c0_129 = arith.constant 0 : index
    %c0_130 = arith.constant 0 : index
    %264 = vector.load %arg2[%c1_128, %c0_129, %c0_130] : memref<4x32x32xf32, #tpu.memory_space<vmem>>, vector<1x32x32xf32>
    %265 = vector.shape_cast %264 : vector<1x32x32xf32> to vector<32x32xf32>
    %cst_131 = arith.constant dense<0.000000e+00> : vector<2x32xf32>
    %266 = tpu.matmul %252, %265, %cst_131 {dimension_numbers = #tpu.dot_dimension_numbers<[1], [0], [0], [1], [0, 0, 1, 1], [], []>} : vector<2x32xf32>, vector<32x32xf32>, vector<2x32xf32> -> vector<2x32xf32>
    %267 = arith.addf %263, %266 : vector<2x32xf32>
    %268 = arith.negf %267 : vector<2x32xf32>
    %269 = math.exp %268 : vector<2x32xf32>
    %cst_132 = arith.constant 1.000000e+00 : f32
    %270 = vector.broadcast %cst_132 : f32 to vector<2x32xf32>
    %271 = arith.addf %270, %269 : vector<2x32xf32>
    %272 = arith.divf %270, %271 : vector<2x32xf32>
    %273 = vector.extract_strided_slice %38 {offsets = [10, 0], sizes = [2, 32], strides = [1, 1]} : vector<16x32xf32> to vector<2x32xf32>
    %c2_133 = arith.constant 2 : index
    %c0_134 = arith.constant 0 : index
    %c0_135 = arith.constant 0 : index
    %274 = vector.load %arg2[%c2_133, %c0_134, %c0_135] : memref<4x32x32xf32, #tpu.memory_space<vmem>>, vector<1x32x32xf32>
    %275 = vector.shape_cast %274 : vector<1x32x32xf32> to vector<32x32xf32>
    %cst_136 = arith.constant dense<0.000000e+00> : vector<2x32xf32>
    %276 = tpu.matmul %252, %275, %cst_136 {dimension_numbers = #tpu.dot_dimension_numbers<[1], [0], [0], [1], [0, 0, 1, 1], [], []>} : vector<2x32xf32>, vector<32x32xf32>, vector<2x32xf32> -> vector<2x32xf32>
    %277 = arith.addf %273, %276 : vector<2x32xf32>
    %278 = math.tanh %277 : vector<2x32xf32>
    %279 = vector.extract_strided_slice %45 {offsets = [10, 0], sizes = [2, 32], strides = [1, 1]} : vector<16x32xf32> to vector<2x32xf32>
    %c3_137 = arith.constant 3 : index
    %c0_138 = arith.constant 0 : index
    %c0_139 = arith.constant 0 : index
    %280 = vector.load %arg2[%c3_137, %c0_138, %c0_139] : memref<4x32x32xf32, #tpu.memory_space<vmem>>, vector<1x32x32xf32>
    %281 = vector.shape_cast %280 : vector<1x32x32xf32> to vector<32x32xf32>
    %cst_140 = arith.constant dense<0.000000e+00> : vector<2x32xf32>
    %282 = tpu.matmul %252, %281, %cst_140 {dimension_numbers = #tpu.dot_dimension_numbers<[1], [0], [0], [1], [0, 0, 1, 1], [], []>} : vector<2x32xf32>, vector<32x32xf32>, vector<2x32xf32> -> vector<2x32xf32>
    %283 = arith.addf %279, %282 : vector<2x32xf32>
    %284 = arith.negf %283 : vector<2x32xf32>
    %285 = math.exp %284 : vector<2x32xf32>
    %cst_141 = arith.constant 1.000000e+00 : f32
    %286 = vector.broadcast %cst_141 : f32 to vector<2x32xf32>
    %287 = arith.addf %286, %285 : vector<2x32xf32>
    %288 = arith.divf %286, %287 : vector<2x32xf32>
    %289 = arith.mulf %272, %250 : vector<2x32xf32>
    %290 = arith.mulf %262, %278 : vector<2x32xf32>
    %291 = arith.addf %289, %290 : vector<2x32xf32>
    %292 = math.tanh %291 : vector<2x32xf32>
    %293 = arith.mulf %288, %292 : vector<2x32xf32>
    %294 = vector.extract_strided_slice %24 {offsets = [12, 0], sizes = [2, 32], strides = [1, 1]} : vector<16x32xf32> to vector<2x32xf32>
    %c0_142 = arith.constant 0 : index
    %c0_143 = arith.constant 0 : index
    %c0_144 = arith.constant 0 : index
    %295 = vector.load %arg2[%c0_142, %c0_143, %c0_144] : memref<4x32x32xf32, #tpu.memory_space<vmem>>, vector<1x32x32xf32>
    %296 = vector.shape_cast %295 : vector<1x32x32xf32> to vector<32x32xf32>
    %cst_145 = arith.constant dense<0.000000e+00> : vector<2x32xf32>
    %297 = tpu.matmul %293, %296, %cst_145 {dimension_numbers = #tpu.dot_dimension_numbers<[1], [0], [0], [1], [0, 0, 1, 1], [], []>} : vector<2x32xf32>, vector<32x32xf32>, vector<2x32xf32> -> vector<2x32xf32>
    %298 = arith.addf %294, %297 : vector<2x32xf32>
    %299 = arith.negf %298 : vector<2x32xf32>
    %300 = math.exp %299 : vector<2x32xf32>
    %cst_146 = arith.constant 1.000000e+00 : f32
    %301 = vector.broadcast %cst_146 : f32 to vector<2x32xf32>
    %302 = arith.addf %301, %300 : vector<2x32xf32>
    %303 = arith.divf %301, %302 : vector<2x32xf32>
    %304 = vector.extract_strided_slice %31 {offsets = [12, 0], sizes = [2, 32], strides = [1, 1]} : vector<16x32xf32> to vector<2x32xf32>
    %c1_147 = arith.constant 1 : index
    %c0_148 = arith.constant 0 : index
    %c0_149 = arith.constant 0 : index
    %305 = vector.load %arg2[%c1_147, %c0_148, %c0_149] : memref<4x32x32xf32, #tpu.memory_space<vmem>>, vector<1x32x32xf32>
    %306 = vector.shape_cast %305 : vector<1x32x32xf32> to vector<32x32xf32>
    %cst_150 = arith.constant dense<0.000000e+00> : vector<2x32xf32>
    %307 = tpu.matmul %293, %306, %cst_150 {dimension_numbers = #tpu.dot_dimension_numbers<[1], [0], [0], [1], [0, 0, 1, 1], [], []>} : vector<2x32xf32>, vector<32x32xf32>, vector<2x32xf32> -> vector<2x32xf32>
    %308 = arith.addf %304, %307 : vector<2x32xf32>
    %309 = arith.negf %308 : vector<2x32xf32>
    %310 = math.exp %309 : vector<2x32xf32>
    %cst_151 = arith.constant 1.000000e+00 : f32
    %311 = vector.broadcast %cst_151 : f32 to vector<2x32xf32>
    %312 = arith.addf %311, %310 : vector<2x32xf32>
    %313 = arith.divf %311, %312 : vector<2x32xf32>
    %314 = vector.extract_strided_slice %38 {offsets = [12, 0], sizes = [2, 32], strides = [1, 1]} : vector<16x32xf32> to vector<2x32xf32>
    %c2_152 = arith.constant 2 : index
    %c0_153 = arith.constant 0 : index
    %c0_154 = arith.constant 0 : index
    %315 = vector.load %arg2[%c2_152, %c0_153, %c0_154] : memref<4x32x32xf32, #tpu.memory_space<vmem>>, vector<1x32x32xf32>
    %316 = vector.shape_cast %315 : vector<1x32x32xf32> to vector<32x32xf32>
    %cst_155 = arith.constant dense<0.000000e+00> : vector<2x32xf32>
    %317 = tpu.matmul %293, %316, %cst_155 {dimension_numbers = #tpu.dot_dimension_numbers<[1], [0], [0], [1], [0, 0, 1, 1], [], []>} : vector<2x32xf32>, vector<32x32xf32>, vector<2x32xf32> -> vector<2x32xf32>
    %318 = arith.addf %314, %317 : vector<2x32xf32>
    %319 = math.tanh %318 : vector<2x32xf32>
    %320 = vector.extract_strided_slice %45 {offsets = [12, 0], sizes = [2, 32], strides = [1, 1]} : vector<16x32xf32> to vector<2x32xf32>
    %c3_156 = arith.constant 3 : index
    %c0_157 = arith.constant 0 : index
    %c0_158 = arith.constant 0 : index
    %321 = vector.load %arg2[%c3_156, %c0_157, %c0_158] : memref<4x32x32xf32, #tpu.memory_space<vmem>>, vector<1x32x32xf32>
    %322 = vector.shape_cast %321 : vector<1x32x32xf32> to vector<32x32xf32>
    %cst_159 = arith.constant dense<0.000000e+00> : vector<2x32xf32>
    %323 = tpu.matmul %293, %322, %cst_159 {dimension_numbers = #tpu.dot_dimension_numbers<[1], [0], [0], [1], [0, 0, 1, 1], [], []>} : vector<2x32xf32>, vector<32x32xf32>, vector<2x32xf32> -> vector<2x32xf32>
    %324 = arith.addf %320, %323 : vector<2x32xf32>
    %325 = arith.negf %324 : vector<2x32xf32>
    %326 = math.exp %325 : vector<2x32xf32>
    %cst_160 = arith.constant 1.000000e+00 : f32
    %327 = vector.broadcast %cst_160 : f32 to vector<2x32xf32>
    %328 = arith.addf %327, %326 : vector<2x32xf32>
    %329 = arith.divf %327, %328 : vector<2x32xf32>
    %330 = arith.mulf %313, %291 : vector<2x32xf32>
    %331 = arith.mulf %303, %319 : vector<2x32xf32>
    %332 = arith.addf %330, %331 : vector<2x32xf32>
    %333 = math.tanh %332 : vector<2x32xf32>
    %334 = arith.mulf %329, %333 : vector<2x32xf32>
    %335 = vector.extract_strided_slice %24 {offsets = [14, 0], sizes = [2, 32], strides = [1, 1]} : vector<16x32xf32> to vector<2x32xf32>
    %c0_161 = arith.constant 0 : index
    %c0_162 = arith.constant 0 : index
    %c0_163 = arith.constant 0 : index
    %336 = vector.load %arg2[%c0_161, %c0_162, %c0_163] : memref<4x32x32xf32, #tpu.memory_space<vmem>>, vector<1x32x32xf32>
    %337 = vector.shape_cast %336 : vector<1x32x32xf32> to vector<32x32xf32>
    %cst_164 = arith.constant dense<0.000000e+00> : vector<2x32xf32>
    %338 = tpu.matmul %334, %337, %cst_164 {dimension_numbers = #tpu.dot_dimension_numbers<[1], [0], [0], [1], [0, 0, 1, 1], [], []>} : vector<2x32xf32>, vector<32x32xf32>, vector<2x32xf32> -> vector<2x32xf32>
    %339 = arith.addf %335, %338 : vector<2x32xf32>
    %340 = arith.negf %339 : vector<2x32xf32>
    %341 = math.exp %340 : vector<2x32xf32>
    %cst_165 = arith.constant 1.000000e+00 : f32
    %342 = vector.broadcast %cst_165 : f32 to vector<2x32xf32>
    %343 = arith.addf %342, %341 : vector<2x32xf32>
    %344 = arith.divf %342, %343 : vector<2x32xf32>
    %345 = vector.extract_strided_slice %31 {offsets = [14, 0], sizes = [2, 32], strides = [1, 1]} : vector<16x32xf32> to vector<2x32xf32>
    %c1_166 = arith.constant 1 : index
    %c0_167 = arith.constant 0 : index
    %c0_168 = arith.constant 0 : index
    %346 = vector.load %arg2[%c1_166, %c0_167, %c0_168] : memref<4x32x32xf32, #tpu.memory_space<vmem>>, vector<1x32x32xf32>
    %347 = vector.shape_cast %346 : vector<1x32x32xf32> to vector<32x32xf32>
    %cst_169 = arith.constant dense<0.000000e+00> : vector<2x32xf32>
    %348 = tpu.matmul %334, %347, %cst_169 {dimension_numbers = #tpu.dot_dimension_numbers<[1], [0], [0], [1], [0, 0, 1, 1], [], []>} : vector<2x32xf32>, vector<32x32xf32>, vector<2x32xf32> -> vector<2x32xf32>
    %349 = arith.addf %345, %348 : vector<2x32xf32>
    %350 = arith.negf %349 : vector<2x32xf32>
    %351 = math.exp %350 : vector<2x32xf32>
    %cst_170 = arith.constant 1.000000e+00 : f32
    %352 = vector.broadcast %cst_170 : f32 to vector<2x32xf32>
    %353 = arith.addf %352, %351 : vector<2x32xf32>
    %354 = arith.divf %352, %353 : vector<2x32xf32>
    %355 = vector.extract_strided_slice %38 {offsets = [14, 0], sizes = [2, 32], strides = [1, 1]} : vector<16x32xf32> to vector<2x32xf32>
    %c2_171 = arith.constant 2 : index
    %c0_172 = arith.constant 0 : index
    %c0_173 = arith.constant 0 : index
    %356 = vector.load %arg2[%c2_171, %c0_172, %c0_173] : memref<4x32x32xf32, #tpu.memory_space<vmem>>, vector<1x32x32xf32>
    %357 = vector.shape_cast %356 : vector<1x32x32xf32> to vector<32x32xf32>
    %cst_174 = arith.constant dense<0.000000e+00> : vector<2x32xf32>
    %358 = tpu.matmul %334, %357, %cst_174 {dimension_numbers = #tpu.dot_dimension_numbers<[1], [0], [0], [1], [0, 0, 1, 1], [], []>} : vector<2x32xf32>, vector<32x32xf32>, vector<2x32xf32> -> vector<2x32xf32>
    %359 = arith.addf %355, %358 : vector<2x32xf32>
    %360 = math.tanh %359 : vector<2x32xf32>
    %361 = vector.extract_strided_slice %45 {offsets = [14, 0], sizes = [2, 32], strides = [1, 1]} : vector<16x32xf32> to vector<2x32xf32>
    %c3_175 = arith.constant 3 : index
    %c0_176 = arith.constant 0 : index
    %c0_177 = arith.constant 0 : index
    %362 = vector.load %arg2[%c3_175, %c0_176, %c0_177] : memref<4x32x32xf32, #tpu.memory_space<vmem>>, vector<1x32x32xf32>
    %363 = vector.shape_cast %362 : vector<1x32x32xf32> to vector<32x32xf32>
    %cst_178 = arith.constant dense<0.000000e+00> : vector<2x32xf32>
    %364 = tpu.matmul %334, %363, %cst_178 {dimension_numbers = #tpu.dot_dimension_numbers<[1], [0], [0], [1], [0, 0, 1, 1], [], []>} : vector<2x32xf32>, vector<32x32xf32>, vector<2x32xf32> -> vector<2x32xf32>
    %365 = arith.addf %361, %364 : vector<2x32xf32>
    %366 = arith.negf %365 : vector<2x32xf32>
    %367 = math.exp %366 : vector<2x32xf32>
    %cst_179 = arith.constant 1.000000e+00 : f32
    %368 = vector.broadcast %cst_179 : f32 to vector<2x32xf32>
    %369 = arith.addf %368, %367 : vector<2x32xf32>
    %370 = arith.divf %368, %369 : vector<2x32xf32>
    %371 = arith.mulf %354, %332 : vector<2x32xf32>
    %372 = arith.mulf %344, %360 : vector<2x32xf32>
    %373 = arith.addf %371, %372 : vector<2x32xf32>
    %374 = math.tanh %373 : vector<2x32xf32>
    %375 = arith.mulf %370, %374 : vector<2x32xf32>
    %376 = tpu.concatenate %88, %129, %170, %211, %252, %293, %334, %375 in 0 : vector<2x32xf32>, vector<2x32xf32>, vector<2x32xf32>, vector<2x32xf32>, vector<2x32xf32>, vector<2x32xf32>, vector<2x32xf32>, vector<2x32xf32> -> vector<16x32xf32>
    %c0_180 = arith.constant 0 : index
    %c0_181 = arith.constant 0 : index
    %c0_182 = arith.constant 0 : index
    %377 = vector.load %arg4[%c0_180, %c0_181, %c0_182] : memref<4x32x32xf32, #tpu.memory_space<vmem>>, vector<1x32x32xf32>
    %378 = vector.shape_cast %377 : vector<1x32x32xf32> to vector<32x32xf32>
    %cst_183 = arith.constant dense<0.000000e+00> : vector<16x32xf32>
    %379 = tpu.matmul %376, %378, %cst_183 {dimension_numbers = #tpu.dot_dimension_numbers<[1], [0], [0], [1], [0, 0, 1, 1], [], []>} : vector<16x32xf32>, vector<32x32xf32>, vector<16x32xf32> -> vector<16x32xf32>
    %c0_184 = arith.constant 0 : index
    %c0_185 = arith.constant 0 : index
    %c0_186 = arith.constant 0 : index
    %380 = vector.load %arg6[%c0_184, %c0_185, %c0_186] : memref<4x1x32xf32, #tpu.memory_space<vmem>>, vector<1x1x32xf32>
    %381 = vector.shape_cast %380 : vector<1x1x32xf32> to vector<1x32xf32>
    %382 = vector.broadcast %381 : vector<1x32xf32> to vector<16x32xf32>
    %383 = arith.addf %379, %382 : vector<16x32xf32>
    %c1_187 = arith.constant 1 : index
    %c0_188 = arith.constant 0 : index
    %c0_189 = arith.constant 0 : index
    %384 = vector.load %arg4[%c1_187, %c0_188, %c0_189] : memref<4x32x32xf32, #tpu.memory_space<vmem>>, vector<1x32x32xf32>
    %385 = vector.shape_cast %384 : vector<1x32x32xf32> to vector<32x32xf32>
    %cst_190 = arith.constant dense<0.000000e+00> : vector<16x32xf32>
    %386 = tpu.matmul %376, %385, %cst_190 {dimension_numbers = #tpu.dot_dimension_numbers<[1], [0], [0], [1], [0, 0, 1, 1], [], []>} : vector<16x32xf32>, vector<32x32xf32>, vector<16x32xf32> -> vector<16x32xf32>
    %c1_191 = arith.constant 1 : index
    %c0_192 = arith.constant 0 : index
    %c0_193 = arith.constant 0 : index
    %387 = vector.load %arg6[%c1_191, %c0_192, %c0_193] : memref<4x1x32xf32, #tpu.memory_space<vmem>>, vector<1x1x32xf32>
    %388 = vector.shape_cast %387 : vector<1x1x32xf32> to vector<1x32xf32>
    %389 = vector.broadcast %388 : vector<1x32xf32> to vector<16x32xf32>
    %390 = arith.addf %386, %389 : vector<16x32xf32>
    %c2_194 = arith.constant 2 : index
    %c0_195 = arith.constant 0 : index
    %c0_196 = arith.constant 0 : index
    %391 = vector.load %arg4[%c2_194, %c0_195, %c0_196] : memref<4x32x32xf32, #tpu.memory_space<vmem>>, vector<1x32x32xf32>
    %392 = vector.shape_cast %391 : vector<1x32x32xf32> to vector<32x32xf32>
    %cst_197 = arith.constant dense<0.000000e+00> : vector<16x32xf32>
    %393 = tpu.matmul %376, %392, %cst_197 {dimension_numbers = #tpu.dot_dimension_numbers<[1], [0], [0], [1], [0, 0, 1, 1], [], []>} : vector<16x32xf32>, vector<32x32xf32>, vector<16x32xf32> -> vector<16x32xf32>
    %c2_198 = arith.constant 2 : index
    %c0_199 = arith.constant 0 : index
    %c0_200 = arith.constant 0 : index
    %394 = vector.load %arg6[%c2_198, %c0_199, %c0_200] : memref<4x1x32xf32, #tpu.memory_space<vmem>>, vector<1x1x32xf32>
    %395 = vector.shape_cast %394 : vector<1x1x32xf32> to vector<1x32xf32>
    %396 = vector.broadcast %395 : vector<1x32xf32> to vector<16x32xf32>
    %397 = arith.addf %393, %396 : vector<16x32xf32>
    %c3_201 = arith.constant 3 : index
    %c0_202 = arith.constant 0 : index
    %c0_203 = arith.constant 0 : index
    %398 = vector.load %arg4[%c3_201, %c0_202, %c0_203] : memref<4x32x32xf32, #tpu.memory_space<vmem>>, vector<1x32x32xf32>
    %399 = vector.shape_cast %398 : vector<1x32x32xf32> to vector<32x32xf32>
    %cst_204 = arith.constant dense<0.000000e+00> : vector<16x32xf32>
    %400 = tpu.matmul %376, %399, %cst_204 {dimension_numbers = #tpu.dot_dimension_numbers<[1], [0], [0], [1], [0, 0, 1, 1], [], []>} : vector<16x32xf32>, vector<32x32xf32>, vector<16x32xf32> -> vector<16x32xf32>
    %c3_205 = arith.constant 3 : index
    %c0_206 = arith.constant 0 : index
    %c0_207 = arith.constant 0 : index
    %401 = vector.load %arg6[%c3_205, %c0_206, %c0_207] : memref<4x1x32xf32, #tpu.memory_space<vmem>>, vector<1x1x32xf32>
    %402 = vector.shape_cast %401 : vector<1x1x32xf32> to vector<1x32xf32>
    %403 = vector.broadcast %402 : vector<1x32xf32> to vector<16x32xf32>
    %404 = arith.addf %400, %403 : vector<16x32xf32>
    %cst_208 = arith.constant 0.000000e+00 : f32
    %405 = vector.broadcast %cst_208 : f32 to vector<2x32xf32>
    %cst_209 = arith.constant 0.000000e+00 : f32
    %406 = vector.broadcast %cst_209 : f32 to vector<2x32xf32>
    %407 = vector.extract_strided_slice %383 {offsets = [0, 0], sizes = [2, 32], strides = [1, 1]} : vector<16x32xf32> to vector<2x32xf32>
    %c0_210 = arith.constant 0 : index
    %c0_211 = arith.constant 0 : index
    %c0_212 = arith.constant 0 : index
    %408 = vector.load %arg5[%c0_210, %c0_211, %c0_212] : memref<4x32x32xf32, #tpu.memory_space<vmem>>, vector<1x32x32xf32>
    %409 = vector.shape_cast %408 : vector<1x32x32xf32> to vector<32x32xf32>
    %cst_213 = arith.constant dense<0.000000e+00> : vector<2x32xf32>
    %410 = tpu.matmul %405, %409, %cst_213 {dimension_numbers = #tpu.dot_dimension_numbers<[1], [0], [0], [1], [0, 0, 1, 1], [], []>} : vector<2x32xf32>, vector<32x32xf32>, vector<2x32xf32> -> vector<2x32xf32>
    %411 = arith.addf %407, %410 : vector<2x32xf32>
    %412 = arith.negf %411 : vector<2x32xf32>
    %413 = math.exp %412 : vector<2x32xf32>
    %cst_214 = arith.constant 1.000000e+00 : f32
    %414 = vector.broadcast %cst_214 : f32 to vector<2x32xf32>
    %415 = arith.addf %414, %413 : vector<2x32xf32>
    %416 = arith.divf %414, %415 : vector<2x32xf32>
    %417 = vector.extract_strided_slice %390 {offsets = [0, 0], sizes = [2, 32], strides = [1, 1]} : vector<16x32xf32> to vector<2x32xf32>
    %c1_215 = arith.constant 1 : index
    %c0_216 = arith.constant 0 : index
    %c0_217 = arith.constant 0 : index
    %418 = vector.load %arg5[%c1_215, %c0_216, %c0_217] : memref<4x32x32xf32, #tpu.memory_space<vmem>>, vector<1x32x32xf32>
    %419 = vector.shape_cast %418 : vector<1x32x32xf32> to vector<32x32xf32>
    %cst_218 = arith.constant dense<0.000000e+00> : vector<2x32xf32>
    %420 = tpu.matmul %405, %419, %cst_218 {dimension_numbers = #tpu.dot_dimension_numbers<[1], [0], [0], [1], [0, 0, 1, 1], [], []>} : vector<2x32xf32>, vector<32x32xf32>, vector<2x32xf32> -> vector<2x32xf32>
    %421 = arith.addf %417, %420 : vector<2x32xf32>
    %422 = arith.negf %421 : vector<2x32xf32>
    %423 = math.exp %422 : vector<2x32xf32>
    %cst_219 = arith.constant 1.000000e+00 : f32
    %424 = vector.broadcast %cst_219 : f32 to vector<2x32xf32>
    %425 = arith.addf %424, %423 : vector<2x32xf32>
    %426 = arith.divf %424, %425 : vector<2x32xf32>
    %427 = vector.extract_strided_slice %397 {offsets = [0, 0], sizes = [2, 32], strides = [1, 1]} : vector<16x32xf32> to vector<2x32xf32>
    %c2_220 = arith.constant 2 : index
    %c0_221 = arith.constant 0 : index
    %c0_222 = arith.constant 0 : index
    %428 = vector.load %arg5[%c2_220, %c0_221, %c0_222] : memref<4x32x32xf32, #tpu.memory_space<vmem>>, vector<1x32x32xf32>
    %429 = vector.shape_cast %428 : vector<1x32x32xf32> to vector<32x32xf32>
    %cst_223 = arith.constant dense<0.000000e+00> : vector<2x32xf32>
    %430 = tpu.matmul %405, %429, %cst_223 {dimension_numbers = #tpu.dot_dimension_numbers<[1], [0], [0], [1], [0, 0, 1, 1], [], []>} : vector<2x32xf32>, vector<32x32xf32>, vector<2x32xf32> -> vector<2x32xf32>
    %431 = arith.addf %427, %430 : vector<2x32xf32>
    %432 = math.tanh %431 : vector<2x32xf32>
    %433 = vector.extract_strided_slice %404 {offsets = [0, 0], sizes = [2, 32], strides = [1, 1]} : vector<16x32xf32> to vector<2x32xf32>
    %c3_224 = arith.constant 3 : index
    %c0_225 = arith.constant 0 : index
    %c0_226 = arith.constant 0 : index
    %434 = vector.load %arg5[%c3_224, %c0_225, %c0_226] : memref<4x32x32xf32, #tpu.memory_space<vmem>>, vector<1x32x32xf32>
    %435 = vector.shape_cast %434 : vector<1x32x32xf32> to vector<32x32xf32>
    %cst_227 = arith.constant dense<0.000000e+00> : vector<2x32xf32>
    %436 = tpu.matmul %405, %435, %cst_227 {dimension_numbers = #tpu.dot_dimension_numbers<[1], [0], [0], [1], [0, 0, 1, 1], [], []>} : vector<2x32xf32>, vector<32x32xf32>, vector<2x32xf32> -> vector<2x32xf32>
    %437 = arith.addf %433, %436 : vector<2x32xf32>
    %438 = arith.negf %437 : vector<2x32xf32>
    %439 = math.exp %438 : vector<2x32xf32>
    %cst_228 = arith.constant 1.000000e+00 : f32
    %440 = vector.broadcast %cst_228 : f32 to vector<2x32xf32>
    %441 = arith.addf %440, %439 : vector<2x32xf32>
    %442 = arith.divf %440, %441 : vector<2x32xf32>
    %443 = arith.mulf %426, %406 : vector<2x32xf32>
    %444 = arith.mulf %416, %432 : vector<2x32xf32>
    %445 = arith.addf %443, %444 : vector<2x32xf32>
    %446 = math.tanh %445 : vector<2x32xf32>
    %447 = arith.mulf %442, %446 : vector<2x32xf32>
    %448 = vector.extract_strided_slice %383 {offsets = [2, 0], sizes = [2, 32], strides = [1, 1]} : vector<16x32xf32> to vector<2x32xf32>
    %c0_229 = arith.constant 0 : index
    %c0_230 = arith.constant 0 : index
    %c0_231 = arith.constant 0 : index
    %449 = vector.load %arg5[%c0_229, %c0_230, %c0_231] : memref<4x32x32xf32, #tpu.memory_space<vmem>>, vector<1x32x32xf32>
    %450 = vector.shape_cast %449 : vector<1x32x32xf32> to vector<32x32xf32>
    %cst_232 = arith.constant dense<0.000000e+00> : vector<2x32xf32>
    %451 = tpu.matmul %447, %450, %cst_232 {dimension_numbers = #tpu.dot_dimension_numbers<[1], [0], [0], [1], [0, 0, 1, 1], [], []>} : vector<2x32xf32>, vector<32x32xf32>, vector<2x32xf32> -> vector<2x32xf32>
    %452 = arith.addf %448, %451 : vector<2x32xf32>
    %453 = arith.negf %452 : vector<2x32xf32>
    %454 = math.exp %453 : vector<2x32xf32>
    %cst_233 = arith.constant 1.000000e+00 : f32
    %455 = vector.broadcast %cst_233 : f32 to vector<2x32xf32>
    %456 = arith.addf %455, %454 : vector<2x32xf32>
    %457 = arith.divf %455, %456 : vector<2x32xf32>
    %458 = vector.extract_strided_slice %390 {offsets = [2, 0], sizes = [2, 32], strides = [1, 1]} : vector<16x32xf32> to vector<2x32xf32>
    %c1_234 = arith.constant 1 : index
    %c0_235 = arith.constant 0 : index
    %c0_236 = arith.constant 0 : index
    %459 = vector.load %arg5[%c1_234, %c0_235, %c0_236] : memref<4x32x32xf32, #tpu.memory_space<vmem>>, vector<1x32x32xf32>
    %460 = vector.shape_cast %459 : vector<1x32x32xf32> to vector<32x32xf32>
    %cst_237 = arith.constant dense<0.000000e+00> : vector<2x32xf32>
    %461 = tpu.matmul %447, %460, %cst_237 {dimension_numbers = #tpu.dot_dimension_numbers<[1], [0], [0], [1], [0, 0, 1, 1], [], []>} : vector<2x32xf32>, vector<32x32xf32>, vector<2x32xf32> -> vector<2x32xf32>
    %462 = arith.addf %458, %461 : vector<2x32xf32>
    %463 = arith.negf %462 : vector<2x32xf32>
    %464 = math.exp %463 : vector<2x32xf32>
    %cst_238 = arith.constant 1.000000e+00 : f32
    %465 = vector.broadcast %cst_238 : f32 to vector<2x32xf32>
    %466 = arith.addf %465, %464 : vector<2x32xf32>
    %467 = arith.divf %465, %466 : vector<2x32xf32>
    %468 = vector.extract_strided_slice %397 {offsets = [2, 0], sizes = [2, 32], strides = [1, 1]} : vector<16x32xf32> to vector<2x32xf32>
    %c2_239 = arith.constant 2 : index
    %c0_240 = arith.constant 0 : index
    %c0_241 = arith.constant 0 : index
    %469 = vector.load %arg5[%c2_239, %c0_240, %c0_241] : memref<4x32x32xf32, #tpu.memory_space<vmem>>, vector<1x32x32xf32>
    %470 = vector.shape_cast %469 : vector<1x32x32xf32> to vector<32x32xf32>
    %cst_242 = arith.constant dense<0.000000e+00> : vector<2x32xf32>
    %471 = tpu.matmul %447, %470, %cst_242 {dimension_numbers = #tpu.dot_dimension_numbers<[1], [0], [0], [1], [0, 0, 1, 1], [], []>} : vector<2x32xf32>, vector<32x32xf32>, vector<2x32xf32> -> vector<2x32xf32>
    %472 = arith.addf %468, %471 : vector<2x32xf32>
    %473 = math.tanh %472 : vector<2x32xf32>
    %474 = vector.extract_strided_slice %404 {offsets = [2, 0], sizes = [2, 32], strides = [1, 1]} : vector<16x32xf32> to vector<2x32xf32>
    %c3_243 = arith.constant 3 : index
    %c0_244 = arith.constant 0 : index
    %c0_245 = arith.constant 0 : index
    %475 = vector.load %arg5[%c3_243, %c0_244, %c0_245] : memref<4x32x32xf32, #tpu.memory_space<vmem>>, vector<1x32x32xf32>
    %476 = vector.shape_cast %475 : vector<1x32x32xf32> to vector<32x32xf32>
    %cst_246 = arith.constant dense<0.000000e+00> : vector<2x32xf32>
    %477 = tpu.matmul %447, %476, %cst_246 {dimension_numbers = #tpu.dot_dimension_numbers<[1], [0], [0], [1], [0, 0, 1, 1], [], []>} : vector<2x32xf32>, vector<32x32xf32>, vector<2x32xf32> -> vector<2x32xf32>
    %478 = arith.addf %474, %477 : vector<2x32xf32>
    %479 = arith.negf %478 : vector<2x32xf32>
    %480 = math.exp %479 : vector<2x32xf32>
    %cst_247 = arith.constant 1.000000e+00 : f32
    %481 = vector.broadcast %cst_247 : f32 to vector<2x32xf32>
    %482 = arith.addf %481, %480 : vector<2x32xf32>
    %483 = arith.divf %481, %482 : vector<2x32xf32>
    %484 = arith.mulf %467, %445 : vector<2x32xf32>
    %485 = arith.mulf %457, %473 : vector<2x32xf32>
    %486 = arith.addf %484, %485 : vector<2x32xf32>
    %487 = math.tanh %486 : vector<2x32xf32>
    %488 = arith.mulf %483, %487 : vector<2x32xf32>
    %489 = vector.extract_strided_slice %383 {offsets = [4, 0], sizes = [2, 32], strides = [1, 1]} : vector<16x32xf32> to vector<2x32xf32>
    %c0_248 = arith.constant 0 : index
    %c0_249 = arith.constant 0 : index
    %c0_250 = arith.constant 0 : index
    %490 = vector.load %arg5[%c0_248, %c0_249, %c0_250] : memref<4x32x32xf32, #tpu.memory_space<vmem>>, vector<1x32x32xf32>
    %491 = vector.shape_cast %490 : vector<1x32x32xf32> to vector<32x32xf32>
    %cst_251 = arith.constant dense<0.000000e+00> : vector<2x32xf32>
    %492 = tpu.matmul %488, %491, %cst_251 {dimension_numbers = #tpu.dot_dimension_numbers<[1], [0], [0], [1], [0, 0, 1, 1], [], []>} : vector<2x32xf32>, vector<32x32xf32>, vector<2x32xf32> -> vector<2x32xf32>
    %493 = arith.addf %489, %492 : vector<2x32xf32>
    %494 = arith.negf %493 : vector<2x32xf32>
    %495 = math.exp %494 : vector<2x32xf32>
    %cst_252 = arith.constant 1.000000e+00 : f32
    %496 = vector.broadcast %cst_252 : f32 to vector<2x32xf32>
    %497 = arith.addf %496, %495 : vector<2x32xf32>
    %498 = arith.divf %496, %497 : vector<2x32xf32>
    %499 = vector.extract_strided_slice %390 {offsets = [4, 0], sizes = [2, 32], strides = [1, 1]} : vector<16x32xf32> to vector<2x32xf32>
    %c1_253 = arith.constant 1 : index
    %c0_254 = arith.constant 0 : index
    %c0_255 = arith.constant 0 : index
    %500 = vector.load %arg5[%c1_253, %c0_254, %c0_255] : memref<4x32x32xf32, #tpu.memory_space<vmem>>, vector<1x32x32xf32>
    %501 = vector.shape_cast %500 : vector<1x32x32xf32> to vector<32x32xf32>
    %cst_256 = arith.constant dense<0.000000e+00> : vector<2x32xf32>
    %502 = tpu.matmul %488, %501, %cst_256 {dimension_numbers = #tpu.dot_dimension_numbers<[1], [0], [0], [1], [0, 0, 1, 1], [], []>} : vector<2x32xf32>, vector<32x32xf32>, vector<2x32xf32> -> vector<2x32xf32>
    %503 = arith.addf %499, %502 : vector<2x32xf32>
    %504 = arith.negf %503 : vector<2x32xf32>
    %505 = math.exp %504 : vector<2x32xf32>
    %cst_257 = arith.constant 1.000000e+00 : f32
    %506 = vector.broadcast %cst_257 : f32 to vector<2x32xf32>
    %507 = arith.addf %506, %505 : vector<2x32xf32>
    %508 = arith.divf %506, %507 : vector<2x32xf32>
    %509 = vector.extract_strided_slice %397 {offsets = [4, 0], sizes = [2, 32], strides = [1, 1]} : vector<16x32xf32> to vector<2x32xf32>
    %c2_258 = arith.constant 2 : index
    %c0_259 = arith.constant 0 : index
    %c0_260 = arith.constant 0 : index
    %510 = vector.load %arg5[%c2_258, %c0_259, %c0_260] : memref<4x32x32xf32, #tpu.memory_space<vmem>>, vector<1x32x32xf32>
    %511 = vector.shape_cast %510 : vector<1x32x32xf32> to vector<32x32xf32>
    %cst_261 = arith.constant dense<0.000000e+00> : vector<2x32xf32>
    %512 = tpu.matmul %488, %511, %cst_261 {dimension_numbers = #tpu.dot_dimension_numbers<[1], [0], [0], [1], [0, 0, 1, 1], [], []>} : vector<2x32xf32>, vector<32x32xf32>, vector<2x32xf32> -> vector<2x32xf32>
    %513 = arith.addf %509, %512 : vector<2x32xf32>
    %514 = math.tanh %513 : vector<2x32xf32>
    %515 = vector.extract_strided_slice %404 {offsets = [4, 0], sizes = [2, 32], strides = [1, 1]} : vector<16x32xf32> to vector<2x32xf32>
    %c3_262 = arith.constant 3 : index
    %c0_263 = arith.constant 0 : index
    %c0_264 = arith.constant 0 : index
    %516 = vector.load %arg5[%c3_262, %c0_263, %c0_264] : memref<4x32x32xf32, #tpu.memory_space<vmem>>, vector<1x32x32xf32>
    %517 = vector.shape_cast %516 : vector<1x32x32xf32> to vector<32x32xf32>
    %cst_265 = arith.constant dense<0.000000e+00> : vector<2x32xf32>
    %518 = tpu.matmul %488, %517, %cst_265 {dimension_numbers = #tpu.dot_dimension_numbers<[1], [0], [0], [1], [0, 0, 1, 1], [], []>} : vector<2x32xf32>, vector<32x32xf32>, vector<2x32xf32> -> vector<2x32xf32>
    %519 = arith.addf %515, %518 : vector<2x32xf32>
    %520 = arith.negf %519 : vector<2x32xf32>
    %521 = math.exp %520 : vector<2x32xf32>
    %cst_266 = arith.constant 1.000000e+00 : f32
    %522 = vector.broadcast %cst_266 : f32 to vector<2x32xf32>
    %523 = arith.addf %522, %521 : vector<2x32xf32>
    %524 = arith.divf %522, %523 : vector<2x32xf32>
    %525 = arith.mulf %508, %486 : vector<2x32xf32>
    %526 = arith.mulf %498, %514 : vector<2x32xf32>
    %527 = arith.addf %525, %526 : vector<2x32xf32>
    %528 = math.tanh %527 : vector<2x32xf32>
    %529 = arith.mulf %524, %528 : vector<2x32xf32>
    %530 = vector.extract_strided_slice %383 {offsets = [6, 0], sizes = [2, 32], strides = [1, 1]} : vector<16x32xf32> to vector<2x32xf32>
    %c0_267 = arith.constant 0 : index
    %c0_268 = arith.constant 0 : index
    %c0_269 = arith.constant 0 : index
    %531 = vector.load %arg5[%c0_267, %c0_268, %c0_269] : memref<4x32x32xf32, #tpu.memory_space<vmem>>, vector<1x32x32xf32>
    %532 = vector.shape_cast %531 : vector<1x32x32xf32> to vector<32x32xf32>
    %cst_270 = arith.constant dense<0.000000e+00> : vector<2x32xf32>
    %533 = tpu.matmul %529, %532, %cst_270 {dimension_numbers = #tpu.dot_dimension_numbers<[1], [0], [0], [1], [0, 0, 1, 1], [], []>} : vector<2x32xf32>, vector<32x32xf32>, vector<2x32xf32> -> vector<2x32xf32>
    %534 = arith.addf %530, %533 : vector<2x32xf32>
    %535 = arith.negf %534 : vector<2x32xf32>
    %536 = math.exp %535 : vector<2x32xf32>
    %cst_271 = arith.constant 1.000000e+00 : f32
    %537 = vector.broadcast %cst_271 : f32 to vector<2x32xf32>
    %538 = arith.addf %537, %536 : vector<2x32xf32>
    %539 = arith.divf %537, %538 : vector<2x32xf32>
    %540 = vector.extract_strided_slice %390 {offsets = [6, 0], sizes = [2, 32], strides = [1, 1]} : vector<16x32xf32> to vector<2x32xf32>
    %c1_272 = arith.constant 1 : index
    %c0_273 = arith.constant 0 : index
    %c0_274 = arith.constant 0 : index
    %541 = vector.load %arg5[%c1_272, %c0_273, %c0_274] : memref<4x32x32xf32, #tpu.memory_space<vmem>>, vector<1x32x32xf32>
    %542 = vector.shape_cast %541 : vector<1x32x32xf32> to vector<32x32xf32>
    %cst_275 = arith.constant dense<0.000000e+00> : vector<2x32xf32>
    %543 = tpu.matmul %529, %542, %cst_275 {dimension_numbers = #tpu.dot_dimension_numbers<[1], [0], [0], [1], [0, 0, 1, 1], [], []>} : vector<2x32xf32>, vector<32x32xf32>, vector<2x32xf32> -> vector<2x32xf32>
    %544 = arith.addf %540, %543 : vector<2x32xf32>
    %545 = arith.negf %544 : vector<2x32xf32>
    %546 = math.exp %545 : vector<2x32xf32>
    %cst_276 = arith.constant 1.000000e+00 : f32
    %547 = vector.broadcast %cst_276 : f32 to vector<2x32xf32>
    %548 = arith.addf %547, %546 : vector<2x32xf32>
    %549 = arith.divf %547, %548 : vector<2x32xf32>
    %550 = vector.extract_strided_slice %397 {offsets = [6, 0], sizes = [2, 32], strides = [1, 1]} : vector<16x32xf32> to vector<2x32xf32>
    %c2_277 = arith.constant 2 : index
    %c0_278 = arith.constant 0 : index
    %c0_279 = arith.constant 0 : index
    %551 = vector.load %arg5[%c2_277, %c0_278, %c0_279] : memref<4x32x32xf32, #tpu.memory_space<vmem>>, vector<1x32x32xf32>
    %552 = vector.shape_cast %551 : vector<1x32x32xf32> to vector<32x32xf32>
    %cst_280 = arith.constant dense<0.000000e+00> : vector<2x32xf32>
    %553 = tpu.matmul %529, %552, %cst_280 {dimension_numbers = #tpu.dot_dimension_numbers<[1], [0], [0], [1], [0, 0, 1, 1], [], []>} : vector<2x32xf32>, vector<32x32xf32>, vector<2x32xf32> -> vector<2x32xf32>
    %554 = arith.addf %550, %553 : vector<2x32xf32>
    %555 = math.tanh %554 : vector<2x32xf32>
    %556 = vector.extract_strided_slice %404 {offsets = [6, 0], sizes = [2, 32], strides = [1, 1]} : vector<16x32xf32> to vector<2x32xf32>
    %c3_281 = arith.constant 3 : index
    %c0_282 = arith.constant 0 : index
    %c0_283 = arith.constant 0 : index
    %557 = vector.load %arg5[%c3_281, %c0_282, %c0_283] : memref<4x32x32xf32, #tpu.memory_space<vmem>>, vector<1x32x32xf32>
    %558 = vector.shape_cast %557 : vector<1x32x32xf32> to vector<32x32xf32>
    %cst_284 = arith.constant dense<0.000000e+00> : vector<2x32xf32>
    %559 = tpu.matmul %529, %558, %cst_284 {dimension_numbers = #tpu.dot_dimension_numbers<[1], [0], [0], [1], [0, 0, 1, 1], [], []>} : vector<2x32xf32>, vector<32x32xf32>, vector<2x32xf32> -> vector<2x32xf32>
    %560 = arith.addf %556, %559 : vector<2x32xf32>
    %561 = arith.negf %560 : vector<2x32xf32>
    %562 = math.exp %561 : vector<2x32xf32>
    %cst_285 = arith.constant 1.000000e+00 : f32
    %563 = vector.broadcast %cst_285 : f32 to vector<2x32xf32>
    %564 = arith.addf %563, %562 : vector<2x32xf32>
    %565 = arith.divf %563, %564 : vector<2x32xf32>
    %566 = arith.mulf %549, %527 : vector<2x32xf32>
    %567 = arith.mulf %539, %555 : vector<2x32xf32>
    %568 = arith.addf %566, %567 : vector<2x32xf32>
    %569 = math.tanh %568 : vector<2x32xf32>
    %570 = arith.mulf %565, %569 : vector<2x32xf32>
    %571 = vector.extract_strided_slice %383 {offsets = [8, 0], sizes = [2, 32], strides = [1, 1]} : vector<16x32xf32> to vector<2x32xf32>
    %c0_286 = arith.constant 0 : index
    %c0_287 = arith.constant 0 : index
    %c0_288 = arith.constant 0 : index
    %572 = vector.load %arg5[%c0_286, %c0_287, %c0_288] : memref<4x32x32xf32, #tpu.memory_space<vmem>>, vector<1x32x32xf32>
    %573 = vector.shape_cast %572 : vector<1x32x32xf32> to vector<32x32xf32>
    %cst_289 = arith.constant dense<0.000000e+00> : vector<2x32xf32>
    %574 = tpu.matmul %570, %573, %cst_289 {dimension_numbers = #tpu.dot_dimension_numbers<[1], [0], [0], [1], [0, 0, 1, 1], [], []>} : vector<2x32xf32>, vector<32x32xf32>, vector<2x32xf32> -> vector<2x32xf32>
    %575 = arith.addf %571, %574 : vector<2x32xf32>
    %576 = arith.negf %575 : vector<2x32xf32>
    %577 = math.exp %576 : vector<2x32xf32>
    %cst_290 = arith.constant 1.000000e+00 : f32
    %578 = vector.broadcast %cst_290 : f32 to vector<2x32xf32>
    %579 = arith.addf %578, %577 : vector<2x32xf32>
    %580 = arith.divf %578, %579 : vector<2x32xf32>
    %581 = vector.extract_strided_slice %390 {offsets = [8, 0], sizes = [2, 32], strides = [1, 1]} : vector<16x32xf32> to vector<2x32xf32>
    %c1_291 = arith.constant 1 : index
    %c0_292 = arith.constant 0 : index
    %c0_293 = arith.constant 0 : index
    %582 = vector.load %arg5[%c1_291, %c0_292, %c0_293] : memref<4x32x32xf32, #tpu.memory_space<vmem>>, vector<1x32x32xf32>
    %583 = vector.shape_cast %582 : vector<1x32x32xf32> to vector<32x32xf32>
    %cst_294 = arith.constant dense<0.000000e+00> : vector<2x32xf32>
    %584 = tpu.matmul %570, %583, %cst_294 {dimension_numbers = #tpu.dot_dimension_numbers<[1], [0], [0], [1], [0, 0, 1, 1], [], []>} : vector<2x32xf32>, vector<32x32xf32>, vector<2x32xf32> -> vector<2x32xf32>
    %585 = arith.addf %581, %584 : vector<2x32xf32>
    %586 = arith.negf %585 : vector<2x32xf32>
    %587 = math.exp %586 : vector<2x32xf32>
    %cst_295 = arith.constant 1.000000e+00 : f32
    %588 = vector.broadcast %cst_295 : f32 to vector<2x32xf32>
    %589 = arith.addf %588, %587 : vector<2x32xf32>
    %590 = arith.divf %588, %589 : vector<2x32xf32>
    %591 = vector.extract_strided_slice %397 {offsets = [8, 0], sizes = [2, 32], strides = [1, 1]} : vector<16x32xf32> to vector<2x32xf32>
    %c2_296 = arith.constant 2 : index
    %c0_297 = arith.constant 0 : index
    %c0_298 = arith.constant 0 : index
    %592 = vector.load %arg5[%c2_296, %c0_297, %c0_298] : memref<4x32x32xf32, #tpu.memory_space<vmem>>, vector<1x32x32xf32>
    %593 = vector.shape_cast %592 : vector<1x32x32xf32> to vector<32x32xf32>
    %cst_299 = arith.constant dense<0.000000e+00> : vector<2x32xf32>
    %594 = tpu.matmul %570, %593, %cst_299 {dimension_numbers = #tpu.dot_dimension_numbers<[1], [0], [0], [1], [0, 0, 1, 1], [], []>} : vector<2x32xf32>, vector<32x32xf32>, vector<2x32xf32> -> vector<2x32xf32>
    %595 = arith.addf %591, %594 : vector<2x32xf32>
    %596 = math.tanh %595 : vector<2x32xf32>
    %597 = vector.extract_strided_slice %404 {offsets = [8, 0], sizes = [2, 32], strides = [1, 1]} : vector<16x32xf32> to vector<2x32xf32>
    %c3_300 = arith.constant 3 : index
    %c0_301 = arith.constant 0 : index
    %c0_302 = arith.constant 0 : index
    %598 = vector.load %arg5[%c3_300, %c0_301, %c0_302] : memref<4x32x32xf32, #tpu.memory_space<vmem>>, vector<1x32x32xf32>
    %599 = vector.shape_cast %598 : vector<1x32x32xf32> to vector<32x32xf32>
    %cst_303 = arith.constant dense<0.000000e+00> : vector<2x32xf32>
    %600 = tpu.matmul %570, %599, %cst_303 {dimension_numbers = #tpu.dot_dimension_numbers<[1], [0], [0], [1], [0, 0, 1, 1], [], []>} : vector<2x32xf32>, vector<32x32xf32>, vector<2x32xf32> -> vector<2x32xf32>
    %601 = arith.addf %597, %600 : vector<2x32xf32>
    %602 = arith.negf %601 : vector<2x32xf32>
    %603 = math.exp %602 : vector<2x32xf32>
    %cst_304 = arith.constant 1.000000e+00 : f32
    %604 = vector.broadcast %cst_304 : f32 to vector<2x32xf32>
    %605 = arith.addf %604, %603 : vector<2x32xf32>
    %606 = arith.divf %604, %605 : vector<2x32xf32>
    %607 = arith.mulf %590, %568 : vector<2x32xf32>
    %608 = arith.mulf %580, %596 : vector<2x32xf32>
    %609 = arith.addf %607, %608 : vector<2x32xf32>
    %610 = math.tanh %609 : vector<2x32xf32>
    %611 = arith.mulf %606, %610 : vector<2x32xf32>
    %612 = vector.extract_strided_slice %383 {offsets = [10, 0], sizes = [2, 32], strides = [1, 1]} : vector<16x32xf32> to vector<2x32xf32>
    %c0_305 = arith.constant 0 : index
    %c0_306 = arith.constant 0 : index
    %c0_307 = arith.constant 0 : index
    %613 = vector.load %arg5[%c0_305, %c0_306, %c0_307] : memref<4x32x32xf32, #tpu.memory_space<vmem>>, vector<1x32x32xf32>
    %614 = vector.shape_cast %613 : vector<1x32x32xf32> to vector<32x32xf32>
    %cst_308 = arith.constant dense<0.000000e+00> : vector<2x32xf32>
    %615 = tpu.matmul %611, %614, %cst_308 {dimension_numbers = #tpu.dot_dimension_numbers<[1], [0], [0], [1], [0, 0, 1, 1], [], []>} : vector<2x32xf32>, vector<32x32xf32>, vector<2x32xf32> -> vector<2x32xf32>
    %616 = arith.addf %612, %615 : vector<2x32xf32>
    %617 = arith.negf %616 : vector<2x32xf32>
    %618 = math.exp %617 : vector<2x32xf32>
    %cst_309 = arith.constant 1.000000e+00 : f32
    %619 = vector.broadcast %cst_309 : f32 to vector<2x32xf32>
    %620 = arith.addf %619, %618 : vector<2x32xf32>
    %621 = arith.divf %619, %620 : vector<2x32xf32>
    %622 = vector.extract_strided_slice %390 {offsets = [10, 0], sizes = [2, 32], strides = [1, 1]} : vector<16x32xf32> to vector<2x32xf32>
    %c1_310 = arith.constant 1 : index
    %c0_311 = arith.constant 0 : index
    %c0_312 = arith.constant 0 : index
    %623 = vector.load %arg5[%c1_310, %c0_311, %c0_312] : memref<4x32x32xf32, #tpu.memory_space<vmem>>, vector<1x32x32xf32>
    %624 = vector.shape_cast %623 : vector<1x32x32xf32> to vector<32x32xf32>
    %cst_313 = arith.constant dense<0.000000e+00> : vector<2x32xf32>
    %625 = tpu.matmul %611, %624, %cst_313 {dimension_numbers = #tpu.dot_dimension_numbers<[1], [0], [0], [1], [0, 0, 1, 1], [], []>} : vector<2x32xf32>, vector<32x32xf32>, vector<2x32xf32> -> vector<2x32xf32>
    %626 = arith.addf %622, %625 : vector<2x32xf32>
    %627 = arith.negf %626 : vector<2x32xf32>
    %628 = math.exp %627 : vector<2x32xf32>
    %cst_314 = arith.constant 1.000000e+00 : f32
    %629 = vector.broadcast %cst_314 : f32 to vector<2x32xf32>
    %630 = arith.addf %629, %628 : vector<2x32xf32>
    %631 = arith.divf %629, %630 : vector<2x32xf32>
    %632 = vector.extract_strided_slice %397 {offsets = [10, 0], sizes = [2, 32], strides = [1, 1]} : vector<16x32xf32> to vector<2x32xf32>
    %c2_315 = arith.constant 2 : index
    %c0_316 = arith.constant 0 : index
    %c0_317 = arith.constant 0 : index
    %633 = vector.load %arg5[%c2_315, %c0_316, %c0_317] : memref<4x32x32xf32, #tpu.memory_space<vmem>>, vector<1x32x32xf32>
    %634 = vector.shape_cast %633 : vector<1x32x32xf32> to vector<32x32xf32>
    %cst_318 = arith.constant dense<0.000000e+00> : vector<2x32xf32>
    %635 = tpu.matmul %611, %634, %cst_318 {dimension_numbers = #tpu.dot_dimension_numbers<[1], [0], [0], [1], [0, 0, 1, 1], [], []>} : vector<2x32xf32>, vector<32x32xf32>, vector<2x32xf32> -> vector<2x32xf32>
    %636 = arith.addf %632, %635 : vector<2x32xf32>
    %637 = math.tanh %636 : vector<2x32xf32>
    %638 = vector.extract_strided_slice %404 {offsets = [10, 0], sizes = [2, 32], strides = [1, 1]} : vector<16x32xf32> to vector<2x32xf32>
    %c3_319 = arith.constant 3 : index
    %c0_320 = arith.constant 0 : index
    %c0_321 = arith.constant 0 : index
    %639 = vector.load %arg5[%c3_319, %c0_320, %c0_321] : memref<4x32x32xf32, #tpu.memory_space<vmem>>, vector<1x32x32xf32>
    %640 = vector.shape_cast %639 : vector<1x32x32xf32> to vector<32x32xf32>
    %cst_322 = arith.constant dense<0.000000e+00> : vector<2x32xf32>
    %641 = tpu.matmul %611, %640, %cst_322 {dimension_numbers = #tpu.dot_dimension_numbers<[1], [0], [0], [1], [0, 0, 1, 1], [], []>} : vector<2x32xf32>, vector<32x32xf32>, vector<2x32xf32> -> vector<2x32xf32>
    %642 = arith.addf %638, %641 : vector<2x32xf32>
    %643 = arith.negf %642 : vector<2x32xf32>
    %644 = math.exp %643 : vector<2x32xf32>
    %cst_323 = arith.constant 1.000000e+00 : f32
    %645 = vector.broadcast %cst_323 : f32 to vector<2x32xf32>
    %646 = arith.addf %645, %644 : vector<2x32xf32>
    %647 = arith.divf %645, %646 : vector<2x32xf32>
    %648 = arith.mulf %631, %609 : vector<2x32xf32>
    %649 = arith.mulf %621, %637 : vector<2x32xf32>
    %650 = arith.addf %648, %649 : vector<2x32xf32>
    %651 = math.tanh %650 : vector<2x32xf32>
    %652 = arith.mulf %647, %651 : vector<2x32xf32>
    %653 = vector.extract_strided_slice %383 {offsets = [12, 0], sizes = [2, 32], strides = [1, 1]} : vector<16x32xf32> to vector<2x32xf32>
    %c0_324 = arith.constant 0 : index
    %c0_325 = arith.constant 0 : index
    %c0_326 = arith.constant 0 : index
    %654 = vector.load %arg5[%c0_324, %c0_325, %c0_326] : memref<4x32x32xf32, #tpu.memory_space<vmem>>, vector<1x32x32xf32>
    %655 = vector.shape_cast %654 : vector<1x32x32xf32> to vector<32x32xf32>
    %cst_327 = arith.constant dense<0.000000e+00> : vector<2x32xf32>
    %656 = tpu.matmul %652, %655, %cst_327 {dimension_numbers = #tpu.dot_dimension_numbers<[1], [0], [0], [1], [0, 0, 1, 1], [], []>} : vector<2x32xf32>, vector<32x32xf32>, vector<2x32xf32> -> vector<2x32xf32>
    %657 = arith.addf %653, %656 : vector<2x32xf32>
    %658 = arith.negf %657 : vector<2x32xf32>
    %659 = math.exp %658 : vector<2x32xf32>
    %cst_328 = arith.constant 1.000000e+00 : f32
    %660 = vector.broadcast %cst_328 : f32 to vector<2x32xf32>
    %661 = arith.addf %660, %659 : vector<2x32xf32>
    %662 = arith.divf %660, %661 : vector<2x32xf32>
    %663 = vector.extract_strided_slice %390 {offsets = [12, 0], sizes = [2, 32], strides = [1, 1]} : vector<16x32xf32> to vector<2x32xf32>
    %c1_329 = arith.constant 1 : index
    %c0_330 = arith.constant 0 : index
    %c0_331 = arith.constant 0 : index
    %664 = vector.load %arg5[%c1_329, %c0_330, %c0_331] : memref<4x32x32xf32, #tpu.memory_space<vmem>>, vector<1x32x32xf32>
    %665 = vector.shape_cast %664 : vector<1x32x32xf32> to vector<32x32xf32>
    %cst_332 = arith.constant dense<0.000000e+00> : vector<2x32xf32>
    %666 = tpu.matmul %652, %665, %cst_332 {dimension_numbers = #tpu.dot_dimension_numbers<[1], [0], [0], [1], [0, 0, 1, 1], [], []>} : vector<2x32xf32>, vector<32x32xf32>, vector<2x32xf32> -> vector<2x32xf32>
    %667 = arith.addf %663, %666 : vector<2x32xf32>
    %668 = arith.negf %667 : vector<2x32xf32>
    %669 = math.exp %668 : vector<2x32xf32>
    %cst_333 = arith.constant 1.000000e+00 : f32
    %670 = vector.broadcast %cst_333 : f32 to vector<2x32xf32>
    %671 = arith.addf %670, %669 : vector<2x32xf32>
    %672 = arith.divf %670, %671 : vector<2x32xf32>
    %673 = vector.extract_strided_slice %397 {offsets = [12, 0], sizes = [2, 32], strides = [1, 1]} : vector<16x32xf32> to vector<2x32xf32>
    %c2_334 = arith.constant 2 : index
    %c0_335 = arith.constant 0 : index
    %c0_336 = arith.constant 0 : index
    %674 = vector.load %arg5[%c2_334, %c0_335, %c0_336] : memref<4x32x32xf32, #tpu.memory_space<vmem>>, vector<1x32x32xf32>
    %675 = vector.shape_cast %674 : vector<1x32x32xf32> to vector<32x32xf32>
    %cst_337 = arith.constant dense<0.000000e+00> : vector<2x32xf32>
    %676 = tpu.matmul %652, %675, %cst_337 {dimension_numbers = #tpu.dot_dimension_numbers<[1], [0], [0], [1], [0, 0, 1, 1], [], []>} : vector<2x32xf32>, vector<32x32xf32>, vector<2x32xf32> -> vector<2x32xf32>
    %677 = arith.addf %673, %676 : vector<2x32xf32>
    %678 = math.tanh %677 : vector<2x32xf32>
    %679 = vector.extract_strided_slice %404 {offsets = [12, 0], sizes = [2, 32], strides = [1, 1]} : vector<16x32xf32> to vector<2x32xf32>
    %c3_338 = arith.constant 3 : index
    %c0_339 = arith.constant 0 : index
    %c0_340 = arith.constant 0 : index
    %680 = vector.load %arg5[%c3_338, %c0_339, %c0_340] : memref<4x32x32xf32, #tpu.memory_space<vmem>>, vector<1x32x32xf32>
    %681 = vector.shape_cast %680 : vector<1x32x32xf32> to vector<32x32xf32>
    %cst_341 = arith.constant dense<0.000000e+00> : vector<2x32xf32>
    %682 = tpu.matmul %652, %681, %cst_341 {dimension_numbers = #tpu.dot_dimension_numbers<[1], [0], [0], [1], [0, 0, 1, 1], [], []>} : vector<2x32xf32>, vector<32x32xf32>, vector<2x32xf32> -> vector<2x32xf32>
    %683 = arith.addf %679, %682 : vector<2x32xf32>
    %684 = arith.negf %683 : vector<2x32xf32>
    %685 = math.exp %684 : vector<2x32xf32>
    %cst_342 = arith.constant 1.000000e+00 : f32
    %686 = vector.broadcast %cst_342 : f32 to vector<2x32xf32>
    %687 = arith.addf %686, %685 : vector<2x32xf32>
    %688 = arith.divf %686, %687 : vector<2x32xf32>
    %689 = arith.mulf %672, %650 : vector<2x32xf32>
    %690 = arith.mulf %662, %678 : vector<2x32xf32>
    %691 = arith.addf %689, %690 : vector<2x32xf32>
    %692 = math.tanh %691 : vector<2x32xf32>
    %693 = arith.mulf %688, %692 : vector<2x32xf32>
    %694 = vector.extract_strided_slice %383 {offsets = [14, 0], sizes = [2, 32], strides = [1, 1]} : vector<16x32xf32> to vector<2x32xf32>
    %c0_343 = arith.constant 0 : index
    %c0_344 = arith.constant 0 : index
    %c0_345 = arith.constant 0 : index
    %695 = vector.load %arg5[%c0_343, %c0_344, %c0_345] : memref<4x32x32xf32, #tpu.memory_space<vmem>>, vector<1x32x32xf32>
    %696 = vector.shape_cast %695 : vector<1x32x32xf32> to vector<32x32xf32>
    %cst_346 = arith.constant dense<0.000000e+00> : vector<2x32xf32>
    %697 = tpu.matmul %693, %696, %cst_346 {dimension_numbers = #tpu.dot_dimension_numbers<[1], [0], [0], [1], [0, 0, 1, 1], [], []>} : vector<2x32xf32>, vector<32x32xf32>, vector<2x32xf32> -> vector<2x32xf32>
    %698 = arith.addf %694, %697 : vector<2x32xf32>
    %699 = arith.negf %698 : vector<2x32xf32>
    %700 = math.exp %699 : vector<2x32xf32>
    %cst_347 = arith.constant 1.000000e+00 : f32
    %701 = vector.broadcast %cst_347 : f32 to vector<2x32xf32>
    %702 = arith.addf %701, %700 : vector<2x32xf32>
    %703 = arith.divf %701, %702 : vector<2x32xf32>
    %704 = vector.extract_strided_slice %390 {offsets = [14, 0], sizes = [2, 32], strides = [1, 1]} : vector<16x32xf32> to vector<2x32xf32>
    %c1_348 = arith.constant 1 : index
    %c0_349 = arith.constant 0 : index
    %c0_350 = arith.constant 0 : index
    %705 = vector.load %arg5[%c1_348, %c0_349, %c0_350] : memref<4x32x32xf32, #tpu.memory_space<vmem>>, vector<1x32x32xf32>
    %706 = vector.shape_cast %705 : vector<1x32x32xf32> to vector<32x32xf32>
    %cst_351 = arith.constant dense<0.000000e+00> : vector<2x32xf32>
    %707 = tpu.matmul %693, %706, %cst_351 {dimension_numbers = #tpu.dot_dimension_numbers<[1], [0], [0], [1], [0, 0, 1, 1], [], []>} : vector<2x32xf32>, vector<32x32xf32>, vector<2x32xf32> -> vector<2x32xf32>
    %708 = arith.addf %704, %707 : vector<2x32xf32>
    %709 = arith.negf %708 : vector<2x32xf32>
    %710 = math.exp %709 : vector<2x32xf32>
    %cst_352 = arith.constant 1.000000e+00 : f32
    %711 = vector.broadcast %cst_352 : f32 to vector<2x32xf32>
    %712 = arith.addf %711, %710 : vector<2x32xf32>
    %713 = arith.divf %711, %712 : vector<2x32xf32>
    %714 = vector.extract_strided_slice %397 {offsets = [14, 0], sizes = [2, 32], strides = [1, 1]} : vector<16x32xf32> to vector<2x32xf32>
    %c2_353 = arith.constant 2 : index
    %c0_354 = arith.constant 0 : index
    %c0_355 = arith.constant 0 : index
    %715 = vector.load %arg5[%c2_353, %c0_354, %c0_355] : memref<4x32x32xf32, #tpu.memory_space<vmem>>, vector<1x32x32xf32>
    %716 = vector.shape_cast %715 : vector<1x32x32xf32> to vector<32x32xf32>
    %cst_356 = arith.constant dense<0.000000e+00> : vector<2x32xf32>
    %717 = tpu.matmul %693, %716, %cst_356 {dimension_numbers = #tpu.dot_dimension_numbers<[1], [0], [0], [1], [0, 0, 1, 1], [], []>} : vector<2x32xf32>, vector<32x32xf32>, vector<2x32xf32> -> vector<2x32xf32>
    %718 = arith.addf %714, %717 : vector<2x32xf32>
    %719 = math.tanh %718 : vector<2x32xf32>
    %720 = vector.extract_strided_slice %404 {offsets = [14, 0], sizes = [2, 32], strides = [1, 1]} : vector<16x32xf32> to vector<2x32xf32>
    %c3_357 = arith.constant 3 : index
    %c0_358 = arith.constant 0 : index
    %c0_359 = arith.constant 0 : index
    %721 = vector.load %arg5[%c3_357, %c0_358, %c0_359] : memref<4x32x32xf32, #tpu.memory_space<vmem>>, vector<1x32x32xf32>
    %722 = vector.shape_cast %721 : vector<1x32x32xf32> to vector<32x32xf32>
    %cst_360 = arith.constant dense<0.000000e+00> : vector<2x32xf32>
    %723 = tpu.matmul %693, %722, %cst_360 {dimension_numbers = #tpu.dot_dimension_numbers<[1], [0], [0], [1], [0, 0, 1, 1], [], []>} : vector<2x32xf32>, vector<32x32xf32>, vector<2x32xf32> -> vector<2x32xf32>
    %724 = arith.addf %720, %723 : vector<2x32xf32>
    %725 = arith.negf %724 : vector<2x32xf32>
    %726 = math.exp %725 : vector<2x32xf32>
    %cst_361 = arith.constant 1.000000e+00 : f32
    %727 = vector.broadcast %cst_361 : f32 to vector<2x32xf32>
    %728 = arith.addf %727, %726 : vector<2x32xf32>
    %729 = arith.divf %727, %728 : vector<2x32xf32>
    %730 = arith.mulf %713, %691 : vector<2x32xf32>
    %731 = arith.mulf %703, %719 : vector<2x32xf32>
    %732 = arith.addf %730, %731 : vector<2x32xf32>
    %733 = math.tanh %732 : vector<2x32xf32>
    %734 = arith.mulf %729, %733 : vector<2x32xf32>
    %c0_362 = arith.constant 0 : index
    %c0_363 = arith.constant 0 : index
    %735 = vector.load %arg7[%c0_362, %c0_363] : memref<32x8xf32, #tpu.memory_space<vmem>>, vector<32x8xf32>
    %cst_364 = arith.constant dense<0.000000e+00> : vector<2x8xf32>
    %736 = tpu.matmul %734, %735, %cst_364 {dimension_numbers = #tpu.dot_dimension_numbers<[1], [0], [0], [1], [0, 0, 1, 1], [], []>} : vector<2x32xf32>, vector<32x8xf32>, vector<2x8xf32> -> vector<2x8xf32>
    %c0_365 = arith.constant 0 : index
    %c0_366 = arith.constant 0 : index
    %737 = vector.load %arg8[%c0_365, %c0_366] : memref<1x8xf32, #tpu.memory_space<vmem>>, vector<1x8xf32>
    %738 = vector.broadcast %737 : vector<1x8xf32> to vector<2x8xf32>
    %739 = arith.addf %736, %738 : vector<2x8xf32>
    %c0_367 = arith.constant 0 : index
    %c0_368 = arith.constant 0 : index
    %740 = vector.load %arg9[%c0_367, %c0_368] : memref<2x8xf32, #tpu.memory_space<vmem>>, vector<2x8xf32>
    tpu.vector_store %arg9[%c0_367, %c0_368], %739 {strides = array<i32>} : memref<2x8xf32, #tpu.memory_space<vmem>>, vector<2x8xf32>,
    return
  }
}

</mosaic_0001>

<llo_original>
// kernel: lstm_model_forward.1
$region0: #{lstm_model_forward.1}
  #allocation0 [shape = 'u32[]', space=smem, size = 0x4, offset = 0x4, fixed_abs, tag = 'smem constant byte address 0x4 - core index']
  #allocation1 [shape = 'u32[144,128]{1,0:T(1,128)}', space=vmem, size = 0x12000, scoped, tag = 'internal scratch']
  %s0 = inlined_call_operand.vmem [shape: f32[2,8,16], index: 0, kind: input, shape index: {}]
  %s1 = inlined_call_operand.hbm [shape: f32[4,16,32], index: 1, kind: input, shape index: {}]
  %s2 = inlined_call_operand.hbm [shape: f32[4,32,32], index: 2, kind: input, shape index: {}]
  %s3 = inlined_call_operand.vmem [shape: f32[4,1,32], index: 3, kind: input, shape index: {}]
  %s4 = inlined_call_operand.hbm [shape: f32[4,32,32], index: 4, kind: input, shape index: {}]
  %s5 = inlined_call_operand.hbm [shape: f32[4,32,32], index: 5, kind: input, shape index: {}]
  %s6 = inlined_call_operand.vmem [shape: f32[4,1,32], index: 6, kind: input, shape index: {}]
  %s7 = inlined_call_operand.vmem [shape: f32[32,8], index: 7, kind: input, shape index: {}]
  %s8 = inlined_call_operand.vmem [shape: f32[1,8], index: 8, kind: input, shape index: {}]
  %s9 = inlined_call_operand.hbm [shape: f32[2,8], index: 9, kind: output, shape index: {}]
  %s10 = sld [smem:[#allocation0]]
  $region62: #{lstm_model_forward.1} parent=0
    _
  %s12 = ssub.s32 1, %s10
  %s13 = scalar_select 0, %s12, %s10
  $region1: #{lstm_model_forward.1} parent=0
    #allocation2 [shape = 'u8[32768]{0}', space=vmem, size = 0x8000, scoped, tag = 'input window, operand 1, single buffered']
    #allocation3 [shape = 's32[1]{0}', space=sflag, size = 0x4, scoped, tag = 'scoped memory for lstm_model_forward.1']
    #allocation4 [shape = 's32[1]{0}', space=sflag, size = 0x4, scoped, tag = 'scoped memory for lstm_model_forward.1']
    #allocation5 [shape = 'u8[65536]{0}', space=vmem, size = 0x10000, scoped, tag = 'input window, operand 2, single buffered']
    #allocation6 [shape = 's32[1]{0}', space=sflag, size = 0x4, scoped, tag = 'scoped memory for lstm_model_forward.1']
    #allocation7 [shape = 'u8[65536]{0}', space=vmem, size = 0x10000, scoped, tag = 'input window, operand 4, single buffered']
    #allocation8 [shape = 'u8[65536]{0}', space=vmem, size = 0x10000, scoped, tag = 'input window, operand 5, single buffered']
    #allocation9 [shape = 's32[1]{0}', space=sflag, size = 0x4, scoped, tag = 'scoped memory for lstm_model_forward.1']
    #allocation10 [shape = 'u8[1024]{0}', space=vmem, size = 0x400, scoped, tag = 'output window, operand 0, single buffered']
    %14 = vsyncpa [#allocation3], 0
    %15 = vsyncpa [#allocation6], 0
    %16 = vsyncpa [#allocation9], 0
    %17 = vsyncpa [#allocation4], 0
    // Predicated region
    $region2: #{lstm_model_forward.1} parent=1 // pred_check
      _
    $region3: #{lstm_model_forward.1} parent=1 // pred_check_branch
      %19 = sbr.rel (0) target = $region5
    $region4: #{lstm_model_forward.1} parent=1 // pred_region
      _
    $region5: #{lstm_model_forward.1} parent=1 // pred_fallthru
      _
    // Predicated region
    $region6: #{lstm_model_forward.1} parent=1 // pred_check
      _
    $region7: #{lstm_model_forward.1} parent=1 // pred_check_branch
      %21 = sbr.rel (0) target = $region9
    $region8: #{lstm_model_forward.1} parent=1 // pred_region
      %s23 = ssub.s32 1024, 1024
      %24 = vsyncadd [#allocation3], %s23
      %s25 = sshll.u32 [#allocation2], 4
      %s26 = int_to_ptr.vmem [resolvable:$true] %s25
      %31 = dma.hbm_to_vmem [thread:$0]  %s1, 1024, %s26, [#allocation3], 128, 128, 8
    $region9: #{lstm_model_forward.1} parent=1 // pred_fallthru
      _
    // Predicated region
    $region10: #{lstm_model_forward.1} parent=1 // pred_check
      _
    $region11: #{lstm_model_forward.1} parent=1 // pred_check_branch
      %33 = sbr.rel (0) target = $region13
    $region12: #{lstm_model_forward.1} parent=1 // pred_region
      %s35 = ssub.s32 2048, 2048
      %36 = vsyncadd [#allocation6], %s35
      %s37 = sshll.u32 [#allocation5], 4
      %s38 = int_to_ptr.vmem [resolvable:$true] %s37
      %43 = dma.hbm_to_vmem [thread:$0]  %s2, 2048, %s38, [#allocation6], 128, 128, 8
    $region13: #{lstm_model_forward.1} parent=1 // pred_fallthru
      _
    // Predicated region
    $region14: #{lstm_model_forward.1} parent=1 // pred_check
      _
    $region15: #{lstm_model_forward.1} parent=1 // pred_check_branch
      %45 = sbr.rel (0) target = $region17
    $region16: #{lstm_model_forward.1} parent=1 // pred_region
      _
    $region17: #{lstm_model_forward.1} parent=1 // pred_fallthru
      _
    // Predicated region
    $region18: #{lstm_model_forward.1} parent=1 // pred_check
      _
    $region19: #{lstm_model_forward.1} parent=1 // pred_check_branch
      %47 = sbr.rel (0) target = $region21
    $region20: #{lstm_model_forward.1} parent=1 // pred_region
      %s49 = ssub.s32 2048, 2048
      %50 = vsyncadd [#allocation6], %s49
      %s51 = sshll.u32 [#allocation7], 4
      %s52 = int_to_ptr.vmem [resolvable:$true] %s51
      %57 = dma.hbm_to_vmem [thread:$0]  %s4, 2048, %s52, [#allocation6], 128, 128, 8
    $region21: #{lstm_model_forward.1} parent=1 // pred_fallthru
      _
    // Predicated region
    $region22: #{lstm_model_forward.1} parent=1 // pred_check
      _
    $region23: #{lstm_model_forward.1} parent=1 // pred_check_branch
      %59 = sbr.rel (0) target = $region25
    $region24: #{lstm_model_forward.1} parent=1 // pred_region
      %s61 = ssub.s32 2048, 2048
      %62 = vsyncadd [#allocation9], %s61
      %s63 = sshll.u32 [#allocation8], 4
      %s64 = int_to_ptr.vmem [resolvable:$true] %s63
      %69 = dma.hbm_to_vmem [thread:$0]  %s5, 2048, %s64, [#allocation9], 128, 128, 8
    $region25: #{lstm_model_forward.1} parent=1 // pred_fallthru
      _
    // Predicated region
    $region26: #{lstm_model_forward.1} parent=1 // pred_check
      _
    $region27: #{lstm_model_forward.1} parent=1 // pred_check_branch
      %71 = sbr.rel (0) target = $region29
    $region28: #{lstm_model_forward.1} parent=1 // pred_region
      _
    $region29: #{lstm_model_forward.1} parent=1 // pred_fallthru
      _
    // Predicated region
    $region30: #{lstm_model_forward.1} parent=1 // pred_check
      _
    $region31: #{lstm_model_forward.1} parent=1 // pred_check_branch
      %73 = sbr.rel (0) target = $region33
    $region32: #{lstm_model_forward.1} parent=1 // pred_region
      _
    $region33: #{lstm_model_forward.1} parent=1 // pred_fallthru
      _
    // Predicated region
    $region34: #{lstm_model_forward.1} parent=1 // pred_check
      _
    $region35: #{lstm_model_forward.1} parent=1 // pred_check_branch
      %75 = sbr.rel (0) target = $region37
    $region36: #{lstm_model_forward.1} parent=1 // pred_region
      _
    $region37: #{lstm_model_forward.1} parent=1 // pred_fallthru
      _
    // Predicated region
    $region38: #{lstm_model_forward.1} parent=1 // pred_check
      _
    $region39: #{lstm_model_forward.1} parent=1 // pred_check_branch
      %77 = sbr.rel (0) target = $region41
    $region40: #{lstm_model_forward.1} parent=1 // pred_region
      %78 = dma.done [#allocation3], 1024
    $region41: #{lstm_model_forward.1} parent=1 // pred_fallthru
      _
    // Predicated region
    $region42: #{lstm_model_forward.1} parent=1 // pred_check
      _
    $region43: #{lstm_model_forward.1} parent=1 // pred_check_branch
      %80 = sbr.rel (0) target = $region45
    $region44: #{lstm_model_forward.1} parent=1 // pred_region
      %81 = dma.done [#allocation6], 2048
    $region45: #{lstm_model_forward.1} parent=1 // pred_fallthru
      _
    // Predicated region
    $region46: #{lstm_model_forward.1} parent=1 // pred_check
      _
    $region47: #{lstm_model_forward.1} parent=1 // pred_check_branch
      %83 = sbr.rel (0) target = $region49
    $region48: #{lstm_model_forward.1} parent=1 // pred_region
      %84 = dma.done [#allocation6], 2048
    $region49: #{lstm_model_forward.1} parent=1 // pred_fallthru
      _
    // Predicated region
    $region50: #{lstm_model_forward.1} parent=1 // pred_check
      _
    $region51: #{lstm_model_forward.1} parent=1 // pred_check_branch
      %86 = sbr.rel (0) target = $region53
    $region52: #{lstm_model_forward.1} parent=1 // pred_region
      %87 = dma.done [#allocation9], 2048
    $region53: #{lstm_model_forward.1} parent=1 // pred_fallthru
      _
    %v88 = vld [vmem:[%s0] sm:$0xff]
    %v89 = vld [vmem:[%s0 + $0x8] sm:$0xff]
    %v92 = vrot.slane %v89, 7
    %vm93 = vcmask 1041409
    %v94 = vsel %vm93, %v92, %v88
    %v96 = vrot.slane %v88, 7
    %v97 = vrot.slane %v89, 6
    %vm98 = vcmask 1043459
    %v99 = vsel %vm98, %v97, %v96
    %v101 = vrot.slane %v88, 6
    %v102 = vrot.slane %v89, 5
    %vm103 = vcmask 1045509
    %v104 = vsel %vm103, %v102, %v101
    %v106 = vrot.slane %v88, 5
    %v107 = vrot.slane %v89, 4
    %vm108 = vcmask 1047559
    %v109 = vsel %vm108, %v107, %v106
    %v111 = vrot.slane %v88, 4
    %v112 = vrot.slane %v89, 3
    %v113 = vsel %vm93, %v112, %v111
    %v115 = vrot.slane %v88, 3
    %v116 = vrot.slane %v89, 2
    %v117 = vsel %vm98, %v116, %v115
    %v119 = vrot.slane %v88, 2
    %v120 = vrot.slane %v89, 1
    %v121 = vsel %vm103, %v120, %v119
    %v123 = vrot.slane %v88, 1
    %v124 = vsel %vm108, %v89, %v123
    %vm126 = vcmask 1041408
    %v127 = vsel %vm126, %v94, %v99
    %vm128 = vcmask 1043456
    %v129 = vsel %vm128, %v127, %v104
    %vm130 = vcmask 1045504
    %v131 = vsel %vm130, %v129, %v109
    %v132 = vsel %vm126, %v113, %v117
    %v133 = vsel %vm128, %v132, %v121
    %v134 = vsel %vm130, %v133, %v124
    %v135 = vld [vmem:[#allocation2] sm:$0xff]
    %v136 = vld [vmem:[#allocation2 + $0x8] sm:$0xff]
    %v137 = vld [vmem:[%s3] sm:$0x1]
    %v139 = vlaneseq
    %v140 = vshrl.u32 %v139, 7
    %v141 = vsub.s32 0, %v140
    %v142 = vrot.slane %v137, %v141
    %vm144 = vcmask 130048
    %v146 = vsel %vm144, %v131, 0
    %v149 = vsel %vm144, %v134, 0
    %151 = vmatprep.subr.mxu0 0.0
    %152 = vmatpush1.msra.mxu0 %v135
    %153 = vmatprep.subr.mxu0 0.0
    %154 = vmatpush1.msra.mxu0 %v136
    %155 = vmatprep.subr.mxu0 0.0
    %156 = vmatpush1.msra.mxu0 0.0
    %157 = vmatprep.subr.mxu0 0.0
    %158 = vmatpush1.msra.mxu0 0.0
    %159 = vmatprep.subr.mxu0 0.0
    %160 = vmatpush1.msra.mxu0 0.0
    %161 = vmatprep.subr.mxu0 0.0
    %162 = vmatpush1.msra.mxu0 0.0
    %163 = vmatprep.subr.mxu0 0.0
    %164 = vmatpush1.msra.mxu0 0.0
    %165 = vmatprep.subr.mxu0 0.0
    %166 = vmatpush1.msra.mxu0 0.0
    %167 = vmatprep.subr.mxu0 0.0
    %168 = vmatpush1.msra.mxu0 0.0
    %169 = vmatprep.subr.mxu0 0.0
    %170 = vmatpush1.msra.mxu0 0.0
    %171 = vmatprep.subr.mxu0 0.0
    %172 = vmatpush1.msra.mxu0 0.0
    %173 = vmatprep.subr.mxu0 0.0
    %174 = vmatpush1.msra.mxu0 0.0
    %175 = vmatprep.subr.mxu0 0.0
    %176 = vmatpush1.msra.mxu0 0.0
    %177 = vmatprep.subr.mxu0 0.0
    %178 = vmatpush1.msra.mxu0 0.0
    %179 = vmatprep.subr.mxu0 0.0
    %180 = vmatpush1.msra.mxu0 0.0
    %181 = vmatprep.subr.mxu0 0.0
    %182 = vmatpush1.msra.mxu0 0.0
    %183 = vmatprep.subr.mxu0 0.0
    %184 = vmatpush1.msra.mxu0 0.0
    %185 = vmatprep.subr.mxu0 0.0
    %186 = vmatpush1.msra.mxu0 0.0
    %187 = vmatprep.subr.mxu0 0.0
    %188 = vmatpush1.msra.mxu0 0.0
    %189 = vmatprep.subr.mxu0 0.0
    %190 = vmatpush1.msra.mxu0 0.0
    %191 = vmatprep.subr.mxu0 0.0
    %192 = vmatpush1.msra.mxu0 0.0
    %193 = vmatprep.subr.mxu0 0.0
    %194 = vmatpush1.msra.mxu0 0.0
    %195 = vmatprep.subr.mxu0 0.0
    %196 = vmatpush1.msra.mxu0 0.0
    %197 = vmatprep.subr.mxu0 0.0
    %198 = vmatpush1.msra.mxu0 0.0
    %199 = vmatprep.subr.mxu0 0.0
    %200 = vmatpush1.msra.mxu0 0.0
    %201 = vmatprep.subr.mxu0 0.0
    %202 = vmatpush1.msra.mxu0 0.0
    %203 = vmatprep.subr.mxu0 0.0
    %204 = vmatpush1.msra.mxu0 0.0
    %205 = vmatprep.subr.mxu0 0.0
    %206 = vmatpush1.msra.mxu0 0.0
    %207 = vmatprep.subr.mxu0 0.0
    %208 = vmatpush1.msra.mxu0 0.0
    %209 = vmatprep.subr.mxu0 0.0
    %210 = vmatpush1.msra.mxu0 0.0
    %211 = vmatprep.subr.mxu0 0.0
    %212 = vmatpush1.msra.mxu0 0.0
    %213 = vmatprep.subr.mxu0 0.0
    %214 = vmatpush1.msra.mxu0 0.0
    %215 = vmatprep.mubr.f32.mxu0 0.0
    %216 = vmatmul.mubr.f32.gmra.mrb[0].mxu0 %v146
    %v217 = vpop.f32.mrb[0].mxu0
    %v218 = vadd.f32 %v142, %v217
    %v219 = vpop.f32.mrb[0].mxu0
    %220 = vmatprep.mubr.f32.mxu0 0.0
    %221 = vmatmul.mubr.f32.gmra.mrb[0].mxu0 %v149
    %v222 = vpop.f32.mrb[0].mxu0
    %v223 = vadd.f32 %v142, %v222
    %v224 = vpop.f32.mrb[0].mxu0
    %225 = vdwg.mxu0
    %s226 = scalar_lea.vmem [#allocation2], 16
    %v227 = vld [vmem:[%s226] sm:$0xff]
    %v228 = vld [vmem:[%s226 + $0x8] sm:$0xff]
    %s229 = scalar_lea.vmem %s3, 1
    %v230 = vld [vmem:[%s229] sm:$0x1]
    %v232 = vlaneseq
    %v233 = vshrl.u32 %v232, 7
    %v234 = vsub.s32 0, %v233
    %v235 = vrot.slane %v230, %v234
    %237 = vmatprep.subr.mxu0 0.0
    %238 = vmatpush1.msra.mxu0 %v227
    %239 = vmatprep.subr.mxu0 0.0
    %240 = vmatpush1.msra.mxu0 %v228
    %241 = vmatprep.subr.mxu0 0.0
    %242 = vmatpush1.msra.mxu0 0.0
    %243 = vmatprep.subr.mxu0 0.0
    %244 = vmatpush1.msra.mxu0 0.0
    %245 = vmatprep.subr.mxu0 0.0
    %246 = vmatpush1.msra.mxu0 0.0
    %247 = vmatprep.subr.mxu0 0.0
    %248 = vmatpush1.msra.mxu0 0.0
    %249 = vmatprep.subr.mxu0 0.0
    %250 = vmatpush1.msra.mxu0 0.0
    %251 = vmatprep.subr.mxu0 0.0
    %252 = vmatpush1.msra.mxu0 0.0
    %253 = vmatprep.subr.mxu0 0.0
    %254 = vmatpush1.msra.mxu0 0.0
    %255 = vmatprep.subr.mxu0 0.0
    %256 = vmatpush1.msra.mxu0 0.0
    %257 = vmatprep.subr.mxu0 0.0
    %258 = vmatpush1.msra.mxu0 0.0
    %259 = vmatprep.subr.mxu0 0.0
    %260 = vmatpush1.msra.mxu0 0.0
    %261 = vmatprep.subr.mxu0 0.0
    %262 = vmatpush1.msra.mxu0 0.0
    %263 = vmatprep.subr.mxu0 0.0
    %264 = vmatpush1.msra.mxu0 0.0
    %265 = vmatprep.subr.mxu0 0.0
    %266 = vmatpush1.msra.mxu0 0.0
    %267 = vmatprep.subr.mxu0 0.0
    %268 = vmatpush1.msra.mxu0 0.0
    %269 = vmatprep.subr.mxu0 0.0
    %270 = vmatpush1.msra.mxu0 0.0
    %271 = vmatprep.subr.mxu0 0.0
    %272 = vmatpush1.msra.mxu0 0.0
    %273 = vmatprep.subr.mxu0 0.0
    %274 = vmatpush1.msra.mxu0 0.0
    %275 = vmatprep.subr.mxu0 0.0
    %276 = vmatpush1.msra.mxu0 0.0
    %277 = vmatprep.subr.mxu0 0.0
    %278 = vmatpush1.msra.mxu0 0.0
    %279 = vmatprep.subr.mxu0 0.0
    %280 = vmatpush1.msra.mxu0 0.0
    %281 = vmatprep.subr.mxu0 0.0
    %282 = vmatpush1.msra.mxu0 0.0
    %283 = vmatprep.subr.mxu0 0.0
    %284 = vmatpush1.msra.mxu0 0.0
    %285 = vmatprep.subr.mxu0 0.0
    %286 = vmatpush1.msra.mxu0 0.0
    %287 = vmatprep.subr.mxu0 0.0
    %288 = vmatpush1.msra.mxu0 0.0
    %289 = vmatprep.subr.mxu0 0.0
    %290 = vmatpush1.msra.mxu0 0.0
    %291 = vmatprep.subr.mxu0 0.0
    %292 = vmatpush1.msra.mxu0 0.0
    %293 = vmatprep.subr.mxu0 0.0
    %294 = vmatpush1.msra.mxu0 0.0
    %295 = vmatprep.subr.mxu0 0.0
    %296 = vmatpush1.msra.mxu0 0.0
    %297 = vmatprep.subr.mxu0 0.0
    %298 = vmatpush1.msra.mxu0 0.0
    %299 = vmatprep.subr.mxu0 0.0
    %300 = vmatpush1.msra.mxu0 0.0
    %301 = vmatprep.mubr.f32.mxu0 0.0
    %302 = vmatmul.mubr.f32.gmra.mrb[0].mxu0 %v146
    %v303 = vpop.f32.mrb[0].mxu0
    %v304 = vadd.f32 %v235, %v303
    %v305 = vpop.f32.mrb[0].mxu0
    %306 = vmatprep.mubr.f32.mxu0 0.0
    %307 = vmatmul.mubr.f32.gmra.mrb[0].mxu0 %v149
    %v308 = vpop.f32.mrb[0].mxu0
    %v309 = vadd.f32 %v235, %v308
    %v310 = vpop.f32.mrb[0].mxu0
    %311 = vdwg.mxu0
    %s312 = scalar_lea.vmem [#allocation2], 32
    %v313 = vld [vmem:[%s312] sm:$0xff]
    %v314 = vld [vmem:[%s312 + $0x8] sm:$0xff]
    %s315 = scalar_lea.vmem %s3, 2
    %v316 = vld [vmem:[%s315] sm:$0x1]
    %v318 = vlaneseq
    %v319 = vshrl.u32 %v318, 7
    %v320 = vsub.s32 0, %v319
    %v321 = vrot.slane %v316, %v320
    %323 = vmatprep.subr.mxu0 0.0
    %324 = vmatpush1.msra.mxu0 %v313
    %325 = vmatprep.subr.mxu0 0.0
    %326 = vmatpush1.msra.mxu0 %v314
    %327 = vmatprep.subr.mxu0 0.0
    %328 = vmatpush1.msra.mxu0 0.0
    %329 = vmatprep.subr.mxu0 0.0
    %330 = vmatpush1.msra.mxu0 0.0
    %331 = vmatprep.subr.mxu0 0.0
    %332 = vmatpush1.msra.mxu0 0.0
    %333 = vmatprep.subr.mxu0 0.0
    %334 = vmatpush1.msra.mxu0 0.0
    %335 = vmatprep.subr.mxu0 0.0
    %336 = vmatpush1.msra.mxu0 0.0
    %337 = vmatprep.subr.mxu0 0.0
    %338 = vmatpush1.msra.mxu0 0.0
    %339 = vmatprep.subr.mxu0 0.0
    %340 = vmatpush1.msra.mxu0 0.0
    %341 = vmatprep.subr.mxu0 0.0
    %342 = vmatpush1.msra.mxu0 0.0
    %343 = vmatprep.subr.mxu0 0.0
    %344 = vmatpush1.msra.mxu0 0.0
    %345 = vmatprep.subr.mxu0 0.0
    %346 = vmatpush1.msra.mxu0 0.0
    %347 = vmatprep.subr.mxu0 0.0
    %348 = vmatpush1.msra.mxu0 0.0
    %349 = vmatprep.subr.mxu0 0.0
    %350 = vmatpush1.msra.mxu0 0.0
    %351 = vmatprep.subr.mxu0 0.0
    %352 = vmatpush1.msra.mxu0 0.0
    %353 = vmatprep.subr.mxu0 0.0
    %354 = vmatpush1.msra.mxu0 0.0
    %355 = vmatprep.subr.mxu0 0.0
    %356 = vmatpush1.msra.mxu0 0.0
    %357 = vmatprep.subr.mxu0 0.0
    %358 = vmatpush1.msra.mxu0 0.0
    %359 = vmatprep.subr.mxu0 0.0
    %360 = vmatpush1.msra.mxu0 0.0
    %361 = vmatprep.subr.mxu0 0.0
    %362 = vmatpush1.msra.mxu0 0.0
    %363 = vmatprep.subr.mxu0 0.0
    %364 = vmatpush1.msra.mxu0 0.0
    %365 = vmatprep.subr.mxu0 0.0
    %366 = vmatpush1.msra.mxu0 0.0
    %367 = vmatprep.subr.mxu0 0.0
    %368 = vmatpush1.msra.mxu0 0.0
    %369 = vmatprep.subr.mxu0 0.0
    %370 = vmatpush1.msra.mxu0 0.0
    %371 = vmatprep.subr.mxu0 0.0
    %372 = vmatpush1.msra.mxu0 0.0
    %373 = vmatprep.subr.mxu0 0.0
    %374 = vmatpush1.msra.mxu0 0.0
    %375 = vmatprep.subr.mxu0 0.0
    %376 = vmatpush1.msra.mxu0 0.0
    %377 = vmatprep.subr.mxu0 0.0
    %378 = vmatpush1.msra.mxu0 0.0
    %379 = vmatprep.subr.mxu0 0.0
    %380 = vmatpush1.msra.mxu0 0.0
    %381 = vmatprep.subr.mxu0 0.0
    %382 = vmatpush1.msra.mxu0 0.0
    %383 = vmatprep.subr.mxu0 0.0
    %384 = vmatpush1.msra.mxu0 0.0
    %385 = vmatprep.subr.mxu0 0.0
    %386 = vmatpush1.msra.mxu0 0.0
    %387 = vmatprep.mubr.f32.mxu0 0.0
    %388 = vmatmul.mubr.f32.gmra.mrb[0].mxu0 %v146
    %v389 = vpop.f32.mrb[0].mxu0
    %v390 = vadd.f32 %v321, %v389
    %v391 = vpop.f32.mrb[0].mxu0
    %392 = vmatprep.mubr.f32.mxu0 0.0
    %393 = vmatmul.mubr.f32.gmra.mrb[0].mxu0 %v149
    %v394 = vpop.f32.mrb[0].mxu0
    %v395 = vadd.f32 %v321, %v394
    %v396 = vpop.f32.mrb[0].mxu0
    %397 = vdwg.mxu0
    %s398 = scalar_lea.vmem [#allocation2], 48
    %v399 = vld [vmem:[%s398] sm:$0xff]
    %v400 = vld [vmem:[%s398 + $0x8] sm:$0xff]
    %s401 = scalar_lea.vmem %s3, 3
    %v402 = vld [vmem:[%s401] sm:$0x1]
    %v404 = vlaneseq
    %v405 = vshrl.u32 %v404, 7
    %v406 = vsub.s32 0, %v405
    %v407 = vrot.slane %v402, %v406
    %409 = vmatprep.subr.mxu0 0.0
    %410 = vmatpush1.msra.mxu0 %v399
    %411 = vmatprep.subr.mxu0 0.0
    %412 = vmatpush1.msra.mxu0 %v400
    %413 = vmatprep.subr.mxu0 0.0
    %414 = vmatpush1.msra.mxu0 0.0
    %415 = vmatprep.subr.mxu0 0.0
    %416 = vmatpush1.msra.mxu0 0.0
    %417 = vmatprep.subr.mxu0 0.0
    %418 = vmatpush1.msra.mxu0 0.0
    %419 = vmatprep.subr.mxu0 0.0
    %420 = vmatpush1.msra.mxu0 0.0
    %421 = vmatprep.subr.mxu0 0.0
    %422 = vmatpush1.msra.mxu0 0.0
    %423 = vmatprep.subr.mxu0 0.0
    %424 = vmatpush1.msra.mxu0 0.0
    %425 = vmatprep.subr.mxu0 0.0
    %426 = vmatpush1.msra.mxu0 0.0
    %427 = vmatprep.subr.mxu0 0.0
    %428 = vmatpush1.msra.mxu0 0.0
    %429 = vmatprep.subr.mxu0 0.0
    %430 = vmatpush1.msra.mxu0 0.0
    %431 = vmatprep.subr.mxu0 0.0
    %432 = vmatpush1.msra.mxu0 0.0
    %433 = vmatprep.subr.mxu0 0.0
    %434 = vmatpush1.msra.mxu0 0.0
    %435 = vmatprep.subr.mxu0 0.0
    %436 = vmatpush1.msra.mxu0 0.0
    %437 = vmatprep.subr.mxu0 0.0
    %438 = vmatpush1.msra.mxu0 0.0
    %439 = vmatprep.subr.mxu0 0.0
    %440 = vmatpush1.msra.mxu0 0.0
    %441 = vmatprep.subr.mxu0 0.0
    %442 = vmatpush1.msra.mxu0 0.0
    %443 = vmatprep.subr.mxu0 0.0
    %444 = vmatpush1.msra.mxu0 0.0
    %445 = vmatprep.subr.mxu0 0.0
    %446 = vmatpush1.msra.mxu0 0.0
    %447 = vmatprep.subr.mxu0 0.0
    %448 = vmatpush1.msra.mxu0 0.0
    %449 = vmatprep.subr.mxu0 0.0
    %450 = vmatpush1.msra.mxu0 0.0
    %451 = vmatprep.subr.mxu0 0.0
    %452 = vmatpush1.msra.mxu0 0.0
    %453 = vmatprep.subr.mxu0 0.0
    %454 = vmatpush1.msra.mxu0 0.0
    %455 = vmatprep.subr.mxu0 0.0
    %456 = vmatpush1.msra.mxu0 0.0
    %457 = vmatprep.subr.mxu0 0.0
    %458 = vmatpush1.msra.mxu0 0.0
    %459 = vmatprep.subr.mxu0 0.0
    %460 = vmatpush1.msra.mxu0 0.0
    %461 = vmatprep.subr.mxu0 0.0
    %462 = vmatpush1.msra.mxu0 0.0
    %463 = vmatprep.subr.mxu0 0.0
    %464 = vmatpush1.msra.mxu0 0.0
    %465 = vmatprep.subr.mxu0 0.0
    %466 = vmatpush1.msra.mxu0 0.0
    %467 = vmatprep.subr.mxu0 0.0
    %468 = vmatpush1.msra.mxu0 0.0
    %469 = vmatprep.subr.mxu0 0.0
    %470 = vmatpush1.msra.mxu0 0.0
    %471 = vmatprep.subr.mxu0 0.0
    %472 = vmatpush1.msra.mxu0 0.0
    %473 = vmatprep.mubr.f32.mxu0 0.0
    %474 = vmatmul.mubr.f32.gmra.mrb[0].mxu0 %v146
    %v475 = vpop.f32.mrb[0].mxu0
    %v476 = vadd.f32 %v407, %v475
    %v477 = vpop.f32.mrb[0].mxu0
    %478 = vmatprep.mubr.f32.mxu0 0.0
    %479 = vmatmul.mubr.f32.gmra.mrb[0].mxu0 %v149
    %v480 = vpop.f32.mrb[0].mxu0
    %v481 = vadd.f32 %v407, %v480
    %v482 = vpop.f32.mrb[0].mxu0
    %483 = vdwg.mxu0
    %v484 = vld [vmem:[#allocation5] sm:$0xff]
    %v485 = vld [vmem:[#allocation5 + $0x8] sm:$0xff]
    %v486 = vld [vmem:[#allocation5 + $0x10] sm:$0xff]
    %v487 = vld [vmem:[#allocation5 + $0x18] sm:$0xff]
    %vm488 = vcmask 261120
    %v490 = vsel %vm488, 0.0, 0
    %492 = vmatprep.subr.mxu0 0.0
    %493 = vmatpush1.msra.mxu0 %v484
    %494 = vmatprep.subr.mxu0 0.0
    %495 = vmatpush1.msra.mxu0 %v485
    %496 = vmatprep.subr.mxu0 0.0
    %497 = vmatpush1.msra.mxu0 %v486
    %498 = vmatprep.subr.mxu0 0.0
    %499 = vmatpush1.msra.mxu0 %v487
    %500 = vmatprep.subr.mxu0 0.0
    %501 = vmatpush1.msra.mxu0 0.0
    %502 = vmatprep.subr.mxu0 0.0
    %503 = vmatpush1.msra.mxu0 0.0
    %504 = vmatprep.subr.mxu0 0.0
    %505 = vmatpush1.msra.mxu0 0.0
    %506 = vmatprep.subr.mxu0 0.0
    %507 = vmatpush1.msra.mxu0 0.0
    %508 = vmatprep.subr.mxu0 0.0
    %509 = vmatpush1.msra.mxu0 0.0
    %510 = vmatprep.subr.mxu0 0.0
    %511 = vmatpush1.msra.mxu0 0.0
    %512 = vmatprep.subr.mxu0 0.0
    %513 = vmatpush1.msra.mxu0 0.0
    %514 = vmatprep.subr.mxu0 0.0
    %515 = vmatpush1.msra.mxu0 0.0
    %516 = vmatprep.subr.mxu0 0.0
    %517 = vmatpush1.msra.mxu0 0.0
    %518 = vmatprep.subr.mxu0 0.0
    %519 = vmatpush1.msra.mxu0 0.0
    %520 = vmatprep.subr.mxu0 0.0
    %521 = vmatpush1.msra.mxu0 0.0
    %522 = vmatprep.subr.mxu0 0.0
    %523 = vmatpush1.msra.mxu0 0.0
    %524 = vmatprep.subr.mxu0 0.0
    %525 = vmatpush1.msra.mxu0 0.0
    %526 = vmatprep.subr.mxu0 0.0
    %527 = vmatpush1.msra.mxu0 0.0
    %528 = vmatprep.subr.mxu0 0.0
    %529 = vmatpush1.msra.mxu0 0.0
    %530 = vmatprep.subr.mxu0 0.0
    %531 = vmatpush1.msra.mxu0 0.0
    %532 = vmatprep.subr.mxu0 0.0
    %533 = vmatpush1.msra.mxu0 0.0
    %534 = vmatprep.subr.mxu0 0.0
    %535 = vmatpush1.msra.mxu0 0.0
    %536 = vmatprep.subr.mxu0 0.0
    %537 = vmatpush1.msra.mxu0 0.0
    %538 = vmatprep.subr.mxu0 0.0
    %539 = vmatpush1.msra.mxu0 0.0
    %540 = vmatprep.subr.mxu0 0.0
    %541 = vmatpush1.msra.mxu0 0.0
    %542 = vmatprep.subr.mxu0 0.0
    %543 = vmatpush1.msra.mxu0 0.0
    %544 = vmatprep.subr.mxu0 0.0
    %545 = vmatpush1.msra.mxu0 0.0
    %546 = vmatprep.subr.mxu0 0.0
    %547 = vmatpush1.msra.mxu0 0.0
    %548 = vmatprep.subr.mxu0 0.0
    %549 = vmatpush1.msra.mxu0 0.0
    %550 = vmatprep.subr.mxu0 0.0
    %551 = vmatpush1.msra.mxu0 0.0
    %552 = vmatprep.subr.mxu0 0.0
    %553 = vmatpush1.msra.mxu0 0.0
    %554 = vmatprep.subr.mxu0 0.0
    %555 = vmatpush1.msra.mxu0 0.0
    %556 = vmatprep.mubr.f32.mxu0 0.0
    %557 = vmatmul.mubr.f32.gmra.mrb[0].mxu0 %v490
    %v558 = vpop.f32.mrb[0].mxu0
    %v559 = vadd.f32 0.0, %v558
    %v560 = vpop.f32.mrb[0].mxu0
    %561 = vdwg.mxu0
    %v562 = vadd.f32 %v218, %v559
    %v563 = vxor.u32 %v562, 2147483648
    %v564 = vmul.f32 %v563, 1.442695
    %v565 = vpow.pop %v564
    %v566 = vadd.f32 %v565, 1.0
    %v567 = vrcp.pop %v566
    %v568 = vmul.f32 1.0, %v567
    %s569 = scalar_lea.vmem [#allocation5], 32
    %v570 = vld [vmem:[%s569] sm:$0xff]
    %v571 = vld [vmem:[%s569 + $0x8] sm:$0xff]
    %v572 = vld [vmem:[%s569 + $0x10] sm:$0xff]
    %v573 = vld [vmem:[%s569 + $0x18] sm:$0xff]
    %574 = vmatprep.subr.mxu0 0.0
    %575 = vmatpush1.msra.mxu0 %v570
    %576 = vmatprep.subr.mxu0 0.0
    %577 = vmatpush1.msra.mxu0 %v571
    %578 = vmatprep.subr.mxu0 0.0
    %579 = vmatpush1.msra.mxu0 %v572
    %580 = vmatprep.subr.mxu0 0.0
    %581 = vmatpush1.msra.mxu0 %v573
    %582 = vmatprep.subr.mxu0 0.0
    %583 = vmatpush1.msra.mxu0 0.0
    %584 = vmatprep.subr.mxu0 0.0
    %585 = vmatpush1.msra.mxu0 0.0
    %586 = vmatprep.subr.mxu0 0.0
    %587 = vmatpush1.msra.mxu0 0.0
    %588 = vmatprep.subr.mxu0 0.0
    %589 = vmatpush1.msra.mxu0 0.0
    %590 = vmatprep.subr.mxu0 0.0
    %591 = vmatpush1.msra.mxu0 0.0
    %592 = vmatprep.subr.mxu0 0.0
    %593 = vmatpush1.msra.mxu0 0.0
    %594 = vmatprep.subr.mxu0 0.0
    %595 = vmatpush1.msra.mxu0 0.0
    %596 = vmatprep.subr.mxu0 0.0
    %597 = vmatpush1.msra.mxu0 0.0
    %598 = vmatprep.subr.mxu0 0.0
    %599 = vmatpush1.msra.mxu0 0.0
    %600 = vmatprep.subr.mxu0 0.0
    %601 = vmatpush1.msra.mxu0 0.0
    %602 = vmatprep.subr.mxu0 0.0
    %603 = vmatpush1.msra.mxu0 0.0
    %604 = vmatprep.subr.mxu0 0.0
    %605 = vmatpush1.msra.mxu0 0.0
    %606 = vmatprep.subr.mxu0 0.0
    %607 = vmatpush1.msra.mxu0 0.0
    %608 = vmatprep.subr.mxu0 0.0
    %609 = vmatpush1.msra.mxu0 0.0
    %610 = vmatprep.subr.mxu0 0.0
    %611 = vmatpush1.msra.mxu0 0.0
    %612 = vmatprep.subr.mxu0 0.0
    %613 = vmatpush1.msra.mxu0 0.0
    %614 = vmatprep.subr.mxu0 0.0
    %615 = vmatpush1.msra.mxu0 0.0
    %616 = vmatprep.subr.mxu0 0.0
    %617 = vmatpush1.msra.mxu0 0.0
    %618 = vmatprep.subr.mxu0 0.0
    %619 = vmatpush1.msra.mxu0 0.0
    %620 = vmatprep.subr.mxu0 0.0
    %621 = vmatpush1.msra.mxu0 0.0
    %622 = vmatprep.subr.mxu0 0.0
    %623 = vmatpush1.msra.mxu0 0.0
    %624 = vmatprep.subr.mxu0 0.0
    %625 = vmatpush1.msra.mxu0 0.0
    %626 = vmatprep.subr.mxu0 0.0
    %627 = vmatpush1.msra.mxu0 0.0
    %628 = vmatprep.subr.mxu0 0.0
    %629 = vmatpush1.msra.mxu0 0.0
    %630 = vmatprep.subr.mxu0 0.0
    %631 = vmatpush1.msra.mxu0 0.0
    %632 = vmatprep.subr.mxu0 0.0
    %633 = vmatpush1.msra.mxu0 0.0
    %634 = vmatprep.subr.mxu0 0.0
    %635 = vmatpush1.msra.mxu0 0.0
    %636 = vmatprep.subr.mxu0 0.0
    %637 = vmatpush1.msra.mxu0 0.0
    %638 = vmatprep.mubr.f32.mxu0 0.0
    %639 = vmatmul.mubr.f32.gmra.mrb[0].mxu0 %v490
    %v640 = vpop.f32.mrb[0].mxu0
    %v641 = vadd.f32 0.0, %v640
    %v642 = vpop.f32.mrb[0].mxu0
    %643 = vdwg.mxu0
    %v644 = vadd.f32 %v304, %v641
    %v645 = vxor.u32 %v644, 2147483648
    %v646 = vmul.f32 %v645, 1.442695
    %v647 = vpow.pop %v646
    %v648 = vadd.f32 %v647, 1.0
    %v649 = vrcp.pop %v648
    %v650 = vmul.f32 1.0, %v649
    %s651 = scalar_lea.vmem [#allocation5], 64
    %v652 = vld [vmem:[%s651] sm:$0xff]
    %v653 = vld [vmem:[%s651 + $0x8] sm:$0xff]
    %v654 = vld [vmem:[%s651 + $0x10] sm:$0xff]
    %v655 = vld [vmem:[%s651 + $0x18] sm:$0xff]
    %656 = vmatprep.subr.mxu0 0.0
    %657 = vmatpush1.msra.mxu0 %v652
    %658 = vmatprep.subr.mxu0 0.0
    %659 = vmatpush1.msra.mxu0 %v653
    %660 = vmatprep.subr.mxu0 0.0
    %661 = vmatpush1.msra.mxu0 %v654
    %662 = vmatprep.subr.mxu0 0.0
    %663 = vmatpush1.msra.mxu0 %v655
    %664 = vmatprep.subr.mxu0 0.0
    %665 = vmatpush1.msra.mxu0 0.0
    %666 = vmatprep.subr.mxu0 0.0
    %667 = vmatpush1.msra.mxu0 0.0
    %668 = vmatprep.subr.mxu0 0.0
    %669 = vmatpush1.msra.mxu0 0.0
    %670 = vmatprep.subr.mxu0 0.0
    %671 = vmatpush1.msra.mxu0 0.0
    %672 = vmatprep.subr.mxu0 0.0
    %673 = vmatpush1.msra.mxu0 0.0
    %674 = vmatprep.subr.mxu0 0.0
    %675 = vmatpush1.msra.mxu0 0.0
    %676 = vmatprep.subr.mxu0 0.0
    %677 = vmatpush1.msra.mxu0 0.0
    %678 = vmatprep.subr.mxu0 0.0
    %679 = vmatpush1.msra.mxu0 0.0
    %680 = vmatprep.subr.mxu0 0.0
    %681 = vmatpush1.msra.mxu0 0.0
    %682 = vmatprep.subr.mxu0 0.0
    %683 = vmatpush1.msra.mxu0 0.0
    %684 = vmatprep.subr.mxu0 0.0
    %685 = vmatpush1.msra.mxu0 0.0
    %686 = vmatprep.subr.mxu0 0.0
    %687 = vmatpush1.msra.mxu0 0.0
    %688 = vmatprep.subr.mxu0 0.0
    %689 = vmatpush1.msra.mxu0 0.0
    %690 = vmatprep.subr.mxu0 0.0
    %691 = vmatpush1.msra.mxu0 0.0
    %692 = vmatprep.subr.mxu0 0.0
    %693 = vmatpush1.msra.mxu0 0.0
    %694 = vmatprep.subr.mxu0 0.0
    %695 = vmatpush1.msra.mxu0 0.0
    %696 = vmatprep.subr.mxu0 0.0
    %697 = vmatpush1.msra.mxu0 0.0
    %698 = vmatprep.subr.mxu0 0.0
    %699 = vmatpush1.msra.mxu0 0.0
    %700 = vmatprep.subr.mxu0 0.0
    %701 = vmatpush1.msra.mxu0 0.0
    %702 = vmatprep.subr.mxu0 0.0
    %703 = vmatpush1.msra.mxu0 0.0
    %704 = vmatprep.subr.mxu0 0.0
    %705 = vmatpush1.msra.mxu0 0.0
    %706 = vmatprep.subr.mxu0 0.0
    %707 = vmatpush1.msra.mxu0 0.0
    %708 = vmatprep.subr.mxu0 0.0
    %709 = vmatpush1.msra.mxu0 0.0
    %710 = vmatprep.subr.mxu0 0.0
    %711 = vmatpush1.msra.mxu0 0.0
    %712 = vmatprep.subr.mxu0 0.0
    %713 = vmatpush1.msra.mxu0 0.0
    %714 = vmatprep.subr.mxu0 0.0
    %715 = vmatpush1.msra.mxu0 0.0
    %716 = vmatprep.subr.mxu0 0.0
    %717 = vmatpush1.msra.mxu0 0.0
    %718 = vmatprep.subr.mxu0 0.0
    %719 = vmatpush1.msra.mxu0 0.0
    %720 = vmatprep.mubr.f32.mxu0 0.0
    %721 = vmatmul.mubr.f32.gmra.mrb[0].mxu0 %v490
    %v722 = vpop.f32.mrb[0].mxu0
    %v723 = vadd.f32 0.0, %v722
    %v724 = vpop.f32.mrb[0].mxu0
    %725 = vdwg.mxu0
    %v726 = vadd.f32 %v390, %v723
    %v727 = vtanh.pop %v726
    %s728 = scalar_lea.vmem [#allocation5], 96
    %v729 = vld [vmem:[%s728] sm:$0xff]
    %v730 = vld [vmem:[%s728 + $0x8] sm:$0xff]
    %v731 = vld [vmem:[%s728 + $0x10] sm:$0xff]
    %v732 = vld [vmem:[%s728 + $0x18] sm:$0xff]
    %733 = vmatprep.subr.mxu0 0.0
    %734 = vmatpush1.msra.mxu0 %v729
    %735 = vmatprep.subr.mxu0 0.0
    %736 = vmatpush1.msra.mxu0 %v730
    %737 = vmatprep.subr.mxu0 0.0
    %738 = vmatpush1.msra.mxu0 %v731
    %739 = vmatprep.subr.mxu0 0.0
    %740 = vmatpush1.msra.mxu0 %v732
    %741 = vmatprep.subr.mxu0 0.0
    %742 = vmatpush1.msra.mxu0 0.0
    %743 = vmatprep.subr.mxu0 0.0
    %744 = vmatpush1.msra.mxu0 0.0
    %745 = vmatprep.subr.mxu0 0.0
    %746 = vmatpush1.msra.mxu0 0.0
    %747 = vmatprep.subr.mxu0 0.0
    %748 = vmatpush1.msra.mxu0 0.0
    %749 = vmatprep.subr.mxu0 0.0
    %750 = vmatpush1.msra.mxu0 0.0
    %751 = vmatprep.subr.mxu0 0.0
    %752 = vmatpush1.msra.mxu0 0.0
    %753 = vmatprep.subr.mxu0 0.0
    %754 = vmatpush1.msra.mxu0 0.0
    %755 = vmatprep.subr.mxu0 0.0
    %756 = vmatpush1.msra.mxu0 0.0
    %757 = vmatprep.subr.mxu0 0.0
    %758 = vmatpush1.msra.mxu0 0.0
    %759 = vmatprep.subr.mxu0 0.0
    %760 = vmatpush1.msra.mxu0 0.0
    %761 = vmatprep.subr.mxu0 0.0
    %762 = vmatpush1.msra.mxu0 0.0
    %763 = vmatprep.subr.mxu0 0.0
    %764 = vmatpush1.msra.mxu0 0.0
    %765 = vmatprep.subr.mxu0 0.0
    %766 = vmatpush1.msra.mxu0 0.0
    %767 = vmatprep.subr.mxu0 0.0
    %768 = vmatpush1.msra.mxu0 0.0
    %769 = vmatprep.subr.mxu0 0.0
    %770 = vmatpush1.msra.mxu0 0.0
    %771 = vmatprep.subr.mxu0 0.0
    %772 = vmatpush1.msra.mxu0 0.0
    %773 = vmatprep.subr.mxu0 0.0
    %774 = vmatpush1.msra.mxu0 0.0
    %775 = vmatprep.subr.mxu0 0.0
    %776 = vmatpush1.msra.mxu0 0.0
    %777 = vmatprep.subr.mxu0 0.0
    %778 = vmatpush1.msra.mxu0 0.0
    %779 = vmatprep.subr.mxu0 0.0
    %780 = vmatpush1.msra.mxu0 0.0
    %781 = vmatprep.subr.mxu0 0.0
    %782 = vmatpush1.msra.mxu0 0.0
    %783 = vmatprep.subr.mxu0 0.0
    %784 = vmatpush1.msra.mxu0 0.0
    %785 = vmatprep.subr.mxu0 0.0
    %786 = vmatpush1.msra.mxu0 0.0
    %787 = vmatprep.subr.mxu0 0.0
    %788 = vmatpush1.msra.mxu0 0.0
    %789 = vmatprep.subr.mxu0 0.0
    %790 = vmatpush1.msra.mxu0 0.0
    %791 = vmatprep.subr.mxu0 0.0
    %792 = vmatpush1.msra.mxu0 0.0
    %793 = vmatprep.subr.mxu0 0.0
    %794 = vmatpush1.msra.mxu0 0.0
    %795 = vmatprep.subr.mxu0 0.0
    %796 = vmatpush1.msra.mxu0 0.0
    %797 = vmatprep.mubr.f32.mxu0 0.0
    %798 = vmatmul.mubr.f32.gmra.mrb[0].mxu0 %v490
    %v799 = vpop.f32.mrb[0].mxu0
    %v800 = vadd.f32 0.0, %v799
    %v801 = vpop.f32.mrb[0].mxu0
    %802 = vdwg.mxu0
    %v803 = vadd.f32 %v476, %v800
    %v804 = vxor.u32 %v803, 2147483648
    %v805 = vmul.f32 %v804, 1.442695
    %v806 = vpow.pop %v805
    %v807 = vadd.f32 %v806, 1.0
    %v808 = vrcp.pop %v807
    %v809 = vmul.f32 1.0, %v808
    %v810 = vmul.f32 %v650, 0.0
    %v811 = vmul.f32 %v568, %v727
    %v812 = vadd.f32 %v810, %v811
    %v813 = vtanh.pop %v812
    %v814 = vmul.f32 %v809, %v813
    %v816 = vsel %vm488, %v814, 0
    %818 = vmatprep.subr.mxu0 0.0
    %819 = vmatpush1.msra.mxu0 %v484
    %820 = vmatprep.subr.mxu0 0.0
    %821 = vmatpush1.msra.mxu0 %v485
    %822 = vmatprep.subr.mxu0 0.0
    %823 = vmatpush1.msra.mxu0 %v486
    %824 = vmatprep.subr.mxu0 0.0
    %825 = vmatpush1.msra.mxu0 %v487
    %826 = vmatprep.subr.mxu0 0.0
    %827 = vmatpush1.msra.mxu0 0.0
    %828 = vmatprep.subr.mxu0 0.0
    %829 = vmatpush1.msra.mxu0 0.0
    %830 = vmatprep.subr.mxu0 0.0
    %831 = vmatpush1.msra.mxu0 0.0
    %832 = vmatprep.subr.mxu0 0.0
    %833 = vmatpush1.msra.mxu0 0.0
    %834 = vmatprep.subr.mxu0 0.0
    %835 = vmatpush1.msra.mxu0 0.0
    %836 = vmatprep.subr.mxu0 0.0
    %837 = vmatpush1.msra.mxu0 0.0
    %838 = vmatprep.subr.mxu0 0.0
    %839 = vmatpush1.msra.mxu0 0.0
    %840 = vmatprep.subr.mxu0 0.0
    %841 = vmatpush1.msra.mxu0 0.0
    %842 = vmatprep.subr.mxu0 0.0
    %843 = vmatpush1.msra.mxu0 0.0
    %844 = vmatprep.subr.mxu0 0.0
    %845 = vmatpush1.msra.mxu0 0.0
    %846 = vmatprep.subr.mxu0 0.0
    %847 = vmatpush1.msra.mxu0 0.0
    %848 = vmatprep.subr.mxu0 0.0
    %849 = vmatpush1.msra.mxu0 0.0
    %850 = vmatprep.subr.mxu0 0.0
    %851 = vmatpush1.msra.mxu0 0.0
    %852 = vmatprep.subr.mxu0 0.0
    %853 = vmatpush1.msra.mxu0 0.0
    %854 = vmatprep.subr.mxu0 0.0
    %855 = vmatpush1.msra.mxu0 0.0
    %856 = vmatprep.subr.mxu0 0.0
    %857 = vmatpush1.msra.mxu0 0.0
    %858 = vmatprep.subr.mxu0 0.0
    %859 = vmatpush1.msra.mxu0 0.0
    %860 = vmatprep.subr.mxu0 0.0
    %861 = vmatpush1.msra.mxu0 0.0
    %862 = vmatprep.subr.mxu0 0.0
    %863 = vmatpush1.msra.mxu0 0.0
    %864 = vmatprep.subr.mxu0 0.0
    %865 = vmatpush1.msra.mxu0 0.0
    %866 = vmatprep.subr.mxu0 0.0
    %867 = vmatpush1.msra.mxu0 0.0
    %868 = vmatprep.subr.mxu0 0.0
    %869 = vmatpush1.msra.mxu0 0.0
    %870 = vmatprep.subr.mxu0 0.0
    %871 = vmatpush1.msra.mxu0 0.0
    %872 = vmatprep.subr.mxu0 0.0
    %873 = vmatpush1.msra.mxu0 0.0
    %874 = vmatprep.subr.mxu0 0.0
    %875 = vmatpush1.msra.mxu0 0.0
    %876 = vmatprep.subr.mxu0 0.0
    %877 = vmatpush1.msra.mxu0 0.0
    %878 = vmatprep.subr.mxu0 0.0
    %879 = vmatpush1.msra.mxu0 0.0
    %880 = vmatprep.subr.mxu0 0.0
    %881 = vmatpush1.msra.mxu0 0.0
    %882 = vmatprep.mubr.f32.mxu0 0.0
    %883 = vmatmul.mubr.f32.gmra.mrb[0].mxu0 %v816
    %v884 = vpop.f32.mrb[0].mxu0
    %v885 = vadd.f32 0.0, %v884
    %v886 = vpop.f32.mrb[0].mxu0
    %887 = vdwg.mxu0
    %v889 = vrot.slane %v885, 6
    %v891 = vadd.f32 %v218, %v889
    %v892 = vxor.u32 %v891, 2147483648
    %v893 = vmul.f32 %v892, 1.442695
    %v894 = vpow.pop %v893
    %v895 = vadd.f32 %v894, 1.0
    %v896 = vrcp.pop %v895
    %v897 = vmul.f32 1.0, %v896
    %898 = vmatprep.subr.mxu0 0.0
    %899 = vmatpush1.msra.mxu0 %v570
    %900 = vmatprep.subr.mxu0 0.0
    %901 = vmatpush1.msra.mxu0 %v571
    %902 = vmatprep.subr.mxu0 0.0
    %903 = vmatpush1.msra.mxu0 %v572
    %904 = vmatprep.subr.mxu0 0.0
    %905 = vmatpush1.msra.mxu0 %v573
    %906 = vmatprep.subr.mxu0 0.0
    %907 = vmatpush1.msra.mxu0 0.0
    %908 = vmatprep.subr.mxu0 0.0
    %909 = vmatpush1.msra.mxu0 0.0
    %910 = vmatprep.subr.mxu0 0.0
    %911 = vmatpush1.msra.mxu0 0.0
    %912 = vmatprep.subr.mxu0 0.0
    %913 = vmatpush1.msra.mxu0 0.0
    %914 = vmatprep.subr.mxu0 0.0
    %915 = vmatpush1.msra.mxu0 0.0
    %916 = vmatprep.subr.mxu0 0.0
    %917 = vmatpush1.msra.mxu0 0.0
    %918 = vmatprep.subr.mxu0 0.0
    %919 = vmatpush1.msra.mxu0 0.0
    %920 = vmatprep.subr.mxu0 0.0
    %921 = vmatpush1.msra.mxu0 0.0
    %922 = vmatprep.subr.mxu0 0.0
    %923 = vmatpush1.msra.mxu0 0.0
    %924 = vmatprep.subr.mxu0 0.0
    %925 = vmatpush1.msra.mxu0 0.0
    %926 = vmatprep.subr.mxu0 0.0
    %927 = vmatpush1.msra.mxu0 0.0
    %928 = vmatprep.subr.mxu0 0.0
    %929 = vmatpush1.msra.mxu0 0.0
    %930 = vmatprep.subr.mxu0 0.0
    %931 = vmatpush1.msra.mxu0 0.0
    %932 = vmatprep.subr.mxu0 0.0
    %933 = vmatpush1.msra.mxu0 0.0
    %934 = vmatprep.subr.mxu0 0.0
    %935 = vmatpush1.msra.mxu0 0.0
    %936 = vmatprep.subr.mxu0 0.0
    %937 = vmatpush1.msra.mxu0 0.0
    %938 = vmatprep.subr.mxu0 0.0
    %939 = vmatpush1.msra.mxu0 0.0
    %940 = vmatprep.subr.mxu0 0.0
    %941 = vmatpush1.msra.mxu0 0.0
    %942 = vmatprep.subr.mxu0 0.0
    %943 = vmatpush1.msra.mxu0 0.0
    %944 = vmatprep.subr.mxu0 0.0
    %945 = vmatpush1.msra.mxu0 0.0
    %946 = vmatprep.subr.mxu0 0.0
    %947 = vmatpush1.msra.mxu0 0.0
    %948 = vmatprep.subr.mxu0 0.0
    %949 = vmatpush1.msra.mxu0 0.0
    %950 = vmatprep.subr.mxu0 0.0
    %951 = vmatpush1.msra.mxu0 0.0
    %952 = vmatprep.subr.mxu0 0.0
    %953 = vmatpush1.msra.mxu0 0.0
    %954 = vmatprep.subr.mxu0 0.0
    %955 = vmatpush1.msra.mxu0 0.0
    %956 = vmatprep.subr.mxu0 0.0
    %957 = vmatpush1.msra.mxu0 0.0
    %958 = vmatprep.subr.mxu0 0.0
    %959 = vmatpush1.msra.mxu0 0.0
    %960 = vmatprep.subr.mxu0 0.0
    %961 = vmatpush1.msra.mxu0 0.0
    %962 = vmatprep.mubr.f32.mxu0 0.0
    %963 = vmatmul.mubr.f32.gmra.mrb[0].mxu0 %v816
    %v964 = vpop.f32.mrb[0].mxu0
    %v965 = vadd.f32 0.0, %v964
    %v966 = vpop.f32.mrb[0].mxu0
    %967 = vdwg.mxu0
    %v969 = vrot.slane %v965, 6
    %v971 = vadd.f32 %v304, %v969
    %v972 = vxor.u32 %v971, 2147483648
    %v973 = vmul.f32 %v972, 1.442695
    %v974 = vpow.pop %v973
    %v975 = vadd.f32 %v974, 1.0
    %v976 = vrcp.pop %v975
    %v977 = vmul.f32 1.0, %v976
    %978 = vmatprep.subr.mxu0 0.0
    %979 = vmatpush1.msra.mxu0 %v652
    %980 = vmatprep.subr.mxu0 0.0
    %981 = vmatpush1.msra.mxu0 %v653
    %982 = vmatprep.subr.mxu0 0.0
    %983 = vmatpush1.msra.mxu0 %v654
    %984 = vmatprep.subr.mxu0 0.0
    %985 = vmatpush1.msra.mxu0 %v655
    %986 = vmatprep.subr.mxu0 0.0
    %987 = vmatpush1.msra.mxu0 0.0
    %988 = vmatprep.subr.mxu0 0.0
    %989 = vmatpush1.msra.mxu0 0.0
    %990 = vmatprep.subr.mxu0 0.0
    %991 = vmatpush1.msra.mxu0 0.0
    %992 = vmatprep.subr.mxu0 0.0
    %993 = vmatpush1.msra.mxu0 0.0
    %994 = vmatprep.subr.mxu0 0.0
    %995 = vmatpush1.msra.mxu0 0.0
    %996 = vmatprep.subr.mxu0 0.0
    %997 = vmatpush1.msra.mxu0 0.0
    %998 = vmatprep.subr.mxu0 0.0
    %999 = vmatpush1.msra.mxu0 0.0
    %1000 = vmatprep.subr.mxu0 0.0
    %1001 = vmatpush1.msra.mxu0 0.0
    %1002 = vmatprep.subr.mxu0 0.0
    %1003 = vmatpush1.msra.mxu0 0.0
    %1004 = vmatprep.subr.mxu0 0.0
    %1005 = vmatpush1.msra.mxu0 0.0
    %1006 = vmatprep.subr.mxu0 0.0
    %1007 = vmatpush1.msra.mxu0 0.0
    %1008 = vmatprep.subr.mxu0 0.0
    %1009 = vmatpush1.msra.mxu0 0.0
    %1010 = vmatprep.subr.mxu0 0.0
    %1011 = vmatpush1.msra.mxu0 0.0
    %1012 = vmatprep.subr.mxu0 0.0
    %1013 = vmatpush1.msra.mxu0 0.0
    %1014 = vmatprep.subr.mxu0 0.0
    %1015 = vmatpush1.msra.mxu0 0.0
    %1016 = vmatprep.subr.mxu0 0.0
    %1017 = vmatpush1.msra.mxu0 0.0
    %1018 = vmatprep.subr.mxu0 0.0
    %1019 = vmatpush1.msra.mxu0 0.0
    %1020 = vmatprep.subr.mxu0 0.0
    %1021 = vmatpush1.msra.mxu0 0.0
    %1022 = vmatprep.subr.mxu0 0.0
    %1023 = vmatpush1.msra.mxu0 0.0
    %1024 = vmatprep.subr.mxu0 0.0
    %1025 = vmatpush1.msra.mxu0 0.0
    %1026 = vmatprep.subr.mxu0 0.0
    %1027 = vmatpush1.msra.mxu0 0.0
    %1028 = vmatprep.subr.mxu0 0.0
    %1029 = vmatpush1.msra.mxu0 0.0
    %1030 = vmatprep.subr.mxu0 0.0
    %1031 = vmatpush1.msra.mxu0 0.0
    %1032 = vmatprep.subr.mxu0 0.0
    %1033 = vmatpush1.msra.mxu0 0.0
    %1034 = vmatprep.subr.mxu0 0.0
    %1035 = vmatpush1.msra.mxu0 0.0
    %1036 = vmatprep.subr.mxu0 0.0
    %1037 = vmatpush1.msra.mxu0 0.0
    %1038 = vmatprep.subr.mxu0 0.0
    %1039 = vmatpush1.msra.mxu0 0.0
    %1040 = vmatprep.subr.mxu0 0.0
    %1041 = vmatpush1.msra.mxu0 0.0
    %1042 = vmatprep.mubr.f32.mxu0 0.0
    %1043 = vmatmul.mubr.f32.gmra.mrb[0].mxu0 %v816
    %v1044 = vpop.f32.mrb[0].mxu0
    %v1045 = vadd.f32 0.0, %v1044
    %v1046 = vpop.f32.mrb[0].mxu0
    %1047 = vdwg.mxu0
    %v1049 = vrot.slane %v1045, 6
    %v1051 = vadd.f32 %v390, %v1049
    %v1052 = vtanh.pop %v1051
    %1053 = vmatprep.subr.mxu0 0.0
    %1054 = vmatpush1.msra.mxu0 %v729
    %1055 = vmatprep.subr.mxu0 0.0
    %1056 = vmatpush1.msra.mxu0 %v730
    %1057 = vmatprep.subr.mxu0 0.0
    %1058 = vmatpush1.msra.mxu0 %v731
    %1059 = vmatprep.subr.mxu0 0.0
    %1060 = vmatpush1.msra.mxu0 %v732
    %1061 = vmatprep.subr.mxu0 0.0
    %1062 = vmatpush1.msra.mxu0 0.0
    %1063 = vmatprep.subr.mxu0 0.0
    %1064 = vmatpush1.msra.mxu0 0.0
    %1065 = vmatprep.subr.mxu0 0.0
    %1066 = vmatpush1.msra.mxu0 0.0
    %1067 = vmatprep.subr.mxu0 0.0
    %1068 = vmatpush1.msra.mxu0 0.0
    %1069 = vmatprep.subr.mxu0 0.0
    %1070 = vmatpush1.msra.mxu0 0.0
    %1071 = vmatprep.subr.mxu0 0.0
    %1072 = vmatpush1.msra.mxu0 0.0
    %1073 = vmatprep.subr.mxu0 0.0
    %1074 = vmatpush1.msra.mxu0 0.0
    %1075 = vmatprep.subr.mxu0 0.0
    %1076 = vmatpush1.msra.mxu0 0.0
    %1077 = vmatprep.subr.mxu0 0.0
    %1078 = vmatpush1.msra.mxu0 0.0
    %1079 = vmatprep.subr.mxu0 0.0
    %1080 = vmatpush1.msra.mxu0 0.0
    %1081 = vmatprep.subr.mxu0 0.0
    %1082 = vmatpush1.msra.mxu0 0.0
    %1083 = vmatprep.subr.mxu0 0.0
    %1084 = vmatpush1.msra.mxu0 0.0
    %1085 = vmatprep.subr.mxu0 0.0
    %1086 = vmatpush1.msra.mxu0 0.0
    %1087 = vmatprep.subr.mxu0 0.0
    %1088 = vmatpush1.msra.mxu0 0.0
    %1089 = vmatprep.subr.mxu0 0.0
    %1090 = vmatpush1.msra.mxu0 0.0
    %1091 = vmatprep.subr.mxu0 0.0
    %1092 = vmatpush1.msra.mxu0 0.0
    %1093 = vmatprep.subr.mxu0 0.0
    %1094 = vmatpush1.msra.mxu0 0.0
    %1095 = vmatprep.subr.mxu0 0.0
    %1096 = vmatpush1.msra.mxu0 0.0
    %1097 = vmatprep.subr.mxu0 0.0
    %1098 = vmatpush1.msra.mxu0 0.0
    %1099 = vmatprep.subr.mxu0 0.0
    %1100 = vmatpush1.msra.mxu0 0.0
    %1101 = vmatprep.subr.mxu0 0.0
    %1102 = vmatpush1.msra.mxu0 0.0
    %1103 = vmatprep.subr.mxu0 0.0
    %1104 = vmatpush1.msra.mxu0 0.0
    %1105 = vmatprep.subr.mxu0 0.0
    %1106 = vmatpush1.msra.mxu0 0.0
    %1107 = vmatprep.subr.mxu0 0.0
    %1108 = vmatpush1.msra.mxu0 0.0
    %1109 = vmatprep.subr.mxu0 0.0
    %1110 = vmatpush1.msra.mxu0 0.0
    %1111 = vmatprep.subr.mxu0 0.0
    %1112 = vmatpush1.msra.mxu0 0.0
    %1113 = vmatprep.subr.mxu0 0.0
    %1114 = vmatpush1.msra.mxu0 0.0
    %1115 = vmatprep.subr.mxu0 0.0
    %1116 = vmatpush1.msra.mxu0 0.0
    %1117 = vmatprep.mubr.f32.mxu0 0.0
    %1118 = vmatmul.mubr.f32.gmra.mrb[0].mxu0 %v816
    %v1119 = vpop.f32.mrb[0].mxu0
    %v1120 = vadd.f32 0.0, %v1119
    %v1121 = vpop.f32.mrb[0].mxu0
    %1122 = vdwg.mxu0
    %v1124 = vrot.slane %v1120, 6
    %v1126 = vadd.f32 %v476, %v1124
    %v1127 = vxor.u32 %v1126, 2147483648
    %v1128 = vmul.f32 %v1127, 1.442695
    %v1129 = vpow.pop %v1128
    %v1130 = vadd.f32 %v1129, 1.0
    %v1131 = vrcp.pop %v1130
    %v1132 = vmul.f32 1.0, %v1131
    %v1134 = vrot.slane %v812, 6
    %v1136 = vmul.f32 %v977, %v1134
    %v1137 = vmul.f32 %v897, %v1052
    %v1138 = vadd.f32 %v1136, %v1137
    %v1139 = vtanh.pop %v1138
    %v1140 = vmul.f32 %v1132, %v1139
    %v1142 = vrot.slane %v1140, 2
    %v1143 = vsel %vm488, %v1142, 0
    %1145 = vmatprep.subr.mxu0 0.0
    %1146 = vmatpush1.msra.mxu0 %v484
    %1147 = vmatprep.subr.mxu0 0.0
    %1148 = vmatpush1.msra.mxu0 %v485
    %1149 = vmatprep.subr.mxu0 0.0
    %1150 = vmatpush1.msra.mxu0 %v486
    %1151 = vmatprep.subr.mxu0 0.0
    %1152 = vmatpush1.msra.mxu0 %v487
    %1153 = vmatprep.subr.mxu0 0.0
    %1154 = vmatpush1.msra.mxu0 0.0
    %1155 = vmatprep.subr.mxu0 0.0
    %1156 = vmatpush1.msra.mxu0 0.0
    %1157 = vmatprep.subr.mxu0 0.0
    %1158 = vmatpush1.msra.mxu0 0.0
    %1159 = vmatprep.subr.mxu0 0.0
    %1160 = vmatpush1.msra.mxu0 0.0
    %1161 = vmatprep.subr.mxu0 0.0
    %1162 = vmatpush1.msra.mxu0 0.0
    %1163 = vmatprep.subr.mxu0 0.0
    %1164 = vmatpush1.msra.mxu0 0.0
    %1165 = vmatprep.subr.mxu0 0.0
    %1166 = vmatpush1.msra.mxu0 0.0
    %1167 = vmatprep.subr.mxu0 0.0
    %1168 = vmatpush1.msra.mxu0 0.0
    %1169 = vmatprep.subr.mxu0 0.0
    %1170 = vmatpush1.msra.mxu0 0.0
    %1171 = vmatprep.subr.mxu0 0.0
    %1172 = vmatpush1.msra.mxu0 0.0
    %1173 = vmatprep.subr.mxu0 0.0
    %1174 = vmatpush1.msra.mxu0 0.0
    %1175 = vmatprep.subr.mxu0 0.0
    %1176 = vmatpush1.msra.mxu0 0.0
    %1177 = vmatprep.subr.mxu0 0.0
    %1178 = vmatpush1.msra.mxu0 0.0
    %1179 = vmatprep.subr.mxu0 0.0
    %1180 = vmatpush1.msra.mxu0 0.0
    %1181 = vmatprep.subr.mxu0 0.0
    %1182 = vmatpush1.msra.mxu0 0.0
    %1183 = vmatprep.subr.mxu0 0.0
    %1184 = vmatpush1.msra.mxu0 0.0
    %1185 = vmatprep.subr.mxu0 0.0
    %1186 = vmatpush1.msra.mxu0 0.0
    %1187 = vmatprep.subr.mxu0 0.0
    %1188 = vmatpush1.msra.mxu0 0.0
    %1189 = vmatprep.subr.mxu0 0.0
    %1190 = vmatpush1.msra.mxu0 0.0
    %1191 = vmatprep.subr.mxu0 0.0
    %1192 = vmatpush1.msra.mxu0 0.0
    %1193 = vmatprep.subr.mxu0 0.0
    %1194 = vmatpush1.msra.mxu0 0.0
    %1195 = vmatprep.subr.mxu0 0.0
    %1196 = vmatpush1.msra.mxu0 0.0
    %1197 = vmatprep.subr.mxu0 0.0
    %1198 = vmatpush1.msra.mxu0 0.0
    %1199 = vmatprep.subr.mxu0 0.0
    %1200 = vmatpush1.msra.mxu0 0.0
    %1201 = vmatprep.subr.mxu0 0.0
    %1202 = vmatpush1.msra.mxu0 0.0
    %1203 = vmatprep.subr.mxu0 0.0
    %1204 = vmatpush1.msra.mxu0 0.0
    %1205 = vmatprep.subr.mxu0 0.0
    %1206 = vmatpush1.msra.mxu0 0.0
    %1207 = vmatprep.subr.mxu0 0.0
    %1208 = vmatpush1.msra.mxu0 0.0
    %1209 = vmatprep.mubr.f32.mxu0 0.0
    %1210 = vmatmul.mubr.f32.gmra.mrb[0].mxu0 %v1143
    %v1211 = vpop.f32.mrb[0].mxu0
    %v1212 = vadd.f32 0.0, %v1211
    %v1213 = vpop.f32.mrb[0].mxu0
    %1214 = vdwg.mxu0
    %v1216 = vrot.slane %v1212, 4
    %v1218 = vadd.f32 %v218, %v1216
    %v1219 = vxor.u32 %v1218, 2147483648
    %v1220 = vmul.f32 %v1219, 1.442695
    %v1221 = vpow.pop %v1220
    %v1222 = vadd.f32 %v1221, 1.0
    %v1223 = vrcp.pop %v1222
    %v1224 = vmul.f32 1.0, %v1223
    %1225 = vmatprep.subr.mxu0 0.0
    %1226 = vmatpush1.msra.mxu0 %v570
    %1227 = vmatprep.subr.mxu0 0.0
    %1228 = vmatpush1.msra.mxu0 %v571
    %1229 = vmatprep.subr.mxu0 0.0
    %1230 = vmatpush1.msra.mxu0 %v572
    %1231 = vmatprep.subr.mxu0 0.0
    %1232 = vmatpush1.msra.mxu0 %v573
    %1233 = vmatprep.subr.mxu0 0.0
    %1234 = vmatpush1.msra.mxu0 0.0
    %1235 = vmatprep.subr.mxu0 0.0
    %1236 = vmatpush1.msra.mxu0 0.0
    %1237 = vmatprep.subr.mxu0 0.0
    %1238 = vmatpush1.msra.mxu0 0.0
    %1239 = vmatprep.subr.mxu0 0.0
    %1240 = vmatpush1.msra.mxu0 0.0
    %1241 = vmatprep.subr.mxu0 0.0
    %1242 = vmatpush1.msra.mxu0 0.0
    %1243 = vmatprep.subr.mxu0 0.0
    %1244 = vmatpush1.msra.mxu0 0.0
    %1245 = vmatprep.subr.mxu0 0.0
    %1246 = vmatpush1.msra.mxu0 0.0
    %1247 = vmatprep.subr.mxu0 0.0
    %1248 = vmatpush1.msra.mxu0 0.0
    %1249 = vmatprep.subr.mxu0 0.0
    %1250 = vmatpush1.msra.mxu0 0.0
    %1251 = vmatprep.subr.mxu0 0.0
    %1252 = vmatpush1.msra.mxu0 0.0
    %1253 = vmatprep.subr.mxu0 0.0
    %1254 = vmatpush1.msra.mxu0 0.0
    %1255 = vmatprep.subr.mxu0 0.0
    %1256 = vmatpush1.msra.mxu0 0.0
    %1257 = vmatprep.subr.mxu0 0.0
    %1258 = vmatpush1.msra.mxu0 0.0
    %1259 = vmatprep.subr.mxu0 0.0
    %1260 = vmatpush1.msra.mxu0 0.0
    %1261 = vmatprep.subr.mxu0 0.0
    %1262 = vmatpush1.msra.mxu0 0.0
    %1263 = vmatprep.subr.mxu0 0.0
    %1264 = vmatpush1.msra.mxu0 0.0
    %1265 = vmatprep.subr.mxu0 0.0
    %1266 = vmatpush1.msra.mxu0 0.0
    %1267 = vmatprep.subr.mxu0 0.0
    %1268 = vmatpush1.msra.mxu0 0.0
    %1269 = vmatprep.subr.mxu0 0.0
    %1270 = vmatpush1.msra.mxu0 0.0
    %1271 = vmatprep.subr.mxu0 0.0
    %1272 = vmatpush1.msra.mxu0 0.0
    %1273 = vmatprep.subr.mxu0 0.0
    %1274 = vmatpush1.msra.mxu0 0.0
    %1275 = vmatprep.subr.mxu0 0.0
    %1276 = vmatpush1.msra.mxu0 0.0
    %1277 = vmatprep.subr.mxu0 0.0
    %1278 = vmatpush1.msra.mxu0 0.0
    %1279 = vmatprep.subr.mxu0 0.0
    %1280 = vmatpush1.msra.mxu0 0.0
    %1281 = vmatprep.subr.mxu0 0.0
    %1282 = vmatpush1.msra.mxu0 0.0
    %1283 = vmatprep.subr.mxu0 0.0
    %1284 = vmatpush1.msra.mxu0 0.0
    %1285 = vmatprep.subr.mxu0 0.0
    %1286 = vmatpush1.msra.mxu0 0.0
    %1287 = vmatprep.subr.mxu0 0.0
    %1288 = vmatpush1.msra.mxu0 0.0
    %1289 = vmatprep.mubr.f32.mxu0 0.0
    %1290 = vmatmul.mubr.f32.gmra.mrb[0].mxu0 %v1143
    %v1291 = vpop.f32.mrb[0].mxu0
    %v1292 = vadd.f32 0.0, %v1291
    %v1293 = vpop.f32.mrb[0].mxu0
    %1294 = vdwg.mxu0
    %v1296 = vrot.slane %v1292, 4
    %v1298 = vadd.f32 %v304, %v1296
    %v1299 = vxor.u32 %v1298, 2147483648
    %v1300 = vmul.f32 %v1299, 1.442695
    %v1301 = vpow.pop %v1300
    %v1302 = vadd.f32 %v1301, 1.0
    %v1303 = vrcp.pop %v1302
    %v1304 = vmul.f32 1.0, %v1303
    %1305 = vmatprep.subr.mxu0 0.0
    %1306 = vmatpush1.msra.mxu0 %v652
    %1307 = vmatprep.subr.mxu0 0.0
    %1308 = vmatpush1.msra.mxu0 %v653
    %1309 = vmatprep.subr.mxu0 0.0
    %1310 = vmatpush1.msra.mxu0 %v654
    %1311 = vmatprep.subr.mxu0 0.0
    %1312 = vmatpush1.msra.mxu0 %v655
    %1313 = vmatprep.subr.mxu0 0.0
    %1314 = vmatpush1.msra.mxu0 0.0
    %1315 = vmatprep.subr.mxu0 0.0
    %1316 = vmatpush1.msra.mxu0 0.0
    %1317 = vmatprep.subr.mxu0 0.0
    %1318 = vmatpush1.msra.mxu0 0.0
    %1319 = vmatprep.subr.mxu0 0.0
    %1320 = vmatpush1.msra.mxu0 0.0
    %1321 = vmatprep.subr.mxu0 0.0
    %1322 = vmatpush1.msra.mxu0 0.0
    %1323 = vmatprep.subr.mxu0 0.0
    %1324 = vmatpush1.msra.mxu0 0.0
    %1325 = vmatprep.subr.mxu0 0.0
    %1326 = vmatpush1.msra.mxu0 0.0
    %1327 = vmatprep.subr.mxu0 0.0
    %1328 = vmatpush1.msra.mxu0 0.0
    %1329 = vmatprep.subr.mxu0 0.0
    %1330 = vmatpush1.msra.mxu0 0.0
    %1331 = vmatprep.subr.mxu0 0.0
    %1332 = vmatpush1.msra.mxu0 0.0
    %1333 = vmatprep.subr.mxu0 0.0
    %1334 = vmatpush1.msra.mxu0 0.0
    %1335 = vmatprep.subr.mxu0 0.0
    %1336 = vmatpush1.msra.mxu0 0.0
    %1337 = vmatprep.subr.mxu0 0.0
    %1338 = vmatpush1.msra.mxu0 0.0
    %1339 = vmatprep.subr.mxu0 0.0
    %1340 = vmatpush1.msra.mxu0 0.0
    %1341 = vmatprep.subr.mxu0 0.0
    %1342 = vmatpush1.msra.mxu0 0.0
    %1343 = vmatprep.subr.mxu0 0.0
    %1344 = vmatpush1.msra.mxu0 0.0
    %1345 = vmatprep.subr.mxu0 0.0
    %1346 = vmatpush1.msra.mxu0 0.0
    %1347 = vmatprep.subr.mxu0 0.0
    %1348 = vmatpush1.msra.mxu0 0.0
    %1349 = vmatprep.subr.mxu0 0.0
    %1350 = vmatpush1.msra.mxu0 0.0
    %1351 = vmatprep.subr.mxu0 0.0
    %1352 = vmatpush1.msra.mxu0 0.0
    %1353 = vmatprep.subr.mxu0 0.0
    %1354 = vmatpush1.msra.mxu0 0.0
    %1355 = vmatprep.subr.mxu0 0.0
    %1356 = vmatpush1.msra.mxu0 0.0
    %1357 = vmatprep.subr.mxu0 0.0
    %1358 = vmatpush1.msra.mxu0 0.0
    %1359 = vmatprep.subr.mxu0 0.0
    %1360 = vmatpush1.msra.mxu0 0.0
    %1361 = vmatprep.subr.mxu0 0.0
    %1362 = vmatpush1.msra.mxu0 0.0
    %1363 = vmatprep.subr.mxu0 0.0
    %1364 = vmatpush1.msra.mxu0 0.0
    %1365 = vmatprep.subr.mxu0 0.0
    %1366 = vmatpush1.msra.mxu0 0.0
    %1367 = vmatprep.subr.mxu0 0.0
    %1368 = vmatpush1.msra.mxu0 0.0
    %1369 = vmatprep.mubr.f32.mxu0 0.0
    %1370 = vmatmul.mubr.f32.gmra.mrb[0].mxu0 %v1143
    %v1371 = vpop.f32.mrb[0].mxu0
    %v1372 = vadd.f32 0.0, %v1371
    %v1373 = vpop.f32.mrb[0].mxu0
    %1374 = vdwg.mxu0
    %v1376 = vrot.slane %v1372, 4
    %v1378 = vadd.f32 %v390, %v1376
    %v1379 = vtanh.pop %v1378
    %1380 = vmatprep.subr.mxu0 0.0
    %1381 = vmatpush1.msra.mxu0 %v729
    %1382 = vmatprep.subr.mxu0 0.0
    %1383 = vmatpush1.msra.mxu0 %v730
    %1384 = vmatprep.subr.mxu0 0.0
    %1385 = vmatpush1.msra.mxu0 %v731
    %1386 = vmatprep.subr.mxu0 0.0
    %1387 = vmatpush1.msra.mxu0 %v732
    %1388 = vmatprep.subr.mxu0 0.0
    %1389 = vmatpush1.msra.mxu0 0.0
    %1390 = vmatprep.subr.mxu0 0.0
    %1391 = vmatpush1.msra.mxu0 0.0
    %1392 = vmatprep.subr.mxu0 0.0
    %1393 = vmatpush1.msra.mxu0 0.0
    %1394 = vmatprep.subr.mxu0 0.0
    %1395 = vmatpush1.msra.mxu0 0.0
    %1396 = vmatprep.subr.mxu0 0.0
    %1397 = vmatpush1.msra.mxu0 0.0
    %1398 = vmatprep.subr.mxu0 0.0
    %1399 = vmatpush1.msra.mxu0 0.0
    %1400 = vmatprep.subr.mxu0 0.0
    %1401 = vmatpush1.msra.mxu0 0.0
    %1402 = vmatprep.subr.mxu0 0.0
    %1403 = vmatpush1.msra.mxu0 0.0
    %1404 = vmatprep.subr.mxu0 0.0
    %1405 = vmatpush1.msra.mxu0 0.0
    %1406 = vmatprep.subr.mxu0 0.0
    %1407 = vmatpush1.msra.mxu0 0.0
    %1408 = vmatprep.subr.mxu0 0.0
    %1409 = vmatpush1.msra.mxu0 0.0
    %1410 = vmatprep.subr.mxu0 0.0
    %1411 = vmatpush1.msra.mxu0 0.0
    %1412 = vmatprep.subr.mxu0 0.0
    %1413 = vmatpush1.msra.mxu0 0.0
    %1414 = vmatprep.subr.mxu0 0.0
    %1415 = vmatpush1.msra.mxu0 0.0
    %1416 = vmatprep.subr.mxu0 0.0
    %1417 = vmatpush1.msra.mxu0 0.0
    %1418 = vmatprep.subr.mxu0 0.0
    %1419 = vmatpush1.msra.mxu0 0.0
    %1420 = vmatprep.subr.mxu0 0.0
    %1421 = vmatpush1.msra.mxu0 0.0
    %1422 = vmatprep.subr.mxu0 0.0
    %1423 = vmatpush1.msra.mxu0 0.0
    %1424 = vmatprep.subr.mxu0 0.0
    %1425 = vmatpush1.msra.mxu0 0.0
    %1426 = vmatprep.subr.mxu0 0.0
    %1427 = vmatpush1.msra.mxu0 0.0
    %1428 = vmatprep.subr.mxu0 0.0
    %1429 = vmatpush1.msra.mxu0 0.0
    %1430 = vmatprep.subr.mxu0 0.0
    %1431 = vmatpush1.msra.mxu0 0.0
    %1432 = vmatprep.subr.mxu0 0.0
    %1433 = vmatpush1.msra.mxu0 0.0
    %1434 = vmatprep.subr.mxu0 0.0
    %1435 = vmatpush1.msra.mxu0 0.0
    %1436 = vmatprep.subr.mxu0 0.0
    %1437 = vmatpush1.msra.mxu0 0.0
    %1438 = vmatprep.subr.mxu0 0.0
    %1439 = vmatpush1.msra.mxu0 0.0
    %1440 = vmatprep.subr.mxu0 0.0
    %1441 = vmatpush1.msra.mxu0 0.0
    %1442 = vmatprep.subr.mxu0 0.0
    %1443 = vmatpush1.msra.mxu0 0.0
    %1444 = vmatprep.mubr.f32.mxu0 0.0
    %1445 = vmatmul.mubr.f32.gmra.mrb[0].mxu0 %v1143
    %v1446 = vpop.f32.mrb[0].mxu0
    %v1447 = vadd.f32 0.0, %v1446
    %v1448 = vpop.f32.mrb[0].mxu0
    %1449 = vdwg.mxu0
    %v1451 = vrot.slane %v1447, 4
    %v1453 = vadd.f32 %v476, %v1451
    %v1454 = vxor.u32 %v1453, 2147483648
    %v1455 = vmul.f32 %v1454, 1.442695
    %v1456 = vpow.pop %v1455
    %v1457 = vadd.f32 %v1456, 1.0
    %v1458 = vrcp.pop %v1457
    %v1459 = vmul.f32 1.0, %v1458
    %v1461 = vrot.slane %v1138, 6
    %v1463 = vmul.f32 %v1304, %v1461
    %v1464 = vmul.f32 %v1224, %v1379
    %v1465 = vadd.f32 %v1463, %v1464
    %v1466 = vtanh.pop %v1465
    %v1467 = vmul.f32 %v1459, %v1466
    %v1469 = vrot.slane %v1467, 4
    %v1470 = vsel %vm488, %v1469, 0
    %1472 = vmatprep.subr.mxu0 0.0
    %1473 = vmatpush1.msra.mxu0 %v484
    %1474 = vmatprep.subr.mxu0 0.0
    %1475 = vmatpush1.msra.mxu0 %v485
    %1476 = vmatprep.subr.mxu0 0.0
    %1477 = vmatpush1.msra.mxu0 %v486
    %1478 = vmatprep.subr.mxu0 0.0
    %1479 = vmatpush1.msra.mxu0 %v487
    %1480 = vmatprep.subr.mxu0 0.0
    %1481 = vmatpush1.msra.mxu0 0.0
    %1482 = vmatprep.subr.mxu0 0.0
    %1483 = vmatpush1.msra.mxu0 0.0
    %1484 = vmatprep.subr.mxu0 0.0
    %1485 = vmatpush1.msra.mxu0 0.0
    %1486 = vmatprep.subr.mxu0 0.0
    %1487 = vmatpush1.msra.mxu0 0.0
    %1488 = vmatprep.subr.mxu0 0.0
    %1489 = vmatpush1.msra.mxu0 0.0
    %1490 = vmatprep.subr.mxu0 0.0
    %1491 = vmatpush1.msra.mxu0 0.0
    %1492 = vmatprep.subr.mxu0 0.0
    %1493 = vmatpush1.msra.mxu0 0.0
    %1494 = vmatprep.subr.mxu0 0.0
    %1495 = vmatpush1.msra.mxu0 0.0
    %1496 = vmatprep.subr.mxu0 0.0
    %1497 = vmatpush1.msra.mxu0 0.0
    %1498 = vmatprep.subr.mxu0 0.0
    %1499 = vmatpush1.msra.mxu0 0.0
    %1500 = vmatprep.subr.mxu0 0.0
    %1501 = vmatpush1.msra.mxu0 0.0
    %1502 = vmatprep.subr.mxu0 0.0
    %1503 = vmatpush1.msra.mxu0 0.0
    %1504 = vmatprep.subr.mxu0 0.0
    %1505 = vmatpush1.msra.mxu0 0.0
    %1506 = vmatprep.subr.mxu0 0.0
    %1507 = vmatpush1.msra.mxu0 0.0
    %1508 = vmatprep.subr.mxu0 0.0
    %1509 = vmatpush1.msra.mxu0 0.0
    %1510 = vmatprep.subr.mxu0 0.0
    %1511 = vmatpush1.msra.mxu0 0.0
    %1512 = vmatprep.subr.mxu0 0.0
    %1513 = vmatpush1.msra.mxu0 0.0
    %1514 = vmatprep.subr.mxu0 0.0
    %1515 = vmatpush1.msra.mxu0 0.0
    %1516 = vmatprep.subr.mxu0 0.0
    %1517 = vmatpush1.msra.mxu0 0.0
    %1518 = vmatprep.subr.mxu0 0.0
    %1519 = vmatpush1.msra.mxu0 0.0
    %1520 = vmatprep.subr.mxu0 0.0
    %1521 = vmatpush1.msra.mxu0 0.0
    %1522 = vmatprep.subr.mxu0 0.0
    %1523 = vmatpush1.msra.mxu0 0.0
    %1524 = vmatprep.subr.mxu0 0.0
    %1525 = vmatpush1.msra.mxu0 0.0
    %1526 = vmatprep.subr.mxu0 0.0
    %1527 = vmatpush1.msra.mxu0 0.0
    %1528 = vmatprep.subr.mxu0 0.0
    %1529 = vmatpush1.msra.mxu0 0.0
    %1530 = vmatprep.subr.mxu0 0.0
    %1531 = vmatpush1.msra.mxu0 0.0
    %1532 = vmatprep.subr.mxu0 0.0
    %1533 = vmatpush1.msra.mxu0 0.0
    %1534 = vmatprep.subr.mxu0 0.0
    %1535 = vmatpush1.msra.mxu0 0.0
    %1536 = vmatprep.mubr.f32.mxu0 0.0
    %1537 = vmatmul.mubr.f32.gmra.mrb[0].mxu0 %v1470
    %v1538 = vpop.f32.mrb[0].mxu0
    %v1539 = vadd.f32 0.0, %v1538
    %v1540 = vpop.f32.mrb[0].mxu0
    %1541 = vdwg.mxu0
    %v1543 = vrot.slane %v1539, 2
    %v1545 = vadd.f32 %v218, %v1543
    %v1546 = vxor.u32 %v1545, 2147483648
    %v1547 = vmul.f32 %v1546, 1.442695
    %v1548 = vpow.pop %v1547
    %v1549 = vadd.f32 %v1548, 1.0
    %v1550 = vrcp.pop %v1549
    %v1551 = vmul.f32 1.0, %v1550
    %1552 = vmatprep.subr.mxu0 0.0
    %1553 = vmatpush1.msra.mxu0 %v570
    %1554 = vmatprep.subr.mxu0 0.0
    %1555 = vmatpush1.msra.mxu0 %v571
    %1556 = vmatprep.subr.mxu0 0.0
    %1557 = vmatpush1.msra.mxu0 %v572
    %1558 = vmatprep.subr.mxu0 0.0
    %1559 = vmatpush1.msra.mxu0 %v573
    %1560 = vmatprep.subr.mxu0 0.0
    %1561 = vmatpush1.msra.mxu0 0.0
    %1562 = vmatprep.subr.mxu0 0.0
    %1563 = vmatpush1.msra.mxu0 0.0
    %1564 = vmatprep.subr.mxu0 0.0
    %1565 = vmatpush1.msra.mxu0 0.0
    %1566 = vmatprep.subr.mxu0 0.0
    %1567 = vmatpush1.msra.mxu0 0.0
    %1568 = vmatprep.subr.mxu0 0.0
    %1569 = vmatpush1.msra.mxu0 0.0
    %1570 = vmatprep.subr.mxu0 0.0
    %1571 = vmatpush1.msra.mxu0 0.0
    %1572 = vmatprep.subr.mxu0 0.0
    %1573 = vmatpush1.msra.mxu0 0.0
    %1574 = vmatprep.subr.mxu0 0.0
    %1575 = vmatpush1.msra.mxu0 0.0
    %1576 = vmatprep.subr.mxu0 0.0
    %1577 = vmatpush1.msra.mxu0 0.0
    %1578 = vmatprep.subr.mxu0 0.0
    %1579 = vmatpush1.msra.mxu0 0.0
    %1580 = vmatprep.subr.mxu0 0.0
    %1581 = vmatpush1.msra.mxu0 0.0
    %1582 = vmatprep.subr.mxu0 0.0
    %1583 = vmatpush1.msra.mxu0 0.0
    %1584 = vmatprep.subr.mxu0 0.0
    %1585 = vmatpush1.msra.mxu0 0.0
    %1586 = vmatprep.subr.mxu0 0.0
    %1587 = vmatpush1.msra.mxu0 0.0
    %1588 = vmatprep.subr.mxu0 0.0
    %1589 = vmatpush1.msra.mxu0 0.0
    %1590 = vmatprep.subr.mxu0 0.0
    %1591 = vmatpush1.msra.mxu0 0.0
    %1592 = vmatprep.subr.mxu0 0.0
    %1593 = vmatpush1.msra.mxu0 0.0
    %1594 = vmatprep.subr.mxu0 0.0
    %1595 = vmatpush1.msra.mxu0 0.0
    %1596 = vmatprep.subr.mxu0 0.0
    %1597 = vmatpush1.msra.mxu0 0.0
    %1598 = vmatprep.subr.mxu0 0.0
    %1599 = vmatpush1.msra.mxu0 0.0
    %1600 = vmatprep.subr.mxu0 0.0
    %1601 = vmatpush1.msra.mxu0 0.0
    %1602 = vmatprep.subr.mxu0 0.0
    %1603 = vmatpush1.msra.mxu0 0.0
    %1604 = vmatprep.subr.mxu0 0.0
    %1605 = vmatpush1.msra.mxu0 0.0
    %1606 = vmatprep.subr.mxu0 0.0
    %1607 = vmatpush1.msra.mxu0 0.0
    %1608 = vmatprep.subr.mxu0 0.0
    %1609 = vmatpush1.msra.mxu0 0.0
    %1610 = vmatprep.subr.mxu0 0.0
    %1611 = vmatpush1.msra.mxu0 0.0
    %1612 = vmatprep.subr.mxu0 0.0
    %1613 = vmatpush1.msra.mxu0 0.0
    %1614 = vmatprep.subr.mxu0 0.0
    %1615 = vmatpush1.msra.mxu0 0.0
    %1616 = vmatprep.mubr.f32.mxu0 0.0
    %1617 = vmatmul.mubr.f32.gmra.mrb[0].mxu0 %v1470
    %v1618 = vpop.f32.mrb[0].mxu0
    %v1619 = vadd.f32 0.0, %v1618
    %v1620 = vpop.f32.mrb[0].mxu0
    %1621 = vdwg.mxu0
    %v1623 = vrot.slane %v1619, 2
    %v1625 = vadd.f32 %v304, %v1623
    %v1626 = vxor.u32 %v1625, 2147483648
    %v1627 = vmul.f32 %v1626, 1.442695
    %v1628 = vpow.pop %v1627
    %v1629 = vadd.f32 %v1628, 1.0
    %v1630 = vrcp.pop %v1629
    %v1631 = vmul.f32 1.0, %v1630
    %1632 = vmatprep.subr.mxu0 0.0
    %1633 = vmatpush1.msra.mxu0 %v652
    %1634 = vmatprep.subr.mxu0 0.0
    %1635 = vmatpush1.msra.mxu0 %v653
    %1636 = vmatprep.subr.mxu0 0.0
    %1637 = vmatpush1.msra.mxu0 %v654
    %1638 = vmatprep.subr.mxu0 0.0
    %1639 = vmatpush1.msra.mxu0 %v655
    %1640 = vmatprep.subr.mxu0 0.0
    %1641 = vmatpush1.msra.mxu0 0.0
    %1642 = vmatprep.subr.mxu0 0.0
    %1643 = vmatpush1.msra.mxu0 0.0
    %1644 = vmatprep.subr.mxu0 0.0
    %1645 = vmatpush1.msra.mxu0 0.0
    %1646 = vmatprep.subr.mxu0 0.0
    %1647 = vmatpush1.msra.mxu0 0.0
    %1648 = vmatprep.subr.mxu0 0.0
    %1649 = vmatpush1.msra.mxu0 0.0
    %1650 = vmatprep.subr.mxu0 0.0
    %1651 = vmatpush1.msra.mxu0 0.0
    %1652 = vmatprep.subr.mxu0 0.0
    %1653 = vmatpush1.msra.mxu0 0.0
    %1654 = vmatprep.subr.mxu0 0.0
    %1655 = vmatpush1.msra.mxu0 0.0
    %1656 = vmatprep.subr.mxu0 0.0
    %1657 = vmatpush1.msra.mxu0 0.0
    %1658 = vmatprep.subr.mxu0 0.0
    %1659 = vmatpush1.msra.mxu0 0.0
    %1660 = vmatprep.subr.mxu0 0.0
    %1661 = vmatpush1.msra.mxu0 0.0
    %1662 = vmatprep.subr.mxu0 0.0
    %1663 = vmatpush1.msra.mxu0 0.0
    %1664 = vmatprep.subr.mxu0 0.0
    %1665 = vmatpush1.msra.mxu0 0.0
    %1666 = vmatprep.subr.mxu0 0.0
    %1667 = vmatpush1.msra.mxu0 0.0
    %1668 = vmatprep.subr.mxu0 0.0
    %1669 = vmatpush1.msra.mxu0 0.0
    %1670 = vmatprep.subr.mxu0 0.0
    %1671 = vmatpush1.msra.mxu0 0.0
    %1672 = vmatprep.subr.mxu0 0.0
    %1673 = vmatpush1.msra.mxu0 0.0
    %1674 = vmatprep.subr.mxu0 0.0
    %1675 = vmatpush1.msra.mxu0 0.0
    %1676 = vmatprep.subr.mxu0 0.0
    %1677 = vmatpush1.msra.mxu0 0.0
    %1678 = vmatprep.subr.mxu0 0.0
    %1679 = vmatpush1.msra.mxu0 0.0
    %1680 = vmatprep.subr.mxu0 0.0
    %1681 = vmatpush1.msra.mxu0 0.0
    %1682 = vmatprep.subr.mxu0 0.0
    %1683 = vmatpush1.msra.mxu0 0.0
    %1684 = vmatprep.subr.mxu0 0.0
    %1685 = vmatpush1.msra.mxu0 0.0
    %1686 = vmatprep.subr.mxu0 0.0
    %1687 = vmatpush1.msra.mxu0 0.0
    %1688 = vmatprep.subr.mxu0 0.0
    %1689 = vmatpush1.msra.mxu0 0.0
    %1690 = vmatprep.subr.mxu0 0.0
    %1691 = vmatpush1.msra.mxu0 0.0
    %1692 = vmatprep.subr.mxu0 0.0
    %1693 = vmatpush1.msra.mxu0 0.0
    %1694 = vmatprep.subr.mxu0 0.0
    %1695 = vmatpush1.msra.mxu0 0.0
    %1696 = vmatprep.mubr.f32.mxu0 0.0
    %1697 = vmatmul.mubr.f32.gmra.mrb[0].mxu0 %v1470
    %v1698 = vpop.f32.mrb[0].mxu0
    %v1699 = vadd.f32 0.0, %v1698
    %v1700 = vpop.f32.mrb[0].mxu0
    %1701 = vdwg.mxu0
    %v1703 = vrot.slane %v1699, 2
    %v1705 = vadd.f32 %v390, %v1703
    %v1706 = vtanh.pop %v1705
    %1707 = vmatprep.subr.mxu0 0.0
    %1708 = vmatpush1.msra.mxu0 %v729
    %1709 = vmatprep.subr.mxu0 0.0
    %1710 = vmatpush1.msra.mxu0 %v730
    %1711 = vmatprep.subr.mxu0 0.0
    %1712 = vmatpush1.msra.mxu0 %v731
    %1713 = vmatprep.subr.mxu0 0.0
    %1714 = vmatpush1.msra.mxu0 %v732
    %1715 = vmatprep.subr.mxu0 0.0
    %1716 = vmatpush1.msra.mxu0 0.0
    %1717 = vmatprep.subr.mxu0 0.0
    %1718 = vmatpush1.msra.mxu0 0.0
    %1719 = vmatprep.subr.mxu0 0.0
    %1720 = vmatpush1.msra.mxu0 0.0
    %1721 = vmatprep.subr.mxu0 0.0
    %1722 = vmatpush1.msra.mxu0 0.0
    %1723 = vmatprep.subr.mxu0 0.0
    %1724 = vmatpush1.msra.mxu0 0.0
    %1725 = vmatprep.subr.mxu0 0.0
    %1726 = vmatpush1.msra.mxu0 0.0
    %1727 = vmatprep.subr.mxu0 0.0
    %1728 = vmatpush1.msra.mxu0 0.0
    %1729 = vmatprep.subr.mxu0 0.0
    %1730 = vmatpush1.msra.mxu0 0.0
    %1731 = vmatprep.subr.mxu0 0.0
    %1732 = vmatpush1.msra.mxu0 0.0
    %1733 = vmatprep.subr.mxu0 0.0
    %1734 = vmatpush1.msra.mxu0 0.0
    %1735 = vmatprep.subr.mxu0 0.0
    %1736 = vmatpush1.msra.mxu0 0.0
    %1737 = vmatprep.subr.mxu0 0.0
    %1738 = vmatpush1.msra.mxu0 0.0
    %1739 = vmatprep.subr.mxu0 0.0
    %1740 = vmatpush1.msra.mxu0 0.0
    %1741 = vmatprep.subr.mxu0 0.0
    %1742 = vmatpush1.msra.mxu0 0.0
    %1743 = vmatprep.subr.mxu0 0.0
    %1744 = vmatpush1.msra.mxu0 0.0
    %1745 = vmatprep.subr.mxu0 0.0
    %1746 = vmatpush1.msra.mxu0 0.0
    %1747 = vmatprep.subr.mxu0 0.0
    %1748 = vmatpush1.msra.mxu0 0.0
    %1749 = vmatprep.subr.mxu0 0.0
    %1750 = vmatpush1.msra.mxu0 0.0
    %1751 = vmatprep.subr.mxu0 0.0
    %1752 = vmatpush1.msra.mxu0 0.0
    %1753 = vmatprep.subr.mxu0 0.0
    %1754 = vmatpush1.msra.mxu0 0.0
    %1755 = vmatprep.subr.mxu0 0.0
    %1756 = vmatpush1.msra.mxu0 0.0
    %1757 = vmatprep.subr.mxu0 0.0
    %1758 = vmatpush1.msra.mxu0 0.0
    %1759 = vmatprep.subr.mxu0 0.0
    %1760 = vmatpush1.msra.mxu0 0.0
    %1761 = vmatprep.subr.mxu0 0.0
    %1762 = vmatpush1.msra.mxu0 0.0
    %1763 = vmatprep.subr.mxu0 0.0
    %1764 = vmatpush1.msra.mxu0 0.0
    %1765 = vmatprep.subr.mxu0 0.0
    %1766 = vmatpush1.msra.mxu0 0.0
    %1767 = vmatprep.subr.mxu0 0.0
    %1768 = vmatpush1.msra.mxu0 0.0
    %1769 = vmatprep.subr.mxu0 0.0
    %1770 = vmatpush1.msra.mxu0 0.0
    %1771 = vmatprep.mubr.f32.mxu0 0.0
    %1772 = vmatmul.mubr.f32.gmra.mrb[0].mxu0 %v1470
    %v1773 = vpop.f32.mrb[0].mxu0
    %v1774 = vadd.f32 0.0, %v1773
    %v1775 = vpop.f32.mrb[0].mxu0
    %1776 = vdwg.mxu0
    %v1778 = vrot.slane %v1774, 2
    %v1780 = vadd.f32 %v476, %v1778
    %v1781 = vxor.u32 %v1780, 2147483648
    %v1782 = vmul.f32 %v1781, 1.442695
    %v1783 = vpow.pop %v1782
    %v1784 = vadd.f32 %v1783, 1.0
    %v1785 = vrcp.pop %v1784
    %v1786 = vmul.f32 1.0, %v1785
    %v1788 = vrot.slane %v1465, 6
    %v1790 = vmul.f32 %v1631, %v1788
    %v1791 = vmul.f32 %v1551, %v1706
    %v1792 = vadd.f32 %v1790, %v1791
    %v1793 = vtanh.pop %v1792
    %v1794 = vmul.f32 %v1786, %v1793
    %v1796 = vrot.slane %v1794, 6
    %v1797 = vsel %vm488, %v1796, 0
    %1799 = vmatprep.subr.mxu0 0.0
    %1800 = vmatpush1.msra.mxu0 %v484
    %1801 = vmatprep.subr.mxu0 0.0
    %1802 = vmatpush1.msra.mxu0 %v485
    %1803 = vmatprep.subr.mxu0 0.0
    %1804 = vmatpush1.msra.mxu0 %v486
    %1805 = vmatprep.subr.mxu0 0.0
    %1806 = vmatpush1.msra.mxu0 %v487
    %1807 = vmatprep.subr.mxu0 0.0
    %1808 = vmatpush1.msra.mxu0 0.0
    %1809 = vmatprep.subr.mxu0 0.0
    %1810 = vmatpush1.msra.mxu0 0.0
    %1811 = vmatprep.subr.mxu0 0.0
    %1812 = vmatpush1.msra.mxu0 0.0
    %1813 = vmatprep.subr.mxu0 0.0
    %1814 = vmatpush1.msra.mxu0 0.0
    %1815 = vmatprep.subr.mxu0 0.0
    %1816 = vmatpush1.msra.mxu0 0.0
    %1817 = vmatprep.subr.mxu0 0.0
    %1818 = vmatpush1.msra.mxu0 0.0
    %1819 = vmatprep.subr.mxu0 0.0
    %1820 = vmatpush1.msra.mxu0 0.0
    %1821 = vmatprep.subr.mxu0 0.0
    %1822 = vmatpush1.msra.mxu0 0.0
    %1823 = vmatprep.subr.mxu0 0.0
    %1824 = vmatpush1.msra.mxu0 0.0
    %1825 = vmatprep.subr.mxu0 0.0
    %1826 = vmatpush1.msra.mxu0 0.0
    %1827 = vmatprep.subr.mxu0 0.0
    %1828 = vmatpush1.msra.mxu0 0.0
    %1829 = vmatprep.subr.mxu0 0.0
    %1830 = vmatpush1.msra.mxu0 0.0
    %1831 = vmatprep.subr.mxu0 0.0
    %1832 = vmatpush1.msra.mxu0 0.0
    %1833 = vmatprep.subr.mxu0 0.0
    %1834 = vmatpush1.msra.mxu0 0.0
    %1835 = vmatprep.subr.mxu0 0.0
    %1836 = vmatpush1.msra.mxu0 0.0
    %1837 = vmatprep.subr.mxu0 0.0
    %1838 = vmatpush1.msra.mxu0 0.0
    %1839 = vmatprep.subr.mxu0 0.0
    %1840 = vmatpush1.msra.mxu0 0.0
    %1841 = vmatprep.subr.mxu0 0.0
    %1842 = vmatpush1.msra.mxu0 0.0
    %1843 = vmatprep.subr.mxu0 0.0
    %1844 = vmatpush1.msra.mxu0 0.0
    %1845 = vmatprep.subr.mxu0 0.0
    %1846 = vmatpush1.msra.mxu0 0.0
    %1847 = vmatprep.subr.mxu0 0.0
    %1848 = vmatpush1.msra.mxu0 0.0
    %1849 = vmatprep.subr.mxu0 0.0
    %1850 = vmatpush1.msra.mxu0 0.0
    %1851 = vmatprep.subr.mxu0 0.0
    %1852 = vmatpush1.msra.mxu0 0.0
    %1853 = vmatprep.subr.mxu0 0.0
    %1854 = vmatpush1.msra.mxu0 0.0
    %1855 = vmatprep.subr.mxu0 0.0
    %1856 = vmatpush1.msra.mxu0 0.0
    %1857 = vmatprep.subr.mxu0 0.0
    %1858 = vmatpush1.msra.mxu0 0.0
    %1859 = vmatprep.subr.mxu0 0.0
    %1860 = vmatpush1.msra.mxu0 0.0
    %1861 = vmatprep.subr.mxu0 0.0
    %1862 = vmatpush1.msra.mxu0 0.0
    %1863 = vmatprep.mubr.f32.mxu0 0.0
    %1864 = vmatmul.mubr.f32.gmra.mrb[0].mxu0 %v1797
    %v1865 = vpop.f32.mrb[0].mxu0
    %v1866 = vadd.f32 0.0, %v1865
    %v1867 = vpop.f32.mrb[0].mxu0
    %1868 = vdwg.mxu0
    %v1869 = vadd.f32 %v223, %v1866
    %v1870 = vxor.u32 %v1869, 2147483648
    %v1871 = vmul.f32 %v1870, 1.442695
    %v1872 = vpow.pop %v1871
    %v1873 = vadd.f32 %v1872, 1.0
    %v1874 = vrcp.pop %v1873
    %v1875 = vmul.f32 1.0, %v1874
    %1876 = vmatprep.subr.mxu0 0.0
    %1877 = vmatpush1.msra.mxu0 %v570
    %1878 = vmatprep.subr.mxu0 0.0
    %1879 = vmatpush1.msra.mxu0 %v571
    %1880 = vmatprep.subr.mxu0 0.0
    %1881 = vmatpush1.msra.mxu0 %v572
    %1882 = vmatprep.subr.mxu0 0.0
    %1883 = vmatpush1.msra.mxu0 %v573
    %1884 = vmatprep.subr.mxu0 0.0
    %1885 = vmatpush1.msra.mxu0 0.0
    %1886 = vmatprep.subr.mxu0 0.0
    %1887 = vmatpush1.msra.mxu0 0.0
    %1888 = vmatprep.subr.mxu0 0.0
    %1889 = vmatpush1.msra.mxu0 0.0
    %1890 = vmatprep.subr.mxu0 0.0
    %1891 = vmatpush1.msra.mxu0 0.0
    %1892 = vmatprep.subr.mxu0 0.0
    %1893 = vmatpush1.msra.mxu0 0.0
    %1894 = vmatprep.subr.mxu0 0.0
    %1895 = vmatpush1.msra.mxu0 0.0
    %1896 = vmatprep.subr.mxu0 0.0
    %1897 = vmatpush1.msra.mxu0 0.0
    %1898 = vmatprep.subr.mxu0 0.0
    %1899 = vmatpush1.msra.mxu0 0.0
    %1900 = vmatprep.subr.mxu0 0.0
    %1901 = vmatpush1.msra.mxu0 0.0
    %1902 = vmatprep.subr.mxu0 0.0
    %1903 = vmatpush1.msra.mxu0 0.0
    %1904 = vmatprep.subr.mxu0 0.0
    %1905 = vmatpush1.msra.mxu0 0.0
    %1906 = vmatprep.subr.mxu0 0.0
    %1907 = vmatpush1.msra.mxu0 0.0
    %1908 = vmatprep.subr.mxu0 0.0
    %1909 = vmatpush1.msra.mxu0 0.0
    %1910 = vmatprep.subr.mxu0 0.0
    %1911 = vmatpush1.msra.mxu0 0.0
    %1912 = vmatprep.subr.mxu0 0.0
    %1913 = vmatpush1.msra.mxu0 0.0
    %1914 = vmatprep.subr.mxu0 0.0
    %1915 = vmatpush1.msra.mxu0 0.0
    %1916 = vmatprep.subr.mxu0 0.0
    %1917 = vmatpush1.msra.mxu0 0.0
    %1918 = vmatprep.subr.mxu0 0.0
    %1919 = vmatpush1.msra.mxu0 0.0
    %1920 = vmatprep.subr.mxu0 0.0
    %1921 = vmatpush1.msra.mxu0 0.0
    %1922 = vmatprep.subr.mxu0 0.0
    %1923 = vmatpush1.msra.mxu0 0.0
    %1924 = vmatprep.subr.mxu0 0.0
    %1925 = vmatpush1.msra.mxu0 0.0
    %1926 = vmatprep.subr.mxu0 0.0
    %1927 = vmatpush1.msra.mxu0 0.0
    %1928 = vmatprep.subr.mxu0 0.0
    %1929 = vmatpush1.msra.mxu0 0.0
    %1930 = vmatprep.subr.mxu0 0.0
    %1931 = vmatpush1.msra.mxu0 0.0
    %1932 = vmatprep.subr.mxu0 0.0
    %1933 = vmatpush1.msra.mxu0 0.0
    %1934 = vmatprep.subr.mxu0 0.0
    %1935 = vmatpush1.msra.mxu0 0.0
    %1936 = vmatprep.subr.mxu0 0.0
    %1937 = vmatpush1.msra.mxu0 0.0
    %1938 = vmatprep.subr.mxu0 0.0
    %1939 = vmatpush1.msra.mxu0 0.0
    %1940 = vmatprep.mubr.f32.mxu0 0.0
    %1941 = vmatmul.mubr.f32.gmra.mrb[0].mxu0 %v1797
    %v1942 = vpop.f32.mrb[0].mxu0
    %v1943 = vadd.f32 0.0, %v1942
    %v1944 = vpop.f32.mrb[0].mxu0
    %1945 = vdwg.mxu0
    %v1946 = vadd.f32 %v309, %v1943
    %v1947 = vxor.u32 %v1946, 2147483648
    %v1948 = vmul.f32 %v1947, 1.442695
    %v1949 = vpow.pop %v1948
    %v1950 = vadd.f32 %v1949, 1.0
    %v1951 = vrcp.pop %v1950
    %v1952 = vmul.f32 1.0, %v1951
    %1953 = vmatprep.subr.mxu0 0.0
    %1954 = vmatpush1.msra.mxu0 %v652
    %1955 = vmatprep.subr.mxu0 0.0
    %1956 = vmatpush1.msra.mxu0 %v653
    %1957 = vmatprep.subr.mxu0 0.0
    %1958 = vmatpush1.msra.mxu0 %v654
    %1959 = vmatprep.subr.mxu0 0.0
    %1960 = vmatpush1.msra.mxu0 %v655
    %1961 = vmatprep.subr.mxu0 0.0
    %1962 = vmatpush1.msra.mxu0 0.0
    %1963 = vmatprep.subr.mxu0 0.0
    %1964 = vmatpush1.msra.mxu0 0.0
    %1965 = vmatprep.subr.mxu0 0.0
    %1966 = vmatpush1.msra.mxu0 0.0
    %1967 = vmatprep.subr.mxu0 0.0
    %1968 = vmatpush1.msra.mxu0 0.0
    %1969 = vmatprep.subr.mxu0 0.0
    %1970 = vmatpush1.msra.mxu0 0.0
    %1971 = vmatprep.subr.mxu0 0.0
    %1972 = vmatpush1.msra.mxu0 0.0
    %1973 = vmatprep.subr.mxu0 0.0
    %1974 = vmatpush1.msra.mxu0 0.0
    %1975 = vmatprep.subr.mxu0 0.0
    %1976 = vmatpush1.msra.mxu0 0.0
    %1977 = vmatprep.subr.mxu0 0.0
    %1978 = vmatpush1.msra.mxu0 0.0
    %1979 = vmatprep.subr.mxu0 0.0
    %1980 = vmatpush1.msra.mxu0 0.0
    %1981 = vmatprep.subr.mxu0 0.0
    %1982 = vmatpush1.msra.mxu0 0.0
    %1983 = vmatprep.subr.mxu0 0.0
    %1984 = vmatpush1.msra.mxu0 0.0
    %1985 = vmatprep.subr.mxu0 0.0
    %1986 = vmatpush1.msra.mxu0 0.0
    %1987 = vmatprep.subr.mxu0 0.0
    %1988 = vmatpush1.msra.mxu0 0.0
    %1989 = vmatprep.subr.mxu0 0.0
    %1990 = vmatpush1.msra.mxu0 0.0
    %1991 = vmatprep.subr.mxu0 0.0
    %1992 = vmatpush1.msra.mxu0 0.0
    %1993 = vmatprep.subr.mxu0 0.0
    %1994 = vmatpush1.msra.mxu0 0.0
    %1995 = vmatprep.subr.mxu0 0.0
    %1996 = vmatpush1.msra.mxu0 0.0
    %1997 = vmatprep.subr.mxu0 0.0
    %1998 = vmatpush1.msra.mxu0 0.0
    %1999 = vmatprep.subr.mxu0 0.0
    %2000 = vmatpush1.msra.mxu0 0.0
    %2001 = vmatprep.subr.mxu0 0.0
    %2002 = vmatpush1.msra.mxu0 0.0
    %2003 = vmatprep.subr.mxu0 0.0
    %2004 = vmatpush1.msra.mxu0 0.0
    %2005 = vmatprep.subr.mxu0 0.0
    %2006 = vmatpush1.msra.mxu0 0.0
    %2007 = vmatprep.subr.mxu0 0.0
    %2008 = vmatpush1.msra.mxu0 0.0
    %2009 = vmatprep.subr.mxu0 0.0
    %2010 = vmatpush1.msra.mxu0 0.0
    %2011 = vmatprep.subr.mxu0 0.0
    %2012 = vmatpush1.msra.mxu0 0.0
    %2013 = vmatprep.subr.mxu0 0.0
    %2014 = vmatpush1.msra.mxu0 0.0
    %2015 = vmatprep.subr.mxu0 0.0
    %2016 = vmatpush1.msra.mxu0 0.0
    %2017 = vmatprep.mubr.f32.mxu0 0.0
    %2018 = vmatmul.mubr.f32.gmra.mrb[0].mxu0 %v1797
    %v2019 = vpop.f32.mrb[0].mxu0
    %v2020 = vadd.f32 0.0, %v2019
    %v2021 = vpop.f32.mrb[0].mxu0
    %2022 = vdwg.mxu0
    %v2023 = vadd.f32 %v395, %v2020
    %v2024 = vtanh.pop %v2023
    %2025 = vmatprep.subr.mxu0 0.0
    %2026 = vmatpush1.msra.mxu0 %v729
    %2027 = vmatprep.subr.mxu0 0.0
    %2028 = vmatpush1.msra.mxu0 %v730
    %2029 = vmatprep.subr.mxu0 0.0
    %2030 = vmatpush1.msra.mxu0 %v731
    %2031 = vmatprep.subr.mxu0 0.0
    %2032 = vmatpush1.msra.mxu0 %v732
    %2033 = vmatprep.subr.mxu0 0.0
    %2034 = vmatpush1.msra.mxu0 0.0
    %2035 = vmatprep.subr.mxu0 0.0
    %2036 = vmatpush1.msra.mxu0 0.0
    %2037 = vmatprep.subr.mxu0 0.0
    %2038 = vmatpush1.msra.mxu0 0.0
    %2039 = vmatprep.subr.mxu0 0.0
    %2040 = vmatpush1.msra.mxu0 0.0
    %2041 = vmatprep.subr.mxu0 0.0
    %2042 = vmatpush1.msra.mxu0 0.0
    %2043 = vmatprep.subr.mxu0 0.0
    %2044 = vmatpush1.msra.mxu0 0.0
    %2045 = vmatprep.subr.mxu0 0.0
    %2046 = vmatpush1.msra.mxu0 0.0
    %2047 = vmatprep.subr.mxu0 0.0
    %2048 = vmatpush1.msra.mxu0 0.0
    %2049 = vmatprep.subr.mxu0 0.0
    %2050 = vmatpush1.msra.mxu0 0.0
    %2051 = vmatprep.subr.mxu0 0.0
    %2052 = vmatpush1.msra.mxu0 0.0
    %2053 = vmatprep.subr.mxu0 0.0
    %2054 = vmatpush1.msra.mxu0 0.0
    %2055 = vmatprep.subr.mxu0 0.0
    %2056 = vmatpush1.msra.mxu0 0.0
    %2057 = vmatprep.subr.mxu0 0.0
    %2058 = vmatpush1.msra.mxu0 0.0
    %2059 = vmatprep.subr.mxu0 0.0
    %2060 = vmatpush1.msra.mxu0 0.0
    %2061 = vmatprep.subr.mxu0 0.0
    %2062 = vmatpush1.msra.mxu0 0.0
    %2063 = vmatprep.subr.mxu0 0.0
    %2064 = vmatpush1.msra.mxu0 0.0
    %2065 = vmatprep.subr.mxu0 0.0
    %2066 = vmatpush1.msra.mxu0 0.0
    %2067 = vmatprep.subr.mxu0 0.0
    %2068 = vmatpush1.msra.mxu0 0.0
    %2069 = vmatprep.subr.mxu0 0.0
    %2070 = vmatpush1.msra.mxu0 0.0
    %2071 = vmatprep.subr.mxu0 0.0
    %2072 = vmatpush1.msra.mxu0 0.0
    %2073 = vmatprep.subr.mxu0 0.0
    %2074 = vmatpush1.msra.mxu0 0.0
    %2075 = vmatprep.subr.mxu0 0.0
    %2076 = vmatpush1.msra.mxu0 0.0
    %2077 = vmatprep.subr.mxu0 0.0
    %2078 = vmatpush1.msra.mxu0 0.0
    %2079 = vmatprep.subr.mxu0 0.0
    %2080 = vmatpush1.msra.mxu0 0.0
    %2081 = vmatprep.subr.mxu0 0.0
    %2082 = vmatpush1.msra.mxu0 0.0
    %2083 = vmatprep.subr.mxu0 0.0
    %2084 = vmatpush1.msra.mxu0 0.0
    %2085 = vmatprep.subr.mxu0 0.0
    %2086 = vmatpush1.msra.mxu0 0.0
    %2087 = vmatprep.subr.mxu0 0.0
    %2088 = vmatpush1.msra.mxu0 0.0
    %2089 = vmatprep.mubr.f32.mxu0 0.0
    %2090 = vmatmul.mubr.f32.gmra.mrb[0].mxu0 %v1797
    %v2091 = vpop.f32.mrb[0].mxu0
    %v2092 = vadd.f32 0.0, %v2091
    %v2093 = vpop.f32.mrb[0].mxu0
    %2094 = vdwg.mxu0
    %v2095 = vadd.f32 %v481, %v2092
    %v2096 = vxor.u32 %v2095, 2147483648
    %v2097 = vmul.f32 %v2096, 1.442695
    %v2098 = vpow.pop %v2097
    %v2099 = vadd.f32 %v2098, 1.0
    %v2100 = vrcp.pop %v2099
    %v2101 = vmul.f32 1.0, %v2100
    %v2103 = vrot.slane %v1792, 6
    %v2105 = vmul.f32 %v1952, %v2103
    %v2106 = vmul.f32 %v1875, %v2024
    %v2107 = vadd.f32 %v2105, %v2106
    %v2108 = vtanh.pop %v2107
    %v2109 = vmul.f32 %v2101, %v2108
    %v2111 = vsel %vm488, %v2109, 0
    %2113 = vmatprep.subr.mxu0 0.0
    %2114 = vmatpush1.msra.mxu0 %v484
    %2115 = vmatprep.subr.mxu0 0.0
    %2116 = vmatpush1.msra.mxu0 %v485
    %2117 = vmatprep.subr.mxu0 0.0
    %2118 = vmatpush1.msra.mxu0 %v486
    %2119 = vmatprep.subr.mxu0 0.0
    %2120 = vmatpush1.msra.mxu0 %v487
    %2121 = vmatprep.subr.mxu0 0.0
    %2122 = vmatpush1.msra.mxu0 0.0
    %2123 = vmatprep.subr.mxu0 0.0
    %2124 = vmatpush1.msra.mxu0 0.0
    %2125 = vmatprep.subr.mxu0 0.0
    %2126 = vmatpush1.msra.mxu0 0.0
    %2127 = vmatprep.subr.mxu0 0.0
    %2128 = vmatpush1.msra.mxu0 0.0
    %2129 = vmatprep.subr.mxu0 0.0
    %2130 = vmatpush1.msra.mxu0 0.0
    %2131 = vmatprep.subr.mxu0 0.0
    %2132 = vmatpush1.msra.mxu0 0.0
    %2133 = vmatprep.subr.mxu0 0.0
    %2134 = vmatpush1.msra.mxu0 0.0
    %2135 = vmatprep.subr.mxu0 0.0
    %2136 = vmatpush1.msra.mxu0 0.0
    %2137 = vmatprep.subr.mxu0 0.0
    %2138 = vmatpush1.msra.mxu0 0.0
    %2139 = vmatprep.subr.mxu0 0.0
    %2140 = vmatpush1.msra.mxu0 0.0
    %2141 = vmatprep.subr.mxu0 0.0
    %2142 = vmatpush1.msra.mxu0 0.0
    %2143 = vmatprep.subr.mxu0 0.0
    %2144 = vmatpush1.msra.mxu0 0.0
    %2145 = vmatprep.subr.mxu0 0.0
    %2146 = vmatpush1.msra.mxu0 0.0
    %2147 = vmatprep.subr.mxu0 0.0
    %2148 = vmatpush1.msra.mxu0 0.0
    %2149 = vmatprep.subr.mxu0 0.0
    %2150 = vmatpush1.msra.mxu0 0.0
    %2151 = vmatprep.subr.mxu0 0.0
    %2152 = vmatpush1.msra.mxu0 0.0
    %2153 = vmatprep.subr.mxu0 0.0
    %2154 = vmatpush1.msra.mxu0 0.0
    %2155 = vmatprep.subr.mxu0 0.0
    %2156 = vmatpush1.msra.mxu0 0.0
    %2157 = vmatprep.subr.mxu0 0.0
    %2158 = vmatpush1.msra.mxu0 0.0
    %2159 = vmatprep.subr.mxu0 0.0
    %2160 = vmatpush1.msra.mxu0 0.0
    %2161 = vmatprep.subr.mxu0 0.0
    %2162 = vmatpush1.msra.mxu0 0.0
    %2163 = vmatprep.subr.mxu0 0.0
    %2164 = vmatpush1.msra.mxu0 0.0
    %2165 = vmatprep.subr.mxu0 0.0
    %2166 = vmatpush1.msra.mxu0 0.0
    %2167 = vmatprep.subr.mxu0 0.0
    %2168 = vmatpush1.msra.mxu0 0.0
    %2169 = vmatprep.subr.mxu0 0.0
    %2170 = vmatpush1.msra.mxu0 0.0
    %2171 = vmatprep.subr.mxu0 0.0
    %2172 = vmatpush1.msra.mxu0 0.0
    %2173 = vmatprep.subr.mxu0 0.0
    %2174 = vmatpush1.msra.mxu0 0.0
    %2175 = vmatprep.subr.mxu0 0.0
    %2176 = vmatpush1.msra.mxu0 0.0
    %2177 = vmatprep.mubr.f32.mxu0 0.0
    %2178 = vmatmul.mubr.f32.gmra.mrb[0].mxu0 %v2111
    %v2179 = vpop.f32.mrb[0].mxu0
    %v2180 = vadd.f32 0.0, %v2179
    %v2181 = vpop.f32.mrb[0].mxu0
    %2182 = vdwg.mxu0
    %v2184 = vrot.slane %v2180, 6
    %v2186 = vadd.f32 %v223, %v2184
    %v2187 = vxor.u32 %v2186, 2147483648
    %v2188 = vmul.f32 %v2187, 1.442695
    %v2189 = vpow.pop %v2188
    %v2190 = vadd.f32 %v2189, 1.0
    %v2191 = vrcp.pop %v2190
    %v2192 = vmul.f32 1.0, %v2191
    %2193 = vmatprep.subr.mxu0 0.0
    %2194 = vmatpush1.msra.mxu0 %v570
    %2195 = vmatprep.subr.mxu0 0.0
    %2196 = vmatpush1.msra.mxu0 %v571
    %2197 = vmatprep.subr.mxu0 0.0
    %2198 = vmatpush1.msra.mxu0 %v572
    %2199 = vmatprep.subr.mxu0 0.0
    %2200 = vmatpush1.msra.mxu0 %v573
    %2201 = vmatprep.subr.mxu0 0.0
    %2202 = vmatpush1.msra.mxu0 0.0
    %2203 = vmatprep.subr.mxu0 0.0
    %2204 = vmatpush1.msra.mxu0 0.0
    %2205 = vmatprep.subr.mxu0 0.0
    %2206 = vmatpush1.msra.mxu0 0.0
    %2207 = vmatprep.subr.mxu0 0.0
    %2208 = vmatpush1.msra.mxu0 0.0
    %2209 = vmatprep.subr.mxu0 0.0
    %2210 = vmatpush1.msra.mxu0 0.0
    %2211 = vmatprep.subr.mxu0 0.0
    %2212 = vmatpush1.msra.mxu0 0.0
    %2213 = vmatprep.subr.mxu0 0.0
    %2214 = vmatpush1.msra.mxu0 0.0
    %2215 = vmatprep.subr.mxu0 0.0
    %2216 = vmatpush1.msra.mxu0 0.0
    %2217 = vmatprep.subr.mxu0 0.0
    %2218 = vmatpush1.msra.mxu0 0.0
    %2219 = vmatprep.subr.mxu0 0.0
    %2220 = vmatpush1.msra.mxu0 0.0
    %2221 = vmatprep.subr.mxu0 0.0
    %2222 = vmatpush1.msra.mxu0 0.0
    %2223 = vmatprep.subr.mxu0 0.0
    %2224 = vmatpush1.msra.mxu0 0.0
    %2225 = vmatprep.subr.mxu0 0.0
    %2226 = vmatpush1.msra.mxu0 0.0
    %2227 = vmatprep.subr.mxu0 0.0
    %2228 = vmatpush1.msra.mxu0 0.0
    %2229 = vmatprep.subr.mxu0 0.0
    %2230 = vmatpush1.msra.mxu0 0.0
    %2231 = vmatprep.subr.mxu0 0.0
    %2232 = vmatpush1.msra.mxu0 0.0
    %2233 = vmatprep.subr.mxu0 0.0
    %2234 = vmatpush1.msra.mxu0 0.0
    %2235 = vmatprep.subr.mxu0 0.0
    %2236 = vmatpush1.msra.mxu0 0.0
    %2237 = vmatprep.subr.mxu0 0.0
    %2238 = vmatpush1.msra.mxu0 0.0
    %2239 = vmatprep.subr.mxu0 0.0
    %2240 = vmatpush1.msra.mxu0 0.0
    %2241 = vmatprep.subr.mxu0 0.0
    %2242 = vmatpush1.msra.mxu0 0.0
    %2243 = vmatprep.subr.mxu0 0.0
    %2244 = vmatpush1.msra.mxu0 0.0
    %2245 = vmatprep.subr.mxu0 0.0
    %2246 = vmatpush1.msra.mxu0 0.0
    %2247 = vmatprep.subr.mxu0 0.0
    %2248 = vmatpush1.msra.mxu0 0.0
    %2249 = vmatprep.subr.mxu0 0.0
    %2250 = vmatpush1.msra.mxu0 0.0
    %2251 = vmatprep.subr.mxu0 0.0
    %2252 = vmatpush1.msra.mxu0 0.0
    %2253 = vmatprep.subr.mxu0 0.0
    %2254 = vmatpush1.msra.mxu0 0.0
    %2255 = vmatprep.subr.mxu0 0.0
    %2256 = vmatpush1.msra.mxu0 0.0
    %2257 = vmatprep.mubr.f32.mxu0 0.0
    %2258 = vmatmul.mubr.f32.gmra.mrb[0].mxu0 %v2111
    %v2259 = vpop.f32.mrb[0].mxu0
    %v2260 = vadd.f32 0.0, %v2259
    %v2261 = vpop.f32.mrb[0].mxu0
    %2262 = vdwg.mxu0
    %v2264 = vrot.slane %v2260, 6
    %v2266 = vadd.f32 %v309, %v2264
    %v2267 = vxor.u32 %v2266, 2147483648
    %v2268 = vmul.f32 %v2267, 1.442695
    %v2269 = vpow.pop %v2268
    %v2270 = vadd.f32 %v2269, 1.0
    %v2271 = vrcp.pop %v2270
    %v2272 = vmul.f32 1.0, %v2271
    %2273 = vmatprep.subr.mxu0 0.0
    %2274 = vmatpush1.msra.mxu0 %v652
    %2275 = vmatprep.subr.mxu0 0.0
    %2276 = vmatpush1.msra.mxu0 %v653
    %2277 = vmatprep.subr.mxu0 0.0
    %2278 = vmatpush1.msra.mxu0 %v654
    %2279 = vmatprep.subr.mxu0 0.0
    %2280 = vmatpush1.msra.mxu0 %v655
    %2281 = vmatprep.subr.mxu0 0.0
    %2282 = vmatpush1.msra.mxu0 0.0
    %2283 = vmatprep.subr.mxu0 0.0
    %2284 = vmatpush1.msra.mxu0 0.0
    %2285 = vmatprep.subr.mxu0 0.0
    %2286 = vmatpush1.msra.mxu0 0.0
    %2287 = vmatprep.subr.mxu0 0.0
    %2288 = vmatpush1.msra.mxu0 0.0
    %2289 = vmatprep.subr.mxu0 0.0
    %2290 = vmatpush1.msra.mxu0 0.0
    %2291 = vmatprep.subr.mxu0 0.0
    %2292 = vmatpush1.msra.mxu0 0.0
    %2293 = vmatprep.subr.mxu0 0.0
    %2294 = vmatpush1.msra.mxu0 0.0
    %2295 = vmatprep.subr.mxu0 0.0
    %2296 = vmatpush1.msra.mxu0 0.0
    %2297 = vmatprep.subr.mxu0 0.0
    %2298 = vmatpush1.msra.mxu0 0.0
    %2299 = vmatprep.subr.mxu0 0.0
    %2300 = vmatpush1.msra.mxu0 0.0
    %2301 = vmatprep.subr.mxu0 0.0
    %2302 = vmatpush1.msra.mxu0 0.0
    %2303 = vmatprep.subr.mxu0 0.0
    %2304 = vmatpush1.msra.mxu0 0.0
    %2305 = vmatprep.subr.mxu0 0.0
    %2306 = vmatpush1.msra.mxu0 0.0
    %2307 = vmatprep.subr.mxu0 0.0
    %2308 = vmatpush1.msra.mxu0 0.0
    %2309 = vmatprep.subr.mxu0 0.0
    %2310 = vmatpush1.msra.mxu0 0.0
    %2311 = vmatprep.subr.mxu0 0.0
    %2312 = vmatpush1.msra.mxu0 0.0
    %2313 = vmatprep.subr.mxu0 0.0
    %2314 = vmatpush1.msra.mxu0 0.0
    %2315 = vmatprep.subr.mxu0 0.0
    %2316 = vmatpush1.msra.mxu0 0.0
    %2317 = vmatprep.subr.mxu0 0.0
    %2318 = vmatpush1.msra.mxu0 0.0
    %2319 = vmatprep.subr.mxu0 0.0
    %2320 = vmatpush1.msra.mxu0 0.0
    %2321 = vmatprep.subr.mxu0 0.0
    %2322 = vmatpush1.msra.mxu0 0.0
    %2323 = vmatprep.subr.mxu0 0.0
    %2324 = vmatpush1.msra.mxu0 0.0
    %2325 = vmatprep.subr.mxu0 0.0
    %2326 = vmatpush1.msra.mxu0 0.0
    %2327 = vmatprep.subr.mxu0 0.0
    %2328 = vmatpush1.msra.mxu0 0.0
    %2329 = vmatprep.subr.mxu0 0.0
    %2330 = vmatpush1.msra.mxu0 0.0
    %2331 = vmatprep.subr.mxu0 0.0
    %2332 = vmatpush1.msra.mxu0 0.0
    %2333 = vmatprep.subr.mxu0 0.0
    %2334 = vmatpush1.msra.mxu0 0.0
    %2335 = vmatprep.subr.mxu0 0.0
    %2336 = vmatpush1.msra.mxu0 0.0
    %2337 = vmatprep.mubr.f32.mxu0 0.0
    %2338 = vmatmul.mubr.f32.gmra.mrb[0].mxu0 %v2111
    %v2339 = vpop.f32.mrb[0].mxu0
    %v2340 = vadd.f32 0.0, %v2339
    %v2341 = vpop.f32.mrb[0].mxu0
    %2342 = vdwg.mxu0
    %v2344 = vrot.slane %v2340, 6
    %v2346 = vadd.f32 %v395, %v2344
    %v2347 = vtanh.pop %v2346
    %2348 = vmatprep.subr.mxu0 0.0
    %2349 = vmatpush1.msra.mxu0 %v729
    %2350 = vmatprep.subr.mxu0 0.0
    %2351 = vmatpush1.msra.mxu0 %v730
    %2352 = vmatprep.subr.mxu0 0.0
    %2353 = vmatpush1.msra.mxu0 %v731
    %2354 = vmatprep.subr.mxu0 0.0
    %2355 = vmatpush1.msra.mxu0 %v732
    %2356 = vmatprep.subr.mxu0 0.0
    %2357 = vmatpush1.msra.mxu0 0.0
    %2358 = vmatprep.subr.mxu0 0.0
    %2359 = vmatpush1.msra.mxu0 0.0
    %2360 = vmatprep.subr.mxu0 0.0
    %2361 = vmatpush1.msra.mxu0 0.0
    %2362 = vmatprep.subr.mxu0 0.0
    %2363 = vmatpush1.msra.mxu0 0.0
    %2364 = vmatprep.subr.mxu0 0.0
    %2365 = vmatpush1.msra.mxu0 0.0
    %2366 = vmatprep.subr.mxu0 0.0
    %2367 = vmatpush1.msra.mxu0 0.0
    %2368 = vmatprep.subr.mxu0 0.0
    %2369 = vmatpush1.msra.mxu0 0.0
    %2370 = vmatprep.subr.mxu0 0.0
    %2371 = vmatpush1.msra.mxu0 0.0
    %2372 = vmatprep.subr.mxu0 0.0
    %2373 = vmatpush1.msra.mxu0 0.0
    %2374 = vmatprep.subr.mxu0 0.0
    %2375 = vmatpush1.msra.mxu0 0.0
    %2376 = vmatprep.subr.mxu0 0.0
    %2377 = vmatpush1.msra.mxu0 0.0
    %2378 = vmatprep.subr.mxu0 0.0
    %2379 = vmatpush1.msra.mxu0 0.0
    %2380 = vmatprep.subr.mxu0 0.0
    %2381 = vmatpush1.msra.mxu0 0.0
    %2382 = vmatprep.subr.mxu0 0.0
    %2383 = vmatpush1.msra.mxu0 0.0
    %2384 = vmatprep.subr.mxu0 0.0
    %2385 = vmatpush1.msra.mxu0 0.0
    %2386 = vmatprep.subr.mxu0 0.0
    %2387 = vmatpush1.msra.mxu0 0.0
    %2388 = vmatprep.subr.mxu0 0.0
    %2389 = vmatpush1.msra.mxu0 0.0
    %2390 = vmatprep.subr.mxu0 0.0
    %2391 = vmatpush1.msra.mxu0 0.0
    %2392 = vmatprep.subr.mxu0 0.0
    %2393 = vmatpush1.msra.mxu0 0.0
    %2394 = vmatprep.subr.mxu0 0.0
    %2395 = vmatpush1.msra.mxu0 0.0
    %2396 = vmatprep.subr.mxu0 0.0
    %2397 = vmatpush1.msra.mxu0 0.0
    %2398 = vmatprep.subr.mxu0 0.0
    %2399 = vmatpush1.msra.mxu0 0.0
    %2400 = vmatprep.subr.mxu0 0.0
    %2401 = vmatpush1.msra.mxu0 0.0
    %2402 = vmatprep.subr.mxu0 0.0
    %2403 = vmatpush1.msra.mxu0 0.0
    %2404 = vmatprep.subr.mxu0 0.0
    %2405 = vmatpush1.msra.mxu0 0.0
    %2406 = vmatprep.subr.mxu0 0.0
    %2407 = vmatpush1.msra.mxu0 0.0
    %2408 = vmatprep.subr.mxu0 0.0
    %2409 = vmatpush1.msra.mxu0 0.0
    %2410 = vmatprep.subr.mxu0 0.0
    %2411 = vmatpush1.msra.mxu0 0.0
    %2412 = vmatprep.mubr.f32.mxu0 0.0
    %2413 = vmatmul.mubr.f32.gmra.mrb[0].mxu0 %v2111
    %v2414 = vpop.f32.mrb[0].mxu0
    %v2415 = vadd.f32 0.0, %v2414
    %v2416 = vpop.f32.mrb[0].mxu0
    %2417 = vdwg.mxu0
    %v2419 = vrot.slane %v2415, 6
    %v2421 = vadd.f32 %v481, %v2419
    %v2422 = vxor.u32 %v2421, 2147483648
    %v2423 = vmul.f32 %v2422, 1.442695
    %v2424 = vpow.pop %v2423
    %v2425 = vadd.f32 %v2424, 1.0
    %v2426 = vrcp.pop %v2425
    %v2427 = vmul.f32 1.0, %v2426
    %v2429 = vrot.slane %v2107, 6
    %v2431 = vmul.f32 %v2272, %v2429
    %v2432 = vmul.f32 %v2192, %v2347
    %v2433 = vadd.f32 %v2431, %v2432
    %v2434 = vtanh.pop %v2433
    %v2435 = vmul.f32 %v2427, %v2434
    %v2437 = vrot.slane %v2435, 2
    %v2438 = vsel %vm488, %v2437, 0
    %2440 = vmatprep.subr.mxu0 0.0
    %2441 = vmatpush1.msra.mxu0 %v484
    %2442 = vmatprep.subr.mxu0 0.0
    %2443 = vmatpush1.msra.mxu0 %v485
    %2444 = vmatprep.subr.mxu0 0.0
    %2445 = vmatpush1.msra.mxu0 %v486
    %2446 = vmatprep.subr.mxu0 0.0
    %2447 = vmatpush1.msra.mxu0 %v487
    %2448 = vmatprep.subr.mxu0 0.0
    %2449 = vmatpush1.msra.mxu0 0.0
    %2450 = vmatprep.subr.mxu0 0.0
    %2451 = vmatpush1.msra.mxu0 0.0
    %2452 = vmatprep.subr.mxu0 0.0
    %2453 = vmatpush1.msra.mxu0 0.0
    %2454 = vmatprep.subr.mxu0 0.0
    %2455 = vmatpush1.msra.mxu0 0.0
    %2456 = vmatprep.subr.mxu0 0.0
    %2457 = vmatpush1.msra.mxu0 0.0
    %2458 = vmatprep.subr.mxu0 0.0
    %2459 = vmatpush1.msra.mxu0 0.0
    %2460 = vmatprep.subr.mxu0 0.0
    %2461 = vmatpush1.msra.mxu0 0.0
    %2462 = vmatprep.subr.mxu0 0.0
    %2463 = vmatpush1.msra.mxu0 0.0
    %2464 = vmatprep.subr.mxu0 0.0
    %2465 = vmatpush1.msra.mxu0 0.0
    %2466 = vmatprep.subr.mxu0 0.0
    %2467 = vmatpush1.msra.mxu0 0.0
    %2468 = vmatprep.subr.mxu0 0.0
    %2469 = vmatpush1.msra.mxu0 0.0
    %2470 = vmatprep.subr.mxu0 0.0
    %2471 = vmatpush1.msra.mxu0 0.0
    %2472 = vmatprep.subr.mxu0 0.0
    %2473 = vmatpush1.msra.mxu0 0.0
    %2474 = vmatprep.subr.mxu0 0.0
    %2475 = vmatpush1.msra.mxu0 0.0
    %2476 = vmatprep.subr.mxu0 0.0
    %2477 = vmatpush1.msra.mxu0 0.0
    %2478 = vmatprep.subr.mxu0 0.0
    %2479 = vmatpush1.msra.mxu0 0.0
    %2480 = vmatprep.subr.mxu0 0.0
    %2481 = vmatpush1.msra.mxu0 0.0
    %2482 = vmatprep.subr.mxu0 0.0
    %2483 = vmatpush1.msra.mxu0 0.0
    %2484 = vmatprep.subr.mxu0 0.0
    %2485 = vmatpush1.msra.mxu0 0.0
    %2486 = vmatprep.subr.mxu0 0.0
    %2487 = vmatpush1.msra.mxu0 0.0
    %2488 = vmatprep.subr.mxu0 0.0
    %2489 = vmatpush1.msra.mxu0 0.0
    %2490 = vmatprep.subr.mxu0 0.0
    %2491 = vmatpush1.msra.mxu0 0.0
    %2492 = vmatprep.subr.mxu0 0.0
    %2493 = vmatpush1.msra.mxu0 0.0
    %2494 = vmatprep.subr.mxu0 0.0
    %2495 = vmatpush1.msra.mxu0 0.0
    %2496 = vmatprep.subr.mxu0 0.0
    %2497 = vmatpush1.msra.mxu0 0.0
    %2498 = vmatprep.subr.mxu0 0.0
    %2499 = vmatpush1.msra.mxu0 0.0
    %2500 = vmatprep.subr.mxu0 0.0
    %2501 = vmatpush1.msra.mxu0 0.0
    %2502 = vmatprep.subr.mxu0 0.0
    %2503 = vmatpush1.msra.mxu0 0.0
    %2504 = vmatprep.mubr.f32.mxu0 0.0
    %2505 = vmatmul.mubr.f32.gmra.mrb[0].mxu0 %v2438
    %v2506 = vpop.f32.mrb[0].mxu0
    %v2507 = vadd.f32 0.0, %v2506
    %v2508 = vpop.f32.mrb[0].mxu0
    %2509 = vdwg.mxu0
    %v2511 = vrot.slane %v2507, 4
    %v2513 = vadd.f32 %v223, %v2511
    %v2514 = vxor.u32 %v2513, 2147483648
    %v2515 = vmul.f32 %v2514, 1.442695
    %v2516 = vpow.pop %v2515
    %v2517 = vadd.f32 %v2516, 1.0
    %v2518 = vrcp.pop %v2517
    %v2519 = vmul.f32 1.0, %v2518
    %2520 = vmatprep.subr.mxu0 0.0
    %2521 = vmatpush1.msra.mxu0 %v570
    %2522 = vmatprep.subr.mxu0 0.0
    %2523 = vmatpush1.msra.mxu0 %v571
    %2524 = vmatprep.subr.mxu0 0.0
    %2525 = vmatpush1.msra.mxu0 %v572
    %2526 = vmatprep.subr.mxu0 0.0
    %2527 = vmatpush1.msra.mxu0 %v573
    %2528 = vmatprep.subr.mxu0 0.0
    %2529 = vmatpush1.msra.mxu0 0.0
    %2530 = vmatprep.subr.mxu0 0.0
    %2531 = vmatpush1.msra.mxu0 0.0
    %2532 = vmatprep.subr.mxu0 0.0
    %2533 = vmatpush1.msra.mxu0 0.0
    %2534 = vmatprep.subr.mxu0 0.0
    %2535 = vmatpush1.msra.mxu0 0.0
    %2536 = vmatprep.subr.mxu0 0.0
    %2537 = vmatpush1.msra.mxu0 0.0
    %2538 = vmatprep.subr.mxu0 0.0
    %2539 = vmatpush1.msra.mxu0 0.0
    %2540 = vmatprep.subr.mxu0 0.0
    %2541 = vmatpush1.msra.mxu0 0.0
    %2542 = vmatprep.subr.mxu0 0.0
    %2543 = vmatpush1.msra.mxu0 0.0
    %2544 = vmatprep.subr.mxu0 0.0
    %2545 = vmatpush1.msra.mxu0 0.0
    %2546 = vmatprep.subr.mxu0 0.0
    %2547 = vmatpush1.msra.mxu0 0.0
    %2548 = vmatprep.subr.mxu0 0.0
    %2549 = vmatpush1.msra.mxu0 0.0
    %2550 = vmatprep.subr.mxu0 0.0
    %2551 = vmatpush1.msra.mxu0 0.0
    %2552 = vmatprep.subr.mxu0 0.0
    %2553 = vmatpush1.msra.mxu0 0.0
    %2554 = vmatprep.subr.mxu0 0.0
    %2555 = vmatpush1.msra.mxu0 0.0
    %2556 = vmatprep.subr.mxu0 0.0
    %2557 = vmatpush1.msra.mxu0 0.0
    %2558 = vmatprep.subr.mxu0 0.0
    %2559 = vmatpush1.msra.mxu0 0.0
    %2560 = vmatprep.subr.mxu0 0.0
    %2561 = vmatpush1.msra.mxu0 0.0
    %2562 = vmatprep.subr.mxu0 0.0
    %2563 = vmatpush1.msra.mxu0 0.0
    %2564 = vmatprep.subr.mxu0 0.0
    %2565 = vmatpush1.msra.mxu0 0.0
    %2566 = vmatprep.subr.mxu0 0.0
    %2567 = vmatpush1.msra.mxu0 0.0
    %2568 = vmatprep.subr.mxu0 0.0
    %2569 = vmatpush1.msra.mxu0 0.0
    %2570 = vmatprep.subr.mxu0 0.0
    %2571 = vmatpush1.msra.mxu0 0.0
    %2572 = vmatprep.subr.mxu0 0.0
    %2573 = vmatpush1.msra.mxu0 0.0
    %2574 = vmatprep.subr.mxu0 0.0
    %2575 = vmatpush1.msra.mxu0 0.0
    %2576 = vmatprep.subr.mxu0 0.0
    %2577 = vmatpush1.msra.mxu0 0.0
    %2578 = vmatprep.subr.mxu0 0.0
    %2579 = vmatpush1.msra.mxu0 0.0
    %2580 = vmatprep.subr.mxu0 0.0
    %2581 = vmatpush1.msra.mxu0 0.0
    %2582 = vmatprep.subr.mxu0 0.0
    %2583 = vmatpush1.msra.mxu0 0.0
    %2584 = vmatprep.mubr.f32.mxu0 0.0
    %2585 = vmatmul.mubr.f32.gmra.mrb[0].mxu0 %v2438
    %v2586 = vpop.f32.mrb[0].mxu0
    %v2587 = vadd.f32 0.0, %v2586
    %v2588 = vpop.f32.mrb[0].mxu0
    %2589 = vdwg.mxu0
    %v2591 = vrot.slane %v2587, 4
    %v2593 = vadd.f32 %v309, %v2591
    %v2594 = vxor.u32 %v2593, 2147483648
    %v2595 = vmul.f32 %v2594, 1.442695
    %v2596 = vpow.pop %v2595
    %v2597 = vadd.f32 %v2596, 1.0
    %v2598 = vrcp.pop %v2597
    %v2599 = vmul.f32 1.0, %v2598
    %2600 = vmatprep.subr.mxu0 0.0
    %2601 = vmatpush1.msra.mxu0 %v652
    %2602 = vmatprep.subr.mxu0 0.0
    %2603 = vmatpush1.msra.mxu0 %v653
    %2604 = vmatprep.subr.mxu0 0.0
    %2605 = vmatpush1.msra.mxu0 %v654
    %2606 = vmatprep.subr.mxu0 0.0
    %2607 = vmatpush1.msra.mxu0 %v655
    %2608 = vmatprep.subr.mxu0 0.0
    %2609 = vmatpush1.msra.mxu0 0.0
    %2610 = vmatprep.subr.mxu0 0.0
    %2611 = vmatpush1.msra.mxu0 0.0
    %2612 = vmatprep.subr.mxu0 0.0
    %2613 = vmatpush1.msra.mxu0 0.0
    %2614 = vmatprep.subr.mxu0 0.0
    %2615 = vmatpush1.msra.mxu0 0.0
    %2616 = vmatprep.subr.mxu0 0.0
    %2617 = vmatpush1.msra.mxu0 0.0
    %2618 = vmatprep.subr.mxu0 0.0
    %2619 = vmatpush1.msra.mxu0 0.0
    %2620 = vmatprep.subr.mxu0 0.0
    %2621 = vmatpush1.msra.mxu0 0.0
    %2622 = vmatprep.subr.mxu0 0.0
    %2623 = vmatpush1.msra.mxu0 0.0
    %2624 = vmatprep.subr.mxu0 0.0
    %2625 = vmatpush1.msra.mxu0 0.0
    %2626 = vmatprep.subr.mxu0 0.0
    %2627 = vmatpush1.msra.mxu0 0.0
    %2628 = vmatprep.subr.mxu0 0.0
    %2629 = vmatpush1.msra.mxu0 0.0
    %2630 = vmatprep.subr.mxu0 0.0
    %2631 = vmatpush1.msra.mxu0 0.0
    %2632 = vmatprep.subr.mxu0 0.0
    %2633 = vmatpush1.msra.mxu0 0.0
    %2634 = vmatprep.subr.mxu0 0.0
    %2635 = vmatpush1.msra.mxu0 0.0
    %2636 = vmatprep.subr.mxu0 0.0
    %2637 = vmatpush1.msra.mxu0 0.0
    %2638 = vmatprep.subr.mxu0 0.0
    %2639 = vmatpush1.msra.mxu0 0.0
    %2640 = vmatprep.subr.mxu0 0.0
    %2641 = vmatpush1.msra.mxu0 0.0
    %2642 = vmatprep.subr.mxu0 0.0
    %2643 = vmatpush1.msra.mxu0 0.0
    %2644 = vmatprep.subr.mxu0 0.0
    %2645 = vmatpush1.msra.mxu0 0.0
    %2646 = vmatprep.subr.mxu0 0.0
    %2647 = vmatpush1.msra.mxu0 0.0
    %2648 = vmatprep.subr.mxu0 0.0
    %2649 = vmatpush1.msra.mxu0 0.0
    %2650 = vmatprep.subr.mxu0 0.0
    %2651 = vmatpush1.msra.mxu0 0.0
    %2652 = vmatprep.subr.mxu0 0.0
    %2653 = vmatpush1.msra.mxu0 0.0
    %2654 = vmatprep.subr.mxu0 0.0
    %2655 = vmatpush1.msra.mxu0 0.0
    %2656 = vmatprep.subr.mxu0 0.0
    %2657 = vmatpush1.msra.mxu0 0.0
    %2658 = vmatprep.subr.mxu0 0.0
    %2659 = vmatpush1.msra.mxu0 0.0
    %2660 = vmatprep.subr.mxu0 0.0
    %2661 = vmatpush1.msra.mxu0 0.0
    %2662 = vmatprep.subr.mxu0 0.0
    %2663 = vmatpush1.msra.mxu0 0.0
    %2664 = vmatprep.mubr.f32.mxu0 0.0
    %2665 = vmatmul.mubr.f32.gmra.mrb[0].mxu0 %v2438
    %v2666 = vpop.f32.mrb[0].mxu0
    %v2667 = vadd.f32 0.0, %v2666
    %v2668 = vpop.f32.mrb[0].mxu0
    %2669 = vdwg.mxu0
    %v2671 = vrot.slane %v2667, 4
    %v2673 = vadd.f32 %v395, %v2671
    %v2674 = vtanh.pop %v2673
    %2675 = vmatprep.subr.mxu0 0.0
    %2676 = vmatpush1.msra.mxu0 %v729
    %2677 = vmatprep.subr.mxu0 0.0
    %2678 = vmatpush1.msra.mxu0 %v730
    %2679 = vmatprep.subr.mxu0 0.0
    %2680 = vmatpush1.msra.mxu0 %v731
    %2681 = vmatprep.subr.mxu0 0.0
    %2682 = vmatpush1.msra.mxu0 %v732
    %2683 = vmatprep.subr.mxu0 0.0
    %2684 = vmatpush1.msra.mxu0 0.0
    %2685 = vmatprep.subr.mxu0 0.0
    %2686 = vmatpush1.msra.mxu0 0.0
    %2687 = vmatprep.subr.mxu0 0.0
    %2688 = vmatpush1.msra.mxu0 0.0
    %2689 = vmatprep.subr.mxu0 0.0
    %2690 = vmatpush1.msra.mxu0 0.0
    %2691 = vmatprep.subr.mxu0 0.0
    %2692 = vmatpush1.msra.mxu0 0.0
    %2693 = vmatprep.subr.mxu0 0.0
    %2694 = vmatpush1.msra.mxu0 0.0
    %2695 = vmatprep.subr.mxu0 0.0
    %2696 = vmatpush1.msra.mxu0 0.0
    %2697 = vmatprep.subr.mxu0 0.0
    %2698 = vmatpush1.msra.mxu0 0.0
    %2699 = vmatprep.subr.mxu0 0.0
    %2700 = vmatpush1.msra.mxu0 0.0
    %2701 = vmatprep.subr.mxu0 0.0
    %2702 = vmatpush1.msra.mxu0 0.0
    %2703 = vmatprep.subr.mxu0 0.0
    %2704 = vmatpush1.msra.mxu0 0.0
    %2705 = vmatprep.subr.mxu0 0.0
    %2706 = vmatpush1.msra.mxu0 0.0
    %2707 = vmatprep.subr.mxu0 0.0
    %2708 = vmatpush1.msra.mxu0 0.0
    %2709 = vmatprep.subr.mxu0 0.0
    %2710 = vmatpush1.msra.mxu0 0.0
    %2711 = vmatprep.subr.mxu0 0.0
    %2712 = vmatpush1.msra.mxu0 0.0
    %2713 = vmatprep.subr.mxu0 0.0
    %2714 = vmatpush1.msra.mxu0 0.0
    %2715 = vmatprep.subr.mxu0 0.0
    %2716 = vmatpush1.msra.mxu0 0.0
    %2717 = vmatprep.subr.mxu0 0.0
    %2718 = vmatpush1.msra.mxu0 0.0
    %2719 = vmatprep.subr.mxu0 0.0
    %2720 = vmatpush1.msra.mxu0 0.0
    %2721 = vmatprep.subr.mxu0 0.0
    %2722 = vmatpush1.msra.mxu0 0.0
    %2723 = vmatprep.subr.mxu0 0.0
    %2724 = vmatpush1.msra.mxu0 0.0
    %2725 = vmatprep.subr.mxu0 0.0
    %2726 = vmatpush1.msra.mxu0 0.0
    %2727 = vmatprep.subr.mxu0 0.0
    %2728 = vmatpush1.msra.mxu0 0.0
    %2729 = vmatprep.subr.mxu0 0.0
    %2730 = vmatpush1.msra.mxu0 0.0
    %2731 = vmatprep.subr.mxu0 0.0
    %2732 = vmatpush1.msra.mxu0 0.0
    %2733 = vmatprep.subr.mxu0 0.0
    %2734 = vmatpush1.msra.mxu0 0.0
    %2735 = vmatprep.subr.mxu0 0.0
    %2736 = vmatpush1.msra.mxu0 0.0
    %2737 = vmatprep.subr.mxu0 0.0
    %2738 = vmatpush1.msra.mxu0 0.0
    %2739 = vmatprep.mubr.f32.mxu0 0.0
    %2740 = vmatmul.mubr.f32.gmra.mrb[0].mxu0 %v2438
    %v2741 = vpop.f32.mrb[0].mxu0
    %v2742 = vadd.f32 0.0, %v2741
    %v2743 = vpop.f32.mrb[0].mxu0
    %2744 = vdwg.mxu0
    %v2746 = vrot.slane %v2742, 4
    %v2748 = vadd.f32 %v481, %v2746
    %v2749 = vxor.u32 %v2748, 2147483648
    %v2750 = vmul.f32 %v2749, 1.442695
    %v2751 = vpow.pop %v2750
    %v2752 = vadd.f32 %v2751, 1.0
    %v2753 = vrcp.pop %v2752
    %v2754 = vmul.f32 1.0, %v2753
    %v2756 = vrot.slane %v2433, 6
    %v2758 = vmul.f32 %v2599, %v2756
    %v2759 = vmul.f32 %v2519, %v2674
    %v2760 = vadd.f32 %v2758, %v2759
    %v2761 = vtanh.pop %v2760
    %v2762 = vmul.f32 %v2754, %v2761
    %v2764 = vrot.slane %v2762, 4
    %v2765 = vsel %vm488, %v2764, 0
    %2767 = vmatprep.subr.mxu0 0.0
    %2768 = vmatpush1.msra.mxu0 %v484
    %2769 = vmatprep.subr.mxu0 0.0
    %2770 = vmatpush1.msra.mxu0 %v485
    %2771 = vmatprep.subr.mxu0 0.0
    %2772 = vmatpush1.msra.mxu0 %v486
    %2773 = vmatprep.subr.mxu0 0.0
    %2774 = vmatpush1.msra.mxu0 %v487
    %2775 = vmatprep.subr.mxu0 0.0
    %2776 = vmatpush1.msra.mxu0 0.0
    %2777 = vmatprep.subr.mxu0 0.0
    %2778 = vmatpush1.msra.mxu0 0.0
    %2779 = vmatprep.subr.mxu0 0.0
    %2780 = vmatpush1.msra.mxu0 0.0
    %2781 = vmatprep.subr.mxu0 0.0
    %2782 = vmatpush1.msra.mxu0 0.0
    %2783 = vmatprep.subr.mxu0 0.0
    %2784 = vmatpush1.msra.mxu0 0.0
    %2785 = vmatprep.subr.mxu0 0.0
    %2786 = vmatpush1.msra.mxu0 0.0
    %2787 = vmatprep.subr.mxu0 0.0
    %2788 = vmatpush1.msra.mxu0 0.0
    %2789 = vmatprep.subr.mxu0 0.0
    %2790 = vmatpush1.msra.mxu0 0.0
    %2791 = vmatprep.subr.mxu0 0.0
    %2792 = vmatpush1.msra.mxu0 0.0
    %2793 = vmatprep.subr.mxu0 0.0
    %2794 = vmatpush1.msra.mxu0 0.0
    %2795 = vmatprep.subr.mxu0 0.0
    %2796 = vmatpush1.msra.mxu0 0.0
    %2797 = vmatprep.subr.mxu0 0.0
    %2798 = vmatpush1.msra.mxu0 0.0
    %2799 = vmatprep.subr.mxu0 0.0
    %2800 = vmatpush1.msra.mxu0 0.0
    %2801 = vmatprep.subr.mxu0 0.0
    %2802 = vmatpush1.msra.mxu0 0.0
    %2803 = vmatprep.subr.mxu0 0.0
    %2804 = vmatpush1.msra.mxu0 0.0
    %2805 = vmatprep.subr.mxu0 0.0
    %2806 = vmatpush1.msra.mxu0 0.0
    %2807 = vmatprep.subr.mxu0 0.0
    %2808 = vmatpush1.msra.mxu0 0.0
    %2809 = vmatprep.subr.mxu0 0.0
    %2810 = vmatpush1.msra.mxu0 0.0
    %2811 = vmatprep.subr.mxu0 0.0
    %2812 = vmatpush1.msra.mxu0 0.0
    %2813 = vmatprep.subr.mxu0 0.0
    %2814 = vmatpush1.msra.mxu0 0.0
    %2815 = vmatprep.subr.mxu0 0.0
    %2816 = vmatpush1.msra.mxu0 0.0
    %2817 = vmatprep.subr.mxu0 0.0
    %2818 = vmatpush1.msra.mxu0 0.0
    %2819 = vmatprep.subr.mxu0 0.0
    %2820 = vmatpush1.msra.mxu0 0.0
    %2821 = vmatprep.subr.mxu0 0.0
    %2822 = vmatpush1.msra.mxu0 0.0
    %2823 = vmatprep.subr.mxu0 0.0
    %2824 = vmatpush1.msra.mxu0 0.0
    %2825 = vmatprep.subr.mxu0 0.0
    %2826 = vmatpush1.msra.mxu0 0.0
    %2827 = vmatprep.subr.mxu0 0.0
    %2828 = vmatpush1.msra.mxu0 0.0
    %2829 = vmatprep.subr.mxu0 0.0
    %2830 = vmatpush1.msra.mxu0 0.0
    %2831 = vmatprep.mubr.f32.mxu0 0.0
    %2832 = vmatmul.mubr.f32.gmra.mrb[0].mxu0 %v2765
    %v2833 = vpop.f32.mrb[0].mxu0
    %v2834 = vadd.f32 0.0, %v2833
    %v2835 = vpop.f32.mrb[0].mxu0
    %2836 = vdwg.mxu0
    %v2838 = vrot.slane %v2834, 2
    %v2840 = vadd.f32 %v223, %v2838
    %v2841 = vxor.u32 %v2840, 2147483648
    %v2842 = vmul.f32 %v2841, 1.442695
    %v2843 = vpow.pop %v2842
    %v2844 = vadd.f32 %v2843, 1.0
    %v2845 = vrcp.pop %v2844
    %v2846 = vmul.f32 1.0, %v2845
    %2847 = vmatprep.subr.mxu0 0.0
    %2848 = vmatpush1.msra.mxu0 %v570
    %2849 = vmatprep.subr.mxu0 0.0
    %2850 = vmatpush1.msra.mxu0 %v571
    %2851 = vmatprep.subr.mxu0 0.0
    %2852 = vmatpush1.msra.mxu0 %v572
    %2853 = vmatprep.subr.mxu0 0.0
    %2854 = vmatpush1.msra.mxu0 %v573
    %2855 = vmatprep.subr.mxu0 0.0
    %2856 = vmatpush1.msra.mxu0 0.0
    %2857 = vmatprep.subr.mxu0 0.0
    %2858 = vmatpush1.msra.mxu0 0.0
    %2859 = vmatprep.subr.mxu0 0.0
    %2860 = vmatpush1.msra.mxu0 0.0
    %2861 = vmatprep.subr.mxu0 0.0
    %2862 = vmatpush1.msra.mxu0 0.0
    %2863 = vmatprep.subr.mxu0 0.0
    %2864 = vmatpush1.msra.mxu0 0.0
    %2865 = vmatprep.subr.mxu0 0.0
    %2866 = vmatpush1.msra.mxu0 0.0
    %2867 = vmatprep.subr.mxu0 0.0
    %2868 = vmatpush1.msra.mxu0 0.0
    %2869 = vmatprep.subr.mxu0 0.0
    %2870 = vmatpush1.msra.mxu0 0.0
    %2871 = vmatprep.subr.mxu0 0.0
    %2872 = vmatpush1.msra.mxu0 0.0
    %2873 = vmatprep.subr.mxu0 0.0
    %2874 = vmatpush1.msra.mxu0 0.0
    %2875 = vmatprep.subr.mxu0 0.0
    %2876 = vmatpush1.msra.mxu0 0.0
    %2877 = vmatprep.subr.mxu0 0.0
    %2878 = vmatpush1.msra.mxu0 0.0
    %2879 = vmatprep.subr.mxu0 0.0
    %2880 = vmatpush1.msra.mxu0 0.0
    %2881 = vmatprep.subr.mxu0 0.0
    %2882 = vmatpush1.msra.mxu0 0.0
    %2883 = vmatprep.subr.mxu0 0.0
    %2884 = vmatpush1.msra.mxu0 0.0
    %2885 = vmatprep.subr.mxu0 0.0
    %2886 = vmatpush1.msra.mxu0 0.0
    %2887 = vmatprep.subr.mxu0 0.0
    %2888 = vmatpush1.msra.mxu0 0.0
    %2889 = vmatprep.subr.mxu0 0.0
    %2890 = vmatpush1.msra.mxu0 0.0
    %2891 = vmatprep.subr.mxu0 0.0
    %2892 = vmatpush1.msra.mxu0 0.0
    %2893 = vmatprep.subr.mxu0 0.0
    %2894 = vmatpush1.msra.mxu0 0.0
    %2895 = vmatprep.subr.mxu0 0.0
    %2896 = vmatpush1.msra.mxu0 0.0
    %2897 = vmatprep.subr.mxu0 0.0
    %2898 = vmatpush1.msra.mxu0 0.0
    %2899 = vmatprep.subr.mxu0 0.0
    %2900 = vmatpush1.msra.mxu0 0.0
    %2901 = vmatprep.subr.mxu0 0.0
    %2902 = vmatpush1.msra.mxu0 0.0
    %2903 = vmatprep.subr.mxu0 0.0
    %2904 = vmatpush1.msra.mxu0 0.0
    %2905 = vmatprep.subr.mxu0 0.0
    %2906 = vmatpush1.msra.mxu0 0.0
    %2907 = vmatprep.subr.mxu0 0.0
    %2908 = vmatpush1.msra.mxu0 0.0
    %2909 = vmatprep.subr.mxu0 0.0
    %2910 = vmatpush1.msra.mxu0 0.0
    %2911 = vmatprep.mubr.f32.mxu0 0.0
    %2912 = vmatmul.mubr.f32.gmra.mrb[0].mxu0 %v2765
    %v2913 = vpop.f32.mrb[0].mxu0
    %v2914 = vadd.f32 0.0, %v2913
    %v2915 = vpop.f32.mrb[0].mxu0
    %2916 = vdwg.mxu0
    %v2918 = vrot.slane %v2914, 2
    %v2920 = vadd.f32 %v309, %v2918
    %v2921 = vxor.u32 %v2920, 2147483648
    %v2922 = vmul.f32 %v2921, 1.442695
    %v2923 = vpow.pop %v2922
    %v2924 = vadd.f32 %v2923, 1.0
    %v2925 = vrcp.pop %v2924
    %v2926 = vmul.f32 1.0, %v2925
    %2927 = vmatprep.subr.mxu0 0.0
    %2928 = vmatpush1.msra.mxu0 %v652
    %2929 = vmatprep.subr.mxu0 0.0
    %2930 = vmatpush1.msra.mxu0 %v653
    %2931 = vmatprep.subr.mxu0 0.0
    %2932 = vmatpush1.msra.mxu0 %v654
    %2933 = vmatprep.subr.mxu0 0.0
    %2934 = vmatpush1.msra.mxu0 %v655
    %2935 = vmatprep.subr.mxu0 0.0
    %2936 = vmatpush1.msra.mxu0 0.0
    %2937 = vmatprep.subr.mxu0 0.0
    %2938 = vmatpush1.msra.mxu0 0.0
    %2939 = vmatprep.subr.mxu0 0.0
    %2940 = vmatpush1.msra.mxu0 0.0
    %2941 = vmatprep.subr.mxu0 0.0
    %2942 = vmatpush1.msra.mxu0 0.0
    %2943 = vmatprep.subr.mxu0 0.0
    %2944 = vmatpush1.msra.mxu0 0.0
    %2945 = vmatprep.subr.mxu0 0.0
    %2946 = vmatpush1.msra.mxu0 0.0
    %2947 = vmatprep.subr.mxu0 0.0
    %2948 = vmatpush1.msra.mxu0 0.0
    %2949 = vmatprep.subr.mxu0 0.0
    %2950 = vmatpush1.msra.mxu0 0.0
    %2951 = vmatprep.subr.mxu0 0.0
    %2952 = vmatpush1.msra.mxu0 0.0
    %2953 = vmatprep.subr.mxu0 0.0
    %2954 = vmatpush1.msra.mxu0 0.0
    %2955 = vmatprep.subr.mxu0 0.0
    %2956 = vmatpush1.msra.mxu0 0.0
    %2957 = vmatprep.subr.mxu0 0.0
    %2958 = vmatpush1.msra.mxu0 0.0
    %2959 = vmatprep.subr.mxu0 0.0
    %2960 = vmatpush1.msra.mxu0 0.0
    %2961 = vmatprep.subr.mxu0 0.0
    %2962 = vmatpush1.msra.mxu0 0.0
    %2963 = vmatprep.subr.mxu0 0.0
    %2964 = vmatpush1.msra.mxu0 0.0
    %2965 = vmatprep.subr.mxu0 0.0
    %2966 = vmatpush1.msra.mxu0 0.0
    %2967 = vmatprep.subr.mxu0 0.0
    %2968 = vmatpush1.msra.mxu0 0.0
    %2969 = vmatprep.subr.mxu0 0.0
    %2970 = vmatpush1.msra.mxu0 0.0
    %2971 = vmatprep.subr.mxu0 0.0
    %2972 = vmatpush1.msra.mxu0 0.0
    %2973 = vmatprep.subr.mxu0 0.0
    %2974 = vmatpush1.msra.mxu0 0.0
    %2975 = vmatprep.subr.mxu0 0.0
    %2976 = vmatpush1.msra.mxu0 0.0
    %2977 = vmatprep.subr.mxu0 0.0
    %2978 = vmatpush1.msra.mxu0 0.0
    %2979 = vmatprep.subr.mxu0 0.0
    %2980 = vmatpush1.msra.mxu0 0.0
    %2981 = vmatprep.subr.mxu0 0.0
    %2982 = vmatpush1.msra.mxu0 0.0
    %2983 = vmatprep.subr.mxu0 0.0
    %2984 = vmatpush1.msra.mxu0 0.0
    %2985 = vmatprep.subr.mxu0 0.0
    %2986 = vmatpush1.msra.mxu0 0.0
    %2987 = vmatprep.subr.mxu0 0.0
    %2988 = vmatpush1.msra.mxu0 0.0
    %2989 = vmatprep.subr.mxu0 0.0
    %2990 = vmatpush1.msra.mxu0 0.0
    %2991 = vmatprep.mubr.f32.mxu0 0.0
    %2992 = vmatmul.mubr.f32.gmra.mrb[0].mxu0 %v2765
    %v2993 = vpop.f32.mrb[0].mxu0
    %v2994 = vadd.f32 0.0, %v2993
    %v2995 = vpop.f32.mrb[0].mxu0
    %2996 = vdwg.mxu0
    %v2998 = vrot.slane %v2994, 2
    %v3000 = vadd.f32 %v395, %v2998
    %v3001 = vtanh.pop %v3000
    %3002 = vmatprep.subr.mxu0 0.0
    %3003 = vmatpush1.msra.mxu0 %v729
    %3004 = vmatprep.subr.mxu0 0.0
    %3005 = vmatpush1.msra.mxu0 %v730
    %3006 = vmatprep.subr.mxu0 0.0
    %3007 = vmatpush1.msra.mxu0 %v731
    %3008 = vmatprep.subr.mxu0 0.0
    %3009 = vmatpush1.msra.mxu0 %v732
    %3010 = vmatprep.subr.mxu0 0.0
    %3011 = vmatpush1.msra.mxu0 0.0
    %3012 = vmatprep.subr.mxu0 0.0
    %3013 = vmatpush1.msra.mxu0 0.0
    %3014 = vmatprep.subr.mxu0 0.0
    %3015 = vmatpush1.msra.mxu0 0.0
    %3016 = vmatprep.subr.mxu0 0.0
    %3017 = vmatpush1.msra.mxu0 0.0
    %3018 = vmatprep.subr.mxu0 0.0
    %3019 = vmatpush1.msra.mxu0 0.0
    %3020 = vmatprep.subr.mxu0 0.0
    %3021 = vmatpush1.msra.mxu0 0.0
    %3022 = vmatprep.subr.mxu0 0.0
    %3023 = vmatpush1.msra.mxu0 0.0
    %3024 = vmatprep.subr.mxu0 0.0
    %3025 = vmatpush1.msra.mxu0 0.0
    %3026 = vmatprep.subr.mxu0 0.0
    %3027 = vmatpush1.msra.mxu0 0.0
    %3028 = vmatprep.subr.mxu0 0.0
    %3029 = vmatpush1.msra.mxu0 0.0
    %3030 = vmatprep.subr.mxu0 0.0
    %3031 = vmatpush1.msra.mxu0 0.0
    %3032 = vmatprep.subr.mxu0 0.0
    %3033 = vmatpush1.msra.mxu0 0.0
    %3034 = vmatprep.subr.mxu0 0.0
    %3035 = vmatpush1.msra.mxu0 0.0
    %3036 = vmatprep.subr.mxu0 0.0
    %3037 = vmatpush1.msra.mxu0 0.0
    %3038 = vmatprep.subr.mxu0 0.0
    %3039 = vmatpush1.msra.mxu0 0.0
    %3040 = vmatprep.subr.mxu0 0.0
    %3041 = vmatpush1.msra.mxu0 0.0
    %3042 = vmatprep.subr.mxu0 0.0
    %3043 = vmatpush1.msra.mxu0 0.0
    %3044 = vmatprep.subr.mxu0 0.0
    %3045 = vmatpush1.msra.mxu0 0.0
    %3046 = vmatprep.subr.mxu0 0.0
    %3047 = vmatpush1.msra.mxu0 0.0
    %3048 = vmatprep.subr.mxu0 0.0
    %3049 = vmatpush1.msra.mxu0 0.0
    %3050 = vmatprep.subr.mxu0 0.0
    %3051 = vmatpush1.msra.mxu0 0.0
    %3052 = vmatprep.subr.mxu0 0.0
    %3053 = vmatpush1.msra.mxu0 0.0
    %3054 = vmatprep.subr.mxu0 0.0
    %3055 = vmatpush1.msra.mxu0 0.0
    %3056 = vmatprep.subr.mxu0 0.0
    %3057 = vmatpush1.msra.mxu0 0.0
    %3058 = vmatprep.subr.mxu0 0.0
    %3059 = vmatpush1.msra.mxu0 0.0
    %3060 = vmatprep.subr.mxu0 0.0
    %3061 = vmatpush1.msra.mxu0 0.0
    %3062 = vmatprep.subr.mxu0 0.0
    %3063 = vmatpush1.msra.mxu0 0.0
    %3064 = vmatprep.subr.mxu0 0.0
    %3065 = vmatpush1.msra.mxu0 0.0
    %3066 = vmatprep.mubr.f32.mxu0 0.0
    %3067 = vmatmul.mubr.f32.gmra.mrb[0].mxu0 %v2765
    %v3068 = vpop.f32.mrb[0].mxu0
    %v3069 = vadd.f32 0.0, %v3068
    %v3070 = vpop.f32.mrb[0].mxu0
    %3071 = vdwg.mxu0
    %v3073 = vrot.slane %v3069, 2
    %v3075 = vadd.f32 %v481, %v3073
    %v3076 = vxor.u32 %v3075, 2147483648
    %v3077 = vmul.f32 %v3076, 1.442695
    %v3078 = vpow.pop %v3077
    %v3079 = vadd.f32 %v3078, 1.0
    %v3080 = vrcp.pop %v3079
    %v3081 = vmul.f32 1.0, %v3080
    %v3083 = vrot.slane %v2760, 6
    %v3085 = vmul.f32 %v2926, %v3083
    %v3086 = vmul.f32 %v2846, %v3001
    %v3087 = vadd.f32 %v3085, %v3086
    %v3088 = vtanh.pop %v3087
    %v3089 = vmul.f32 %v3081, %v3088
    %v3090 = vsel %vm126, %v814, %v1140
    %v3091 = vsel %vm128, %v3090, %v1467
    %v3092 = vsel %vm130, %v3091, %v1794
    %v3093 = vsel %vm126, %v2109, %v2435
    %v3094 = vsel %vm128, %v3093, %v2762
    %v3095 = vsel %vm130, %v3094, %v3089
    %v3096 = vld [vmem:[#allocation7] sm:$0xff]
    %v3097 = vld [vmem:[#allocation7 + $0x8] sm:$0xff]
    %v3098 = vld [vmem:[#allocation7 + $0x10] sm:$0xff]
    %v3099 = vld [vmem:[#allocation7 + $0x18] sm:$0xff]
    %v3100 = vld [vmem:[%s6] sm:$0x1]
    %v3102 = vlaneseq
    %v3103 = vshrl.u32 %v3102, 7
    %v3104 = vsub.s32 0, %v3103
    %v3105 = vrot.slane %v3100, %v3104
    %v3108 = vsel %vm488, %v3092, 0
    %v3111 = vsel %vm488, %v3095, 0
    %3113 = vmatprep.subr.mxu0 0.0
    %3114 = vmatpush1.msra.mxu0 %v3096
    %3115 = vmatprep.subr.mxu0 0.0
    %3116 = vmatpush1.msra.mxu0 %v3097
    %3117 = vmatprep.subr.mxu0 0.0
    %3118 = vmatpush1.msra.mxu0 %v3098
    %3119 = vmatprep.subr.mxu0 0.0
    %3120 = vmatpush1.msra.mxu0 %v3099
    %3121 = vmatprep.subr.mxu0 0.0
    %3122 = vmatpush1.msra.mxu0 0.0
    %3123 = vmatprep.subr.mxu0 0.0
    %3124 = vmatpush1.msra.mxu0 0.0
    %3125 = vmatprep.subr.mxu0 0.0
    %3126 = vmatpush1.msra.mxu0 0.0
    %3127 = vmatprep.subr.mxu0 0.0
    %3128 = vmatpush1.msra.mxu0 0.0
    %3129 = vmatprep.subr.mxu0 0.0
    %3130 = vmatpush1.msra.mxu0 0.0
    %3131 = vmatprep.subr.mxu0 0.0
    %3132 = vmatpush1.msra.mxu0 0.0
    %3133 = vmatprep.subr.mxu0 0.0
    %3134 = vmatpush1.msra.mxu0 0.0
    %3135 = vmatprep.subr.mxu0 0.0
    %3136 = vmatpush1.msra.mxu0 0.0
    %3137 = vmatprep.subr.mxu0 0.0
    %3138 = vmatpush1.msra.mxu0 0.0
    %3139 = vmatprep.subr.mxu0 0.0
    %3140 = vmatpush1.msra.mxu0 0.0
    %3141 = vmatprep.subr.mxu0 0.0
    %3142 = vmatpush1.msra.mxu0 0.0
    %3143 = vmatprep.subr.mxu0 0.0
    %3144 = vmatpush1.msra.mxu0 0.0
    %3145 = vmatprep.subr.mxu0 0.0
    %3146 = vmatpush1.msra.mxu0 0.0
    %3147 = vmatprep.subr.mxu0 0.0
    %3148 = vmatpush1.msra.mxu0 0.0
    %3149 = vmatprep.subr.mxu0 0.0
    %3150 = vmatpush1.msra.mxu0 0.0
    %3151 = vmatprep.subr.mxu0 0.0
    %3152 = vmatpush1.msra.mxu0 0.0
    %3153 = vmatprep.subr.mxu0 0.0
    %3154 = vmatpush1.msra.mxu0 0.0
    %3155 = vmatprep.subr.mxu0 0.0
    %3156 = vmatpush1.msra.mxu0 0.0
    %3157 = vmatprep.subr.mxu0 0.0
    %3158 = vmatpush1.msra.mxu0 0.0
    %3159 = vmatprep.subr.mxu0 0.0
    %3160 = vmatpush1.msra.mxu0 0.0
    %3161 = vmatprep.subr.mxu0 0.0
    %3162 = vmatpush1.msra.mxu0 0.0
    %3163 = vmatprep.subr.mxu0 0.0
    %3164 = vmatpush1.msra.mxu0 0.0
    %3165 = vmatprep.subr.mxu0 0.0
    %3166 = vmatpush1.msra.mxu0 0.0
    %3167 = vmatprep.subr.mxu0 0.0
    %3168 = vmatpush1.msra.mxu0 0.0
    %3169 = vmatprep.subr.mxu0 0.0
    %3170 = vmatpush1.msra.mxu0 0.0
    %3171 = vmatprep.subr.mxu0 0.0
    %3172 = vmatpush1.msra.mxu0 0.0
    %3173 = vmatprep.subr.mxu0 0.0
    %3174 = vmatpush1.msra.mxu0 0.0
    %3175 = vmatprep.subr.mxu0 0.0
    %3176 = vmatpush1.msra.mxu0 0.0
    %3177 = vmatprep.mubr.f32.mxu0 0.0
    %3178 = vmatmul.mubr.f32.gmra.mrb[0].mxu0 %v3108
    %v3179 = vpop.f32.mrb[0].mxu0
    %v3180 = vadd.f32 %v3105, %v3179
    %v3181 = vpop.f32.mrb[0].mxu0
    %3182 = vmatprep.mubr.f32.mxu0 0.0
    %3183 = vmatmul.mubr.f32.gmra.mrb[0].mxu0 %v3111
    %v3184 = vpop.f32.mrb[0].mxu0
    %v3185 = vadd.f32 %v3105, %v3184
    %v3186 = vpop.f32.mrb[0].mxu0
    %3187 = vdwg.mxu0
    %s3188 = scalar_lea.vmem [#allocation7], 32
    %v3189 = vld [vmem:[%s3188] sm:$0xff]
    %v3190 = vld [vmem:[%s3188 + $0x8] sm:$0xff]
    %v3191 = vld [vmem:[%s3188 + $0x10] sm:$0xff]
    %v3192 = vld [vmem:[%s3188 + $0x18] sm:$0xff]
    %s3193 = scalar_lea.vmem %s6, 1
    %v3194 = vld [vmem:[%s3193] sm:$0x1]
    %v3196 = vlaneseq
    %v3197 = vshrl.u32 %v3196, 7
    %v3198 = vsub.s32 0, %v3197
    %v3199 = vrot.slane %v3194, %v3198
    %3201 = vmatprep.subr.mxu0 0.0
    %3202 = vmatpush1.msra.mxu0 %v3189
    %3203 = vmatprep.subr.mxu0 0.0
    %3204 = vmatpush1.msra.mxu0 %v3190
    %3205 = vmatprep.subr.mxu0 0.0
    %3206 = vmatpush1.msra.mxu0 %v3191
    %3207 = vmatprep.subr.mxu0 0.0
    %3208 = vmatpush1.msra.mxu0 %v3192
    %3209 = vmatprep.subr.mxu0 0.0
    %3210 = vmatpush1.msra.mxu0 0.0
    %3211 = vmatprep.subr.mxu0 0.0
    %3212 = vmatpush1.msra.mxu0 0.0
    %3213 = vmatprep.subr.mxu0 0.0
    %3214 = vmatpush1.msra.mxu0 0.0
    %3215 = vmatprep.subr.mxu0 0.0
    %3216 = vmatpush1.msra.mxu0 0.0
    %3217 = vmatprep.subr.mxu0 0.0
    %3218 = vmatpush1.msra.mxu0 0.0
    %3219 = vmatprep.subr.mxu0 0.0
    %3220 = vmatpush1.msra.mxu0 0.0
    %3221 = vmatprep.subr.mxu0 0.0
    %3222 = vmatpush1.msra.mxu0 0.0
    %3223 = vmatprep.subr.mxu0 0.0
    %3224 = vmatpush1.msra.mxu0 0.0
    %3225 = vmatprep.subr.mxu0 0.0
    %3226 = vmatpush1.msra.mxu0 0.0
    %3227 = vmatprep.subr.mxu0 0.0
    %3228 = vmatpush1.msra.mxu0 0.0
    %3229 = vmatprep.subr.mxu0 0.0
    %3230 = vmatpush1.msra.mxu0 0.0
    %3231 = vmatprep.subr.mxu0 0.0
    %3232 = vmatpush1.msra.mxu0 0.0
    %3233 = vmatprep.subr.mxu0 0.0
    %3234 = vmatpush1.msra.mxu0 0.0
    %3235 = vmatprep.subr.mxu0 0.0
    %3236 = vmatpush1.msra.mxu0 0.0
    %3237 = vmatprep.subr.mxu0 0.0
    %3238 = vmatpush1.msra.mxu0 0.0
    %3239 = vmatprep.subr.mxu0 0.0
    %3240 = vmatpush1.msra.mxu0 0.0
    %3241 = vmatprep.subr.mxu0 0.0
    %3242 = vmatpush1.msra.mxu0 0.0
    %3243 = vmatprep.subr.mxu0 0.0
    %3244 = vmatpush1.msra.mxu0 0.0
    %3245 = vmatprep.subr.mxu0 0.0
    %3246 = vmatpush1.msra.mxu0 0.0
    %3247 = vmatprep.subr.mxu0 0.0
    %3248 = vmatpush1.msra.mxu0 0.0
    %3249 = vmatprep.subr.mxu0 0.0
    %3250 = vmatpush1.msra.mxu0 0.0
    %3251 = vmatprep.subr.mxu0 0.0
    %3252 = vmatpush1.msra.mxu0 0.0
    %3253 = vmatprep.subr.mxu0 0.0
    %3254 = vmatpush1.msra.mxu0 0.0
    %3255 = vmatprep.subr.mxu0 0.0
    %3256 = vmatpush1.msra.mxu0 0.0
    %3257 = vmatprep.subr.mxu0 0.0
    %3258 = vmatpush1.msra.mxu0 0.0
    %3259 = vmatprep.subr.mxu0 0.0
    %3260 = vmatpush1.msra.mxu0 0.0
    %3261 = vmatprep.subr.mxu0 0.0
    %3262 = vmatpush1.msra.mxu0 0.0
    %3263 = vmatprep.subr.mxu0 0.0
    %3264 = vmatpush1.msra.mxu0 0.0
    %3265 = vmatprep.mubr.f32.mxu0 0.0
    %3266 = vmatmul.mubr.f32.gmra.mrb[0].mxu0 %v3108
    %v3267 = vpop.f32.mrb[0].mxu0
    %v3268 = vadd.f32 %v3199, %v3267
    %v3269 = vpop.f32.mrb[0].mxu0
    %3270 = vmatprep.mubr.f32.mxu0 0.0
    %3271 = vmatmul.mubr.f32.gmra.mrb[0].mxu0 %v3111
    %v3272 = vpop.f32.mrb[0].mxu0
    %v3273 = vadd.f32 %v3199, %v3272
    %v3274 = vpop.f32.mrb[0].mxu0
    %3275 = vdwg.mxu0
    %s3276 = scalar_lea.vmem [#allocation7], 64
    %v3277 = vld [vmem:[%s3276] sm:$0xff]
    %v3278 = vld [vmem:[%s3276 + $0x8] sm:$0xff]
    %v3279 = vld [vmem:[%s3276 + $0x10] sm:$0xff]
    %v3280 = vld [vmem:[%s3276 + $0x18] sm:$0xff]
    %s3281 = scalar_lea.vmem %s6, 2
    %v3282 = vld [vmem:[%s3281] sm:$0x1]
    %v3284 = vlaneseq
    %v3285 = vshrl.u32 %v3284, 7
    %v3286 = vsub.s32 0, %v3285
    %v3287 = vrot.slane %v3282, %v3286
    %3289 = vmatprep.subr.mxu0 0.0
    %3290 = vmatpush1.msra.mxu0 %v3277
    %3291 = vmatprep.subr.mxu0 0.0
    %3292 = vmatpush1.msra.mxu0 %v3278
    %3293 = vmatprep.subr.mxu0 0.0
    %3294 = vmatpush1.msra.mxu0 %v3279
    %3295 = vmatprep.subr.mxu0 0.0
    %3296 = vmatpush1.msra.mxu0 %v3280
    %3297 = vmatprep.subr.mxu0 0.0
    %3298 = vmatpush1.msra.mxu0 0.0
    %3299 = vmatprep.subr.mxu0 0.0
    %3300 = vmatpush1.msra.mxu0 0.0
    %3301 = vmatprep.subr.mxu0 0.0
    %3302 = vmatpush1.msra.mxu0 0.0
    %3303 = vmatprep.subr.mxu0 0.0
    %3304 = vmatpush1.msra.mxu0 0.0
    %3305 = vmatprep.subr.mxu0 0.0
    %3306 = vmatpush1.msra.mxu0 0.0
    %3307 = vmatprep.subr.mxu0 0.0
    %3308 = vmatpush1.msra.mxu0 0.0
    %3309 = vmatprep.subr.mxu0 0.0
    %3310 = vmatpush1.msra.mxu0 0.0
    %3311 = vmatprep.subr.mxu0 0.0
    %3312 = vmatpush1.msra.mxu0 0.0
    %3313 = vmatprep.subr.mxu0 0.0
    %3314 = vmatpush1.msra.mxu0 0.0
    %3315 = vmatprep.subr.mxu0 0.0
    %3316 = vmatpush1.msra.mxu0 0.0
    %3317 = vmatprep.subr.mxu0 0.0
    %3318 = vmatpush1.msra.mxu0 0.0
    %3319 = vmatprep.subr.mxu0 0.0
    %3320 = vmatpush1.msra.mxu0 0.0
    %3321 = vmatprep.subr.mxu0 0.0
    %3322 = vmatpush1.msra.mxu0 0.0
    %3323 = vmatprep.subr.mxu0 0.0
    %3324 = vmatpush1.msra.mxu0 0.0
    %3325 = vmatprep.subr.mxu0 0.0
    %3326 = vmatpush1.msra.mxu0 0.0
    %3327 = vmatprep.subr.mxu0 0.0
    %3328 = vmatpush1.msra.mxu0 0.0
    %3329 = vmatprep.subr.mxu0 0.0
    %3330 = vmatpush1.msra.mxu0 0.0
    %3331 = vmatprep.subr.mxu0 0.0
    %3332 = vmatpush1.msra.mxu0 0.0
    %3333 = vmatprep.subr.mxu0 0.0
    %3334 = vmatpush1.msra.mxu0 0.0
    %3335 = vmatprep.subr.mxu0 0.0
    %3336 = vmatpush1.msra.mxu0 0.0
    %3337 = vmatprep.subr.mxu0 0.0
    %3338 = vmatpush1.msra.mxu0 0.0
    %3339 = vmatprep.subr.mxu0 0.0
    %3340 = vmatpush1.msra.mxu0 0.0
    %3341 = vmatprep.subr.mxu0 0.0
    %3342 = vmatpush1.msra.mxu0 0.0
    %3343 = vmatprep.subr.mxu0 0.0
    %3344 = vmatpush1.msra.mxu0 0.0
    %3345 = vmatprep.subr.mxu0 0.0
    %3346 = vmatpush1.msra.mxu0 0.0
    %3347 = vmatprep.subr.mxu0 0.0
    %3348 = vmatpush1.msra.mxu0 0.0
    %3349 = vmatprep.subr.mxu0 0.0
    %3350 = vmatpush1.msra.mxu0 0.0
    %3351 = vmatprep.subr.mxu0 0.0
    %3352 = vmatpush1.msra.mxu0 0.0
    %3353 = vmatprep.mubr.f32.mxu0 0.0
    %3354 = vmatmul.mubr.f32.gmra.mrb[0].mxu0 %v3108
    %v3355 = vpop.f32.mrb[0].mxu0
    %v3356 = vadd.f32 %v3287, %v3355
    %v3357 = vpop.f32.mrb[0].mxu0
    %3358 = vmatprep.mubr.f32.mxu0 0.0
    %3359 = vmatmul.mubr.f32.gmra.mrb[0].mxu0 %v3111
    %v3360 = vpop.f32.mrb[0].mxu0
    %v3361 = vadd.f32 %v3287, %v3360
    %v3362 = vpop.f32.mrb[0].mxu0
    %3363 = vdwg.mxu0
    %s3364 = scalar_lea.vmem [#allocation7], 96
    %v3365 = vld [vmem:[%s3364] sm:$0xff]
    %v3366 = vld [vmem:[%s3364 + $0x8] sm:$0xff]
    %v3367 = vld [vmem:[%s3364 + $0x10] sm:$0xff]
    %v3368 = vld [vmem:[%s3364 + $0x18] sm:$0xff]
    %s3369 = scalar_lea.vmem %s6, 3
    %v3370 = vld [vmem:[%s3369] sm:$0x1]
    %v3372 = vlaneseq
    %v3373 = vshrl.u32 %v3372, 7
    %v3374 = vsub.s32 0, %v3373
    %v3375 = vrot.slane %v3370, %v3374
    %3377 = vmatprep.subr.mxu0 0.0
    %3378 = vmatpush1.msra.mxu0 %v3365
    %3379 = vmatprep.subr.mxu0 0.0
    %3380 = vmatpush1.msra.mxu0 %v3366
    %3381 = vmatprep.subr.mxu0 0.0
    %3382 = vmatpush1.msra.mxu0 %v3367
    %3383 = vmatprep.subr.mxu0 0.0
    %3384 = vmatpush1.msra.mxu0 %v3368
    %3385 = vmatprep.subr.mxu0 0.0
    %3386 = vmatpush1.msra.mxu0 0.0
    %3387 = vmatprep.subr.mxu0 0.0
    %3388 = vmatpush1.msra.mxu0 0.0
    %3389 = vmatprep.subr.mxu0 0.0
    %3390 = vmatpush1.msra.mxu0 0.0
    %3391 = vmatprep.subr.mxu0 0.0
    %3392 = vmatpush1.msra.mxu0 0.0
    %3393 = vmatprep.subr.mxu0 0.0
    %3394 = vmatpush1.msra.mxu0 0.0
    %3395 = vmatprep.subr.mxu0 0.0
    %3396 = vmatpush1.msra.mxu0 0.0
    %3397 = vmatprep.subr.mxu0 0.0
    %3398 = vmatpush1.msra.mxu0 0.0
    %3399 = vmatprep.subr.mxu0 0.0
    %3400 = vmatpush1.msra.mxu0 0.0
    %3401 = vmatprep.subr.mxu0 0.0
    %3402 = vmatpush1.msra.mxu0 0.0
    %3403 = vmatprep.subr.mxu0 0.0
    %3404 = vmatpush1.msra.mxu0 0.0
    %3405 = vmatprep.subr.mxu0 0.0
    %3406 = vmatpush1.msra.mxu0 0.0
    %3407 = vmatprep.subr.mxu0 0.0
    %3408 = vmatpush1.msra.mxu0 0.0
    %3409 = vmatprep.subr.mxu0 0.0
    %3410 = vmatpush1.msra.mxu0 0.0
    %3411 = vmatprep.subr.mxu0 0.0
    %3412 = vmatpush1.msra.mxu0 0.0
    %3413 = vmatprep.subr.mxu0 0.0
    %3414 = vmatpush1.msra.mxu0 0.0
    %3415 = vmatprep.subr.mxu0 0.0
    %3416 = vmatpush1.msra.mxu0 0.0
    %3417 = vmatprep.subr.mxu0 0.0
    %3418 = vmatpush1.msra.mxu0 0.0
    %3419 = vmatprep.subr.mxu0 0.0
    %3420 = vmatpush1.msra.mxu0 0.0
    %3421 = vmatprep.subr.mxu0 0.0
    %3422 = vmatpush1.msra.mxu0 0.0
    %3423 = vmatprep.subr.mxu0 0.0
    %3424 = vmatpush1.msra.mxu0 0.0
    %3425 = vmatprep.subr.mxu0 0.0
    %3426 = vmatpush1.msra.mxu0 0.0
    %3427 = vmatprep.subr.mxu0 0.0
    %3428 = vmatpush1.msra.mxu0 0.0
    %3429 = vmatprep.subr.mxu0 0.0
    %3430 = vmatpush1.msra.mxu0 0.0
    %3431 = vmatprep.subr.mxu0 0.0
    %3432 = vmatpush1.msra.mxu0 0.0
    %3433 = vmatprep.subr.mxu0 0.0
    %3434 = vmatpush1.msra.mxu0 0.0
    %3435 = vmatprep.subr.mxu0 0.0
    %3436 = vmatpush1.msra.mxu0 0.0
    %3437 = vmatprep.subr.mxu0 0.0
    %3438 = vmatpush1.msra.mxu0 0.0
    %3439 = vmatprep.subr.mxu0 0.0
    %3440 = vmatpush1.msra.mxu0 0.0
    %3441 = vmatprep.mubr.f32.mxu0 0.0
    %3442 = vmatmul.mubr.f32.gmra.mrb[0].mxu0 %v3108
    %v3443 = vpop.f32.mrb[0].mxu0
    %v3444 = vadd.f32 %v3375, %v3443
    %v3445 = vpop.f32.mrb[0].mxu0
    %3446 = vmatprep.mubr.f32.mxu0 0.0
    %3447 = vmatmul.mubr.f32.gmra.mrb[0].mxu0 %v3111
    %v3448 = vpop.f32.mrb[0].mxu0
    %v3449 = vadd.f32 %v3375, %v3448
    %v3450 = vpop.f32.mrb[0].mxu0
    %3451 = vdwg.mxu0
    %v3452 = vld [vmem:[#allocation8] sm:$0xff]
    %v3453 = vld [vmem:[#allocation8 + $0x8] sm:$0xff]
    %v3454 = vld [vmem:[#allocation8 + $0x10] sm:$0xff]
    %v3455 = vld [vmem:[#allocation8 + $0x18] sm:$0xff]
    %3456 = vmatprep.subr.mxu0 0.0
    %3457 = vmatpush1.msra.mxu0 %v3452
    %3458 = vmatprep.subr.mxu0 0.0
    %3459 = vmatpush1.msra.mxu0 %v3453
    %3460 = vmatprep.subr.mxu0 0.0
    %3461 = vmatpush1.msra.mxu0 %v3454
    %3462 = vmatprep.subr.mxu0 0.0
    %3463 = vmatpush1.msra.mxu0 %v3455
    %3464 = vmatprep.subr.mxu0 0.0
    %3465 = vmatpush1.msra.mxu0 0.0
    %3466 = vmatprep.subr.mxu0 0.0
    %3467 = vmatpush1.msra.mxu0 0.0
    %3468 = vmatprep.subr.mxu0 0.0
    %3469 = vmatpush1.msra.mxu0 0.0
    %3470 = vmatprep.subr.mxu0 0.0
    %3471 = vmatpush1.msra.mxu0 0.0
    %3472 = vmatprep.subr.mxu0 0.0
    %3473 = vmatpush1.msra.mxu0 0.0
    %3474 = vmatprep.subr.mxu0 0.0
    %3475 = vmatpush1.msra.mxu0 0.0
    %3476 = vmatprep.subr.mxu0 0.0
    %3477 = vmatpush1.msra.mxu0 0.0
    %3478 = vmatprep.subr.mxu0 0.0
    %3479 = vmatpush1.msra.mxu0 0.0
    %3480 = vmatprep.subr.mxu0 0.0
    %3481 = vmatpush1.msra.mxu0 0.0
    %3482 = vmatprep.subr.mxu0 0.0
    %3483 = vmatpush1.msra.mxu0 0.0
    %3484 = vmatprep.subr.mxu0 0.0
    %3485 = vmatpush1.msra.mxu0 0.0
    %3486 = vmatprep.subr.mxu0 0.0
    %3487 = vmatpush1.msra.mxu0 0.0
    %3488 = vmatprep.subr.mxu0 0.0
    %3489 = vmatpush1.msra.mxu0 0.0
    %3490 = vmatprep.subr.mxu0 0.0
    %3491 = vmatpush1.msra.mxu0 0.0
    %3492 = vmatprep.subr.mxu0 0.0
    %3493 = vmatpush1.msra.mxu0 0.0
    %3494 = vmatprep.subr.mxu0 0.0
    %3495 = vmatpush1.msra.mxu0 0.0
    %3496 = vmatprep.subr.mxu0 0.0
    %3497 = vmatpush1.msra.mxu0 0.0
    %3498 = vmatprep.subr.mxu0 0.0
    %3499 = vmatpush1.msra.mxu0 0.0
    %3500 = vmatprep.subr.mxu0 0.0
    %3501 = vmatpush1.msra.mxu0 0.0
    %3502 = vmatprep.subr.mxu0 0.0
    %3503 = vmatpush1.msra.mxu0 0.0
    %3504 = vmatprep.subr.mxu0 0.0
    %3505 = vmatpush1.msra.mxu0 0.0
    %3506 = vmatprep.subr.mxu0 0.0
    %3507 = vmatpush1.msra.mxu0 0.0
    %3508 = vmatprep.subr.mxu0 0.0
    %3509 = vmatpush1.msra.mxu0 0.0
    %3510 = vmatprep.subr.mxu0 0.0
    %3511 = vmatpush1.msra.mxu0 0.0
    %3512 = vmatprep.subr.mxu0 0.0
    %3513 = vmatpush1.msra.mxu0 0.0
    %3514 = vmatprep.subr.mxu0 0.0
    %3515 = vmatpush1.msra.mxu0 0.0
    %3516 = vmatprep.subr.mxu0 0.0
    %3517 = vmatpush1.msra.mxu0 0.0
    %3518 = vmatprep.subr.mxu0 0.0
    %3519 = vmatpush1.msra.mxu0 0.0
    %3520 = vmatprep.mubr.f32.mxu0 0.0
    %3521 = vmatmul.mubr.f32.gmra.mrb[0].mxu0 %v490
    %v3522 = vpop.f32.mrb[0].mxu0
    %v3523 = vadd.f32 0.0, %v3522
    %v3524 = vpop.f32.mrb[0].mxu0
    %3525 = vdwg.mxu0
    %v3526 = vadd.f32 %v3180, %v3523
    %v3527 = vxor.u32 %v3526, 2147483648
    %v3528 = vmul.f32 %v3527, 1.442695
    %v3529 = vpow.pop %v3528
    %v3530 = vadd.f32 %v3529, 1.0
    %v3531 = vrcp.pop %v3530
    %v3532 = vmul.f32 1.0, %v3531
    %s3533 = scalar_lea.vmem [#allocation8], 32
    %v3534 = vld [vmem:[%s3533] sm:$0xff]
    %v3535 = vld [vmem:[%s3533 + $0x8] sm:$0xff]
    %v3536 = vld [vmem:[%s3533 + $0x10] sm:$0xff]
    %v3537 = vld [vmem:[%s3533 + $0x18] sm:$0xff]
    %3538 = vmatprep.subr.mxu0 0.0
    %3539 = vmatpush1.msra.mxu0 %v3534
    %3540 = vmatprep.subr.mxu0 0.0
    %3541 = vmatpush1.msra.mxu0 %v3535
    %3542 = vmatprep.subr.mxu0 0.0
    %3543 = vmatpush1.msra.mxu0 %v3536
    %3544 = vmatprep.subr.mxu0 0.0
    %3545 = vmatpush1.msra.mxu0 %v3537
    %3546 = vmatprep.subr.mxu0 0.0
    %3547 = vmatpush1.msra.mxu0 0.0
    %3548 = vmatprep.subr.mxu0 0.0
    %3549 = vmatpush1.msra.mxu0 0.0
    %3550 = vmatprep.subr.mxu0 0.0
    %3551 = vmatpush1.msra.mxu0 0.0
    %3552 = vmatprep.subr.mxu0 0.0
    %3553 = vmatpush1.msra.mxu0 0.0
    %3554 = vmatprep.subr.mxu0 0.0
    %3555 = vmatpush1.msra.mxu0 0.0
    %3556 = vmatprep.subr.mxu0 0.0
    %3557 = vmatpush1.msra.mxu0 0.0
    %3558 = vmatprep.subr.mxu0 0.0
    %3559 = vmatpush1.msra.mxu0 0.0
    %3560 = vmatprep.subr.mxu0 0.0
    %3561 = vmatpush1.msra.mxu0 0.0
    %3562 = vmatprep.subr.mxu0 0.0
    %3563 = vmatpush1.msra.mxu0 0.0
    %3564 = vmatprep.subr.mxu0 0.0
    %3565 = vmatpush1.msra.mxu0 0.0
    %3566 = vmatprep.subr.mxu0 0.0
    %3567 = vmatpush1.msra.mxu0 0.0
    %3568 = vmatprep.subr.mxu0 0.0
    %3569 = vmatpush1.msra.mxu0 0.0
    %3570 = vmatprep.subr.mxu0 0.0
    %3571 = vmatpush1.msra.mxu0 0.0
    %3572 = vmatprep.subr.mxu0 0.0
    %3573 = vmatpush1.msra.mxu0 0.0
    %3574 = vmatprep.subr.mxu0 0.0
    %3575 = vmatpush1.msra.mxu0 0.0
    %3576 = vmatprep.subr.mxu0 0.0
    %3577 = vmatpush1.msra.mxu0 0.0
    %3578 = vmatprep.subr.mxu0 0.0
    %3579 = vmatpush1.msra.mxu0 0.0
    %3580 = vmatprep.subr.mxu0 0.0
    %3581 = vmatpush1.msra.mxu0 0.0
    %3582 = vmatprep.subr.mxu0 0.0
    %3583 = vmatpush1.msra.mxu0 0.0
    %3584 = vmatprep.subr.mxu0 0.0
    %3585 = vmatpush1.msra.mxu0 0.0
    %3586 = vmatprep.subr.mxu0 0.0
    %3587 = vmatpush1.msra.mxu0 0.0
    %3588 = vmatprep.subr.mxu0 0.0
    %3589 = vmatpush1.msra.mxu0 0.0
    %3590 = vmatprep.subr.mxu0 0.0
    %3591 = vmatpush1.msra.mxu0 0.0
    %3592 = vmatprep.subr.mxu0 0.0
    %3593 = vmatpush1.msra.mxu0 0.0
    %3594 = vmatprep.subr.mxu0 0.0
    %3595 = vmatpush1.msra.mxu0 0.0
    %3596 = vmatprep.subr.mxu0 0.0
    %3597 = vmatpush1.msra.mxu0 0.0
    %3598 = vmatprep.subr.mxu0 0.0
    %3599 = vmatpush1.msra.mxu0 0.0
    %3600 = vmatprep.subr.mxu0 0.0
    %3601 = vmatpush1.msra.mxu0 0.0
    %3602 = vmatprep.mubr.f32.mxu0 0.0
    %3603 = vmatmul.mubr.f32.gmra.mrb[0].mxu0 %v490
    %v3604 = vpop.f32.mrb[0].mxu0
    %v3605 = vadd.f32 0.0, %v3604
    %v3606 = vpop.f32.mrb[0].mxu0
    %3607 = vdwg.mxu0
    %v3608 = vadd.f32 %v3268, %v3605
    %v3609 = vxor.u32 %v3608, 2147483648
    %v3610 = vmul.f32 %v3609, 1.442695
    %v3611 = vpow.pop %v3610
    %v3612 = vadd.f32 %v3611, 1.0
    %v3613 = vrcp.pop %v3612
    %v3614 = vmul.f32 1.0, %v3613
    %s3615 = scalar_lea.vmem [#allocation8], 64
    %v3616 = vld [vmem:[%s3615] sm:$0xff]
    %v3617 = vld [vmem:[%s3615 + $0x8] sm:$0xff]
    %v3618 = vld [vmem:[%s3615 + $0x10] sm:$0xff]
    %v3619 = vld [vmem:[%s3615 + $0x18] sm:$0xff]
    %3620 = vmatprep.subr.mxu0 0.0
    %3621 = vmatpush1.msra.mxu0 %v3616
    %3622 = vmatprep.subr.mxu0 0.0
    %3623 = vmatpush1.msra.mxu0 %v3617
    %3624 = vmatprep.subr.mxu0 0.0
    %3625 = vmatpush1.msra.mxu0 %v3618
    %3626 = vmatprep.subr.mxu0 0.0
    %3627 = vmatpush1.msra.mxu0 %v3619
    %3628 = vmatprep.subr.mxu0 0.0
    %3629 = vmatpush1.msra.mxu0 0.0
    %3630 = vmatprep.subr.mxu0 0.0
    %3631 = vmatpush1.msra.mxu0 0.0
    %3632 = vmatprep.subr.mxu0 0.0
    %3633 = vmatpush1.msra.mxu0 0.0
    %3634 = vmatprep.subr.mxu0 0.0
    %3635 = vmatpush1.msra.mxu0 0.0
    %3636 = vmatprep.subr.mxu0 0.0
    %3637 = vmatpush1.msra.mxu0 0.0
    %3638 = vmatprep.subr.mxu0 0.0
    %3639 = vmatpush1.msra.mxu0 0.0
    %3640 = vmatprep.subr.mxu0 0.0
    %3641 = vmatpush1.msra.mxu0 0.0
    %3642 = vmatprep.subr.mxu0 0.0
    %3643 = vmatpush1.msra.mxu0 0.0
    %3644 = vmatprep.subr.mxu0 0.0
    %3645 = vmatpush1.msra.mxu0 0.0
    %3646 = vmatprep.subr.mxu0 0.0
    %3647 = vmatpush1.msra.mxu0 0.0
    %3648 = vmatprep.subr.mxu0 0.0
    %3649 = vmatpush1.msra.mxu0 0.0
    %3650 = vmatprep.subr.mxu0 0.0
    %3651 = vmatpush1.msra.mxu0 0.0
    %3652 = vmatprep.subr.mxu0 0.0
    %3653 = vmatpush1.msra.mxu0 0.0
    %3654 = vmatprep.subr.mxu0 0.0
    %3655 = vmatpush1.msra.mxu0 0.0
    %3656 = vmatprep.subr.mxu0 0.0
    %3657 = vmatpush1.msra.mxu0 0.0
    %3658 = vmatprep.subr.mxu0 0.0
    %3659 = vmatpush1.msra.mxu0 0.0
    %3660 = vmatprep.subr.mxu0 0.0
    %3661 = vmatpush1.msra.mxu0 0.0
    %3662 = vmatprep.subr.mxu0 0.0
    %3663 = vmatpush1.msra.mxu0 0.0
    %3664 = vmatprep.subr.mxu0 0.0
    %3665 = vmatpush1.msra.mxu0 0.0
    %3666 = vmatprep.subr.mxu0 0.0
    %3667 = vmatpush1.msra.mxu0 0.0
    %3668 = vmatprep.subr.mxu0 0.0
    %3669 = vmatpush1.msra.mxu0 0.0
    %3670 = vmatprep.subr.mxu0 0.0
    %3671 = vmatpush1.msra.mxu0 0.0
    %3672 = vmatprep.subr.mxu0 0.0
    %3673 = vmatpush1.msra.mxu0 0.0
    %3674 = vmatprep.subr.mxu0 0.0
    %3675 = vmatpush1.msra.mxu0 0.0
    %3676 = vmatprep.subr.mxu0 0.0
    %3677 = vmatpush1.msra.mxu0 0.0
    %3678 = vmatprep.subr.mxu0 0.0
    %3679 = vmatpush1.msra.mxu0 0.0
    %3680 = vmatprep.subr.mxu0 0.0
    %3681 = vmatpush1.msra.mxu0 0.0
    %3682 = vmatprep.subr.mxu0 0.0
    %3683 = vmatpush1.msra.mxu0 0.0
    %3684 = vmatprep.mubr.f32.mxu0 0.0
    %3685 = vmatmul.mubr.f32.gmra.mrb[0].mxu0 %v490
    %v3686 = vpop.f32.mrb[0].mxu0
    %v3687 = vadd.f32 0.0, %v3686
    %v3688 = vpop.f32.mrb[0].mxu0
    %3689 = vdwg.mxu0
    %v3690 = vadd.f32 %v3356, %v3687
    %v3691 = vtanh.pop %v3690
    %s3692 = scalar_lea.vmem [#allocation8], 96
    %v3693 = vld [vmem:[%s3692] sm:$0xff]
    %v3694 = vld [vmem:[%s3692 + $0x8] sm:$0xff]
    %v3695 = vld [vmem:[%s3692 + $0x10] sm:$0xff]
    %v3696 = vld [vmem:[%s3692 + $0x18] sm:$0xff]
    %3697 = vmatprep.subr.mxu0 0.0
    %3698 = vmatpush1.msra.mxu0 %v3693
    %3699 = vmatprep.subr.mxu0 0.0
    %3700 = vmatpush1.msra.mxu0 %v3694
    %3701 = vmatprep.subr.mxu0 0.0
    %3702 = vmatpush1.msra.mxu0 %v3695
    %3703 = vmatprep.subr.mxu0 0.0
    %3704 = vmatpush1.msra.mxu0 %v3696
    %3705 = vmatprep.subr.mxu0 0.0
    %3706 = vmatpush1.msra.mxu0 0.0
    %3707 = vmatprep.subr.mxu0 0.0
    %3708 = vmatpush1.msra.mxu0 0.0
    %3709 = vmatprep.subr.mxu0 0.0
    %3710 = vmatpush1.msra.mxu0 0.0
    %3711 = vmatprep.subr.mxu0 0.0
    %3712 = vmatpush1.msra.mxu0 0.0
    %3713 = vmatprep.subr.mxu0 0.0
    %3714 = vmatpush1.msra.mxu0 0.0
    %3715 = vmatprep.subr.mxu0 0.0
    %3716 = vmatpush1.msra.mxu0 0.0
    %3717 = vmatprep.subr.mxu0 0.0
    %3718 = vmatpush1.msra.mxu0 0.0
    %3719 = vmatprep.subr.mxu0 0.0
    %3720 = vmatpush1.msra.mxu0 0.0
    %3721 = vmatprep.subr.mxu0 0.0
    %3722 = vmatpush1.msra.mxu0 0.0
    %3723 = vmatprep.subr.mxu0 0.0
    %3724 = vmatpush1.msra.mxu0 0.0
    %3725 = vmatprep.subr.mxu0 0.0
    %3726 = vmatpush1.msra.mxu0 0.0
    %3727 = vmatprep.subr.mxu0 0.0
    %3728 = vmatpush1.msra.mxu0 0.0
    %3729 = vmatprep.subr.mxu0 0.0
    %3730 = vmatpush1.msra.mxu0 0.0
    %3731 = vmatprep.subr.mxu0 0.0
    %3732 = vmatpush1.msra.mxu0 0.0
    %3733 = vmatprep.subr.mxu0 0.0
    %3734 = vmatpush1.msra.mxu0 0.0
    %3735 = vmatprep.subr.mxu0 0.0
    %3736 = vmatpush1.msra.mxu0 0.0
    %3737 = vmatprep.subr.mxu0 0.0
    %3738 = vmatpush1.msra.mxu0 0.0
    %3739 = vmatprep.subr.mxu0 0.0
    %3740 = vmatpush1.msra.mxu0 0.0
    %3741 = vmatprep.subr.mxu0 0.0
    %3742 = vmatpush1.msra.mxu0 0.0
    %3743 = vmatprep.subr.mxu0 0.0
    %3744 = vmatpush1.msra.mxu0 0.0
    %3745 = vmatprep.subr.mxu0 0.0
    %3746 = vmatpush1.msra.mxu0 0.0
    %3747 = vmatprep.subr.mxu0 0.0
    %3748 = vmatpush1.msra.mxu0 0.0
    %3749 = vmatprep.subr.mxu0 0.0
    %3750 = vmatpush1.msra.mxu0 0.0
    %3751 = vmatprep.subr.mxu0 0.0
    %3752 = vmatpush1.msra.mxu0 0.0
    %3753 = vmatprep.subr.mxu0 0.0
    %3754 = vmatpush1.msra.mxu0 0.0
    %3755 = vmatprep.subr.mxu0 0.0
    %3756 = vmatpush1.msra.mxu0 0.0
    %3757 = vmatprep.subr.mxu0 0.0
    %3758 = vmatpush1.msra.mxu0 0.0
    %3759 = vmatprep.subr.mxu0 0.0
    %3760 = vmatpush1.msra.mxu0 0.0
    %3761 = vmatprep.mubr.f32.mxu0 0.0
    %3762 = vmatmul.mubr.f32.gmra.mrb[0].mxu0 %v490
    %v3763 = vpop.f32.mrb[0].mxu0
    %v3764 = vadd.f32 0.0, %v3763
    %v3765 = vpop.f32.mrb[0].mxu0
    %3766 = vdwg.mxu0
    %v3767 = vadd.f32 %v3444, %v3764
    %v3768 = vxor.u32 %v3767, 2147483648
    %v3769 = vmul.f32 %v3768, 1.442695
    %v3770 = vpow.pop %v3769
    %v3771 = vadd.f32 %v3770, 1.0
    %v3772 = vrcp.pop %v3771
    %v3773 = vmul.f32 1.0, %v3772
    %v3774 = vmul.f32 %v3614, 0.0
    %v3775 = vmul.f32 %v3532, %v3691
    %v3776 = vadd.f32 %v3774, %v3775
    %v3777 = vtanh.pop %v3776
    %v3778 = vmul.f32 %v3773, %v3777
    %v3780 = vsel %vm488, %v3778, 0
    %3782 = vmatprep.subr.mxu0 0.0
    %3783 = vmatpush1.msra.mxu0 %v3452
    %3784 = vmatprep.subr.mxu0 0.0
    %3785 = vmatpush1.msra.mxu0 %v3453
    %3786 = vmatprep.subr.mxu0 0.0
    %3787 = vmatpush1.msra.mxu0 %v3454
    %3788 = vmatprep.subr.mxu0 0.0
    %3789 = vmatpush1.msra.mxu0 %v3455
    %3790 = vmatprep.subr.mxu0 0.0
    %3791 = vmatpush1.msra.mxu0 0.0
    %3792 = vmatprep.subr.mxu0 0.0
    %3793 = vmatpush1.msra.mxu0 0.0
    %3794 = vmatprep.subr.mxu0 0.0
    %3795 = vmatpush1.msra.mxu0 0.0
    %3796 = vmatprep.subr.mxu0 0.0
    %3797 = vmatpush1.msra.mxu0 0.0
    %3798 = vmatprep.subr.mxu0 0.0
    %3799 = vmatpush1.msra.mxu0 0.0
    %3800 = vmatprep.subr.mxu0 0.0
    %3801 = vmatpush1.msra.mxu0 0.0
    %3802 = vmatprep.subr.mxu0 0.0
    %3803 = vmatpush1.msra.mxu0 0.0
    %3804 = vmatprep.subr.mxu0 0.0
    %3805 = vmatpush1.msra.mxu0 0.0
    %3806 = vmatprep.subr.mxu0 0.0
    %3807 = vmatpush1.msra.mxu0 0.0
    %3808 = vmatprep.subr.mxu0 0.0
    %3809 = vmatpush1.msra.mxu0 0.0
    %3810 = vmatprep.subr.mxu0 0.0
    %3811 = vmatpush1.msra.mxu0 0.0
    %3812 = vmatprep.subr.mxu0 0.0
    %3813 = vmatpush1.msra.mxu0 0.0
    %3814 = vmatprep.subr.mxu0 0.0
    %3815 = vmatpush1.msra.mxu0 0.0
    %3816 = vmatprep.subr.mxu0 0.0
    %3817 = vmatpush1.msra.mxu0 0.0
    %3818 = vmatprep.subr.mxu0 0.0
    %3819 = vmatpush1.msra.mxu0 0.0
    %3820 = vmatprep.subr.mxu0 0.0
    %3821 = vmatpush1.msra.mxu0 0.0
    %3822 = vmatprep.subr.mxu0 0.0
    %3823 = vmatpush1.msra.mxu0 0.0
    %3824 = vmatprep.subr.mxu0 0.0
    %3825 = vmatpush1.msra.mxu0 0.0
    %3826 = vmatprep.subr.mxu0 0.0
    %3827 = vmatpush1.msra.mxu0 0.0
    %3828 = vmatprep.subr.mxu0 0.0
    %3829 = vmatpush1.msra.mxu0 0.0
    %3830 = vmatprep.subr.mxu0 0.0
    %3831 = vmatpush1.msra.mxu0 0.0
    %3832 = vmatprep.subr.mxu0 0.0
    %3833 = vmatpush1.msra.mxu0 0.0
    %3834 = vmatprep.subr.mxu0 0.0
    %3835 = vmatpush1.msra.mxu0 0.0
    %3836 = vmatprep.subr.mxu0 0.0
    %3837 = vmatpush1.msra.mxu0 0.0
    %3838 = vmatprep.subr.mxu0 0.0
    %3839 = vmatpush1.msra.mxu0 0.0
    %3840 = vmatprep.subr.mxu0 0.0
    %3841 = vmatpush1.msra.mxu0 0.0
    %3842 = vmatprep.subr.mxu0 0.0
    %3843 = vmatpush1.msra.mxu0 0.0
    %3844 = vmatprep.subr.mxu0 0.0
    %3845 = vmatpush1.msra.mxu0 0.0
    %3846 = vmatprep.mubr.f32.mxu0 0.0
    %3847 = vmatmul.mubr.f32.gmra.mrb[0].mxu0 %v3780
    %v3848 = vpop.f32.mrb[0].mxu0
    %v3849 = vadd.f32 0.0, %v3848
    %v3850 = vpop.f32.mrb[0].mxu0
    %3851 = vdwg.mxu0
    %v3853 = vrot.slane %v3849, 6
    %v3855 = vadd.f32 %v3180, %v3853
    %v3856 = vxor.u32 %v3855, 2147483648
    %v3857 = vmul.f32 %v3856, 1.442695
    %v3858 = vpow.pop %v3857
    %v3859 = vadd.f32 %v3858, 1.0
    %v3860 = vrcp.pop %v3859
    %v3861 = vmul.f32 1.0, %v3860
    %3862 = vmatprep.subr.mxu0 0.0
    %3863 = vmatpush1.msra.mxu0 %v3534
    %3864 = vmatprep.subr.mxu0 0.0
    %3865 = vmatpush1.msra.mxu0 %v3535
    %3866 = vmatprep.subr.mxu0 0.0
    %3867 = vmatpush1.msra.mxu0 %v3536
    %3868 = vmatprep.subr.mxu0 0.0
    %3869 = vmatpush1.msra.mxu0 %v3537
    %3870 = vmatprep.subr.mxu0 0.0
    %3871 = vmatpush1.msra.mxu0 0.0
    %3872 = vmatprep.subr.mxu0 0.0
    %3873 = vmatpush1.msra.mxu0 0.0
    %3874 = vmatprep.subr.mxu0 0.0
    %3875 = vmatpush1.msra.mxu0 0.0
    %3876 = vmatprep.subr.mxu0 0.0
    %3877 = vmatpush1.msra.mxu0 0.0
    %3878 = vmatprep.subr.mxu0 0.0
    %3879 = vmatpush1.msra.mxu0 0.0
    %3880 = vmatprep.subr.mxu0 0.0
    %3881 = vmatpush1.msra.mxu0 0.0
    %3882 = vmatprep.subr.mxu0 0.0
    %3883 = vmatpush1.msra.mxu0 0.0
    %3884 = vmatprep.subr.mxu0 0.0
    %3885 = vmatpush1.msra.mxu0 0.0
    %3886 = vmatprep.subr.mxu0 0.0
    %3887 = vmatpush1.msra.mxu0 0.0
    %3888 = vmatprep.subr.mxu0 0.0
    %3889 = vmatpush1.msra.mxu0 0.0
    %3890 = vmatprep.subr.mxu0 0.0
    %3891 = vmatpush1.msra.mxu0 0.0
    %3892 = vmatprep.subr.mxu0 0.0
    %3893 = vmatpush1.msra.mxu0 0.0
    %3894 = vmatprep.subr.mxu0 0.0
    %3895 = vmatpush1.msra.mxu0 0.0
    %3896 = vmatprep.subr.mxu0 0.0
    %3897 = vmatpush1.msra.mxu0 0.0
    %3898 = vmatprep.subr.mxu0 0.0
    %3899 = vmatpush1.msra.mxu0 0.0
    %3900 = vmatprep.subr.mxu0 0.0
    %3901 = vmatpush1.msra.mxu0 0.0
    %3902 = vmatprep.subr.mxu0 0.0
    %3903 = vmatpush1.msra.mxu0 0.0
    %3904 = vmatprep.subr.mxu0 0.0
    %3905 = vmatpush1.msra.mxu0 0.0
    %3906 = vmatprep.subr.mxu0 0.0
    %3907 = vmatpush1.msra.mxu0 0.0
    %3908 = vmatprep.subr.mxu0 0.0
    %3909 = vmatpush1.msra.mxu0 0.0
    %3910 = vmatprep.subr.mxu0 0.0
    %3911 = vmatpush1.msra.mxu0 0.0
    %3912 = vmatprep.subr.mxu0 0.0
    %3913 = vmatpush1.msra.mxu0 0.0
    %3914 = vmatprep.subr.mxu0 0.0
    %3915 = vmatpush1.msra.mxu0 0.0
    %3916 = vmatprep.subr.mxu0 0.0
    %3917 = vmatpush1.msra.mxu0 0.0
    %3918 = vmatprep.subr.mxu0 0.0
    %3919 = vmatpush1.msra.mxu0 0.0
    %3920 = vmatprep.subr.mxu0 0.0
    %3921 = vmatpush1.msra.mxu0 0.0
    %3922 = vmatprep.subr.mxu0 0.0
    %3923 = vmatpush1.msra.mxu0 0.0
    %3924 = vmatprep.subr.mxu0 0.0
    %3925 = vmatpush1.msra.mxu0 0.0
    %3926 = vmatprep.mubr.f32.mxu0 0.0
    %3927 = vmatmul.mubr.f32.gmra.mrb[0].mxu0 %v3780
    %v3928 = vpop.f32.mrb[0].mxu0
    %v3929 = vadd.f32 0.0, %v3928
    %v3930 = vpop.f32.mrb[0].mxu0
    %3931 = vdwg.mxu0
    %v3933 = vrot.slane %v3929, 6
    %v3935 = vadd.f32 %v3268, %v3933
    %v3936 = vxor.u32 %v3935, 2147483648
    %v3937 = vmul.f32 %v3936, 1.442695
    %v3938 = vpow.pop %v3937
    %v3939 = vadd.f32 %v3938, 1.0
    %v3940 = vrcp.pop %v3939
    %v3941 = vmul.f32 1.0, %v3940
    %3942 = vmatprep.subr.mxu0 0.0
    %3943 = vmatpush1.msra.mxu0 %v3616
    %3944 = vmatprep.subr.mxu0 0.0
    %3945 = vmatpush1.msra.mxu0 %v3617
    %3946 = vmatprep.subr.mxu0 0.0
    %3947 = vmatpush1.msra.mxu0 %v3618
    %3948 = vmatprep.subr.mxu0 0.0
    %3949 = vmatpush1.msra.mxu0 %v3619
    %3950 = vmatprep.subr.mxu0 0.0
    %3951 = vmatpush1.msra.mxu0 0.0
    %3952 = vmatprep.subr.mxu0 0.0
    %3953 = vmatpush1.msra.mxu0 0.0
    %3954 = vmatprep.subr.mxu0 0.0
    %3955 = vmatpush1.msra.mxu0 0.0
    %3956 = vmatprep.subr.mxu0 0.0
    %3957 = vmatpush1.msra.mxu0 0.0
    %3958 = vmatprep.subr.mxu0 0.0
    %3959 = vmatpush1.msra.mxu0 0.0
    %3960 = vmatprep.subr.mxu0 0.0
    %3961 = vmatpush1.msra.mxu0 0.0
    %3962 = vmatprep.subr.mxu0 0.0
    %3963 = vmatpush1.msra.mxu0 0.0
    %3964 = vmatprep.subr.mxu0 0.0
    %3965 = vmatpush1.msra.mxu0 0.0
    %3966 = vmatprep.subr.mxu0 0.0
    %3967 = vmatpush1.msra.mxu0 0.0
    %3968 = vmatprep.subr.mxu0 0.0
    %3969 = vmatpush1.msra.mxu0 0.0
    %3970 = vmatprep.subr.mxu0 0.0
    %3971 = vmatpush1.msra.mxu0 0.0
    %3972 = vmatprep.subr.mxu0 0.0
    %3973 = vmatpush1.msra.mxu0 0.0
    %3974 = vmatprep.subr.mxu0 0.0
    %3975 = vmatpush1.msra.mxu0 0.0
    %3976 = vmatprep.subr.mxu0 0.0
    %3977 = vmatpush1.msra.mxu0 0.0
    %3978 = vmatprep.subr.mxu0 0.0
    %3979 = vmatpush1.msra.mxu0 0.0
    %3980 = vmatprep.subr.mxu0 0.0
    %3981 = vmatpush1.msra.mxu0 0.0
    %3982 = vmatprep.subr.mxu0 0.0
    %3983 = vmatpush1.msra.mxu0 0.0
    %3984 = vmatprep.subr.mxu0 0.0
    %3985 = vmatpush1.msra.mxu0 0.0
    %3986 = vmatprep.subr.mxu0 0.0
    %3987 = vmatpush1.msra.mxu0 0.0
    %3988 = vmatprep.subr.mxu0 0.0
    %3989 = vmatpush1.msra.mxu0 0.0
    %3990 = vmatprep.subr.mxu0 0.0
    %3991 = vmatpush1.msra.mxu0 0.0
    %3992 = vmatprep.subr.mxu0 0.0
    %3993 = vmatpush1.msra.mxu0 0.0
    %3994 = vmatprep.subr.mxu0 0.0
    %3995 = vmatpush1.msra.mxu0 0.0
    %3996 = vmatprep.subr.mxu0 0.0
    %3997 = vmatpush1.msra.mxu0 0.0
    %3998 = vmatprep.subr.mxu0 0.0
    %3999 = vmatpush1.msra.mxu0 0.0
    %4000 = vmatprep.subr.mxu0 0.0
    %4001 = vmatpush1.msra.mxu0 0.0
    %4002 = vmatprep.subr.mxu0 0.0
    %4003 = vmatpush1.msra.mxu0 0.0
    %4004 = vmatprep.subr.mxu0 0.0
    %4005 = vmatpush1.msra.mxu0 0.0
    %4006 = vmatprep.mubr.f32.mxu0 0.0
    %4007 = vmatmul.mubr.f32.gmra.mrb[0].mxu0 %v3780
    %v4008 = vpop.f32.mrb[0].mxu0
    %v4009 = vadd.f32 0.0, %v4008
    %v4010 = vpop.f32.mrb[0].mxu0
    %4011 = vdwg.mxu0
    %v4013 = vrot.slane %v4009, 6
    %v4015 = vadd.f32 %v3356, %v4013
    %v4016 = vtanh.pop %v4015
    %4017 = vmatprep.subr.mxu0 0.0
    %4018 = vmatpush1.msra.mxu0 %v3693
    %4019 = vmatprep.subr.mxu0 0.0
    %4020 = vmatpush1.msra.mxu0 %v3694
    %4021 = vmatprep.subr.mxu0 0.0
    %4022 = vmatpush1.msra.mxu0 %v3695
    %4023 = vmatprep.subr.mxu0 0.0
    %4024 = vmatpush1.msra.mxu0 %v3696
    %4025 = vmatprep.subr.mxu0 0.0
    %4026 = vmatpush1.msra.mxu0 0.0
    %4027 = vmatprep.subr.mxu0 0.0
    %4028 = vmatpush1.msra.mxu0 0.0
    %4029 = vmatprep.subr.mxu0 0.0
    %4030 = vmatpush1.msra.mxu0 0.0
    %4031 = vmatprep.subr.mxu0 0.0
    %4032 = vmatpush1.msra.mxu0 0.0
    %4033 = vmatprep.subr.mxu0 0.0
    %4034 = vmatpush1.msra.mxu0 0.0
    %4035 = vmatprep.subr.mxu0 0.0
    %4036 = vmatpush1.msra.mxu0 0.0
    %4037 = vmatprep.subr.mxu0 0.0
    %4038 = vmatpush1.msra.mxu0 0.0
    %4039 = vmatprep.subr.mxu0 0.0
    %4040 = vmatpush1.msra.mxu0 0.0
    %4041 = vmatprep.subr.mxu0 0.0
    %4042 = vmatpush1.msra.mxu0 0.0
    %4043 = vmatprep.subr.mxu0 0.0
    %4044 = vmatpush1.msra.mxu0 0.0
    %4045 = vmatprep.subr.mxu0 0.0
    %4046 = vmatpush1.msra.mxu0 0.0
    %4047 = vmatprep.subr.mxu0 0.0
    %4048 = vmatpush1.msra.mxu0 0.0
    %4049 = vmatprep.subr.mxu0 0.0
    %4050 = vmatpush1.msra.mxu0 0.0
    %4051 = vmatprep.subr.mxu0 0.0
    %4052 = vmatpush1.msra.mxu0 0.0
    %4053 = vmatprep.subr.mxu0 0.0
    %4054 = vmatpush1.msra.mxu0 0.0
    %4055 = vmatprep.subr.mxu0 0.0
    %4056 = vmatpush1.msra.mxu0 0.0
    %4057 = vmatprep.subr.mxu0 0.0
    %4058 = vmatpush1.msra.mxu0 0.0
    %4059 = vmatprep.subr.mxu0 0.0
    %4060 = vmatpush1.msra.mxu0 0.0
    %4061 = vmatprep.subr.mxu0 0.0
    %4062 = vmatpush1.msra.mxu0 0.0
    %4063 = vmatprep.subr.mxu0 0.0
    %4064 = vmatpush1.msra.mxu0 0.0
    %4065 = vmatprep.subr.mxu0 0.0
    %4066 = vmatpush1.msra.mxu0 0.0
    %4067 = vmatprep.subr.mxu0 0.0
    %4068 = vmatpush1.msra.mxu0 0.0
    %4069 = vmatprep.subr.mxu0 0.0
    %4070 = vmatpush1.msra.mxu0 0.0
    %4071 = vmatprep.subr.mxu0 0.0
    %4072 = vmatpush1.msra.mxu0 0.0
    %4073 = vmatprep.subr.mxu0 0.0
    %4074 = vmatpush1.msra.mxu0 0.0
    %4075 = vmatprep.subr.mxu0 0.0
    %4076 = vmatpush1.msra.mxu0 0.0
    %4077 = vmatprep.subr.mxu0 0.0
    %4078 = vmatpush1.msra.mxu0 0.0
    %4079 = vmatprep.subr.mxu0 0.0
    %4080 = vmatpush1.msra.mxu0 0.0
    %4081 = vmatprep.mubr.f32.mxu0 0.0
    %4082 = vmatmul.mubr.f32.gmra.mrb[0].mxu0 %v3780
    %v4083 = vpop.f32.mrb[0].mxu0
    %v4084 = vadd.f32 0.0, %v4083
    %v4085 = vpop.f32.mrb[0].mxu0
    %4086 = vdwg.mxu0
    %v4088 = vrot.slane %v4084, 6
    %v4090 = vadd.f32 %v3444, %v4088
    %v4091 = vxor.u32 %v4090, 2147483648
    %v4092 = vmul.f32 %v4091, 1.442695
    %v4093 = vpow.pop %v4092
    %v4094 = vadd.f32 %v4093, 1.0
    %v4095 = vrcp.pop %v4094
    %v4096 = vmul.f32 1.0, %v4095
    %v4098 = vrot.slane %v3776, 6
    %v4100 = vmul.f32 %v3941, %v4098
    %v4101 = vmul.f32 %v3861, %v4016
    %v4102 = vadd.f32 %v4100, %v4101
    %v4103 = vtanh.pop %v4102
    %v4104 = vmul.f32 %v4096, %v4103
    %v4106 = vrot.slane %v4104, 2
    %v4107 = vsel %vm488, %v4106, 0
    %4109 = vmatprep.subr.mxu0 0.0
    %4110 = vmatpush1.msra.mxu0 %v3452
    %4111 = vmatprep.subr.mxu0 0.0
    %4112 = vmatpush1.msra.mxu0 %v3453
    %4113 = vmatprep.subr.mxu0 0.0
    %4114 = vmatpush1.msra.mxu0 %v3454
    %4115 = vmatprep.subr.mxu0 0.0
    %4116 = vmatpush1.msra.mxu0 %v3455
    %4117 = vmatprep.subr.mxu0 0.0
    %4118 = vmatpush1.msra.mxu0 0.0
    %4119 = vmatprep.subr.mxu0 0.0
    %4120 = vmatpush1.msra.mxu0 0.0
    %4121 = vmatprep.subr.mxu0 0.0
    %4122 = vmatpush1.msra.mxu0 0.0
    %4123 = vmatprep.subr.mxu0 0.0
    %4124 = vmatpush1.msra.mxu0 0.0
    %4125 = vmatprep.subr.mxu0 0.0
    %4126 = vmatpush1.msra.mxu0 0.0
    %4127 = vmatprep.subr.mxu0 0.0
    %4128 = vmatpush1.msra.mxu0 0.0
    %4129 = vmatprep.subr.mxu0 0.0
    %4130 = vmatpush1.msra.mxu0 0.0
    %4131 = vmatprep.subr.mxu0 0.0
    %4132 = vmatpush1.msra.mxu0 0.0
    %4133 = vmatprep.subr.mxu0 0.0
    %4134 = vmatpush1.msra.mxu0 0.0
    %4135 = vmatprep.subr.mxu0 0.0
    %4136 = vmatpush1.msra.mxu0 0.0
    %4137 = vmatprep.subr.mxu0 0.0
    %4138 = vmatpush1.msra.mxu0 0.0
    %4139 = vmatprep.subr.mxu0 0.0
    %4140 = vmatpush1.msra.mxu0 0.0
    %4141 = vmatprep.subr.mxu0 0.0
    %4142 = vmatpush1.msra.mxu0 0.0
    %4143 = vmatprep.subr.mxu0 0.0
    %4144 = vmatpush1.msra.mxu0 0.0
    %4145 = vmatprep.subr.mxu0 0.0
    %4146 = vmatpush1.msra.mxu0 0.0
    %4147 = vmatprep.subr.mxu0 0.0
    %4148 = vmatpush1.msra.mxu0 0.0
    %4149 = vmatprep.subr.mxu0 0.0
    %4150 = vmatpush1.msra.mxu0 0.0
    %4151 = vmatprep.subr.mxu0 0.0
    %4152 = vmatpush1.msra.mxu0 0.0
    %4153 = vmatprep.subr.mxu0 0.0
    %4154 = vmatpush1.msra.mxu0 0.0
    %4155 = vmatprep.subr.mxu0 0.0
    %4156 = vmatpush1.msra.mxu0 0.0
    %4157 = vmatprep.subr.mxu0 0.0
    %4158 = vmatpush1.msra.mxu0 0.0
    %4159 = vmatprep.subr.mxu0 0.0
    %4160 = vmatpush1.msra.mxu0 0.0
    %4161 = vmatprep.subr.mxu0 0.0
    %4162 = vmatpush1.msra.mxu0 0.0
    %4163 = vmatprep.subr.mxu0 0.0
    %4164 = vmatpush1.msra.mxu0 0.0
    %4165 = vmatprep.subr.mxu0 0.0
    %4166 = vmatpush1.msra.mxu0 0.0
    %4167 = vmatprep.subr.mxu0 0.0
    %4168 = vmatpush1.msra.mxu0 0.0
    %4169 = vmatprep.subr.mxu0 0.0
    %4170 = vmatpush1.msra.mxu0 0.0
    %4171 = vmatprep.subr.mxu0 0.0
    %4172 = vmatpush1.msra.mxu0 0.0
    %4173 = vmatprep.mubr.f32.mxu0 0.0
    %4174 = vmatmul.mubr.f32.gmra.mrb[0].mxu0 %v4107
    %v4175 = vpop.f32.mrb[0].mxu0
    %v4176 = vadd.f32 0.0, %v4175
    %v4177 = vpop.f32.mrb[0].mxu0
    %4178 = vdwg.mxu0
    %v4180 = vrot.slane %v4176, 4
    %v4182 = vadd.f32 %v3180, %v4180
    %v4183 = vxor.u32 %v4182, 2147483648
    %v4184 = vmul.f32 %v4183, 1.442695
    %v4185 = vpow.pop %v4184
    %v4186 = vadd.f32 %v4185, 1.0
    %v4187 = vrcp.pop %v4186
    %v4188 = vmul.f32 1.0, %v4187
    %4189 = vmatprep.subr.mxu0 0.0
    %4190 = vmatpush1.msra.mxu0 %v3534
    %4191 = vmatprep.subr.mxu0 0.0
    %4192 = vmatpush1.msra.mxu0 %v3535
    %4193 = vmatprep.subr.mxu0 0.0
    %4194 = vmatpush1.msra.mxu0 %v3536
    %4195 = vmatprep.subr.mxu0 0.0
    %4196 = vmatpush1.msra.mxu0 %v3537
    %4197 = vmatprep.subr.mxu0 0.0
    %4198 = vmatpush1.msra.mxu0 0.0
    %4199 = vmatprep.subr.mxu0 0.0
    %4200 = vmatpush1.msra.mxu0 0.0
    %4201 = vmatprep.subr.mxu0 0.0
    %4202 = vmatpush1.msra.mxu0 0.0
    %4203 = vmatprep.subr.mxu0 0.0
    %4204 = vmatpush1.msra.mxu0 0.0
    %4205 = vmatprep.subr.mxu0 0.0
    %4206 = vmatpush1.msra.mxu0 0.0
    %4207 = vmatprep.subr.mxu0 0.0
    %4208 = vmatpush1.msra.mxu0 0.0
    %4209 = vmatprep.subr.mxu0 0.0
    %4210 = vmatpush1.msra.mxu0 0.0
    %4211 = vmatprep.subr.mxu0 0.0
    %4212 = vmatpush1.msra.mxu0 0.0
    %4213 = vmatprep.subr.mxu0 0.0
    %4214 = vmatpush1.msra.mxu0 0.0
    %4215 = vmatprep.subr.mxu0 0.0
    %4216 = vmatpush1.msra.mxu0 0.0
    %4217 = vmatprep.subr.mxu0 0.0
    %4218 = vmatpush1.msra.mxu0 0.0
    %4219 = vmatprep.subr.mxu0 0.0
    %4220 = vmatpush1.msra.mxu0 0.0
    %4221 = vmatprep.subr.mxu0 0.0
    %4222 = vmatpush1.msra.mxu0 0.0
    %4223 = vmatprep.subr.mxu0 0.0
    %4224 = vmatpush1.msra.mxu0 0.0
    %4225 = vmatprep.subr.mxu0 0.0
    %4226 = vmatpush1.msra.mxu0 0.0
    %4227 = vmatprep.subr.mxu0 0.0
    %4228 = vmatpush1.msra.mxu0 0.0
    %4229 = vmatprep.subr.mxu0 0.0
    %4230 = vmatpush1.msra.mxu0 0.0
    %4231 = vmatprep.subr.mxu0 0.0
    %4232 = vmatpush1.msra.mxu0 0.0
    %4233 = vmatprep.subr.mxu0 0.0
    %4234 = vmatpush1.msra.mxu0 0.0
    %4235 = vmatprep.subr.mxu0 0.0
    %4236 = vmatpush1.msra.mxu0 0.0
    %4237 = vmatprep.subr.mxu0 0.0
    %4238 = vmatpush1.msra.mxu0 0.0
    %4239 = vmatprep.subr.mxu0 0.0
    %4240 = vmatpush1.msra.mxu0 0.0
    %4241 = vmatprep.subr.mxu0 0.0
    %4242 = vmatpush1.msra.mxu0 0.0
    %4243 = vmatprep.subr.mxu0 0.0
    %4244 = vmatpush1.msra.mxu0 0.0
    %4245 = vmatprep.subr.mxu0 0.0
    %4246 = vmatpush1.msra.mxu0 0.0
    %4247 = vmatprep.subr.mxu0 0.0
    %4248 = vmatpush1.msra.mxu0 0.0
    %4249 = vmatprep.subr.mxu0 0.0
    %4250 = vmatpush1.msra.mxu0 0.0
    %4251 = vmatprep.subr.mxu0 0.0
    %4252 = vmatpush1.msra.mxu0 0.0
    %4253 = vmatprep.mubr.f32.mxu0 0.0
    %4254 = vmatmul.mubr.f32.gmra.mrb[0].mxu0 %v4107
    %v4255 = vpop.f32.mrb[0].mxu0
    %v4256 = vadd.f32 0.0, %v4255
    %v4257 = vpop.f32.mrb[0].mxu0
    %4258 = vdwg.mxu0
    %v4260 = vrot.slane %v4256, 4
    %v4262 = vadd.f32 %v3268, %v4260
    %v4263 = vxor.u32 %v4262, 2147483648
    %v4264 = vmul.f32 %v4263, 1.442695
    %v4265 = vpow.pop %v4264
    %v4266 = vadd.f32 %v4265, 1.0
    %v4267 = vrcp.pop %v4266
    %v4268 = vmul.f32 1.0, %v4267
    %4269 = vmatprep.subr.mxu0 0.0
    %4270 = vmatpush1.msra.mxu0 %v3616
    %4271 = vmatprep.subr.mxu0 0.0
    %4272 = vmatpush1.msra.mxu0 %v3617
    %4273 = vmatprep.subr.mxu0 0.0
    %4274 = vmatpush1.msra.mxu0 %v3618
    %4275 = vmatprep.subr.mxu0 0.0
    %4276 = vmatpush1.msra.mxu0 %v3619
    %4277 = vmatprep.subr.mxu0 0.0
    %4278 = vmatpush1.msra.mxu0 0.0
    %4279 = vmatprep.subr.mxu0 0.0
    %4280 = vmatpush1.msra.mxu0 0.0
    %4281 = vmatprep.subr.mxu0 0.0
    %4282 = vmatpush1.msra.mxu0 0.0
    %4283 = vmatprep.subr.mxu0 0.0
    %4284 = vmatpush1.msra.mxu0 0.0
    %4285 = vmatprep.subr.mxu0 0.0
    %4286 = vmatpush1.msra.mxu0 0.0
    %4287 = vmatprep.subr.mxu0 0.0
    %4288 = vmatpush1.msra.mxu0 0.0
    %4289 = vmatprep.subr.mxu0 0.0
    %4290 = vmatpush1.msra.mxu0 0.0
    %4291 = vmatprep.subr.mxu0 0.0
    %4292 = vmatpush1.msra.mxu0 0.0
    %4293 = vmatprep.subr.mxu0 0.0
    %4294 = vmatpush1.msra.mxu0 0.0
    %4295 = vmatprep.subr.mxu0 0.0
    %4296 = vmatpush1.msra.mxu0 0.0
    %4297 = vmatprep.subr.mxu0 0.0
    %4298 = vmatpush1.msra.mxu0 0.0
    %4299 = vmatprep.subr.mxu0 0.0
    %4300 = vmatpush1.msra.mxu0 0.0
    %4301 = vmatprep.subr.mxu0 0.0
    %4302 = vmatpush1.msra.mxu0 0.0
    %4303 = vmatprep.subr.mxu0 0.0
    %4304 = vmatpush1.msra.mxu0 0.0
    %4305 = vmatprep.subr.mxu0 0.0
    %4306 = vmatpush1.msra.mxu0 0.0
    %4307 = vmatprep.subr.mxu0 0.0
    %4308 = vmatpush1.msra.mxu0 0.0
    %4309 = vmatprep.subr.mxu0 0.0
    %4310 = vmatpush1.msra.mxu0 0.0
    %4311 = vmatprep.subr.mxu0 0.0
    %4312 = vmatpush1.msra.mxu0 0.0
    %4313 = vmatprep.subr.mxu0 0.0
    %4314 = vmatpush1.msra.mxu0 0.0
    %4315 = vmatprep.subr.mxu0 0.0
    %4316 = vmatpush1.msra.mxu0 0.0
    %4317 = vmatprep.subr.mxu0 0.0
    %4318 = vmatpush1.msra.mxu0 0.0
    %4319 = vmatprep.subr.mxu0 0.0
    %4320 = vmatpush1.msra.mxu0 0.0
    %4321 = vmatprep.subr.mxu0 0.0
    %4322 = vmatpush1.msra.mxu0 0.0
    %4323 = vmatprep.subr.mxu0 0.0
    %4324 = vmatpush1.msra.mxu0 0.0
    %4325 = vmatprep.subr.mxu0 0.0
    %4326 = vmatpush1.msra.mxu0 0.0
    %4327 = vmatprep.subr.mxu0 0.0
    %4328 = vmatpush1.msra.mxu0 0.0
    %4329 = vmatprep.subr.mxu0 0.0
    %4330 = vmatpush1.msra.mxu0 0.0
    %4331 = vmatprep.subr.mxu0 0.0
    %4332 = vmatpush1.msra.mxu0 0.0
    %4333 = vmatprep.mubr.f32.mxu0 0.0
    %4334 = vmatmul.mubr.f32.gmra.mrb[0].mxu0 %v4107
    %v4335 = vpop.f32.mrb[0].mxu0
    %v4336 = vadd.f32 0.0, %v4335
    %v4337 = vpop.f32.mrb[0].mxu0
    %4338 = vdwg.mxu0
    %v4340 = vrot.slane %v4336, 4
    %v4342 = vadd.f32 %v3356, %v4340
    %v4343 = vtanh.pop %v4342
    %4344 = vmatprep.subr.mxu0 0.0
    %4345 = vmatpush1.msra.mxu0 %v3693
    %4346 = vmatprep.subr.mxu0 0.0
    %4347 = vmatpush1.msra.mxu0 %v3694
    %4348 = vmatprep.subr.mxu0 0.0
    %4349 = vmatpush1.msra.mxu0 %v3695
    %4350 = vmatprep.subr.mxu0 0.0
    %4351 = vmatpush1.msra.mxu0 %v3696
    %4352 = vmatprep.subr.mxu0 0.0
    %4353 = vmatpush1.msra.mxu0 0.0
    %4354 = vmatprep.subr.mxu0 0.0
    %4355 = vmatpush1.msra.mxu0 0.0
    %4356 = vmatprep.subr.mxu0 0.0
    %4357 = vmatpush1.msra.mxu0 0.0
    %4358 = vmatprep.subr.mxu0 0.0
    %4359 = vmatpush1.msra.mxu0 0.0
    %4360 = vmatprep.subr.mxu0 0.0
    %4361 = vmatpush1.msra.mxu0 0.0
    %4362 = vmatprep.subr.mxu0 0.0
    %4363 = vmatpush1.msra.mxu0 0.0
    %4364 = vmatprep.subr.mxu0 0.0
    %4365 = vmatpush1.msra.mxu0 0.0
    %4366 = vmatprep.subr.mxu0 0.0
    %4367 = vmatpush1.msra.mxu0 0.0
    %4368 = vmatprep.subr.mxu0 0.0
    %4369 = vmatpush1.msra.mxu0 0.0
    %4370 = vmatprep.subr.mxu0 0.0
    %4371 = vmatpush1.msra.mxu0 0.0
    %4372 = vmatprep.subr.mxu0 0.0
    %4373 = vmatpush1.msra.mxu0 0.0
    %4374 = vmatprep.subr.mxu0 0.0
    %4375 = vmatpush1.msra.mxu0 0.0
    %4376 = vmatprep.subr.mxu0 0.0
    %4377 = vmatpush1.msra.mxu0 0.0
    %4378 = vmatprep.subr.mxu0 0.0
    %4379 = vmatpush1.msra.mxu0 0.0
    %4380 = vmatprep.subr.mxu0 0.0
    %4381 = vmatpush1.msra.mxu0 0.0
    %4382 = vmatprep.subr.mxu0 0.0
    %4383 = vmatpush1.msra.mxu0 0.0
    %4384 = vmatprep.subr.mxu0 0.0
    %4385 = vmatpush1.msra.mxu0 0.0
    %4386 = vmatprep.subr.mxu0 0.0
    %4387 = vmatpush1.msra.mxu0 0.0
    %4388 = vmatprep.subr.mxu0 0.0
    %4389 = vmatpush1.msra.mxu0 0.0
    %4390 = vmatprep.subr.mxu0 0.0
    %4391 = vmatpush1.msra.mxu0 0.0
    %4392 = vmatprep.subr.mxu0 0.0
    %4393 = vmatpush1.msra.mxu0 0.0
    %4394 = vmatprep.subr.mxu0 0.0
    %4395 = vmatpush1.msra.mxu0 0.0
    %4396 = vmatprep.subr.mxu0 0.0
    %4397 = vmatpush1.msra.mxu0 0.0
    %4398 = vmatprep.subr.mxu0 0.0
    %4399 = vmatpush1.msra.mxu0 0.0
    %4400 = vmatprep.subr.mxu0 0.0
    %4401 = vmatpush1.msra.mxu0 0.0
    %4402 = vmatprep.subr.mxu0 0.0
    %4403 = vmatpush1.msra.mxu0 0.0
    %4404 = vmatprep.subr.mxu0 0.0
    %4405 = vmatpush1.msra.mxu0 0.0
    %4406 = vmatprep.subr.mxu0 0.0
    %4407 = vmatpush1.msra.mxu0 0.0
    %4408 = vmatprep.mubr.f32.mxu0 0.0
    %4409 = vmatmul.mubr.f32.gmra.mrb[0].mxu0 %v4107
    %v4410 = vpop.f32.mrb[0].mxu0
    %v4411 = vadd.f32 0.0, %v4410
    %v4412 = vpop.f32.mrb[0].mxu0
    %4413 = vdwg.mxu0
    %v4415 = vrot.slane %v4411, 4
    %v4417 = vadd.f32 %v3444, %v4415
    %v4418 = vxor.u32 %v4417, 2147483648
    %v4419 = vmul.f32 %v4418, 1.442695
    %v4420 = vpow.pop %v4419
    %v4421 = vadd.f32 %v4420, 1.0
    %v4422 = vrcp.pop %v4421
    %v4423 = vmul.f32 1.0, %v4422
    %v4425 = vrot.slane %v4102, 6
    %v4427 = vmul.f32 %v4268, %v4425
    %v4428 = vmul.f32 %v4188, %v4343
    %v4429 = vadd.f32 %v4427, %v4428
    %v4430 = vtanh.pop %v4429
    %v4431 = vmul.f32 %v4423, %v4430
    %v4433 = vrot.slane %v4431, 4
    %v4434 = vsel %vm488, %v4433, 0
    %4436 = vmatprep.subr.mxu0 0.0
    %4437 = vmatpush1.msra.mxu0 %v3452
    %4438 = vmatprep.subr.mxu0 0.0
    %4439 = vmatpush1.msra.mxu0 %v3453
    %4440 = vmatprep.subr.mxu0 0.0
    %4441 = vmatpush1.msra.mxu0 %v3454
    %4442 = vmatprep.subr.mxu0 0.0
    %4443 = vmatpush1.msra.mxu0 %v3455
    %4444 = vmatprep.subr.mxu0 0.0
    %4445 = vmatpush1.msra.mxu0 0.0
    %4446 = vmatprep.subr.mxu0 0.0
    %4447 = vmatpush1.msra.mxu0 0.0
    %4448 = vmatprep.subr.mxu0 0.0
    %4449 = vmatpush1.msra.mxu0 0.0
    %4450 = vmatprep.subr.mxu0 0.0
    %4451 = vmatpush1.msra.mxu0 0.0
    %4452 = vmatprep.subr.mxu0 0.0
    %4453 = vmatpush1.msra.mxu0 0.0
    %4454 = vmatprep.subr.mxu0 0.0
    %4455 = vmatpush1.msra.mxu0 0.0
    %4456 = vmatprep.subr.mxu0 0.0
    %4457 = vmatpush1.msra.mxu0 0.0
    %4458 = vmatprep.subr.mxu0 0.0
    %4459 = vmatpush1.msra.mxu0 0.0
    %4460 = vmatprep.subr.mxu0 0.0
    %4461 = vmatpush1.msra.mxu0 0.0
    %4462 = vmatprep.subr.mxu0 0.0
    %4463 = vmatpush1.msra.mxu0 0.0
    %4464 = vmatprep.subr.mxu0 0.0
    %4465 = vmatpush1.msra.mxu0 0.0
    %4466 = vmatprep.subr.mxu0 0.0
    %4467 = vmatpush1.msra.mxu0 0.0
    %4468 = vmatprep.subr.mxu0 0.0
    %4469 = vmatpush1.msra.mxu0 0.0
    %4470 = vmatprep.subr.mxu0 0.0
    %4471 = vmatpush1.msra.mxu0 0.0
    %4472 = vmatprep.subr.mxu0 0.0
    %4473 = vmatpush1.msra.mxu0 0.0
    %4474 = vmatprep.subr.mxu0 0.0
    %4475 = vmatpush1.msra.mxu0 0.0
    %4476 = vmatprep.subr.mxu0 0.0
    %4477 = vmatpush1.msra.mxu0 0.0
    %4478 = vmatprep.subr.mxu0 0.0
    %4479 = vmatpush1.msra.mxu0 0.0
    %4480 = vmatprep.subr.mxu0 0.0
    %4481 = vmatpush1.msra.mxu0 0.0
    %4482 = vmatprep.subr.mxu0 0.0
    %4483 = vmatpush1.msra.mxu0 0.0
    %4484 = vmatprep.subr.mxu0 0.0
    %4485 = vmatpush1.msra.mxu0 0.0
    %4486 = vmatprep.subr.mxu0 0.0
    %4487 = vmatpush1.msra.mxu0 0.0
    %4488 = vmatprep.subr.mxu0 0.0
    %4489 = vmatpush1.msra.mxu0 0.0
    %4490 = vmatprep.subr.mxu0 0.0
    %4491 = vmatpush1.msra.mxu0 0.0
    %4492 = vmatprep.subr.mxu0 0.0
    %4493 = vmatpush1.msra.mxu0 0.0
    %4494 = vmatprep.subr.mxu0 0.0
    %4495 = vmatpush1.msra.mxu0 0.0
    %4496 = vmatprep.subr.mxu0 0.0
    %4497 = vmatpush1.msra.mxu0 0.0
    %4498 = vmatprep.subr.mxu0 0.0
    %4499 = vmatpush1.msra.mxu0 0.0
    %4500 = vmatprep.mubr.f32.mxu0 0.0
    %4501 = vmatmul.mubr.f32.gmra.mrb[0].mxu0 %v4434
    %v4502 = vpop.f32.mrb[0].mxu0
    %v4503 = vadd.f32 0.0, %v4502
    %v4504 = vpop.f32.mrb[0].mxu0
    %4505 = vdwg.mxu0
    %v4507 = vrot.slane %v4503, 2
    %v4509 = vadd.f32 %v3180, %v4507
    %v4510 = vxor.u32 %v4509, 2147483648
    %v4511 = vmul.f32 %v4510, 1.442695
    %v4512 = vpow.pop %v4511
    %v4513 = vadd.f32 %v4512, 1.0
    %v4514 = vrcp.pop %v4513
    %v4515 = vmul.f32 1.0, %v4514
    %4516 = vmatprep.subr.mxu0 0.0
    %4517 = vmatpush1.msra.mxu0 %v3534
    %4518 = vmatprep.subr.mxu0 0.0
    %4519 = vmatpush1.msra.mxu0 %v3535
    %4520 = vmatprep.subr.mxu0 0.0
    %4521 = vmatpush1.msra.mxu0 %v3536
    %4522 = vmatprep.subr.mxu0 0.0
    %4523 = vmatpush1.msra.mxu0 %v3537
    %4524 = vmatprep.subr.mxu0 0.0
    %4525 = vmatpush1.msra.mxu0 0.0
    %4526 = vmatprep.subr.mxu0 0.0
    %4527 = vmatpush1.msra.mxu0 0.0
    %4528 = vmatprep.subr.mxu0 0.0
    %4529 = vmatpush1.msra.mxu0 0.0
    %4530 = vmatprep.subr.mxu0 0.0
    %4531 = vmatpush1.msra.mxu0 0.0
    %4532 = vmatprep.subr.mxu0 0.0
    %4533 = vmatpush1.msra.mxu0 0.0
    %4534 = vmatprep.subr.mxu0 0.0
    %4535 = vmatpush1.msra.mxu0 0.0
    %4536 = vmatprep.subr.mxu0 0.0
    %4537 = vmatpush1.msra.mxu0 0.0
    %4538 = vmatprep.subr.mxu0 0.0
    %4539 = vmatpush1.msra.mxu0 0.0
    %4540 = vmatprep.subr.mxu0 0.0
    %4541 = vmatpush1.msra.mxu0 0.0
    %4542 = vmatprep.subr.mxu0 0.0
    %4543 = vmatpush1.msra.mxu0 0.0
    %4544 = vmatprep.subr.mxu0 0.0
    %4545 = vmatpush1.msra.mxu0 0.0
    %4546 = vmatprep.subr.mxu0 0.0
    %4547 = vmatpush1.msra.mxu0 0.0
    %4548 = vmatprep.subr.mxu0 0.0
    %4549 = vmatpush1.msra.mxu0 0.0
    %4550 = vmatprep.subr.mxu0 0.0
    %4551 = vmatpush1.msra.mxu0 0.0
    %4552 = vmatprep.subr.mxu0 0.0
    %4553 = vmatpush1.msra.mxu0 0.0
    %4554 = vmatprep.subr.mxu0 0.0
    %4555 = vmatpush1.msra.mxu0 0.0
    %4556 = vmatprep.subr.mxu0 0.0
    %4557 = vmatpush1.msra.mxu0 0.0
    %4558 = vmatprep.subr.mxu0 0.0
    %4559 = vmatpush1.msra.mxu0 0.0
    %4560 = vmatprep.subr.mxu0 0.0
    %4561 = vmatpush1.msra.mxu0 0.0
    %4562 = vmatprep.subr.mxu0 0.0
    %4563 = vmatpush1.msra.mxu0 0.0
    %4564 = vmatprep.subr.mxu0 0.0
    %4565 = vmatpush1.msra.mxu0 0.0
    %4566 = vmatprep.subr.mxu0 0.0
    %4567 = vmatpush1.msra.mxu0 0.0
    %4568 = vmatprep.subr.mxu0 0.0
    %4569 = vmatpush1.msra.mxu0 0.0
    %4570 = vmatprep.subr.mxu0 0.0
    %4571 = vmatpush1.msra.mxu0 0.0
    %4572 = vmatprep.subr.mxu0 0.0
    %4573 = vmatpush1.msra.mxu0 0.0
    %4574 = vmatprep.subr.mxu0 0.0
    %4575 = vmatpush1.msra.mxu0 0.0
    %4576 = vmatprep.subr.mxu0 0.0
    %4577 = vmatpush1.msra.mxu0 0.0
    %4578 = vmatprep.subr.mxu0 0.0
    %4579 = vmatpush1.msra.mxu0 0.0
    %4580 = vmatprep.mubr.f32.mxu0 0.0
    %4581 = vmatmul.mubr.f32.gmra.mrb[0].mxu0 %v4434
    %v4582 = vpop.f32.mrb[0].mxu0
    %v4583 = vadd.f32 0.0, %v4582
    %v4584 = vpop.f32.mrb[0].mxu0
    %4585 = vdwg.mxu0
    %v4587 = vrot.slane %v4583, 2
    %v4589 = vadd.f32 %v3268, %v4587
    %v4590 = vxor.u32 %v4589, 2147483648
    %v4591 = vmul.f32 %v4590, 1.442695
    %v4592 = vpow.pop %v4591
    %v4593 = vadd.f32 %v4592, 1.0
    %v4594 = vrcp.pop %v4593
    %v4595 = vmul.f32 1.0, %v4594
    %4596 = vmatprep.subr.mxu0 0.0
    %4597 = vmatpush1.msra.mxu0 %v3616
    %4598 = vmatprep.subr.mxu0 0.0
    %4599 = vmatpush1.msra.mxu0 %v3617
    %4600 = vmatprep.subr.mxu0 0.0
    %4601 = vmatpush1.msra.mxu0 %v3618
    %4602 = vmatprep.subr.mxu0 0.0
    %4603 = vmatpush1.msra.mxu0 %v3619
    %4604 = vmatprep.subr.mxu0 0.0
    %4605 = vmatpush1.msra.mxu0 0.0
    %4606 = vmatprep.subr.mxu0 0.0
    %4607 = vmatpush1.msra.mxu0 0.0
    %4608 = vmatprep.subr.mxu0 0.0
    %4609 = vmatpush1.msra.mxu0 0.0
    %4610 = vmatprep.subr.mxu0 0.0
    %4611 = vmatpush1.msra.mxu0 0.0
    %4612 = vmatprep.subr.mxu0 0.0
    %4613 = vmatpush1.msra.mxu0 0.0
    %4614 = vmatprep.subr.mxu0 0.0
    %4615 = vmatpush1.msra.mxu0 0.0
    %4616 = vmatprep.subr.mxu0 0.0
    %4617 = vmatpush1.msra.mxu0 0.0
    %4618 = vmatprep.subr.mxu0 0.0
    %4619 = vmatpush1.msra.mxu0 0.0
    %4620 = vmatprep.subr.mxu0 0.0
    %4621 = vmatpush1.msra.mxu0 0.0
    %4622 = vmatprep.subr.mxu0 0.0
    %4623 = vmatpush1.msra.mxu0 0.0
    %4624 = vmatprep.subr.mxu0 0.0
    %4625 = vmatpush1.msra.mxu0 0.0
    %4626 = vmatprep.subr.mxu0 0.0
    %4627 = vmatpush1.msra.mxu0 0.0
    %4628 = vmatprep.subr.mxu0 0.0
    %4629 = vmatpush1.msra.mxu0 0.0
    %4630 = vmatprep.subr.mxu0 0.0
    %4631 = vmatpush1.msra.mxu0 0.0
    %4632 = vmatprep.subr.mxu0 0.0
    %4633 = vmatpush1.msra.mxu0 0.0
    %4634 = vmatprep.subr.mxu0 0.0
    %4635 = vmatpush1.msra.mxu0 0.0
    %4636 = vmatprep.subr.mxu0 0.0
    %4637 = vmatpush1.msra.mxu0 0.0
    %4638 = vmatprep.subr.mxu0 0.0
    %4639 = vmatpush1.msra.mxu0 0.0
    %4640 = vmatprep.subr.mxu0 0.0
    %4641 = vmatpush1.msra.mxu0 0.0
    %4642 = vmatprep.subr.mxu0 0.0
    %4643 = vmatpush1.msra.mxu0 0.0
    %4644 = vmatprep.subr.mxu0 0.0
    %4645 = vmatpush1.msra.mxu0 0.0
    %4646 = vmatprep.subr.mxu0 0.0
    %4647 = vmatpush1.msra.mxu0 0.0
    %4648 = vmatprep.subr.mxu0 0.0
    %4649 = vmatpush1.msra.mxu0 0.0
    %4650 = vmatprep.subr.mxu0 0.0
    %4651 = vmatpush1.msra.mxu0 0.0
    %4652 = vmatprep.subr.mxu0 0.0
    %4653 = vmatpush1.msra.mxu0 0.0
    %4654 = vmatprep.subr.mxu0 0.0
    %4655 = vmatpush1.msra.mxu0 0.0
    %4656 = vmatprep.subr.mxu0 0.0
    %4657 = vmatpush1.msra.mxu0 0.0
    %4658 = vmatprep.subr.mxu0 0.0
    %4659 = vmatpush1.msra.mxu0 0.0
    %4660 = vmatprep.mubr.f32.mxu0 0.0
    %4661 = vmatmul.mubr.f32.gmra.mrb[0].mxu0 %v4434
    %v4662 = vpop.f32.mrb[0].mxu0
    %v4663 = vadd.f32 0.0, %v4662
    %v4664 = vpop.f32.mrb[0].mxu0
    %4665 = vdwg.mxu0
    %v4667 = vrot.slane %v4663, 2
    %v4669 = vadd.f32 %v3356, %v4667
    %v4670 = vtanh.pop %v4669
    %4671 = vmatprep.subr.mxu0 0.0
    %4672 = vmatpush1.msra.mxu0 %v3693
    %4673 = vmatprep.subr.mxu0 0.0
    %4674 = vmatpush1.msra.mxu0 %v3694
    %4675 = vmatprep.subr.mxu0 0.0
    %4676 = vmatpush1.msra.mxu0 %v3695
    %4677 = vmatprep.subr.mxu0 0.0
    %4678 = vmatpush1.msra.mxu0 %v3696
    %4679 = vmatprep.subr.mxu0 0.0
    %4680 = vmatpush1.msra.mxu0 0.0
    %4681 = vmatprep.subr.mxu0 0.0
    %4682 = vmatpush1.msra.mxu0 0.0
    %4683 = vmatprep.subr.mxu0 0.0
    %4684 = vmatpush1.msra.mxu0 0.0
    %4685 = vmatprep.subr.mxu0 0.0
    %4686 = vmatpush1.msra.mxu0 0.0
    %4687 = vmatprep.subr.mxu0 0.0
    %4688 = vmatpush1.msra.mxu0 0.0
    %4689 = vmatprep.subr.mxu0 0.0
    %4690 = vmatpush1.msra.mxu0 0.0
    %4691 = vmatprep.subr.mxu0 0.0
    %4692 = vmatpush1.msra.mxu0 0.0
    %4693 = vmatprep.subr.mxu0 0.0
    %4694 = vmatpush1.msra.mxu0 0.0
    %4695 = vmatprep.subr.mxu0 0.0
    %4696 = vmatpush1.msra.mxu0 0.0
    %4697 = vmatprep.subr.mxu0 0.0
    %4698 = vmatpush1.msra.mxu0 0.0
    %4699 = vmatprep.subr.mxu0 0.0
    %4700 = vmatpush1.msra.mxu0 0.0
    %4701 = vmatprep.subr.mxu0 0.0
    %4702 = vmatpush1.msra.mxu0 0.0
    %4703 = vmatprep.subr.mxu0 0.0
    %4704 = vmatpush1.msra.mxu0 0.0
    %4705 = vmatprep.subr.mxu0 0.0
    %4706 = vmatpush1.msra.mxu0 0.0
    %4707 = vmatprep.subr.mxu0 0.0
    %4708 = vmatpush1.msra.mxu0 0.0
    %4709 = vmatprep.subr.mxu0 0.0
    %4710 = vmatpush1.msra.mxu0 0.0
    %4711 = vmatprep.subr.mxu0 0.0
    %4712 = vmatpush1.msra.mxu0 0.0
    %4713 = vmatprep.subr.mxu0 0.0
    %4714 = vmatpush1.msra.mxu0 0.0
    %4715 = vmatprep.subr.mxu0 0.0
    %4716 = vmatpush1.msra.mxu0 0.0
    %4717 = vmatprep.subr.mxu0 0.0
    %4718 = vmatpush1.msra.mxu0 0.0
    %4719 = vmatprep.subr.mxu0 0.0
    %4720 = vmatpush1.msra.mxu0 0.0
    %4721 = vmatprep.subr.mxu0 0.0
    %4722 = vmatpush1.msra.mxu0 0.0
    %4723 = vmatprep.subr.mxu0 0.0
    %4724 = vmatpush1.msra.mxu0 0.0
    %4725 = vmatprep.subr.mxu0 0.0
    %4726 = vmatpush1.msra.mxu0 0.0
    %4727 = vmatprep.subr.mxu0 0.0
    %4728 = vmatpush1.msra.mxu0 0.0
    %4729 = vmatprep.subr.mxu0 0.0
    %4730 = vmatpush1.msra.mxu0 0.0
    %4731 = vmatprep.subr.mxu0 0.0
    %4732 = vmatpush1.msra.mxu0 0.0
    %4733 = vmatprep.subr.mxu0 0.0
    %4734 = vmatpush1.msra.mxu0 0.0
    %4735 = vmatprep.mubr.f32.mxu0 0.0
    %4736 = vmatmul.mubr.f32.gmra.mrb[0].mxu0 %v4434
    %v4737 = vpop.f32.mrb[0].mxu0
    %v4738 = vadd.f32 0.0, %v4737
    %v4739 = vpop.f32.mrb[0].mxu0
    %4740 = vdwg.mxu0
    %v4742 = vrot.slane %v4738, 2
    %v4744 = vadd.f32 %v3444, %v4742
    %v4745 = vxor.u32 %v4744, 2147483648
    %v4746 = vmul.f32 %v4745, 1.442695
    %v4747 = vpow.pop %v4746
    %v4748 = vadd.f32 %v4747, 1.0
    %v4749 = vrcp.pop %v4748
    %v4750 = vmul.f32 1.0, %v4749
    %v4752 = vrot.slane %v4429, 6
    %v4754 = vmul.f32 %v4595, %v4752
    %v4755 = vmul.f32 %v4515, %v4670
    %v4756 = vadd.f32 %v4754, %v4755
    %v4757 = vtanh.pop %v4756
    %v4758 = vmul.f32 %v4750, %v4757
    %v4760 = vrot.slane %v4758, 6
    %v4761 = vsel %vm488, %v4760, 0
    %4763 = vmatprep.subr.mxu0 0.0
    %4764 = vmatpush1.msra.mxu0 %v3452
    %4765 = vmatprep.subr.mxu0 0.0
    %4766 = vmatpush1.msra.mxu0 %v3453
    %4767 = vmatprep.subr.mxu0 0.0
    %4768 = vmatpush1.msra.mxu0 %v3454
    %4769 = vmatprep.subr.mxu0 0.0
    %4770 = vmatpush1.msra.mxu0 %v3455
    %4771 = vmatprep.subr.mxu0 0.0
    %4772 = vmatpush1.msra.mxu0 0.0
    %4773 = vmatprep.subr.mxu0 0.0
    %4774 = vmatpush1.msra.mxu0 0.0
    %4775 = vmatprep.subr.mxu0 0.0
    %4776 = vmatpush1.msra.mxu0 0.0
    %4777 = vmatprep.subr.mxu0 0.0
    %4778 = vmatpush1.msra.mxu0 0.0
    %4779 = vmatprep.subr.mxu0 0.0
    %4780 = vmatpush1.msra.mxu0 0.0
    %4781 = vmatprep.subr.mxu0 0.0
    %4782 = vmatpush1.msra.mxu0 0.0
    %4783 = vmatprep.subr.mxu0 0.0
    %4784 = vmatpush1.msra.mxu0 0.0
    %4785 = vmatprep.subr.mxu0 0.0
    %4786 = vmatpush1.msra.mxu0 0.0
    %4787 = vmatprep.subr.mxu0 0.0
    %4788 = vmatpush1.msra.mxu0 0.0
    %4789 = vmatprep.subr.mxu0 0.0
    %4790 = vmatpush1.msra.mxu0 0.0
    %4791 = vmatprep.subr.mxu0 0.0
    %4792 = vmatpush1.msra.mxu0 0.0
    %4793 = vmatprep.subr.mxu0 0.0
    %4794 = vmatpush1.msra.mxu0 0.0
    %4795 = vmatprep.subr.mxu0 0.0
    %4796 = vmatpush1.msra.mxu0 0.0
    %4797 = vmatprep.subr.mxu0 0.0
    %4798 = vmatpush1.msra.mxu0 0.0
    %4799 = vmatprep.subr.mxu0 0.0
    %4800 = vmatpush1.msra.mxu0 0.0
    %4801 = vmatprep.subr.mxu0 0.0
    %4802 = vmatpush1.msra.mxu0 0.0
    %4803 = vmatprep.subr.mxu0 0.0
    %4804 = vmatpush1.msra.mxu0 0.0
    %4805 = vmatprep.subr.mxu0 0.0
    %4806 = vmatpush1.msra.mxu0 0.0
    %4807 = vmatprep.subr.mxu0 0.0
    %4808 = vmatpush1.msra.mxu0 0.0
    %4809 = vmatprep.subr.mxu0 0.0
    %4810 = vmatpush1.msra.mxu0 0.0
    %4811 = vmatprep.subr.mxu0 0.0
    %4812 = vmatpush1.msra.mxu0 0.0
    %4813 = vmatprep.subr.mxu0 0.0
    %4814 = vmatpush1.msra.mxu0 0.0
    %4815 = vmatprep.subr.mxu0 0.0
    %4816 = vmatpush1.msra.mxu0 0.0
    %4817 = vmatprep.subr.mxu0 0.0
    %4818 = vmatpush1.msra.mxu0 0.0
    %4819 = vmatprep.subr.mxu0 0.0
    %4820 = vmatpush1.msra.mxu0 0.0
    %4821 = vmatprep.subr.mxu0 0.0
    %4822 = vmatpush1.msra.mxu0 0.0
    %4823 = vmatprep.subr.mxu0 0.0
    %4824 = vmatpush1.msra.mxu0 0.0
    %4825 = vmatprep.subr.mxu0 0.0
    %4826 = vmatpush1.msra.mxu0 0.0
    %4827 = vmatprep.mubr.f32.mxu0 0.0
    %4828 = vmatmul.mubr.f32.gmra.mrb[0].mxu0 %v4761
    %v4829 = vpop.f32.mrb[0].mxu0
    %v4830 = vadd.f32 0.0, %v4829
    %v4831 = vpop.f32.mrb[0].mxu0
    %4832 = vdwg.mxu0
    %v4833 = vadd.f32 %v3185, %v4830
    %v4834 = vxor.u32 %v4833, 2147483648
    %v4835 = vmul.f32 %v4834, 1.442695
    %v4836 = vpow.pop %v4835
    %v4837 = vadd.f32 %v4836, 1.0
    %v4838 = vrcp.pop %v4837
    %v4839 = vmul.f32 1.0, %v4838
    %4840 = vmatprep.subr.mxu0 0.0
    %4841 = vmatpush1.msra.mxu0 %v3534
    %4842 = vmatprep.subr.mxu0 0.0
    %4843 = vmatpush1.msra.mxu0 %v3535
    %4844 = vmatprep.subr.mxu0 0.0
    %4845 = vmatpush1.msra.mxu0 %v3536
    %4846 = vmatprep.subr.mxu0 0.0
    %4847 = vmatpush1.msra.mxu0 %v3537
    %4848 = vmatprep.subr.mxu0 0.0
    %4849 = vmatpush1.msra.mxu0 0.0
    %4850 = vmatprep.subr.mxu0 0.0
    %4851 = vmatpush1.msra.mxu0 0.0
    %4852 = vmatprep.subr.mxu0 0.0
    %4853 = vmatpush1.msra.mxu0 0.0
    %4854 = vmatprep.subr.mxu0 0.0
    %4855 = vmatpush1.msra.mxu0 0.0
    %4856 = vmatprep.subr.mxu0 0.0
    %4857 = vmatpush1.msra.mxu0 0.0
    %4858 = vmatprep.subr.mxu0 0.0
    %4859 = vmatpush1.msra.mxu0 0.0
    %4860 = vmatprep.subr.mxu0 0.0
    %4861 = vmatpush1.msra.mxu0 0.0
    %4862 = vmatprep.subr.mxu0 0.0
    %4863 = vmatpush1.msra.mxu0 0.0
    %4864 = vmatprep.subr.mxu0 0.0
    %4865 = vmatpush1.msra.mxu0 0.0
    %4866 = vmatprep.subr.mxu0 0.0
    %4867 = vmatpush1.msra.mxu0 0.0
    %4868 = vmatprep.subr.mxu0 0.0
    %4869 = vmatpush1.msra.mxu0 0.0
    %4870 = vmatprep.subr.mxu0 0.0
    %4871 = vmatpush1.msra.mxu0 0.0
    %4872 = vmatprep.subr.mxu0 0.0
    %4873 = vmatpush1.msra.mxu0 0.0
    %4874 = vmatprep.subr.mxu0 0.0
    %4875 = vmatpush1.msra.mxu0 0.0
    %4876 = vmatprep.subr.mxu0 0.0
    %4877 = vmatpush1.msra.mxu0 0.0
    %4878 = vmatprep.subr.mxu0 0.0
    %4879 = vmatpush1.msra.mxu0 0.0
    %4880 = vmatprep.subr.mxu0 0.0
    %4881 = vmatpush1.msra.mxu0 0.0
    %4882 = vmatprep.subr.mxu0 0.0
    %4883 = vmatpush1.msra.mxu0 0.0
    %4884 = vmatprep.subr.mxu0 0.0
    %4885 = vmatpush1.msra.mxu0 0.0
    %4886 = vmatprep.subr.mxu0 0.0
    %4887 = vmatpush1.msra.mxu0 0.0
    %4888 = vmatprep.subr.mxu0 0.0
    %4889 = vmatpush1.msra.mxu0 0.0
    %4890 = vmatprep.subr.mxu0 0.0
    %4891 = vmatpush1.msra.mxu0 0.0
    %4892 = vmatprep.subr.mxu0 0.0
    %4893 = vmatpush1.msra.mxu0 0.0
    %4894 = vmatprep.subr.mxu0 0.0
    %4895 = vmatpush1.msra.mxu0 0.0
    %4896 = vmatprep.subr.mxu0 0.0
    %4897 = vmatpush1.msra.mxu0 0.0
    %4898 = vmatprep.subr.mxu0 0.0
    %4899 = vmatpush1.msra.mxu0 0.0
    %4900 = vmatprep.subr.mxu0 0.0
    %4901 = vmatpush1.msra.mxu0 0.0
    %4902 = vmatprep.subr.mxu0 0.0
    %4903 = vmatpush1.msra.mxu0 0.0
    %4904 = vmatprep.mubr.f32.mxu0 0.0
    %4905 = vmatmul.mubr.f32.gmra.mrb[0].mxu0 %v4761
    %v4906 = vpop.f32.mrb[0].mxu0
    %v4907 = vadd.f32 0.0, %v4906
    %v4908 = vpop.f32.mrb[0].mxu0
    %4909 = vdwg.mxu0
    %v4910 = vadd.f32 %v3273, %v4907
    %v4911 = vxor.u32 %v4910, 2147483648
    %v4912 = vmul.f32 %v4911, 1.442695
    %v4913 = vpow.pop %v4912
    %v4914 = vadd.f32 %v4913, 1.0
    %v4915 = vrcp.pop %v4914
    %v4916 = vmul.f32 1.0, %v4915
    %4917 = vmatprep.subr.mxu0 0.0
    %4918 = vmatpush1.msra.mxu0 %v3616
    %4919 = vmatprep.subr.mxu0 0.0
    %4920 = vmatpush1.msra.mxu0 %v3617
    %4921 = vmatprep.subr.mxu0 0.0
    %4922 = vmatpush1.msra.mxu0 %v3618
    %4923 = vmatprep.subr.mxu0 0.0
    %4924 = vmatpush1.msra.mxu0 %v3619
    %4925 = vmatprep.subr.mxu0 0.0
    %4926 = vmatpush1.msra.mxu0 0.0
    %4927 = vmatprep.subr.mxu0 0.0
    %4928 = vmatpush1.msra.mxu0 0.0
    %4929 = vmatprep.subr.mxu0 0.0
    %4930 = vmatpush1.msra.mxu0 0.0
    %4931 = vmatprep.subr.mxu0 0.0
    %4932 = vmatpush1.msra.mxu0 0.0
    %4933 = vmatprep.subr.mxu0 0.0
    %4934 = vmatpush1.msra.mxu0 0.0
    %4935 = vmatprep.subr.mxu0 0.0
    %4936 = vmatpush1.msra.mxu0 0.0
    %4937 = vmatprep.subr.mxu0 0.0
    %4938 = vmatpush1.msra.mxu0 0.0
    %4939 = vmatprep.subr.mxu0 0.0
    %4940 = vmatpush1.msra.mxu0 0.0
    %4941 = vmatprep.subr.mxu0 0.0
    %4942 = vmatpush1.msra.mxu0 0.0
    %4943 = vmatprep.subr.mxu0 0.0
    %4944 = vmatpush1.msra.mxu0 0.0
    %4945 = vmatprep.subr.mxu0 0.0
    %4946 = vmatpush1.msra.mxu0 0.0
    %4947 = vmatprep.subr.mxu0 0.0
    %4948 = vmatpush1.msra.mxu0 0.0
    %4949 = vmatprep.subr.mxu0 0.0
    %4950 = vmatpush1.msra.mxu0 0.0
    %4951 = vmatprep.subr.mxu0 0.0
    %4952 = vmatpush1.msra.mxu0 0.0
    %4953 = vmatprep.subr.mxu0 0.0
    %4954 = vmatpush1.msra.mxu0 0.0
    %4955 = vmatprep.subr.mxu0 0.0
    %4956 = vmatpush1.msra.mxu0 0.0
    %4957 = vmatprep.subr.mxu0 0.0
    %4958 = vmatpush1.msra.mxu0 0.0
    %4959 = vmatprep.subr.mxu0 0.0
    %4960 = vmatpush1.msra.mxu0 0.0
    %4961 = vmatprep.subr.mxu0 0.0
    %4962 = vmatpush1.msra.mxu0 0.0
    %4963 = vmatprep.subr.mxu0 0.0
    %4964 = vmatpush1.msra.mxu0 0.0
    %4965 = vmatprep.subr.mxu0 0.0
    %4966 = vmatpush1.msra.mxu0 0.0
    %4967 = vmatprep.subr.mxu0 0.0
    %4968 = vmatpush1.msra.mxu0 0.0
    %4969 = vmatprep.subr.mxu0 0.0
    %4970 = vmatpush1.msra.mxu0 0.0
    %4971 = vmatprep.subr.mxu0 0.0
    %4972 = vmatpush1.msra.mxu0 0.0
    %4973 = vmatprep.subr.mxu0 0.0
    %4974 = vmatpush1.msra.mxu0 0.0
    %4975 = vmatprep.subr.mxu0 0.0
    %4976 = vmatpush1.msra.mxu0 0.0
    %4977 = vmatprep.subr.mxu0 0.0
    %4978 = vmatpush1.msra.mxu0 0.0
    %4979 = vmatprep.subr.mxu0 0.0
    %4980 = vmatpush1.msra.mxu0 0.0
    %4981 = vmatprep.mubr.f32.mxu0 0.0
    %4982 = vmatmul.mubr.f32.gmra.mrb[0].mxu0 %v4761
    %v4983 = vpop.f32.mrb[0].mxu0
    %v4984 = vadd.f32 0.0, %v4983
    %v4985 = vpop.f32.mrb[0].mxu0
    %4986 = vdwg.mxu0
    %v4987 = vadd.f32 %v3361, %v4984
    %v4988 = vtanh.pop %v4987
    %4989 = vmatprep.subr.mxu0 0.0
    %4990 = vmatpush1.msra.mxu0 %v3693
    %4991 = vmatprep.subr.mxu0 0.0
    %4992 = vmatpush1.msra.mxu0 %v3694
    %4993 = vmatprep.subr.mxu0 0.0
    %4994 = vmatpush1.msra.mxu0 %v3695
    %4995 = vmatprep.subr.mxu0 0.0
    %4996 = vmatpush1.msra.mxu0 %v3696
    %4997 = vmatprep.subr.mxu0 0.0
    %4998 = vmatpush1.msra.mxu0 0.0
    %4999 = vmatprep.subr.mxu0 0.0
    %5000 = vmatpush1.msra.mxu0 0.0
    %5001 = vmatprep.subr.mxu0 0.0
    %5002 = vmatpush1.msra.mxu0 0.0
    %5003 = vmatprep.subr.mxu0 0.0
    %5004 = vmatpush1.msra.mxu0 0.0
    %5005 = vmatprep.subr.mxu0 0.0
    %5006 = vmatpush1.msra.mxu0 0.0
    %5007 = vmatprep.subr.mxu0 0.0
    %5008 = vmatpush1.msra.mxu0 0.0
    %5009 = vmatprep.subr.mxu0 0.0
    %5010 = vmatpush1.msra.mxu0 0.0
    %5011 = vmatprep.subr.mxu0 0.0
    %5012 = vmatpush1.msra.mxu0 0.0
    %5013 = vmatprep.subr.mxu0 0.0
    %5014 = vmatpush1.msra.mxu0 0.0
    %5015 = vmatprep.subr.mxu0 0.0
    %5016 = vmatpush1.msra.mxu0 0.0
    %5017 = vmatprep.subr.mxu0 0.0
    %5018 = vmatpush1.msra.mxu0 0.0
    %5019 = vmatprep.subr.mxu0 0.0
    %5020 = vmatpush1.msra.mxu0 0.0
    %5021 = vmatprep.subr.mxu0 0.0
    %5022 = vmatpush1.msra.mxu0 0.0
    %5023 = vmatprep.subr.mxu0 0.0
    %5024 = vmatpush1.msra.mxu0 0.0
    %5025 = vmatprep.subr.mxu0 0.0
    %5026 = vmatpush1.msra.mxu0 0.0
    %5027 = vmatprep.subr.mxu0 0.0
    %5028 = vmatpush1.msra.mxu0 0.0
    %5029 = vmatprep.subr.mxu0 0.0
    %5030 = vmatpush1.msra.mxu0 0.0
    %5031 = vmatprep.subr.mxu0 0.0
    %5032 = vmatpush1.msra.mxu0 0.0
    %5033 = vmatprep.subr.mxu0 0.0
    %5034 = vmatpush1.msra.mxu0 0.0
    %5035 = vmatprep.subr.mxu0 0.0
    %5036 = vmatpush1.msra.mxu0 0.0
    %5037 = vmatprep.subr.mxu0 0.0
    %5038 = vmatpush1.msra.mxu0 0.0
    %5039 = vmatprep.subr.mxu0 0.0
    %5040 = vmatpush1.msra.mxu0 0.0
    %5041 = vmatprep.subr.mxu0 0.0
    %5042 = vmatpush1.msra.mxu0 0.0
    %5043 = vmatprep.subr.mxu0 0.0
    %5044 = vmatpush1.msra.mxu0 0.0
    %5045 = vmatprep.subr.mxu0 0.0
    %5046 = vmatpush1.msra.mxu0 0.0
    %5047 = vmatprep.subr.mxu0 0.0
    %5048 = vmatpush1.msra.mxu0 0.0
    %5049 = vmatprep.subr.mxu0 0.0
    %5050 = vmatpush1.msra.mxu0 0.0
    %5051 = vmatprep.subr.mxu0 0.0
    %5052 = vmatpush1.msra.mxu0 0.0
    %5053 = vmatprep.mubr.f32.mxu0 0.0
    %5054 = vmatmul.mubr.f32.gmra.mrb[0].mxu0 %v4761
    %v5055 = vpop.f32.mrb[0].mxu0
    %v5056 = vadd.f32 0.0, %v5055
    %v5057 = vpop.f32.mrb[0].mxu0
    %5058 = vdwg.mxu0
    %v5059 = vadd.f32 %v3449, %v5056
    %v5060 = vxor.u32 %v5059, 2147483648
    %v5061 = vmul.f32 %v5060, 1.442695
    %v5062 = vpow.pop %v5061
    %v5063 = vadd.f32 %v5062, 1.0
    %v5064 = vrcp.pop %v5063
    %v5065 = vmul.f32 1.0, %v5064
    %v5067 = vrot.slane %v4756, 6
    %v5069 = vmul.f32 %v4916, %v5067
    %v5070 = vmul.f32 %v4839, %v4988
    %v5071 = vadd.f32 %v5069, %v5070
    %v5072 = vtanh.pop %v5071
    %v5073 = vmul.f32 %v5065, %v5072
    %v5075 = vsel %vm488, %v5073, 0
    %5077 = vmatprep.subr.mxu0 0.0
    %5078 = vmatpush1.msra.mxu0 %v3452
    %5079 = vmatprep.subr.mxu0 0.0
    %5080 = vmatpush1.msra.mxu0 %v3453
    %5081 = vmatprep.subr.mxu0 0.0
    %5082 = vmatpush1.msra.mxu0 %v3454
    %5083 = vmatprep.subr.mxu0 0.0
    %5084 = vmatpush1.msra.mxu0 %v3455
    %5085 = vmatprep.subr.mxu0 0.0
    %5086 = vmatpush1.msra.mxu0 0.0
    %5087 = vmatprep.subr.mxu0 0.0
    %5088 = vmatpush1.msra.mxu0 0.0
    %5089 = vmatprep.subr.mxu0 0.0
    %5090 = vmatpush1.msra.mxu0 0.0
    %5091 = vmatprep.subr.mxu0 0.0
    %5092 = vmatpush1.msra.mxu0 0.0
    %5093 = vmatprep.subr.mxu0 0.0
    %5094 = vmatpush1.msra.mxu0 0.0
    %5095 = vmatprep.subr.mxu0 0.0
    %5096 = vmatpush1.msra.mxu0 0.0
    %5097 = vmatprep.subr.mxu0 0.0
    %5098 = vmatpush1.msra.mxu0 0.0
    %5099 = vmatprep.subr.mxu0 0.0
    %5100 = vmatpush1.msra.mxu0 0.0
    %5101 = vmatprep.subr.mxu0 0.0
    %5102 = vmatpush1.msra.mxu0 0.0
    %5103 = vmatprep.subr.mxu0 0.0
    %5104 = vmatpush1.msra.mxu0 0.0
    %5105 = vmatprep.subr.mxu0 0.0
    %5106 = vmatpush1.msra.mxu0 0.0
    %5107 = vmatprep.subr.mxu0 0.0
    %5108 = vmatpush1.msra.mxu0 0.0
    %5109 = vmatprep.subr.mxu0 0.0
    %5110 = vmatpush1.msra.mxu0 0.0
    %5111 = vmatprep.subr.mxu0 0.0
    %5112 = vmatpush1.msra.mxu0 0.0
    %5113 = vmatprep.subr.mxu0 0.0
    %5114 = vmatpush1.msra.mxu0 0.0
    %5115 = vmatprep.subr.mxu0 0.0
    %5116 = vmatpush1.msra.mxu0 0.0
    %5117 = vmatprep.subr.mxu0 0.0
    %5118 = vmatpush1.msra.mxu0 0.0
    %5119 = vmatprep.subr.mxu0 0.0
    %5120 = vmatpush1.msra.mxu0 0.0
    %5121 = vmatprep.subr.mxu0 0.0
    %5122 = vmatpush1.msra.mxu0 0.0
    %5123 = vmatprep.subr.mxu0 0.0
    %5124 = vmatpush1.msra.mxu0 0.0
    %5125 = vmatprep.subr.mxu0 0.0
    %5126 = vmatpush1.msra.mxu0 0.0
    %5127 = vmatprep.subr.mxu0 0.0
    %5128 = vmatpush1.msra.mxu0 0.0
    %5129 = vmatprep.subr.mxu0 0.0
    %5130 = vmatpush1.msra.mxu0 0.0
    %5131 = vmatprep.subr.mxu0 0.0
    %5132 = vmatpush1.msra.mxu0 0.0
    %5133 = vmatprep.subr.mxu0 0.0
    %5134 = vmatpush1.msra.mxu0 0.0
    %5135 = vmatprep.subr.mxu0 0.0
    %5136 = vmatpush1.msra.mxu0 0.0
    %5137 = vmatprep.subr.mxu0 0.0
    %5138 = vmatpush1.msra.mxu0 0.0
    %5139 = vmatprep.subr.mxu0 0.0
    %5140 = vmatpush1.msra.mxu0 0.0
    %5141 = vmatprep.mubr.f32.mxu0 0.0
    %5142 = vmatmul.mubr.f32.gmra.mrb[0].mxu0 %v5075
    %v5143 = vpop.f32.mrb[0].mxu0
    %v5144 = vadd.f32 0.0, %v5143
    %v5145 = vpop.f32.mrb[0].mxu0
    %5146 = vdwg.mxu0
    %v5148 = vrot.slane %v5144, 6
    %v5150 = vadd.f32 %v3185, %v5148
    %v5151 = vxor.u32 %v5150, 2147483648
    %v5152 = vmul.f32 %v5151, 1.442695
    %v5153 = vpow.pop %v5152
    %v5154 = vadd.f32 %v5153, 1.0
    %v5155 = vrcp.pop %v5154
    %v5156 = vmul.f32 1.0, %v5155
    %5157 = vmatprep.subr.mxu0 0.0
    %5158 = vmatpush1.msra.mxu0 %v3534
    %5159 = vmatprep.subr.mxu0 0.0
    %5160 = vmatpush1.msra.mxu0 %v3535
    %5161 = vmatprep.subr.mxu0 0.0
    %5162 = vmatpush1.msra.mxu0 %v3536
    %5163 = vmatprep.subr.mxu0 0.0
    %5164 = vmatpush1.msra.mxu0 %v3537
    %5165 = vmatprep.subr.mxu0 0.0
    %5166 = vmatpush1.msra.mxu0 0.0
    %5167 = vmatprep.subr.mxu0 0.0
    %5168 = vmatpush1.msra.mxu0 0.0
    %5169 = vmatprep.subr.mxu0 0.0
    %5170 = vmatpush1.msra.mxu0 0.0
    %5171 = vmatprep.subr.mxu0 0.0
    %5172 = vmatpush1.msra.mxu0 0.0
    %5173 = vmatprep.subr.mxu0 0.0
    %5174 = vmatpush1.msra.mxu0 0.0
    %5175 = vmatprep.subr.mxu0 0.0
    %5176 = vmatpush1.msra.mxu0 0.0
    %5177 = vmatprep.subr.mxu0 0.0
    %5178 = vmatpush1.msra.mxu0 0.0
    %5179 = vmatprep.subr.mxu0 0.0
    %5180 = vmatpush1.msra.mxu0 0.0
    %5181 = vmatprep.subr.mxu0 0.0
    %5182 = vmatpush1.msra.mxu0 0.0
    %5183 = vmatprep.subr.mxu0 0.0
    %5184 = vmatpush1.msra.mxu0 0.0
    %5185 = vmatprep.subr.mxu0 0.0
    %5186 = vmatpush1.msra.mxu0 0.0
    %5187 = vmatprep.subr.mxu0 0.0
    %5188 = vmatpush1.msra.mxu0 0.0
    %5189 = vmatprep.subr.mxu0 0.0
    %5190 = vmatpush1.msra.mxu0 0.0
    %5191 = vmatprep.subr.mxu0 0.0
    %5192 = vmatpush1.msra.mxu0 0.0
    %5193 = vmatprep.subr.mxu0 0.0
    %5194 = vmatpush1.msra.mxu0 0.0
    %5195 = vmatprep.subr.mxu0 0.0
    %5196 = vmatpush1.msra.mxu0 0.0
    %5197 = vmatprep.subr.mxu0 0.0
    %5198 = vmatpush1.msra.mxu0 0.0
    %5199 = vmatprep.subr.mxu0 0.0
    %5200 = vmatpush1.msra.mxu0 0.0
    %5201 = vmatprep.subr.mxu0 0.0
    %5202 = vmatpush1.msra.mxu0 0.0
    %5203 = vmatprep.subr.mxu0 0.0
    %5204 = vmatpush1.msra.mxu0 0.0
    %5205 = vmatprep.subr.mxu0 0.0
    %5206 = vmatpush1.msra.mxu0 0.0
    %5207 = vmatprep.subr.mxu0 0.0
    %5208 = vmatpush1.msra.mxu0 0.0
    %5209 = vmatprep.subr.mxu0 0.0
    %5210 = vmatpush1.msra.mxu0 0.0
    %5211 = vmatprep.subr.mxu0 0.0
    %5212 = vmatpush1.msra.mxu0 0.0
    %5213 = vmatprep.subr.mxu0 0.0
    %5214 = vmatpush1.msra.mxu0 0.0
    %5215 = vmatprep.subr.mxu0 0.0
    %5216 = vmatpush1.msra.mxu0 0.0
    %5217 = vmatprep.subr.mxu0 0.0
    %5218 = vmatpush1.msra.mxu0 0.0
    %5219 = vmatprep.subr.mxu0 0.0
    %5220 = vmatpush1.msra.mxu0 0.0
    %5221 = vmatprep.mubr.f32.mxu0 0.0
    %5222 = vmatmul.mubr.f32.gmra.mrb[0].mxu0 %v5075
    %v5223 = vpop.f32.mrb[0].mxu0
    %v5224 = vadd.f32 0.0, %v5223
    %v5225 = vpop.f32.mrb[0].mxu0
    %5226 = vdwg.mxu0
    %v5228 = vrot.slane %v5224, 6
    %v5230 = vadd.f32 %v3273, %v5228
    %v5231 = vxor.u32 %v5230, 2147483648
    %v5232 = vmul.f32 %v5231, 1.442695
    %v5233 = vpow.pop %v5232
    %v5234 = vadd.f32 %v5233, 1.0
    %v5235 = vrcp.pop %v5234
    %v5236 = vmul.f32 1.0, %v5235
    %5237 = vmatprep.subr.mxu0 0.0
    %5238 = vmatpush1.msra.mxu0 %v3616
    %5239 = vmatprep.subr.mxu0 0.0
    %5240 = vmatpush1.msra.mxu0 %v3617
    %5241 = vmatprep.subr.mxu0 0.0
    %5242 = vmatpush1.msra.mxu0 %v3618
    %5243 = vmatprep.subr.mxu0 0.0
    %5244 = vmatpush1.msra.mxu0 %v3619
    %5245 = vmatprep.subr.mxu0 0.0
    %5246 = vmatpush1.msra.mxu0 0.0
    %5247 = vmatprep.subr.mxu0 0.0
    %5248 = vmatpush1.msra.mxu0 0.0
    %5249 = vmatprep.subr.mxu0 0.0
    %5250 = vmatpush1.msra.mxu0 0.0
    %5251 = vmatprep.subr.mxu0 0.0
    %5252 = vmatpush1.msra.mxu0 0.0
    %5253 = vmatprep.subr.mxu0 0.0
    %5254 = vmatpush1.msra.mxu0 0.0
    %5255 = vmatprep.subr.mxu0 0.0
    %5256 = vmatpush1.msra.mxu0 0.0
    %5257 = vmatprep.subr.mxu0 0.0
    %5258 = vmatpush1.msra.mxu0 0.0
    %5259 = vmatprep.subr.mxu0 0.0
    %5260 = vmatpush1.msra.mxu0 0.0
    %5261 = vmatprep.subr.mxu0 0.0
    %5262 = vmatpush1.msra.mxu0 0.0
    %5263 = vmatprep.subr.mxu0 0.0
    %5264 = vmatpush1.msra.mxu0 0.0
    %5265 = vmatprep.subr.mxu0 0.0
    %5266 = vmatpush1.msra.mxu0 0.0
    %5267 = vmatprep.subr.mxu0 0.0
    %5268 = vmatpush1.msra.mxu0 0.0
    %5269 = vmatprep.subr.mxu0 0.0
    %5270 = vmatpush1.msra.mxu0 0.0
    %5271 = vmatprep.subr.mxu0 0.0
    %5272 = vmatpush1.msra.mxu0 0.0
    %5273 = vmatprep.subr.mxu0 0.0
    %5274 = vmatpush1.msra.mxu0 0.0
    %5275 = vmatprep.subr.mxu0 0.0
    %5276 = vmatpush1.msra.mxu0 0.0
    %5277 = vmatprep.subr.mxu0 0.0
    %5278 = vmatpush1.msra.mxu0 0.0
    %5279 = vmatprep.subr.mxu0 0.0
    %5280 = vmatpush1.msra.mxu0 0.0
    %5281 = vmatprep.subr.mxu0 0.0
    %5282 = vmatpush1.msra.mxu0 0.0
    %5283 = vmatprep.subr.mxu0 0.0
    %5284 = vmatpush1.msra.mxu0 0.0
    %5285 = vmatprep.subr.mxu0 0.0
    %5286 = vmatpush1.msra.mxu0 0.0
    %5287 = vmatprep.subr.mxu0 0.0
    %5288 = vmatpush1.msra.mxu0 0.0
    %5289 = vmatprep.subr.mxu0 0.0
    %5290 = vmatpush1.msra.mxu0 0.0
    %5291 = vmatprep.subr.mxu0 0.0
    %5292 = vmatpush1.msra.mxu0 0.0
    %5293 = vmatprep.subr.mxu0 0.0
    %5294 = vmatpush1.msra.mxu0 0.0
    %5295 = vmatprep.subr.mxu0 0.0
    %5296 = vmatpush1.msra.mxu0 0.0
    %5297 = vmatprep.subr.mxu0 0.0
    %5298 = vmatpush1.msra.mxu0 0.0
    %5299 = vmatprep.subr.mxu0 0.0
    %5300 = vmatpush1.msra.mxu0 0.0
    %5301 = vmatprep.mubr.f32.mxu0 0.0
    %5302 = vmatmul.mubr.f32.gmra.mrb[0].mxu0 %v5075
    %v5303 = vpop.f32.mrb[0].mxu0
    %v5304 = vadd.f32 0.0, %v5303
    %v5305 = vpop.f32.mrb[0].mxu0
    %5306 = vdwg.mxu0
    %v5308 = vrot.slane %v5304, 6
    %v5310 = vadd.f32 %v3361, %v5308
    %v5311 = vtanh.pop %v5310
    %5312 = vmatprep.subr.mxu0 0.0
    %5313 = vmatpush1.msra.mxu0 %v3693
    %5314 = vmatprep.subr.mxu0 0.0
    %5315 = vmatpush1.msra.mxu0 %v3694
    %5316 = vmatprep.subr.mxu0 0.0
    %5317 = vmatpush1.msra.mxu0 %v3695
    %5318 = vmatprep.subr.mxu0 0.0
    %5319 = vmatpush1.msra.mxu0 %v3696
    %5320 = vmatprep.subr.mxu0 0.0
    %5321 = vmatpush1.msra.mxu0 0.0
    %5322 = vmatprep.subr.mxu0 0.0
    %5323 = vmatpush1.msra.mxu0 0.0
    %5324 = vmatprep.subr.mxu0 0.0
    %5325 = vmatpush1.msra.mxu0 0.0
    %5326 = vmatprep.subr.mxu0 0.0
    %5327 = vmatpush1.msra.mxu0 0.0
    %5328 = vmatprep.subr.mxu0 0.0
    %5329 = vmatpush1.msra.mxu0 0.0
    %5330 = vmatprep.subr.mxu0 0.0
    %5331 = vmatpush1.msra.mxu0 0.0
    %5332 = vmatprep.subr.mxu0 0.0
    %5333 = vmatpush1.msra.mxu0 0.0
    %5334 = vmatprep.subr.mxu0 0.0
    %5335 = vmatpush1.msra.mxu0 0.0
    %5336 = vmatprep.subr.mxu0 0.0
    %5337 = vmatpush1.msra.mxu0 0.0
    %5338 = vmatprep.subr.mxu0 0.0
    %5339 = vmatpush1.msra.mxu0 0.0
    %5340 = vmatprep.subr.mxu0 0.0
    %5341 = vmatpush1.msra.mxu0 0.0
    %5342 = vmatprep.subr.mxu0 0.0
    %5343 = vmatpush1.msra.mxu0 0.0
    %5344 = vmatprep.subr.mxu0 0.0
    %5345 = vmatpush1.msra.mxu0 0.0
    %5346 = vmatprep.subr.mxu0 0.0
    %5347 = vmatpush1.msra.mxu0 0.0
    %5348 = vmatprep.subr.mxu0 0.0
    %5349 = vmatpush1.msra.mxu0 0.0
    %5350 = vmatprep.subr.mxu0 0.0
    %5351 = vmatpush1.msra.mxu0 0.0
    %5352 = vmatprep.subr.mxu0 0.0
    %5353 = vmatpush1.msra.mxu0 0.0
    %5354 = vmatprep.subr.mxu0 0.0
    %5355 = vmatpush1.msra.mxu0 0.0
    %5356 = vmatprep.subr.mxu0 0.0
    %5357 = vmatpush1.msra.mxu0 0.0
    %5358 = vmatprep.subr.mxu0 0.0
    %5359 = vmatpush1.msra.mxu0 0.0
    %5360 = vmatprep.subr.mxu0 0.0
    %5361 = vmatpush1.msra.mxu0 0.0
    %5362 = vmatprep.subr.mxu0 0.0
    %5363 = vmatpush1.msra.mxu0 0.0
    %5364 = vmatprep.subr.mxu0 0.0
    %5365 = vmatpush1.msra.mxu0 0.0
    %5366 = vmatprep.subr.mxu0 0.0
    %5367 = vmatpush1.msra.mxu0 0.0
    %5368 = vmatprep.subr.mxu0 0.0
    %5369 = vmatpush1.msra.mxu0 0.0
    %5370 = vmatprep.subr.mxu0 0.0
    %5371 = vmatpush1.msra.mxu0 0.0
    %5372 = vmatprep.subr.mxu0 0.0
    %5373 = vmatpush1.msra.mxu0 0.0
    %5374 = vmatprep.subr.mxu0 0.0
    %5375 = vmatpush1.msra.mxu0 0.0
    %5376 = vmatprep.mubr.f32.mxu0 0.0
    %5377 = vmatmul.mubr.f32.gmra.mrb[0].mxu0 %v5075
    %v5378 = vpop.f32.mrb[0].mxu0
    %v5379 = vadd.f32 0.0, %v5378
    %v5380 = vpop.f32.mrb[0].mxu0
    %5381 = vdwg.mxu0
    %v5383 = vrot.slane %v5379, 6
    %v5385 = vadd.f32 %v3449, %v5383
    %v5386 = vxor.u32 %v5385, 2147483648
    %v5387 = vmul.f32 %v5386, 1.442695
    %v5388 = vpow.pop %v5387
    %v5389 = vadd.f32 %v5388, 1.0
    %v5390 = vrcp.pop %v5389
    %v5391 = vmul.f32 1.0, %v5390
    %v5393 = vrot.slane %v5071, 6
    %v5395 = vmul.f32 %v5236, %v5393
    %v5396 = vmul.f32 %v5156, %v5311
    %v5397 = vadd.f32 %v5395, %v5396
    %v5398 = vtanh.pop %v5397
    %v5399 = vmul.f32 %v5391, %v5398
    %v5401 = vrot.slane %v5399, 2
    %v5402 = vsel %vm488, %v5401, 0
    %5404 = vmatprep.subr.mxu0 0.0
    %5405 = vmatpush1.msra.mxu0 %v3452
    %5406 = vmatprep.subr.mxu0 0.0
    %5407 = vmatpush1.msra.mxu0 %v3453
    %5408 = vmatprep.subr.mxu0 0.0
    %5409 = vmatpush1.msra.mxu0 %v3454
    %5410 = vmatprep.subr.mxu0 0.0
    %5411 = vmatpush1.msra.mxu0 %v3455
    %5412 = vmatprep.subr.mxu0 0.0
    %5413 = vmatpush1.msra.mxu0 0.0
    %5414 = vmatprep.subr.mxu0 0.0
    %5415 = vmatpush1.msra.mxu0 0.0
    %5416 = vmatprep.subr.mxu0 0.0
    %5417 = vmatpush1.msra.mxu0 0.0
    %5418 = vmatprep.subr.mxu0 0.0
    %5419 = vmatpush1.msra.mxu0 0.0
    %5420 = vmatprep.subr.mxu0 0.0
    %5421 = vmatpush1.msra.mxu0 0.0
    %5422 = vmatprep.subr.mxu0 0.0
    %5423 = vmatpush1.msra.mxu0 0.0
    %5424 = vmatprep.subr.mxu0 0.0
    %5425 = vmatpush1.msra.mxu0 0.0
    %5426 = vmatprep.subr.mxu0 0.0
    %5427 = vmatpush1.msra.mxu0 0.0
    %5428 = vmatprep.subr.mxu0 0.0
    %5429 = vmatpush1.msra.mxu0 0.0
    %5430 = vmatprep.subr.mxu0 0.0
    %5431 = vmatpush1.msra.mxu0 0.0
    %5432 = vmatprep.subr.mxu0 0.0
    %5433 = vmatpush1.msra.mxu0 0.0
    %5434 = vmatprep.subr.mxu0 0.0
    %5435 = vmatpush1.msra.mxu0 0.0
    %5436 = vmatprep.subr.mxu0 0.0
    %5437 = vmatpush1.msra.mxu0 0.0
    %5438 = vmatprep.subr.mxu0 0.0
    %5439 = vmatpush1.msra.mxu0 0.0
    %5440 = vmatprep.subr.mxu0 0.0
    %5441 = vmatpush1.msra.mxu0 0.0
    %5442 = vmatprep.subr.mxu0 0.0
    %5443 = vmatpush1.msra.mxu0 0.0
    %5444 = vmatprep.subr.mxu0 0.0
    %5445 = vmatpush1.msra.mxu0 0.0
    %5446 = vmatprep.subr.mxu0 0.0
    %5447 = vmatpush1.msra.mxu0 0.0
    %5448 = vmatprep.subr.mxu0 0.0
    %5449 = vmatpush1.msra.mxu0 0.0
    %5450 = vmatprep.subr.mxu0 0.0
    %5451 = vmatpush1.msra.mxu0 0.0
    %5452 = vmatprep.subr.mxu0 0.0
    %5453 = vmatpush1.msra.mxu0 0.0
    %5454 = vmatprep.subr.mxu0 0.0
    %5455 = vmatpush1.msra.mxu0 0.0
    %5456 = vmatprep.subr.mxu0 0.0
    %5457 = vmatpush1.msra.mxu0 0.0
    %5458 = vmatprep.subr.mxu0 0.0
    %5459 = vmatpush1.msra.mxu0 0.0
    %5460 = vmatprep.subr.mxu0 0.0
    %5461 = vmatpush1.msra.mxu0 0.0
    %5462 = vmatprep.subr.mxu0 0.0
    %5463 = vmatpush1.msra.mxu0 0.0
    %5464 = vmatprep.subr.mxu0 0.0
    %5465 = vmatpush1.msra.mxu0 0.0
    %5466 = vmatprep.subr.mxu0 0.0
    %5467 = vmatpush1.msra.mxu0 0.0
    %5468 = vmatprep.mubr.f32.mxu0 0.0
    %5469 = vmatmul.mubr.f32.gmra.mrb[0].mxu0 %v5402
    %v5470 = vpop.f32.mrb[0].mxu0
    %v5471 = vadd.f32 0.0, %v5470
    %v5472 = vpop.f32.mrb[0].mxu0
    %5473 = vdwg.mxu0
    %v5475 = vrot.slane %v5471, 4
    %v5477 = vadd.f32 %v3185, %v5475
    %v5478 = vxor.u32 %v5477, 2147483648
    %v5479 = vmul.f32 %v5478, 1.442695
    %v5480 = vpow.pop %v5479
    %v5481 = vadd.f32 %v5480, 1.0
    %v5482 = vrcp.pop %v5481
    %v5483 = vmul.f32 1.0, %v5482
    %5484 = vmatprep.subr.mxu0 0.0
    %5485 = vmatpush1.msra.mxu0 %v3534
    %5486 = vmatprep.subr.mxu0 0.0
    %5487 = vmatpush1.msra.mxu0 %v3535
    %5488 = vmatprep.subr.mxu0 0.0
    %5489 = vmatpush1.msra.mxu0 %v3536
    %5490 = vmatprep.subr.mxu0 0.0
    %5491 = vmatpush1.msra.mxu0 %v3537
    %5492 = vmatprep.subr.mxu0 0.0
    %5493 = vmatpush1.msra.mxu0 0.0
    %5494 = vmatprep.subr.mxu0 0.0
    %5495 = vmatpush1.msra.mxu0 0.0
    %5496 = vmatprep.subr.mxu0 0.0
    %5497 = vmatpush1.msra.mxu0 0.0
    %5498 = vmatprep.subr.mxu0 0.0
    %5499 = vmatpush1.msra.mxu0 0.0
    %5500 = vmatprep.subr.mxu0 0.0
    %5501 = vmatpush1.msra.mxu0 0.0
    %5502 = vmatprep.subr.mxu0 0.0
    %5503 = vmatpush1.msra.mxu0 0.0
    %5504 = vmatprep.subr.mxu0 0.0
    %5505 = vmatpush1.msra.mxu0 0.0
    %5506 = vmatprep.subr.mxu0 0.0
    %5507 = vmatpush1.msra.mxu0 0.0
    %5508 = vmatprep.subr.mxu0 0.0
    %5509 = vmatpush1.msra.mxu0 0.0
    %5510 = vmatprep.subr.mxu0 0.0
    %5511 = vmatpush1.msra.mxu0 0.0
    %5512 = vmatprep.subr.mxu0 0.0
    %5513 = vmatpush1.msra.mxu0 0.0
    %5514 = vmatprep.subr.mxu0 0.0
    %5515 = vmatpush1.msra.mxu0 0.0
    %5516 = vmatprep.subr.mxu0 0.0
    %5517 = vmatpush1.msra.mxu0 0.0
    %5518 = vmatprep.subr.mxu0 0.0
    %5519 = vmatpush1.msra.mxu0 0.0
    %5520 = vmatprep.subr.mxu0 0.0
    %5521 = vmatpush1.msra.mxu0 0.0
    %5522 = vmatprep.subr.mxu0 0.0
    %5523 = vmatpush1.msra.mxu0 0.0
    %5524 = vmatprep.subr.mxu0 0.0
    %5525 = vmatpush1.msra.mxu0 0.0
    %5526 = vmatprep.subr.mxu0 0.0
    %5527 = vmatpush1.msra.mxu0 0.0
    %5528 = vmatprep.subr.mxu0 0.0
    %5529 = vmatpush1.msra.mxu0 0.0
    %5530 = vmatprep.subr.mxu0 0.0
    %5531 = vmatpush1.msra.mxu0 0.0
    %5532 = vmatprep.subr.mxu0 0.0
    %5533 = vmatpush1.msra.mxu0 0.0
    %5534 = vmatprep.subr.mxu0 0.0
    %5535 = vmatpush1.msra.mxu0 0.0
    %5536 = vmatprep.subr.mxu0 0.0
    %5537 = vmatpush1.msra.mxu0 0.0
    %5538 = vmatprep.subr.mxu0 0.0
    %5539 = vmatpush1.msra.mxu0 0.0
    %5540 = vmatprep.subr.mxu0 0.0
    %5541 = vmatpush1.msra.mxu0 0.0
    %5542 = vmatprep.subr.mxu0 0.0
    %5543 = vmatpush1.msra.mxu0 0.0
    %5544 = vmatprep.subr.mxu0 0.0
    %5545 = vmatpush1.msra.mxu0 0.0
    %5546 = vmatprep.subr.mxu0 0.0
    %5547 = vmatpush1.msra.mxu0 0.0
    %5548 = vmatprep.mubr.f32.mxu0 0.0
    %5549 = vmatmul.mubr.f32.gmra.mrb[0].mxu0 %v5402
    %v5550 = vpop.f32.mrb[0].mxu0
    %v5551 = vadd.f32 0.0, %v5550
    %v5552 = vpop.f32.mrb[0].mxu0
    %5553 = vdwg.mxu0
    %v5555 = vrot.slane %v5551, 4
    %v5557 = vadd.f32 %v3273, %v5555
    %v5558 = vxor.u32 %v5557, 2147483648
    %v5559 = vmul.f32 %v5558, 1.442695
    %v5560 = vpow.pop %v5559
    %v5561 = vadd.f32 %v5560, 1.0
    %v5562 = vrcp.pop %v5561
    %v5563 = vmul.f32 1.0, %v5562
    %5564 = vmatprep.subr.mxu0 0.0
    %5565 = vmatpush1.msra.mxu0 %v3616
    %5566 = vmatprep.subr.mxu0 0.0
    %5567 = vmatpush1.msra.mxu0 %v3617
    %5568 = vmatprep.subr.mxu0 0.0
    %5569 = vmatpush1.msra.mxu0 %v3618
    %5570 = vmatprep.subr.mxu0 0.0
    %5571 = vmatpush1.msra.mxu0 %v3619
    %5572 = vmatprep.subr.mxu0 0.0
    %5573 = vmatpush1.msra.mxu0 0.0
    %5574 = vmatprep.subr.mxu0 0.0
    %5575 = vmatpush1.msra.mxu0 0.0
    %5576 = vmatprep.subr.mxu0 0.0
    %5577 = vmatpush1.msra.mxu0 0.0
    %5578 = vmatprep.subr.mxu0 0.0
    %5579 = vmatpush1.msra.mxu0 0.0
    %5580 = vmatprep.subr.mxu0 0.0
    %5581 = vmatpush1.msra.mxu0 0.0
    %5582 = vmatprep.subr.mxu0 0.0
    %5583 = vmatpush1.msra.mxu0 0.0
    %5584 = vmatprep.subr.mxu0 0.0
    %5585 = vmatpush1.msra.mxu0 0.0
    %5586 = vmatprep.subr.mxu0 0.0
    %5587 = vmatpush1.msra.mxu0 0.0
    %5588 = vmatprep.subr.mxu0 0.0
    %5589 = vmatpush1.msra.mxu0 0.0
    %5590 = vmatprep.subr.mxu0 0.0
    %5591 = vmatpush1.msra.mxu0 0.0
    %5592 = vmatprep.subr.mxu0 0.0
    %5593 = vmatpush1.msra.mxu0 0.0
    %5594 = vmatprep.subr.mxu0 0.0
    %5595 = vmatpush1.msra.mxu0 0.0
    %5596 = vmatprep.subr.mxu0 0.0
    %5597 = vmatpush1.msra.mxu0 0.0
    %5598 = vmatprep.subr.mxu0 0.0
    %5599 = vmatpush1.msra.mxu0 0.0
    %5600 = vmatprep.subr.mxu0 0.0
    %5601 = vmatpush1.msra.mxu0 0.0
    %5602 = vmatprep.subr.mxu0 0.0
    %5603 = vmatpush1.msra.mxu0 0.0
    %5604 = vmatprep.subr.mxu0 0.0
    %5605 = vmatpush1.msra.mxu0 0.0
    %5606 = vmatprep.subr.mxu0 0.0
    %5607 = vmatpush1.msra.mxu0 0.0
    %5608 = vmatprep.subr.mxu0 0.0
    %5609 = vmatpush1.msra.mxu0 0.0
    %5610 = vmatprep.subr.mxu0 0.0
    %5611 = vmatpush1.msra.mxu0 0.0
    %5612 = vmatprep.subr.mxu0 0.0
    %5613 = vmatpush1.msra.mxu0 0.0
    %5614 = vmatprep.subr.mxu0 0.0
    %5615 = vmatpush1.msra.mxu0 0.0
    %5616 = vmatprep.subr.mxu0 0.0
    %5617 = vmatpush1.msra.mxu0 0.0
    %5618 = vmatprep.subr.mxu0 0.0
    %5619 = vmatpush1.msra.mxu0 0.0
    %5620 = vmatprep.subr.mxu0 0.0
    %5621 = vmatpush1.msra.mxu0 0.0
    %5622 = vmatprep.subr.mxu0 0.0
    %5623 = vmatpush1.msra.mxu0 0.0
    %5624 = vmatprep.subr.mxu0 0.0
    %5625 = vmatpush1.msra.mxu0 0.0
    %5626 = vmatprep.subr.mxu0 0.0
    %5627 = vmatpush1.msra.mxu0 0.0
    %5628 = vmatprep.mubr.f32.mxu0 0.0
    %5629 = vmatmul.mubr.f32.gmra.mrb[0].mxu0 %v5402
    %v5630 = vpop.f32.mrb[0].mxu0
    %v5631 = vadd.f32 0.0, %v5630
    %v5632 = vpop.f32.mrb[0].mxu0
    %5633 = vdwg.mxu0
    %v5635 = vrot.slane %v5631, 4
    %v5637 = vadd.f32 %v3361, %v5635
    %v5638 = vtanh.pop %v5637
    %5639 = vmatprep.subr.mxu0 0.0
    %5640 = vmatpush1.msra.mxu0 %v3693
    %5641 = vmatprep.subr.mxu0 0.0
    %5642 = vmatpush1.msra.mxu0 %v3694
    %5643 = vmatprep.subr.mxu0 0.0
    %5644 = vmatpush1.msra.mxu0 %v3695
    %5645 = vmatprep.subr.mxu0 0.0
    %5646 = vmatpush1.msra.mxu0 %v3696
    %5647 = vmatprep.subr.mxu0 0.0
    %5648 = vmatpush1.msra.mxu0 0.0
    %5649 = vmatprep.subr.mxu0 0.0
    %5650 = vmatpush1.msra.mxu0 0.0
    %5651 = vmatprep.subr.mxu0 0.0
    %5652 = vmatpush1.msra.mxu0 0.0
    %5653 = vmatprep.subr.mxu0 0.0
    %5654 = vmatpush1.msra.mxu0 0.0
    %5655 = vmatprep.subr.mxu0 0.0
    %5656 = vmatpush1.msra.mxu0 0.0
    %5657 = vmatprep.subr.mxu0 0.0
    %5658 = vmatpush1.msra.mxu0 0.0
    %5659 = vmatprep.subr.mxu0 0.0
    %5660 = vmatpush1.msra.mxu0 0.0
    %5661 = vmatprep.subr.mxu0 0.0
    %5662 = vmatpush1.msra.mxu0 0.0
    %5663 = vmatprep.subr.mxu0 0.0
    %5664 = vmatpush1.msra.mxu0 0.0
    %5665 = vmatprep.subr.mxu0 0.0
    %5666 = vmatpush1.msra.mxu0 0.0
    %5667 = vmatprep.subr.mxu0 0.0
    %5668 = vmatpush1.msra.mxu0 0.0
    %5669 = vmatprep.subr.mxu0 0.0
    %5670 = vmatpush1.msra.mxu0 0.0
    %5671 = vmatprep.subr.mxu0 0.0
    %5672 = vmatpush1.msra.mxu0 0.0
    %5673 = vmatprep.subr.mxu0 0.0
    %5674 = vmatpush1.msra.mxu0 0.0
    %5675 = vmatprep.subr.mxu0 0.0
    %5676 = vmatpush1.msra.mxu0 0.0
    %5677 = vmatprep.subr.mxu0 0.0
    %5678 = vmatpush1.msra.mxu0 0.0
    %5679 = vmatprep.subr.mxu0 0.0
    %5680 = vmatpush1.msra.mxu0 0.0
    %5681 = vmatprep.subr.mxu0 0.0
    %5682 = vmatpush1.msra.mxu0 0.0
    %5683 = vmatprep.subr.mxu0 0.0
    %5684 = vmatpush1.msra.mxu0 0.0
    %5685 = vmatprep.subr.mxu0 0.0
    %5686 = vmatpush1.msra.mxu0 0.0
    %5687 = vmatprep.subr.mxu0 0.0
    %5688 = vmatpush1.msra.mxu0 0.0
    %5689 = vmatprep.subr.mxu0 0.0
    %5690 = vmatpush1.msra.mxu0 0.0
    %5691 = vmatprep.subr.mxu0 0.0
    %5692 = vmatpush1.msra.mxu0 0.0
    %5693 = vmatprep.subr.mxu0 0.0
    %5694 = vmatpush1.msra.mxu0 0.0
    %5695 = vmatprep.subr.mxu0 0.0
    %5696 = vmatpush1.msra.mxu0 0.0
    %5697 = vmatprep.subr.mxu0 0.0
    %5698 = vmatpush1.msra.mxu0 0.0
    %5699 = vmatprep.subr.mxu0 0.0
    %5700 = vmatpush1.msra.mxu0 0.0
    %5701 = vmatprep.subr.mxu0 0.0
    %5702 = vmatpush1.msra.mxu0 0.0
    %5703 = vmatprep.mubr.f32.mxu0 0.0
    %5704 = vmatmul.mubr.f32.gmra.mrb[0].mxu0 %v5402
    %v5705 = vpop.f32.mrb[0].mxu0
    %v5706 = vadd.f32 0.0, %v5705
    %v5707 = vpop.f32.mrb[0].mxu0
    %5708 = vdwg.mxu0
    %v5710 = vrot.slane %v5706, 4
    %v5712 = vadd.f32 %v3449, %v5710
    %v5713 = vxor.u32 %v5712, 2147483648
    %v5714 = vmul.f32 %v5713, 1.442695
    %v5715 = vpow.pop %v5714
    %v5716 = vadd.f32 %v5715, 1.0
    %v5717 = vrcp.pop %v5716
    %v5718 = vmul.f32 1.0, %v5717
    %v5720 = vrot.slane %v5397, 6
    %v5722 = vmul.f32 %v5563, %v5720
    %v5723 = vmul.f32 %v5483, %v5638
    %v5724 = vadd.f32 %v5722, %v5723
    %v5725 = vtanh.pop %v5724
    %v5726 = vmul.f32 %v5718, %v5725
    %v5728 = vrot.slane %v5726, 4
    %v5729 = vsel %vm488, %v5728, 0
    %5731 = vmatprep.subr.mxu0 0.0
    %5732 = vmatpush1.msra.mxu0 %v3452
    %5733 = vmatprep.subr.mxu0 0.0
    %5734 = vmatpush1.msra.mxu0 %v3453
    %5735 = vmatprep.subr.mxu0 0.0
    %5736 = vmatpush1.msra.mxu0 %v3454
    %5737 = vmatprep.subr.mxu0 0.0
    %5738 = vmatpush1.msra.mxu0 %v3455
    %5739 = vmatprep.subr.mxu0 0.0
    %5740 = vmatpush1.msra.mxu0 0.0
    %5741 = vmatprep.subr.mxu0 0.0
    %5742 = vmatpush1.msra.mxu0 0.0
    %5743 = vmatprep.subr.mxu0 0.0
    %5744 = vmatpush1.msra.mxu0 0.0
    %5745 = vmatprep.subr.mxu0 0.0
    %5746 = vmatpush1.msra.mxu0 0.0
    %5747 = vmatprep.subr.mxu0 0.0
    %5748 = vmatpush1.msra.mxu0 0.0
    %5749 = vmatprep.subr.mxu0 0.0
    %5750 = vmatpush1.msra.mxu0 0.0
    %5751 = vmatprep.subr.mxu0 0.0
    %5752 = vmatpush1.msra.mxu0 0.0
    %5753 = vmatprep.subr.mxu0 0.0
    %5754 = vmatpush1.msra.mxu0 0.0
    %5755 = vmatprep.subr.mxu0 0.0
    %5756 = vmatpush1.msra.mxu0 0.0
    %5757 = vmatprep.subr.mxu0 0.0
    %5758 = vmatpush1.msra.mxu0 0.0
    %5759 = vmatprep.subr.mxu0 0.0
    %5760 = vmatpush1.msra.mxu0 0.0
    %5761 = vmatprep.subr.mxu0 0.0
    %5762 = vmatpush1.msra.mxu0 0.0
    %5763 = vmatprep.subr.mxu0 0.0
    %5764 = vmatpush1.msra.mxu0 0.0
    %5765 = vmatprep.subr.mxu0 0.0
    %5766 = vmatpush1.msra.mxu0 0.0
    %5767 = vmatprep.subr.mxu0 0.0
    %5768 = vmatpush1.msra.mxu0 0.0
    %5769 = vmatprep.subr.mxu0 0.0
    %5770 = vmatpush1.msra.mxu0 0.0
    %5771 = vmatprep.subr.mxu0 0.0
    %5772 = vmatpush1.msra.mxu0 0.0
    %5773 = vmatprep.subr.mxu0 0.0
    %5774 = vmatpush1.msra.mxu0 0.0
    %5775 = vmatprep.subr.mxu0 0.0
    %5776 = vmatpush1.msra.mxu0 0.0
    %5777 = vmatprep.subr.mxu0 0.0
    %5778 = vmatpush1.msra.mxu0 0.0
    %5779 = vmatprep.subr.mxu0 0.0
    %5780 = vmatpush1.msra.mxu0 0.0
    %5781 = vmatprep.subr.mxu0 0.0
    %5782 = vmatpush1.msra.mxu0 0.0
    %5783 = vmatprep.subr.mxu0 0.0
    %5784 = vmatpush1.msra.mxu0 0.0
    %5785 = vmatprep.subr.mxu0 0.0
    %5786 = vmatpush1.msra.mxu0 0.0
    %5787 = vmatprep.subr.mxu0 0.0
    %5788 = vmatpush1.msra.mxu0 0.0
    %5789 = vmatprep.subr.mxu0 0.0
    %5790 = vmatpush1.msra.mxu0 0.0
    %5791 = vmatprep.subr.mxu0 0.0
    %5792 = vmatpush1.msra.mxu0 0.0
    %5793 = vmatprep.subr.mxu0 0.0
    %5794 = vmatpush1.msra.mxu0 0.0
    %5795 = vmatprep.mubr.f32.mxu0 0.0
    %5796 = vmatmul.mubr.f32.gmra.mrb[0].mxu0 %v5729
    %v5797 = vpop.f32.mrb[0].mxu0
    %v5798 = vadd.f32 0.0, %v5797
    %v5799 = vpop.f32.mrb[0].mxu0
    %5800 = vdwg.mxu0
    %v5802 = vrot.slane %v5798, 2
    %v5804 = vadd.f32 %v3185, %v5802
    %v5805 = vxor.u32 %v5804, 2147483648
    %v5806 = vmul.f32 %v5805, 1.442695
    %v5807 = vpow.pop %v5806
    %v5808 = vadd.f32 %v5807, 1.0
    %v5809 = vrcp.pop %v5808
    %v5810 = vmul.f32 1.0, %v5809
    %5811 = vmatprep.subr.mxu0 0.0
    %5812 = vmatpush1.msra.mxu0 %v3534
    %5813 = vmatprep.subr.mxu0 0.0
    %5814 = vmatpush1.msra.mxu0 %v3535
    %5815 = vmatprep.subr.mxu0 0.0
    %5816 = vmatpush1.msra.mxu0 %v3536
    %5817 = vmatprep.subr.mxu0 0.0
    %5818 = vmatpush1.msra.mxu0 %v3537
    %5819 = vmatprep.subr.mxu0 0.0
    %5820 = vmatpush1.msra.mxu0 0.0
    %5821 = vmatprep.subr.mxu0 0.0
    %5822 = vmatpush1.msra.mxu0 0.0
    %5823 = vmatprep.subr.mxu0 0.0
    %5824 = vmatpush1.msra.mxu0 0.0
    %5825 = vmatprep.subr.mxu0 0.0
    %5826 = vmatpush1.msra.mxu0 0.0
    %5827 = vmatprep.subr.mxu0 0.0
    %5828 = vmatpush1.msra.mxu0 0.0
    %5829 = vmatprep.subr.mxu0 0.0
    %5830 = vmatpush1.msra.mxu0 0.0
    %5831 = vmatprep.subr.mxu0 0.0
    %5832 = vmatpush1.msra.mxu0 0.0
    %5833 = vmatprep.subr.mxu0 0.0
    %5834 = vmatpush1.msra.mxu0 0.0
    %5835 = vmatprep.subr.mxu0 0.0
    %5836 = vmatpush1.msra.mxu0 0.0
    %5837 = vmatprep.subr.mxu0 0.0
    %5838 = vmatpush1.msra.mxu0 0.0
    %5839 = vmatprep.subr.mxu0 0.0
    %5840 = vmatpush1.msra.mxu0 0.0
    %5841 = vmatprep.subr.mxu0 0.0
    %5842 = vmatpush1.msra.mxu0 0.0
    %5843 = vmatprep.subr.mxu0 0.0
    %5844 = vmatpush1.msra.mxu0 0.0
    %5845 = vmatprep.subr.mxu0 0.0
    %5846 = vmatpush1.msra.mxu0 0.0
    %5847 = vmatprep.subr.mxu0 0.0
    %5848 = vmatpush1.msra.mxu0 0.0
    %5849 = vmatprep.subr.mxu0 0.0
    %5850 = vmatpush1.msra.mxu0 0.0
    %5851 = vmatprep.subr.mxu0 0.0
    %5852 = vmatpush1.msra.mxu0 0.0
    %5853 = vmatprep.subr.mxu0 0.0
    %5854 = vmatpush1.msra.mxu0 0.0
    %5855 = vmatprep.subr.mxu0 0.0
    %5856 = vmatpush1.msra.mxu0 0.0
    %5857 = vmatprep.subr.mxu0 0.0
    %5858 = vmatpush1.msra.mxu0 0.0
    %5859 = vmatprep.subr.mxu0 0.0
    %5860 = vmatpush1.msra.mxu0 0.0
    %5861 = vmatprep.subr.mxu0 0.0
    %5862 = vmatpush1.msra.mxu0 0.0
    %5863 = vmatprep.subr.mxu0 0.0
    %5864 = vmatpush1.msra.mxu0 0.0
    %5865 = vmatprep.subr.mxu0 0.0
    %5866 = vmatpush1.msra.mxu0 0.0
    %5867 = vmatprep.subr.mxu0 0.0
    %5868 = vmatpush1.msra.mxu0 0.0
    %5869 = vmatprep.subr.mxu0 0.0
    %5870 = vmatpush1.msra.mxu0 0.0
    %5871 = vmatprep.subr.mxu0 0.0
    %5872 = vmatpush1.msra.mxu0 0.0
    %5873 = vmatprep.subr.mxu0 0.0
    %5874 = vmatpush1.msra.mxu0 0.0
    %5875 = vmatprep.mubr.f32.mxu0 0.0
    %5876 = vmatmul.mubr.f32.gmra.mrb[0].mxu0 %v5729
    %v5877 = vpop.f32.mrb[0].mxu0
    %v5878 = vadd.f32 0.0, %v5877
    %v5879 = vpop.f32.mrb[0].mxu0
    %5880 = vdwg.mxu0
    %v5882 = vrot.slane %v5878, 2
    %v5884 = vadd.f32 %v3273, %v5882
    %v5885 = vxor.u32 %v5884, 2147483648
    %v5886 = vmul.f32 %v5885, 1.442695
    %v5887 = vpow.pop %v5886
    %v5888 = vadd.f32 %v5887, 1.0
    %v5889 = vrcp.pop %v5888
    %v5890 = vmul.f32 1.0, %v5889
    %5891 = vmatprep.subr.mxu0 0.0
    %5892 = vmatpush1.msra.mxu0 %v3616
    %5893 = vmatprep.subr.mxu0 0.0
    %5894 = vmatpush1.msra.mxu0 %v3617
    %5895 = vmatprep.subr.mxu0 0.0
    %5896 = vmatpush1.msra.mxu0 %v3618
    %5897 = vmatprep.subr.mxu0 0.0
    %5898 = vmatpush1.msra.mxu0 %v3619
    %5899 = vmatprep.subr.mxu0 0.0
    %5900 = vmatpush1.msra.mxu0 0.0
    %5901 = vmatprep.subr.mxu0 0.0
    %5902 = vmatpush1.msra.mxu0 0.0
    %5903 = vmatprep.subr.mxu0 0.0
    %5904 = vmatpush1.msra.mxu0 0.0
    %5905 = vmatprep.subr.mxu0 0.0
    %5906 = vmatpush1.msra.mxu0 0.0
    %5907 = vmatprep.subr.mxu0 0.0
    %5908 = vmatpush1.msra.mxu0 0.0
    %5909 = vmatprep.subr.mxu0 0.0
    %5910 = vmatpush1.msra.mxu0 0.0
    %5911 = vmatprep.subr.mxu0 0.0
    %5912 = vmatpush1.msra.mxu0 0.0
    %5913 = vmatprep.subr.mxu0 0.0
    %5914 = vmatpush1.msra.mxu0 0.0
    %5915 = vmatprep.subr.mxu0 0.0
    %5916 = vmatpush1.msra.mxu0 0.0
    %5917 = vmatprep.subr.mxu0 0.0
    %5918 = vmatpush1.msra.mxu0 0.0
    %5919 = vmatprep.subr.mxu0 0.0
    %5920 = vmatpush1.msra.mxu0 0.0
    %5921 = vmatprep.subr.mxu0 0.0
    %5922 = vmatpush1.msra.mxu0 0.0
    %5923 = vmatprep.subr.mxu0 0.0
    %5924 = vmatpush1.msra.mxu0 0.0
    %5925 = vmatprep.subr.mxu0 0.0
    %5926 = vmatpush1.msra.mxu0 0.0
    %5927 = vmatprep.subr.mxu0 0.0
    %5928 = vmatpush1.msra.mxu0 0.0
    %5929 = vmatprep.subr.mxu0 0.0
    %5930 = vmatpush1.msra.mxu0 0.0
    %5931 = vmatprep.subr.mxu0 0.0
    %5932 = vmatpush1.msra.mxu0 0.0
    %5933 = vmatprep.subr.mxu0 0.0
    %5934 = vmatpush1.msra.mxu0 0.0
    %5935 = vmatprep.subr.mxu0 0.0
    %5936 = vmatpush1.msra.mxu0 0.0
    %5937 = vmatprep.subr.mxu0 0.0
    %5938 = vmatpush1.msra.mxu0 0.0
    %5939 = vmatprep.subr.mxu0 0.0
    %5940 = vmatpush1.msra.mxu0 0.0
    %5941 = vmatprep.subr.mxu0 0.0
    %5942 = vmatpush1.msra.mxu0 0.0
    %5943 = vmatprep.subr.mxu0 0.0
    %5944 = vmatpush1.msra.mxu0 0.0
    %5945 = vmatprep.subr.mxu0 0.0
    %5946 = vmatpush1.msra.mxu0 0.0
    %5947 = vmatprep.subr.mxu0 0.0
    %5948 = vmatpush1.msra.mxu0 0.0
    %5949 = vmatprep.subr.mxu0 0.0
    %5950 = vmatpush1.msra.mxu0 0.0
    %5951 = vmatprep.subr.mxu0 0.0
    %5952 = vmatpush1.msra.mxu0 0.0
    %5953 = vmatprep.subr.mxu0 0.0
    %5954 = vmatpush1.msra.mxu0 0.0
    %5955 = vmatprep.mubr.f32.mxu0 0.0
    %5956 = vmatmul.mubr.f32.gmra.mrb[0].mxu0 %v5729
    %v5957 = vpop.f32.mrb[0].mxu0
    %v5958 = vadd.f32 0.0, %v5957
    %v5959 = vpop.f32.mrb[0].mxu0
    %5960 = vdwg.mxu0
    %v5962 = vrot.slane %v5958, 2
    %v5964 = vadd.f32 %v3361, %v5962
    %v5965 = vtanh.pop %v5964
    %5966 = vmatprep.subr.mxu0 0.0
    %5967 = vmatpush1.msra.mxu0 %v3693
    %5968 = vmatprep.subr.mxu0 0.0
    %5969 = vmatpush1.msra.mxu0 %v3694
    %5970 = vmatprep.subr.mxu0 0.0
    %5971 = vmatpush1.msra.mxu0 %v3695
    %5972 = vmatprep.subr.mxu0 0.0
    %5973 = vmatpush1.msra.mxu0 %v3696
    %5974 = vmatprep.subr.mxu0 0.0
    %5975 = vmatpush1.msra.mxu0 0.0
    %5976 = vmatprep.subr.mxu0 0.0
    %5977 = vmatpush1.msra.mxu0 0.0
    %5978 = vmatprep.subr.mxu0 0.0
    %5979 = vmatpush1.msra.mxu0 0.0
    %5980 = vmatprep.subr.mxu0 0.0
    %5981 = vmatpush1.msra.mxu0 0.0
    %5982 = vmatprep.subr.mxu0 0.0
    %5983 = vmatpush1.msra.mxu0 0.0
    %5984 = vmatprep.subr.mxu0 0.0
    %5985 = vmatpush1.msra.mxu0 0.0
    %5986 = vmatprep.subr.mxu0 0.0
    %5987 = vmatpush1.msra.mxu0 0.0
    %5988 = vmatprep.subr.mxu0 0.0
    %5989 = vmatpush1.msra.mxu0 0.0
    %5990 = vmatprep.subr.mxu0 0.0
    %5991 = vmatpush1.msra.mxu0 0.0
    %5992 = vmatprep.subr.mxu0 0.0
    %5993 = vmatpush1.msra.mxu0 0.0
    %5994 = vmatprep.subr.mxu0 0.0
    %5995 = vmatpush1.msra.mxu0 0.0
    %5996 = vmatprep.subr.mxu0 0.0
    %5997 = vmatpush1.msra.mxu0 0.0
    %5998 = vmatprep.subr.mxu0 0.0
    %5999 = vmatpush1.msra.mxu0 0.0
    %6000 = vmatprep.subr.mxu0 0.0
    %6001 = vmatpush1.msra.mxu0 0.0
    %6002 = vmatprep.subr.mxu0 0.0
    %6003 = vmatpush1.msra.mxu0 0.0
    %6004 = vmatprep.subr.mxu0 0.0
    %6005 = vmatpush1.msra.mxu0 0.0
    %6006 = vmatprep.subr.mxu0 0.0
    %6007 = vmatpush1.msra.mxu0 0.0
    %6008 = vmatprep.subr.mxu0 0.0
    %6009 = vmatpush1.msra.mxu0 0.0
    %6010 = vmatprep.subr.mxu0 0.0
    %6011 = vmatpush1.msra.mxu0 0.0
    %6012 = vmatprep.subr.mxu0 0.0
    %6013 = vmatpush1.msra.mxu0 0.0
    %6014 = vmatprep.subr.mxu0 0.0
    %6015 = vmatpush1.msra.mxu0 0.0
    %6016 = vmatprep.subr.mxu0 0.0
    %6017 = vmatpush1.msra.mxu0 0.0
    %6018 = vmatprep.subr.mxu0 0.0
    %6019 = vmatpush1.msra.mxu0 0.0
    %6020 = vmatprep.subr.mxu0 0.0
    %6021 = vmatpush1.msra.mxu0 0.0
    %6022 = vmatprep.subr.mxu0 0.0
    %6023 = vmatpush1.msra.mxu0 0.0
    %6024 = vmatprep.subr.mxu0 0.0
    %6025 = vmatpush1.msra.mxu0 0.0
    %6026 = vmatprep.subr.mxu0 0.0
    %6027 = vmatpush1.msra.mxu0 0.0
    %6028 = vmatprep.subr.mxu0 0.0
    %6029 = vmatpush1.msra.mxu0 0.0
    %6030 = vmatprep.mubr.f32.mxu0 0.0
    %6031 = vmatmul.mubr.f32.gmra.mrb[0].mxu0 %v5729
    %v6032 = vpop.f32.mrb[0].mxu0
    %v6033 = vadd.f32 0.0, %v6032
    %v6034 = vpop.f32.mrb[0].mxu0
    %6035 = vdwg.mxu0
    %v6037 = vrot.slane %v6033, 2
    %v6039 = vadd.f32 %v3449, %v6037
    %v6040 = vxor.u32 %v6039, 2147483648
    %v6041 = vmul.f32 %v6040, 1.442695
    %v6042 = vpow.pop %v6041
    %v6043 = vadd.f32 %v6042, 1.0
    %v6044 = vrcp.pop %v6043
    %v6045 = vmul.f32 1.0, %v6044
    %v6047 = vrot.slane %v5724, 6
    %v6049 = vmul.f32 %v5890, %v6047
    %v6050 = vmul.f32 %v5810, %v5965
    %v6051 = vadd.f32 %v6049, %v6050
    %v6052 = vtanh.pop %v6051
    %v6053 = vmul.f32 %v6045, %v6052
    %v6054 = vld [vmem:[%s7] sm:$0xff]
    %v6055 = vld [vmem:[%s7 + $0x8] sm:$0xff]
    %v6056 = vld [vmem:[%s7 + $0x10] sm:$0xff]
    %v6057 = vld [vmem:[%s7 + $0x18] sm:$0xff]
    %v6058 = vld [vmem:[%s8] sm:$0x1]
    %v6060 = vlaneseq
    %v6061 = vshrl.u32 %v6060, 7
    %v6062 = vsub.s32 0, %v6061
    %v6063 = vrot.slane %v6058, %v6062
    %v6066 = vrot.slane %v6053, 6
    %v6067 = vsel %vm488, %v6066, 0
    %6069 = vmatprep.subr.mxu0 0.0
    %6070 = vmatpush1.msra.mxu0 %v6054
    %6071 = vmatprep.subr.mxu0 0.0
    %6072 = vmatpush1.msra.mxu0 %v6055
    %6073 = vmatprep.subr.mxu0 0.0
    %6074 = vmatpush1.msra.mxu0 %v6056
    %6075 = vmatprep.subr.mxu0 0.0
    %6076 = vmatpush1.msra.mxu0 %v6057
    %6077 = vmatprep.subr.mxu0 0.0
    %6078 = vmatpush1.msra.mxu0 0.0
    %6079 = vmatprep.subr.mxu0 0.0
    %6080 = vmatpush1.msra.mxu0 0.0
    %6081 = vmatprep.subr.mxu0 0.0
    %6082 = vmatpush1.msra.mxu0 0.0
    %6083 = vmatprep.subr.mxu0 0.0
    %6084 = vmatpush1.msra.mxu0 0.0
    %6085 = vmatprep.subr.mxu0 0.0
    %6086 = vmatpush1.msra.mxu0 0.0
    %6087 = vmatprep.subr.mxu0 0.0
    %6088 = vmatpush1.msra.mxu0 0.0
    %6089 = vmatprep.subr.mxu0 0.0
    %6090 = vmatpush1.msra.mxu0 0.0
    %6091 = vmatprep.subr.mxu0 0.0
    %6092 = vmatpush1.msra.mxu0 0.0
    %6093 = vmatprep.subr.mxu0 0.0
    %6094 = vmatpush1.msra.mxu0 0.0
    %6095 = vmatprep.subr.mxu0 0.0
    %6096 = vmatpush1.msra.mxu0 0.0
    %6097 = vmatprep.subr.mxu0 0.0
    %6098 = vmatpush1.msra.mxu0 0.0
    %6099 = vmatprep.subr.mxu0 0.0
    %6100 = vmatpush1.msra.mxu0 0.0
    %6101 = vmatprep.subr.mxu0 0.0
    %6102 = vmatpush1.msra.mxu0 0.0
    %6103 = vmatprep.subr.mxu0 0.0
    %6104 = vmatpush1.msra.mxu0 0.0
    %6105 = vmatprep.subr.mxu0 0.0
    %6106 = vmatpush1.msra.mxu0 0.0
    %6107 = vmatprep.subr.mxu0 0.0
    %6108 = vmatpush1.msra.mxu0 0.0
    %6109 = vmatprep.subr.mxu0 0.0
    %6110 = vmatpush1.msra.mxu0 0.0
    %6111 = vmatprep.subr.mxu0 0.0
    %6112 = vmatpush1.msra.mxu0 0.0
    %6113 = vmatprep.subr.mxu0 0.0
    %6114 = vmatpush1.msra.mxu0 0.0
    %6115 = vmatprep.subr.mxu0 0.0
    %6116 = vmatpush1.msra.mxu0 0.0
    %6117 = vmatprep.subr.mxu0 0.0
    %6118 = vmatpush1.msra.mxu0 0.0
    %6119 = vmatprep.subr.mxu0 0.0
    %6120 = vmatpush1.msra.mxu0 0.0
    %6121 = vmatprep.subr.mxu0 0.0
    %6122 = vmatpush1.msra.mxu0 0.0
    %6123 = vmatprep.subr.mxu0 0.0
    %6124 = vmatpush1.msra.mxu0 0.0
    %6125 = vmatprep.subr.mxu0 0.0
    %6126 = vmatpush1.msra.mxu0 0.0
    %6127 = vmatprep.subr.mxu0 0.0
    %6128 = vmatpush1.msra.mxu0 0.0
    %6129 = vmatprep.subr.mxu0 0.0
    %6130 = vmatpush1.msra.mxu0 0.0
    %6131 = vmatprep.subr.mxu0 0.0
    %6132 = vmatpush1.msra.mxu0 0.0
    %6133 = vmatprep.mubr.f32.mxu0 0.0
    %6134 = vmatmul.mubr.f32.gmra.mrb[0].mxu0 %v6067
    %v6135 = vpop.f32.mrb[0].mxu0
    %v6136 = vadd.f32 %v6063, %v6135
    %v6137 = vpop.f32.mrb[0].mxu0
    %6138 = vdwg.mxu0
    %vm6139 = vcmask 58368
    %6140 = vst.msk [vmem:[#allocation10] sm:$0x3] %vm6139, %v6136
    // Predicated region
    $region54: #{lstm_model_forward.1} parent=1 // pred_check
      _
    $region55: #{lstm_model_forward.1} parent=1 // pred_check_branch
      %6142 = sbr.rel (0) target = $region57
    $region56: #{lstm_model_forward.1} parent=1 // pred_region
      %s6144 = ssub.s32 32, 32
      %6145 = vsyncadd [#allocation4], %s6144
      %s6147 = sshll.u32 [#allocation10], 4
      %s6148 = int_to_ptr.vmem [resolvable:$true] %s6147
      %6150 = dma.vmem_to_hbm [thread:$0]  %s6148, 32, %s9, [#allocation4]
    $region57: #{lstm_model_forward.1} parent=1 // pred_fallthru
      _
    // Predicated region
    $region58: #{lstm_model_forward.1} parent=1 // pred_check
      _
    $region59: #{lstm_model_forward.1} parent=1 // pred_check_branch
      %6152 = sbr.rel (0) target = $region61
    $region60: #{lstm_model_forward.1} parent=1 // pred_region
      %6153 = dma.done [#allocation4], 32
    $region61: #{lstm_model_forward.1} parent=1 // pred_fallthru
      _
    %6154 = vsyncpa [#allocation3], 1
    %6155 = vsyncpa [#allocation6], 1
    %6156 = vsyncpa [#allocation9], 1
    %6157 = vsyncpa [#allocation4], 1

</llo_original>
